<compile_context>
chip_gen: v7x
topology: tpu7x:2x2x1
jax: 0.10.0
libtpu: 0.0.40
codegen_flags: <defaults>
</compile_context>

<pallas_src>
import functools

import jax
import jax.numpy as jnp
from jax.experimental import pallas as pl
from jax.experimental.pallas import tpu as pltpu


# ----------------------------- Pallas kernel --------------------------------
def _conv_taps(read_tap, ks, lconv, w_ref):
    """Valid Conv1d as `ks` accumulating MXU matmuls over contiguous tap slices."""
    cout = w_ref.shape[-1]
    acc = jnp.zeros((lconv, cout), jnp.float32)
    for t in range(ks):  # static, small
        acc += jnp.dot(read_tap(t, lconv).astype(jnp.bfloat16), w_ref[t],
                       preferred_element_type=jnp.float32)
    return acc


def _conv_relu_pool_stage(read_tap, ks, pool, lconv, lp, w_ref, b_ref,
                          conv_scr, out_scr):
    """Conv1d(valid) -> MaxPool1d(kernel=stride=pool) -> +bias -> ReLU (into out_scr)."""
    conv = _conv_taps(read_tap, ks, lconv, w_ref)          # (lconv, cout) f32
    if pool > 1:
        conv_scr[...] = conv                               # stays in VMEM
        pooled = conv_scr[pl.ds(0, lp, stride=pool), :]    # strided phase reads
        for j in range(1, pool):
            pooled = jnp.maximum(pooled, conv_scr[pl.ds(j, lp, stride=pool), :])
    else:
        pooled = conv
    # bias + ReLU hoisted after the max (both monotone -> mathematically identical)
    out_scr[...] = jnp.maximum(pooled + b_ref[...], 0.0)


def fused_branches_kernel(*args, branch_cfgs, lmin):
    """All branches x all 3 stages for one batch element; intermediates in VMEM.

    args = (x_ref, [w1,b1,w2,b2,w3,b3 per branch]..., o_ref, [4 scratch refs per branch]...)
      x_ref : (1, L, Cin) f32
      w*    : (ks, cin, cout) bf16,  b* : (1, cout) f32
      o_ref : (1, n_branches, lmin, cout3) f32
    """
    nb = len(branch_cfgs)
    x_ref = args[0]
    wb = args[1:1 + 6 * nb]
    o_ref = args[1 + 6 * nb]
    scr = args[2 + 6 * nb:]

    for bi, (ks, pool, lconv1, lp1, lconv2, lp2) in enumerate(branch_cfgs):
        w1, b1, w2, b2, w3, b3 = wb[6 * bi:6 * bi + 6]
        s_c1, s_h1, s_c2, s_h2 = scr[4 * bi:4 * bi + 4]

        # Stage 1: Conv -> ReLU -> MaxPool (Dropout = id); reads the x block.
        _conv_relu_pool_stage(lambda t, n: x_ref[0, pl.ds(t, n), :],
                              ks, pool, lconv1, lp1, w1, b1, s_c1, s_h1)
        # Stage 2: Conv -> ReLU -> MaxPool (Dropout = id); reads stage-1 VMEM scratch.
        _conv_relu_pool_stage(lambda t, n: s_h1[pl.ds(t, n), :],
                              ks, pool, lconv2, lp2, w2, b2, s_c2, s_h2)
        # Stage 3: Conv -> ReLU (no pooling). Only the first `lmin` rows survive the
        # cross-branch crop, so compute just those and store straight to the output.
        conv = _conv_taps(lambda t, n: s_h2[pl.ds(t, n), :], ks, lmin, w3)
        o_ref[0, bi] = jnp.maximum(conv + b3[...], 0.0)


# ------------------------------ JAX wrapper ----------------------------------
def testmodel2_forward(x_ncl, params):
    """Forward pass of TestModel2's conv branches.

    x_ncl : (B, Cin, L) float32 (PyTorch NCL layout).
    params: list of (kernel_size, [(w1,b1),(w2,b2),(w3,b3)]) with w in (K, Cin, Cout).
    Returns branch feature maps concatenated on channels (NCL), cropped to min length.
    """
    x = jnp.transpose(x_ncl, (0, 2, 1)).astype(jnp.float32)  # NCL -> NLC
    b, l, cin = x.shape
    nb = len(params)

    branch_cfgs = []
    flat_inputs = [x]
    in_specs = [pl.BlockSpec((1, l, cin), lambda i: (i, 0, 0))]
    scratch_shapes = []
    lconv3_all = []
    cout3 = None

    for ks, layers in params:
        pool = max(ks // 2, 1)                    # MaxPool1d(kernel=stride=ks//2)
        c1 = layers[0][0].shape[-1]
        c2 = layers[1][0].shape[-1]
        cout3 = layers[2][0].shape[-1]
        lconv1 = l - ks + 1
        lp1 = lconv1 // pool
        lconv2 = lp1 - ks + 1
        lp2 = lconv2 // pool
        lconv3 = lp2 - ks + 1
        assert lconv3 >= 1, "input length too short for this kernel_size list"
        lconv3_all.append(lconv3)
        branch_cfgs.append((ks, pool, lconv1, lp1, lconv2, lp2))

        for (w, bias) in layers:
            kdim, cin_l, cout_l = w.shape
            flat_inputs.append(w.astype(jnp.bfloat16))        # bf16 MXU operands
            in_specs.append(pl.BlockSpec((kdim, cin_l, cout_l), lambda i: (0, 0, 0)))
            flat_inputs.append(bias.reshape(1, cout_l).astype(jnp.float32))
            in_specs.append(pl.BlockSpec((1, cout_l), lambda i: (0, 0)))

        scratch_shapes += [
            pltpu.VMEM((lconv1, c1), jnp.float32),   # stage-1 conv output (pre-pool)
            pltpu.VMEM((lp1, c1), jnp.float32),      # stage-1 activated output
            pltpu.VMEM((lconv2, c2), jnp.float32),   # stage-2 conv output (pre-pool)
            pltpu.VMEM((lp2, c2), jnp.float32),      # stage-2 activated output
        ]

    lmin = min(lconv3_all)
    kernel = functools.partial(fused_branches_kernel,
                               branch_cfgs=tuple(branch_cfgs), lmin=lmin)
    out = pl.pallas_call(
        kernel,
        out_shape=jax.ShapeDtypeStruct((b, nb, lmin, cout3), jnp.float32),
        grid=(b,),
        in_specs=in_specs,
        out_specs=pl.BlockSpec((1, nb, lmin, cout3), lambda i: (i, 0, 0, 0)),
        scratch_shapes=scratch_shapes,
        compiler_params=pltpu.CompilerParams(dimension_semantics=("parallel",)),
    )(*flat_inputs)

    # (B, nb, lmin, C3) -> concat branches on channels, back to NCL: (B, nb*C3, lmin)
    return out.transpose(0, 1, 3, 2).reshape(b, nb * cout3, lmin)


def init_params(key, in_channels, out_channels_list, kernel_size_list):
    params = []
    for ks in kernel_size_list:
        chans = [in_channels] + list(out_channels_list)
        layers = []
        for li in range(3):
            cin, cout = chans[li], chans[li + 1]
            key, kw, kb = jax.random.split(key, 3)
            bound = 1.0 / (cin * ks) ** 0.5  # PyTorch Conv1d default init range
            w = jax.random.uniform(kw, (ks, cin, cout), jnp.float32, -bound, bound)
            b = jax.random.uniform(kb, (cout,), jnp.float32, -bound, bound)
            layers.append((w, b))
        params.append((ks, layers))
    return params


if __name__ == "__main__":
    key = jax.random.PRNGKey(0)
    kparam, kx = jax.random.split(key)

    # Small, module-consistent shapes: batch=2, in_channels=4, length=128,
    # scaled-down channel/kernel lists (module parameters are configurable).
    B, CIN, L = 2, 4, 128
    out_channels_list = [16, 32, 64]   # scaled-down from [100, 200, 400]
    kernel_size_list = [5, 6, 7]       # scaled-down from [5, ..., 15]

    params = init_params(kparam, CIN, out_channels_list, kernel_size_list)
    x = jax.random.normal(kx, (B, CIN, L), jnp.float32)  # NCL input like PyTorch

    fwd = jax.jit(lambda inp: testmodel2_forward(inp, params))
    out = fwd(x)
    jax.block_until_ready(out)
    print("KERNEL_OK")
</pallas_src>

<mosaic_0001>
module attributes {stable_mosaic.version = 11 : i64} {
  func.func @fused_branches_kernel(%arg0: i32, %arg1: memref<1x128x4xf32, #tpu.memory_space<vmem>>, %arg2: memref<5x4x16xbf16, #tpu.memory_space<vmem>>, %arg3: memref<1x16xf32, #tpu.memory_space<vmem>>, %arg4: memref<5x16x32xbf16, #tpu.memory_space<vmem>>, %arg5: memref<1x32xf32, #tpu.memory_space<vmem>>, %arg6: memref<5x32x64xbf16, #tpu.memory_space<vmem>>, %arg7: memref<1x64xf32, #tpu.memory_space<vmem>>, %arg8: memref<6x4x16xbf16, #tpu.memory_space<vmem>>, %arg9: memref<1x16xf32, #tpu.memory_space<vmem>>, %arg10: memref<6x16x32xbf16, #tpu.memory_space<vmem>>, %arg11: memref<1x32xf32, #tpu.memory_space<vmem>>, %arg12: memref<6x32x64xbf16, #tpu.memory_space<vmem>>, %arg13: memref<1x64xf32, #tpu.memory_space<vmem>>, %arg14: memref<7x4x16xbf16, #tpu.memory_space<vmem>>, %arg15: memref<1x16xf32, #tpu.memory_space<vmem>>, %arg16: memref<7x16x32xbf16, #tpu.memory_space<vmem>>, %arg17: memref<1x32xf32, #tpu.memory_space<vmem>>, %arg18: memref<7x32x64xbf16, #tpu.memory_space<vmem>>, %arg19: memref<1x64xf32, #tpu.memory_space<vmem>>, %arg20: memref<1x3x5x64xf32, #tpu.memory_space<vmem>>, %arg21: memref<124x16xf32, #tpu.memory_space<vmem>>, %arg22: memref<62x16xf32, #tpu.memory_space<vmem>>, %arg23: memref<58x32xf32, #tpu.memory_space<vmem>>, %arg24: memref<29x32xf32, #tpu.memory_space<vmem>>, %arg25: memref<123x16xf32, #tpu.memory_space<vmem>>, %arg26: memref<41x16xf32, #tpu.memory_space<vmem>>, %arg27: memref<36x32xf32, #tpu.memory_space<vmem>>, %arg28: memref<12x32xf32, #tpu.memory_space<vmem>>, %arg29: memref<122x16xf32, #tpu.memory_space<vmem>>, %arg30: memref<40x16xf32, #tpu.memory_space<vmem>>, %arg31: memref<34x32xf32, #tpu.memory_space<vmem>>, %arg32: memref<11x32xf32, #tpu.memory_space<vmem>>) attributes {dimension_semantics = [#tpu.dimension_semantics<parallel>], iteration_bounds = array<i64: 2>, scalar_prefetch = 0 : i64, scratch_operands = 12 : i64, tpu.core_type = #tpu.core_type<tc>, window_params = [{transform_indices = @transform_0, window_bounds = array<i64: 1, 128, 4>}, {pipeline_mode = #tpu.pipeline_mode<synchronous>, transform_indices = @transform_1, window_bounds = array<i64: 5, 4, 16>}, {pipeline_mode = #tpu.pipeline_mode<synchronous>, transform_indices = @transform_2, window_bounds = array<i64: 1, 16>}, {pipeline_mode = #tpu.pipeline_mode<synchronous>, transform_indices = @transform_3, window_bounds = array<i64: 5, 16, 32>}, {pipeline_mode = #tpu.pipeline_mode<synchronous>, transform_indices = @transform_4, window_bounds = array<i64: 1, 32>}, {pipeline_mode = #tpu.pipeline_mode<synchronous>, transform_indices = @transform_5, window_bounds = array<i64: 5, 32, 64>}, {pipeline_mode = #tpu.pipeline_mode<synchronous>, transform_indices = @transform_6, window_bounds = array<i64: 1, 64>}, {pipeline_mode = #tpu.pipeline_mode<synchronous>, transform_indices = @transform_7, window_bounds = array<i64: 6, 4, 16>}, {pipeline_mode = #tpu.pipeline_mode<synchronous>, transform_indices = @transform_8, window_bounds = array<i64: 1, 16>}, {pipeline_mode = #tpu.pipeline_mode<synchronous>, transform_indices = @transform_9, window_bounds = array<i64: 6, 16, 32>}, {pipeline_mode = #tpu.pipeline_mode<synchronous>, transform_indices = @transform_10, window_bounds = array<i64: 1, 32>}, {pipeline_mode = #tpu.pipeline_mode<synchronous>, transform_indices = @transform_11, window_bounds = array<i64: 6, 32, 64>}, {pipeline_mode = #tpu.pipeline_mode<synchronous>, transform_indices = @transform_12, window_bounds = array<i64: 1, 64>}, {pipeline_mode = #tpu.pipeline_mode<synchronous>, transform_indices = @transform_13, window_bounds = array<i64: 7, 4, 16>}, {pipeline_mode = #tpu.pipeline_mode<synchronous>, transform_indices = @transform_14, window_bounds = array<i64: 1, 16>}, {pipeline_mode = #tpu.pipeline_mode<synchronous>, transform_indices = @transform_15, window_bounds = array<i64: 7, 16, 32>}, {pipeline_mode = #tpu.pipeline_mode<synchronous>, transform_indices = @transform_16, window_bounds = array<i64: 1, 32>}, {pipeline_mode = #tpu.pipeline_mode<synchronous>, transform_indices = @transform_17, window_bounds = array<i64: 7, 32, 64>}, {pipeline_mode = #tpu.pipeline_mode<synchronous>, transform_indices = @transform_18, window_bounds = array<i64: 1, 64>}, {transform_indices = @transform_19, window_bounds = array<i64: 1, 3, 5, 64>}]} {
    %cst = arith.constant 0.000000e+00 : f32
    %0 = vector.broadcast %cst : f32 to vector<124x16xf32>
    %c0 = arith.constant 0 : index
    %c0_0 = arith.constant 0 : index
    %c0_1 = arith.constant 0 : index
    %1 = vector.load %arg1[%c0, %c0_0, %c0_1] : memref<1x128x4xf32, #tpu.memory_space<vmem>>, vector<1x124x4xf32>
    %2 = vector.shape_cast %1 : vector<1x124x4xf32> to vector<124x4xf32>
    %3 = arith.truncf %2 : vector<124x4xf32> to vector<124x4xbf16>
    %c0_2 = arith.constant 0 : index
    %c0_3 = arith.constant 0 : index
    %c0_4 = arith.constant 0 : index
    %4 = vector.load %arg2[%c0_2, %c0_3, %c0_4] : memref<5x4x16xbf16, #tpu.memory_space<vmem>>, vector<1x4x16xbf16>
    %5 = vector.shape_cast %4 : vector<1x4x16xbf16> to vector<4x16xbf16>
    %cst_5 = arith.constant dense<0.000000e+00> : vector<124x16xf32>
    %6 = tpu.matmul %3, %5, %cst_5 {dimension_numbers = #tpu.dot_dimension_numbers<[1], [0], [0], [1], [0, 0, 1, 1], [], []>} : vector<124x4xbf16>, vector<4x16xbf16>, vector<124x16xf32> -> vector<124x16xf32>
    %7 = arith.addf %0, %6 : vector<124x16xf32>
    %c0_6 = arith.constant 0 : index
    %c1 = arith.constant 1 : index
    %c0_7 = arith.constant 0 : index
    %8 = vector.load %arg1[%c0_6, %c1, %c0_7] : memref<1x128x4xf32, #tpu.memory_space<vmem>>, vector<1x124x4xf32>
    %9 = vector.shape_cast %8 : vector<1x124x4xf32> to vector<124x4xf32>
    %10 = arith.truncf %9 : vector<124x4xf32> to vector<124x4xbf16>
    %c1_8 = arith.constant 1 : index
    %c0_9 = arith.constant 0 : index
    %c0_10 = arith.constant 0 : index
    %11 = vector.load %arg2[%c1_8, %c0_9, %c0_10] : memref<5x4x16xbf16, #tpu.memory_space<vmem>>, vector<1x4x16xbf16>
    %12 = vector.shape_cast %11 : vector<1x4x16xbf16> to vector<4x16xbf16>
    %cst_11 = arith.constant dense<0.000000e+00> : vector<124x16xf32>
    %13 = tpu.matmul %10, %12, %cst_11 {dimension_numbers = #tpu.dot_dimension_numbers<[1], [0], [0], [1], [0, 0, 1, 1], [], []>} : vector<124x4xbf16>, vector<4x16xbf16>, vector<124x16xf32> -> vector<124x16xf32>
    %14 = arith.addf %7, %13 : vector<124x16xf32>
    %c0_12 = arith.constant 0 : index
    %c2 = arith.constant 2 : index
    %c0_13 = arith.constant 0 : index
    %15 = vector.load %arg1[%c0_12, %c2, %c0_13] : memref<1x128x4xf32, #tpu.memory_space<vmem>>, vector<1x124x4xf32>
    %16 = vector.shape_cast %15 : vector<1x124x4xf32> to vector<124x4xf32>
    %17 = arith.truncf %16 : vector<124x4xf32> to vector<124x4xbf16>
    %c2_14 = arith.constant 2 : index
    %c0_15 = arith.constant 0 : index
    %c0_16 = arith.constant 0 : index
    %18 = vector.load %arg2[%c2_14, %c0_15, %c0_16] : memref<5x4x16xbf16, #tpu.memory_space<vmem>>, vector<1x4x16xbf16>
    %19 = vector.shape_cast %18 : vector<1x4x16xbf16> to vector<4x16xbf16>
    %cst_17 = arith.constant dense<0.000000e+00> : vector<124x16xf32>
    %20 = tpu.matmul %17, %19, %cst_17 {dimension_numbers = #tpu.dot_dimension_numbers<[1], [0], [0], [1], [0, 0, 1, 1], [], []>} : vector<124x4xbf16>, vector<4x16xbf16>, vector<124x16xf32> -> vector<124x16xf32>
    %21 = arith.addf %14, %20 : vector<124x16xf32>
    %c0_18 = arith.constant 0 : index
    %c3 = arith.constant 3 : index
    %c0_19 = arith.constant 0 : index
    %22 = vector.load %arg1[%c0_18, %c3, %c0_19] : memref<1x128x4xf32, #tpu.memory_space<vmem>>, vector<1x124x4xf32>
    %23 = vector.shape_cast %22 : vector<1x124x4xf32> to vector<124x4xf32>
    %24 = arith.truncf %23 : vector<124x4xf32> to vector<124x4xbf16>
    %c3_20 = arith.constant 3 : index
    %c0_21 = arith.constant 0 : index
    %c0_22 = arith.constant 0 : index
    %25 = vector.load %arg2[%c3_20, %c0_21, %c0_22] : memref<5x4x16xbf16, #tpu.memory_space<vmem>>, vector<1x4x16xbf16>
    %26 = vector.shape_cast %25 : vector<1x4x16xbf16> to vector<4x16xbf16>
    %cst_23 = arith.constant dense<0.000000e+00> : vector<124x16xf32>
    %27 = tpu.matmul %24, %26, %cst_23 {dimension_numbers = #tpu.dot_dimension_numbers<[1], [0], [0], [1], [0, 0, 1, 1], [], []>} : vector<124x4xbf16>, vector<4x16xbf16>, vector<124x16xf32> -> vector<124x16xf32>
    %28 = arith.addf %21, %27 : vector<124x16xf32>
    %c0_24 = arith.constant 0 : index
    %c4 = arith.constant 4 : index
    %c0_25 = arith.constant 0 : index
    %29 = vector.load %arg1[%c0_24, %c4, %c0_25] : memref<1x128x4xf32, #tpu.memory_space<vmem>>, vector<1x124x4xf32>
    %30 = vector.shape_cast %29 : vector<1x124x4xf32> to vector<124x4xf32>
    %31 = arith.truncf %30 : vector<124x4xf32> to vector<124x4xbf16>
    %c4_26 = arith.constant 4 : index
    %c0_27 = arith.constant 0 : index
    %c0_28 = arith.constant 0 : index
    %32 = vector.load %arg2[%c4_26, %c0_27, %c0_28] : memref<5x4x16xbf16, #tpu.memory_space<vmem>>, vector<1x4x16xbf16>
    %33 = vector.shape_cast %32 : vector<1x4x16xbf16> to vector<4x16xbf16>
    %cst_29 = arith.constant dense<0.000000e+00> : vector<124x16xf32>
    %34 = tpu.matmul %31, %33, %cst_29 {dimension_numbers = #tpu.dot_dimension_numbers<[1], [0], [0], [1], [0, 0, 1, 1], [], []>} : vector<124x4xbf16>, vector<4x16xbf16>, vector<124x16xf32> -> vector<124x16xf32>
    %35 = arith.addf %28, %34 : vector<124x16xf32>
    %c0_30 = arith.constant 0 : index
    %c0_31 = arith.constant 0 : index
    %36 = vector.load %arg21[%c0_30, %c0_31] : memref<124x16xf32, #tpu.memory_space<vmem>>, vector<124x16xf32>
    tpu.vector_store %arg21[%c0_30, %c0_31], %35 {strides = array<i32>} : memref<124x16xf32, #tpu.memory_space<vmem>>, vector<124x16xf32>,
    %c0_32 = arith.constant 0 : index
    %c0_33 = arith.constant 0 : index
    %37 = tpu.strided_load %arg21[%c0_32, %c0_33] {strides = array<i32: 2, 1>} : memref<124x16xf32, #tpu.memory_space<vmem>>, vector<62x16xf32>
    %c1_34 = arith.constant 1 : index
    %c0_35 = arith.constant 0 : index
    %38 = tpu.strided_load %arg21[%c1_34, %c0_35] {strides = array<i32: 2, 1>} : memref<124x16xf32, #tpu.memory_space<vmem>>, vector<62x16xf32>
    %39 = arith.maximumf %37, %38 : vector<62x16xf32>
    %c0_36 = arith.constant 0 : index
    %c0_37 = arith.constant 0 : index
    %40 = vector.load %arg3[%c0_36, %c0_37] : memref<1x16xf32, #tpu.memory_space<vmem>>, vector<1x16xf32>
    %41 = vector.broadcast %40 : vector<1x16xf32> to vector<62x16xf32>
    %42 = arith.addf %39, %41 : vector<62x16xf32>
    %cst_38 = arith.constant 0.000000e+00 : f32
    %43 = vector.broadcast %cst_38 : f32 to vector<62x16xf32>
    %44 = arith.maximumf %42, %43 : vector<62x16xf32>
    %c0_39 = arith.constant 0 : index
    %c0_40 = arith.constant 0 : index
    %45 = vector.load %arg22[%c0_39, %c0_40] : memref<62x16xf32, #tpu.memory_space<vmem>>, vector<62x16xf32>
    tpu.vector_store %arg22[%c0_39, %c0_40], %44 {strides = array<i32>} : memref<62x16xf32, #tpu.memory_space<vmem>>, vector<62x16xf32>,
    %cst_41 = arith.constant 0.000000e+00 : f32
    %46 = vector.broadcast %cst_41 : f32 to vector<58x32xf32>
    %c0_42 = arith.constant 0 : index
    %c0_43 = arith.constant 0 : index
    %47 = vector.load %arg22[%c0_42, %c0_43] : memref<62x16xf32, #tpu.memory_space<vmem>>, vector<58x16xf32>
    %48 = arith.truncf %47 : vector<58x16xf32> to vector<58x16xbf16>
    %c0_44 = arith.constant 0 : index
    %c0_45 = arith.constant 0 : index
    %c0_46 = arith.constant 0 : index
    %49 = vector.load %arg4[%c0_44, %c0_45, %c0_46] : memref<5x16x32xbf16, #tpu.memory_space<vmem>>, vector<1x16x32xbf16>
    %50 = vector.shape_cast %49 : vector<1x16x32xbf16> to vector<16x32xbf16>
    %cst_47 = arith.constant dense<0.000000e+00> : vector<58x32xf32>
    %51 = tpu.matmul %48, %50, %cst_47 {dimension_numbers = #tpu.dot_dimension_numbers<[1], [0], [0], [1], [0, 0, 1, 1], [], []>} : vector<58x16xbf16>, vector<16x32xbf16>, vector<58x32xf32> -> vector<58x32xf32>
    %52 = arith.addf %46, %51 : vector<58x32xf32>
    %c1_48 = arith.constant 1 : index
    %c0_49 = arith.constant 0 : index
    %53 = vector.load %arg22[%c1_48, %c0_49] : memref<62x16xf32, #tpu.memory_space<vmem>>, vector<58x16xf32>
    %54 = arith.truncf %53 : vector<58x16xf32> to vector<58x16xbf16>
    %c1_50 = arith.constant 1 : index
    %c0_51 = arith.constant 0 : index
    %c0_52 = arith.constant 0 : index
    %55 = vector.load %arg4[%c1_50, %c0_51, %c0_52] : memref<5x16x32xbf16, #tpu.memory_space<vmem>>, vector<1x16x32xbf16>
    %56 = vector.shape_cast %55 : vector<1x16x32xbf16> to vector<16x32xbf16>
    %cst_53 = arith.constant dense<0.000000e+00> : vector<58x32xf32>
    %57 = tpu.matmul %54, %56, %cst_53 {dimension_numbers = #tpu.dot_dimension_numbers<[1], [0], [0], [1], [0, 0, 1, 1], [], []>} : vector<58x16xbf16>, vector<16x32xbf16>, vector<58x32xf32> -> vector<58x32xf32>
    %58 = arith.addf %52, %57 : vector<58x32xf32>
    %c2_54 = arith.constant 2 : index
    %c0_55 = arith.constant 0 : index
    %59 = vector.load %arg22[%c2_54, %c0_55] : memref<62x16xf32, #tpu.memory_space<vmem>>, vector<58x16xf32>
    %60 = arith.truncf %59 : vector<58x16xf32> to vector<58x16xbf16>
    %c2_56 = arith.constant 2 : index
    %c0_57 = arith.constant 0 : index
    %c0_58 = arith.constant 0 : index
    %61 = vector.load %arg4[%c2_56, %c0_57, %c0_58] : memref<5x16x32xbf16, #tpu.memory_space<vmem>>, vector<1x16x32xbf16>
    %62 = vector.shape_cast %61 : vector<1x16x32xbf16> to vector<16x32xbf16>
    %cst_59 = arith.constant dense<0.000000e+00> : vector<58x32xf32>
    %63 = tpu.matmul %60, %62, %cst_59 {dimension_numbers = #tpu.dot_dimension_numbers<[1], [0], [0], [1], [0, 0, 1, 1], [], []>} : vector<58x16xbf16>, vector<16x32xbf16>, vector<58x32xf32> -> vector<58x32xf32>
    %64 = arith.addf %58, %63 : vector<58x32xf32>
    %c3_60 = arith.constant 3 : index
    %c0_61 = arith.constant 0 : index
    %65 = vector.load %arg22[%c3_60, %c0_61] : memref<62x16xf32, #tpu.memory_space<vmem>>, vector<58x16xf32>
    %66 = arith.truncf %65 : vector<58x16xf32> to vector<58x16xbf16>
    %c3_62 = arith.constant 3 : index
    %c0_63 = arith.constant 0 : index
    %c0_64 = arith.constant 0 : index
    %67 = vector.load %arg4[%c3_62, %c0_63, %c0_64] : memref<5x16x32xbf16, #tpu.memory_space<vmem>>, vector<1x16x32xbf16>
    %68 = vector.shape_cast %67 : vector<1x16x32xbf16> to vector<16x32xbf16>
    %cst_65 = arith.constant dense<0.000000e+00> : vector<58x32xf32>
    %69 = tpu.matmul %66, %68, %cst_65 {dimension_numbers = #tpu.dot_dimension_numbers<[1], [0], [0], [1], [0, 0, 1, 1], [], []>} : vector<58x16xbf16>, vector<16x32xbf16>, vector<58x32xf32> -> vector<58x32xf32>
    %70 = arith.addf %64, %69 : vector<58x32xf32>
    %c4_66 = arith.constant 4 : index
    %c0_67 = arith.constant 0 : index
    %71 = vector.load %arg22[%c4_66, %c0_67] : memref<62x16xf32, #tpu.memory_space<vmem>>, vector<58x16xf32>
    %72 = arith.truncf %71 : vector<58x16xf32> to vector<58x16xbf16>
    %c4_68 = arith.constant 4 : index
    %c0_69 = arith.constant 0 : index
    %c0_70 = arith.constant 0 : index
    %73 = vector.load %arg4[%c4_68, %c0_69, %c0_70] : memref<5x16x32xbf16, #tpu.memory_space<vmem>>, vector<1x16x32xbf16>
    %74 = vector.shape_cast %73 : vector<1x16x32xbf16> to vector<16x32xbf16>
    %cst_71 = arith.constant dense<0.000000e+00> : vector<58x32xf32>
    %75 = tpu.matmul %72, %74, %cst_71 {dimension_numbers = #tpu.dot_dimension_numbers<[1], [0], [0], [1], [0, 0, 1, 1], [], []>} : vector<58x16xbf16>, vector<16x32xbf16>, vector<58x32xf32> -> vector<58x32xf32>
    %76 = arith.addf %70, %75 : vector<58x32xf32>
    %c0_72 = arith.constant 0 : index
    %c0_73 = arith.constant 0 : index
    %77 = vector.load %arg23[%c0_72, %c0_73] : memref<58x32xf32, #tpu.memory_space<vmem>>, vector<58x32xf32>
    tpu.vector_store %arg23[%c0_72, %c0_73], %76 {strides = array<i32>} : memref<58x32xf32, #tpu.memory_space<vmem>>, vector<58x32xf32>,
    %c0_74 = arith.constant 0 : index
    %c0_75 = arith.constant 0 : index
    %78 = tpu.strided_load %arg23[%c0_74, %c0_75] {strides = array<i32: 2, 1>} : memref<58x32xf32, #tpu.memory_space<vmem>>, vector<29x32xf32>
    %c1_76 = arith.constant 1 : index
    %c0_77 = arith.constant 0 : index
    %79 = tpu.strided_load %arg23[%c1_76, %c0_77] {strides = array<i32: 2, 1>} : memref<58x32xf32, #tpu.memory_space<vmem>>, vector<29x32xf32>
    %80 = arith.maximumf %78, %79 : vector<29x32xf32>
    %c0_78 = arith.constant 0 : index
    %c0_79 = arith.constant 0 : index
    %81 = vector.load %arg5[%c0_78, %c0_79] : memref<1x32xf32, #tpu.memory_space<vmem>>, vector<1x32xf32>
    %82 = vector.broadcast %81 : vector<1x32xf32> to vector<29x32xf32>
    %83 = arith.addf %80, %82 : vector<29x32xf32>
    %cst_80 = arith.constant 0.000000e+00 : f32
    %84 = vector.broadcast %cst_80 : f32 to vector<29x32xf32>
    %85 = arith.maximumf %83, %84 : vector<29x32xf32>
    %c0_81 = arith.constant 0 : index
    %c0_82 = arith.constant 0 : index
    %86 = vector.load %arg24[%c0_81, %c0_82] : memref<29x32xf32, #tpu.memory_space<vmem>>, vector<29x32xf32>
    tpu.vector_store %arg24[%c0_81, %c0_82], %85 {strides = array<i32>} : memref<29x32xf32, #tpu.memory_space<vmem>>, vector<29x32xf32>,
    %cst_83 = arith.constant 0.000000e+00 : f32
    %87 = vector.broadcast %cst_83 : f32 to vector<5x64xf32>
    %c0_84 = arith.constant 0 : index
    %c0_85 = arith.constant 0 : index
    %88 = vector.load %arg24[%c0_84, %c0_85] : memref<29x32xf32, #tpu.memory_space<vmem>>, vector<5x32xf32>
    %89 = arith.truncf %88 : vector<5x32xf32> to vector<5x32xbf16>
    %c0_86 = arith.constant 0 : index
    %c0_87 = arith.constant 0 : index
    %c0_88 = arith.constant 0 : index
    %90 = vector.load %arg6[%c0_86, %c0_87, %c0_88] : memref<5x32x64xbf16, #tpu.memory_space<vmem>>, vector<1x32x64xbf16>
    %91 = vector.shape_cast %90 : vector<1x32x64xbf16> to vector<32x64xbf16>
    %cst_89 = arith.constant dense<0.000000e+00> : vector<5x64xf32>
    %92 = tpu.matmul %89, %91, %cst_89 {dimension_numbers = #tpu.dot_dimension_numbers<[1], [0], [0], [1], [0, 0, 1, 1], [], []>} : vector<5x32xbf16>, vector<32x64xbf16>, vector<5x64xf32> -> vector<5x64xf32>
    %93 = arith.addf %87, %92 : vector<5x64xf32>
    %c1_90 = arith.constant 1 : index
    %c0_91 = arith.constant 0 : index
    %94 = vector.load %arg24[%c1_90, %c0_91] : memref<29x32xf32, #tpu.memory_space<vmem>>, vector<5x32xf32>
    %95 = arith.truncf %94 : vector<5x32xf32> to vector<5x32xbf16>
    %c1_92 = arith.constant 1 : index
    %c0_93 = arith.constant 0 : index
    %c0_94 = arith.constant 0 : index
    %96 = vector.load %arg6[%c1_92, %c0_93, %c0_94] : memref<5x32x64xbf16, #tpu.memory_space<vmem>>, vector<1x32x64xbf16>
    %97 = vector.shape_cast %96 : vector<1x32x64xbf16> to vector<32x64xbf16>
    %cst_95 = arith.constant dense<0.000000e+00> : vector<5x64xf32>
    %98 = tpu.matmul %95, %97, %cst_95 {dimension_numbers = #tpu.dot_dimension_numbers<[1], [0], [0], [1], [0, 0, 1, 1], [], []>} : vector<5x32xbf16>, vector<32x64xbf16>, vector<5x64xf32> -> vector<5x64xf32>
    %99 = arith.addf %93, %98 : vector<5x64xf32>
    %c2_96 = arith.constant 2 : index
    %c0_97 = arith.constant 0 : index
    %100 = vector.load %arg24[%c2_96, %c0_97] : memref<29x32xf32, #tpu.memory_space<vmem>>, vector<5x32xf32>
    %101 = arith.truncf %100 : vector<5x32xf32> to vector<5x32xbf16>
    %c2_98 = arith.constant 2 : index
    %c0_99 = arith.constant 0 : index
    %c0_100 = arith.constant 0 : index
    %102 = vector.load %arg6[%c2_98, %c0_99, %c0_100] : memref<5x32x64xbf16, #tpu.memory_space<vmem>>, vector<1x32x64xbf16>
    %103 = vector.shape_cast %102 : vector<1x32x64xbf16> to vector<32x64xbf16>
    %cst_101 = arith.constant dense<0.000000e+00> : vector<5x64xf32>
    %104 = tpu.matmul %101, %103, %cst_101 {dimension_numbers = #tpu.dot_dimension_numbers<[1], [0], [0], [1], [0, 0, 1, 1], [], []>} : vector<5x32xbf16>, vector<32x64xbf16>, vector<5x64xf32> -> vector<5x64xf32>
    %105 = arith.addf %99, %104 : vector<5x64xf32>
    %c3_102 = arith.constant 3 : index
    %c0_103 = arith.constant 0 : index
    %106 = vector.load %arg24[%c3_102, %c0_103] : memref<29x32xf32, #tpu.memory_space<vmem>>, vector<5x32xf32>
    %107 = arith.truncf %106 : vector<5x32xf32> to vector<5x32xbf16>
    %c3_104 = arith.constant 3 : index
    %c0_105 = arith.constant 0 : index
    %c0_106 = arith.constant 0 : index
    %108 = vector.load %arg6[%c3_104, %c0_105, %c0_106] : memref<5x32x64xbf16, #tpu.memory_space<vmem>>, vector<1x32x64xbf16>
    %109 = vector.shape_cast %108 : vector<1x32x64xbf16> to vector<32x64xbf16>
    %cst_107 = arith.constant dense<0.000000e+00> : vector<5x64xf32>
    %110 = tpu.matmul %107, %109, %cst_107 {dimension_numbers = #tpu.dot_dimension_numbers<[1], [0], [0], [1], [0, 0, 1, 1], [], []>} : vector<5x32xbf16>, vector<32x64xbf16>, vector<5x64xf32> -> vector<5x64xf32>
    %111 = arith.addf %105, %110 : vector<5x64xf32>
    %c4_108 = arith.constant 4 : index
    %c0_109 = arith.constant 0 : index
    %112 = vector.load %arg24[%c4_108, %c0_109] : memref<29x32xf32, #tpu.memory_space<vmem>>, vector<5x32xf32>
    %113 = arith.truncf %112 : vector<5x32xf32> to vector<5x32xbf16>
    %c4_110 = arith.constant 4 : index
    %c0_111 = arith.constant 0 : index
    %c0_112 = arith.constant 0 : index
    %114 = vector.load %arg6[%c4_110, %c0_111, %c0_112] : memref<5x32x64xbf16, #tpu.memory_space<vmem>>, vector<1x32x64xbf16>
    %115 = vector.shape_cast %114 : vector<1x32x64xbf16> to vector<32x64xbf16>
    %cst_113 = arith.constant dense<0.000000e+00> : vector<5x64xf32>
    %116 = tpu.matmul %113, %115, %cst_113 {dimension_numbers = #tpu.dot_dimension_numbers<[1], [0], [0], [1], [0, 0, 1, 1], [], []>} : vector<5x32xbf16>, vector<32x64xbf16>, vector<5x64xf32> -> vector<5x64xf32>
    %117 = arith.addf %111, %116 : vector<5x64xf32>
    %c0_114 = arith.constant 0 : index
    %c0_115 = arith.constant 0 : index
    %118 = vector.load %arg7[%c0_114, %c0_115] : memref<1x64xf32, #tpu.memory_space<vmem>>, vector<1x64xf32>
    %119 = vector.broadcast %118 : vector<1x64xf32> to vector<5x64xf32>
    %120 = arith.addf %117, %119 : vector<5x64xf32>
    %cst_116 = arith.constant 0.000000e+00 : f32
    %121 = vector.broadcast %cst_116 : f32 to vector<5x64xf32>
    %122 = arith.maximumf %120, %121 : vector<5x64xf32>
    %c0_117 = arith.constant 0 : index
    %c0_118 = arith.constant 0 : index
    %c0_119 = arith.constant 0 : index
    %c0_120 = arith.constant 0 : index
    %123 = vector.load %arg20[%c0_117, %c0_118, %c0_119, %c0_120] : memref<1x3x5x64xf32, #tpu.memory_space<vmem>>, vector<1x1x5x64xf32>
    %124 = vector.shape_cast %123 : vector<1x1x5x64xf32> to vector<5x64xf32>
    %125 = vector.shape_cast %122 : vector<5x64xf32> to vector<1x1x5x64xf32>
    tpu.vector_store %arg20[%c0_117, %c0_118, %c0_119, %c0_120], %125 {strides = array<i32>} : memref<1x3x5x64xf32, #tpu.memory_space<vmem>>, vector<1x1x5x64xf32>,
    %cst_121 = arith.constant 0.000000e+00 : f32
    %126 = vector.broadcast %cst_121 : f32 to vector<123x16xf32>
    %c0_122 = arith.constant 0 : index
    %c0_123 = arith.constant 0 : index
    %c0_124 = arith.constant 0 : index
    %127 = vector.load %arg1[%c0_122, %c0_123, %c0_124] : memref<1x128x4xf32, #tpu.memory_space<vmem>>, vector<1x123x4xf32>
    %128 = vector.shape_cast %127 : vector<1x123x4xf32> to vector<123x4xf32>
    %129 = arith.truncf %128 : vector<123x4xf32> to vector<123x4xbf16>
    %c0_125 = arith.constant 0 : index
    %c0_126 = arith.constant 0 : index
    %c0_127 = arith.constant 0 : index
    %130 = vector.load %arg8[%c0_125, %c0_126, %c0_127] : memref<6x4x16xbf16, #tpu.memory_space<vmem>>, vector<1x4x16xbf16>
    %131 = vector.shape_cast %130 : vector<1x4x16xbf16> to vector<4x16xbf16>
    %cst_128 = arith.constant dense<0.000000e+00> : vector<123x16xf32>
    %132 = tpu.matmul %129, %131, %cst_128 {dimension_numbers = #tpu.dot_dimension_numbers<[1], [0], [0], [1], [0, 0, 1, 1], [], []>} : vector<123x4xbf16>, vector<4x16xbf16>, vector<123x16xf32> -> vector<123x16xf32>
    %133 = arith.addf %126, %132 : vector<123x16xf32>
    %c0_129 = arith.constant 0 : index
    %c1_130 = arith.constant 1 : index
    %c0_131 = arith.constant 0 : index
    %134 = vector.load %arg1[%c0_129, %c1_130, %c0_131] : memref<1x128x4xf32, #tpu.memory_space<vmem>>, vector<1x123x4xf32>
    %135 = vector.shape_cast %134 : vector<1x123x4xf32> to vector<123x4xf32>
    %136 = arith.truncf %135 : vector<123x4xf32> to vector<123x4xbf16>
    %c1_132 = arith.constant 1 : index
    %c0_133 = arith.constant 0 : index
    %c0_134 = arith.constant 0 : index
    %137 = vector.load %arg8[%c1_132, %c0_133, %c0_134] : memref<6x4x16xbf16, #tpu.memory_space<vmem>>, vector<1x4x16xbf16>
    %138 = vector.shape_cast %137 : vector<1x4x16xbf16> to vector<4x16xbf16>
    %cst_135 = arith.constant dense<0.000000e+00> : vector<123x16xf32>
    %139 = tpu.matmul %136, %138, %cst_135 {dimension_numbers = #tpu.dot_dimension_numbers<[1], [0], [0], [1], [0, 0, 1, 1], [], []>} : vector<123x4xbf16>, vector<4x16xbf16>, vector<123x16xf32> -> vector<123x16xf32>
    %140 = arith.addf %133, %139 : vector<123x16xf32>
    %c0_136 = arith.constant 0 : index
    %c2_137 = arith.constant 2 : index
    %c0_138 = arith.constant 0 : index
    %141 = vector.load %arg1[%c0_136, %c2_137, %c0_138] : memref<1x128x4xf32, #tpu.memory_space<vmem>>, vector<1x123x4xf32>
    %142 = vector.shape_cast %141 : vector<1x123x4xf32> to vector<123x4xf32>
    %143 = arith.truncf %142 : vector<123x4xf32> to vector<123x4xbf16>
    %c2_139 = arith.constant 2 : index
    %c0_140 = arith.constant 0 : index
    %c0_141 = arith.constant 0 : index
    %144 = vector.load %arg8[%c2_139, %c0_140, %c0_141] : memref<6x4x16xbf16, #tpu.memory_space<vmem>>, vector<1x4x16xbf16>
    %145 = vector.shape_cast %144 : vector<1x4x16xbf16> to vector<4x16xbf16>
    %cst_142 = arith.constant dense<0.000000e+00> : vector<123x16xf32>
    %146 = tpu.matmul %143, %145, %cst_142 {dimension_numbers = #tpu.dot_dimension_numbers<[1], [0], [0], [1], [0, 0, 1, 1], [], []>} : vector<123x4xbf16>, vector<4x16xbf16>, vector<123x16xf32> -> vector<123x16xf32>
    %147 = arith.addf %140, %146 : vector<123x16xf32>
    %c0_143 = arith.constant 0 : index
    %c3_144 = arith.constant 3 : index
    %c0_145 = arith.constant 0 : index
    %148 = vector.load %arg1[%c0_143, %c3_144, %c0_145] : memref<1x128x4xf32, #tpu.memory_space<vmem>>, vector<1x123x4xf32>
    %149 = vector.shape_cast %148 : vector<1x123x4xf32> to vector<123x4xf32>
    %150 = arith.truncf %149 : vector<123x4xf32> to vector<123x4xbf16>
    %c3_146 = arith.constant 3 : index
    %c0_147 = arith.constant 0 : index
    %c0_148 = arith.constant 0 : index
    %151 = vector.load %arg8[%c3_146, %c0_147, %c0_148] : memref<6x4x16xbf16, #tpu.memory_space<vmem>>, vector<1x4x16xbf16>
    %152 = vector.shape_cast %151 : vector<1x4x16xbf16> to vector<4x16xbf16>
    %cst_149 = arith.constant dense<0.000000e+00> : vector<123x16xf32>
    %153 = tpu.matmul %150, %152, %cst_149 {dimension_numbers = #tpu.dot_dimension_numbers<[1], [0], [0], [1], [0, 0, 1, 1], [], []>} : vector<123x4xbf16>, vector<4x16xbf16>, vector<123x16xf32> -> vector<123x16xf32>
    %154 = arith.addf %147, %153 : vector<123x16xf32>
    %c0_150 = arith.constant 0 : index
    %c4_151 = arith.constant 4 : index
    %c0_152 = arith.constant 0 : index
    %155 = vector.load %arg1[%c0_150, %c4_151, %c0_152] : memref<1x128x4xf32, #tpu.memory_space<vmem>>, vector<1x123x4xf32>
    %156 = vector.shape_cast %155 : vector<1x123x4xf32> to vector<123x4xf32>
    %157 = arith.truncf %156 : vector<123x4xf32> to vector<123x4xbf16>
    %c4_153 = arith.constant 4 : index
    %c0_154 = arith.constant 0 : index
    %c0_155 = arith.constant 0 : index
    %158 = vector.load %arg8[%c4_153, %c0_154, %c0_155] : memref<6x4x16xbf16, #tpu.memory_space<vmem>>, vector<1x4x16xbf16>
    %159 = vector.shape_cast %158 : vector<1x4x16xbf16> to vector<4x16xbf16>
    %cst_156 = arith.constant dense<0.000000e+00> : vector<123x16xf32>
    %160 = tpu.matmul %157, %159, %cst_156 {dimension_numbers = #tpu.dot_dimension_numbers<[1], [0], [0], [1], [0, 0, 1, 1], [], []>} : vector<123x4xbf16>, vector<4x16xbf16>, vector<123x16xf32> -> vector<123x16xf32>
    %161 = arith.addf %154, %160 : vector<123x16xf32>
    %c0_157 = arith.constant 0 : index
    %c5 = arith.constant 5 : index
    %c0_158 = arith.constant 0 : index
    %162 = vector.load %arg1[%c0_157, %c5, %c0_158] : memref<1x128x4xf32, #tpu.memory_space<vmem>>, vector<1x123x4xf32>
    %163 = vector.shape_cast %162 : vector<1x123x4xf32> to vector<123x4xf32>
    %164 = arith.truncf %163 : vector<123x4xf32> to vector<123x4xbf16>
    %c5_159 = arith.constant 5 : index
    %c0_160 = arith.constant 0 : index
    %c0_161 = arith.constant 0 : index
    %165 = vector.load %arg8[%c5_159, %c0_160, %c0_161] : memref<6x4x16xbf16, #tpu.memory_space<vmem>>, vector<1x4x16xbf16>
    %166 = vector.shape_cast %165 : vector<1x4x16xbf16> to vector<4x16xbf16>
    %cst_162 = arith.constant dense<0.000000e+00> : vector<123x16xf32>
    %167 = tpu.matmul %164, %166, %cst_162 {dimension_numbers = #tpu.dot_dimension_numbers<[1], [0], [0], [1], [0, 0, 1, 1], [], []>} : vector<123x4xbf16>, vector<4x16xbf16>, vector<123x16xf32> -> vector<123x16xf32>
    %168 = arith.addf %161, %167 : vector<123x16xf32>
    %c0_163 = arith.constant 0 : index
    %c0_164 = arith.constant 0 : index
    %169 = vector.load %arg25[%c0_163, %c0_164] : memref<123x16xf32, #tpu.memory_space<vmem>>, vector<123x16xf32>
    tpu.vector_store %arg25[%c0_163, %c0_164], %168 {strides = array<i32>} : memref<123x16xf32, #tpu.memory_space<vmem>>, vector<123x16xf32>,
    %c0_165 = arith.constant 0 : index
    %c0_166 = arith.constant 0 : index
    %170 = tpu.strided_load %arg25[%c0_165, %c0_166] {strides = array<i32: 3, 1>} : memref<123x16xf32, #tpu.memory_space<vmem>>, vector<41x16xf32>
    %c1_167 = arith.constant 1 : index
    %c0_168 = arith.constant 0 : index
    %171 = tpu.strided_load %arg25[%c1_167, %c0_168] {strides = array<i32: 3, 1>} : memref<123x16xf32, #tpu.memory_space<vmem>>, vector<41x16xf32>
    %172 = arith.maximumf %170, %171 : vector<41x16xf32>
    %c2_169 = arith.constant 2 : index
    %c0_170 = arith.constant 0 : index
    %173 = tpu.strided_load %arg25[%c2_169, %c0_170] {strides = array<i32: 3, 1>} : memref<123x16xf32, #tpu.memory_space<vmem>>, vector<41x16xf32>
    %174 = arith.maximumf %172, %173 : vector<41x16xf32>
    %c0_171 = arith.constant 0 : index
    %c0_172 = arith.constant 0 : index
    %175 = vector.load %arg9[%c0_171, %c0_172] : memref<1x16xf32, #tpu.memory_space<vmem>>, vector<1x16xf32>
    %176 = vector.broadcast %175 : vector<1x16xf32> to vector<41x16xf32>
    %177 = arith.addf %174, %176 : vector<41x16xf32>
    %cst_173 = arith.constant 0.000000e+00 : f32
    %178 = vector.broadcast %cst_173 : f32 to vector<41x16xf32>
    %179 = arith.maximumf %177, %178 : vector<41x16xf32>
    %c0_174 = arith.constant 0 : index
    %c0_175 = arith.constant 0 : index
    %180 = vector.load %arg26[%c0_174, %c0_175] : memref<41x16xf32, #tpu.memory_space<vmem>>, vector<41x16xf32>
    tpu.vector_store %arg26[%c0_174, %c0_175], %179 {strides = array<i32>} : memref<41x16xf32, #tpu.memory_space<vmem>>, vector<41x16xf32>,
    %cst_176 = arith.constant 0.000000e+00 : f32
    %181 = vector.broadcast %cst_176 : f32 to vector<36x32xf32>
    %c0_177 = arith.constant 0 : index
    %c0_178 = arith.constant 0 : index
    %182 = vector.load %arg26[%c0_177, %c0_178] : memref<41x16xf32, #tpu.memory_space<vmem>>, vector<36x16xf32>
    %183 = arith.truncf %182 : vector<36x16xf32> to vector<36x16xbf16>
    %c0_179 = arith.constant 0 : index
    %c0_180 = arith.constant 0 : index
    %c0_181 = arith.constant 0 : index
    %184 = vector.load %arg10[%c0_179, %c0_180, %c0_181] : memref<6x16x32xbf16, #tpu.memory_space<vmem>>, vector<1x16x32xbf16>
    %185 = vector.shape_cast %184 : vector<1x16x32xbf16> to vector<16x32xbf16>
    %cst_182 = arith.constant dense<0.000000e+00> : vector<36x32xf32>
    %186 = tpu.matmul %183, %185, %cst_182 {dimension_numbers = #tpu.dot_dimension_numbers<[1], [0], [0], [1], [0, 0, 1, 1], [], []>} : vector<36x16xbf16>, vector<16x32xbf16>, vector<36x32xf32> -> vector<36x32xf32>
    %187 = arith.addf %181, %186 : vector<36x32xf32>
    %c1_183 = arith.constant 1 : index
    %c0_184 = arith.constant 0 : index
    %188 = vector.load %arg26[%c1_183, %c0_184] : memref<41x16xf32, #tpu.memory_space<vmem>>, vector<36x16xf32>
    %189 = arith.truncf %188 : vector<36x16xf32> to vector<36x16xbf16>
    %c1_185 = arith.constant 1 : index
    %c0_186 = arith.constant 0 : index
    %c0_187 = arith.constant 0 : index
    %190 = vector.load %arg10[%c1_185, %c0_186, %c0_187] : memref<6x16x32xbf16, #tpu.memory_space<vmem>>, vector<1x16x32xbf16>
    %191 = vector.shape_cast %190 : vector<1x16x32xbf16> to vector<16x32xbf16>
    %cst_188 = arith.constant dense<0.000000e+00> : vector<36x32xf32>
    %192 = tpu.matmul %189, %191, %cst_188 {dimension_numbers = #tpu.dot_dimension_numbers<[1], [0], [0], [1], [0, 0, 1, 1], [], []>} : vector<36x16xbf16>, vector<16x32xbf16>, vector<36x32xf32> -> vector<36x32xf32>
    %193 = arith.addf %187, %192 : vector<36x32xf32>
    %c2_189 = arith.constant 2 : index
    %c0_190 = arith.constant 0 : index
    %194 = vector.load %arg26[%c2_189, %c0_190] : memref<41x16xf32, #tpu.memory_space<vmem>>, vector<36x16xf32>
    %195 = arith.truncf %194 : vector<36x16xf32> to vector<36x16xbf16>
    %c2_191 = arith.constant 2 : index
    %c0_192 = arith.constant 0 : index
    %c0_193 = arith.constant 0 : index
    %196 = vector.load %arg10[%c2_191, %c0_192, %c0_193] : memref<6x16x32xbf16, #tpu.memory_space<vmem>>, vector<1x16x32xbf16>
    %197 = vector.shape_cast %196 : vector<1x16x32xbf16> to vector<16x32xbf16>
    %cst_194 = arith.constant dense<0.000000e+00> : vector<36x32xf32>
    %198 = tpu.matmul %195, %197, %cst_194 {dimension_numbers = #tpu.dot_dimension_numbers<[1], [0], [0], [1], [0, 0, 1, 1], [], []>} : vector<36x16xbf16>, vector<16x32xbf16>, vector<36x32xf32> -> vector<36x32xf32>
    %199 = arith.addf %193, %198 : vector<36x32xf32>
    %c3_195 = arith.constant 3 : index
    %c0_196 = arith.constant 0 : index
    %200 = vector.load %arg26[%c3_195, %c0_196] : memref<41x16xf32, #tpu.memory_space<vmem>>, vector<36x16xf32>
    %201 = arith.truncf %200 : vector<36x16xf32> to vector<36x16xbf16>
    %c3_197 = arith.constant 3 : index
    %c0_198 = arith.constant 0 : index
    %c0_199 = arith.constant 0 : index
    %202 = vector.load %arg10[%c3_197, %c0_198, %c0_199] : memref<6x16x32xbf16, #tpu.memory_space<vmem>>, vector<1x16x32xbf16>
    %203 = vector.shape_cast %202 : vector<1x16x32xbf16> to vector<16x32xbf16>
    %cst_200 = arith.constant dense<0.000000e+00> : vector<36x32xf32>
    %204 = tpu.matmul %201, %203, %cst_200 {dimension_numbers = #tpu.dot_dimension_numbers<[1], [0], [0], [1], [0, 0, 1, 1], [], []>} : vector<36x16xbf16>, vector<16x32xbf16>, vector<36x32xf32> -> vector<36x32xf32>
    %205 = arith.addf %199, %204 : vector<36x32xf32>
    %c4_201 = arith.constant 4 : index
    %c0_202 = arith.constant 0 : index
    %206 = vector.load %arg26[%c4_201, %c0_202] : memref<41x16xf32, #tpu.memory_space<vmem>>, vector<36x16xf32>
    %207 = arith.truncf %206 : vector<36x16xf32> to vector<36x16xbf16>
    %c4_203 = arith.constant 4 : index
    %c0_204 = arith.constant 0 : index
    %c0_205 = arith.constant 0 : index
    %208 = vector.load %arg10[%c4_203, %c0_204, %c0_205] : memref<6x16x32xbf16, #tpu.memory_space<vmem>>, vector<1x16x32xbf16>
    %209 = vector.shape_cast %208 : vector<1x16x32xbf16> to vector<16x32xbf16>
    %cst_206 = arith.constant dense<0.000000e+00> : vector<36x32xf32>
    %210 = tpu.matmul %207, %209, %cst_206 {dimension_numbers = #tpu.dot_dimension_numbers<[1], [0], [0], [1], [0, 0, 1, 1], [], []>} : vector<36x16xbf16>, vector<16x32xbf16>, vector<36x32xf32> -> vector<36x32xf32>
    %211 = arith.addf %205, %210 : vector<36x32xf32>
    %c5_207 = arith.constant 5 : index
    %c0_208 = arith.constant 0 : index
    %212 = vector.load %arg26[%c5_207, %c0_208] : memref<41x16xf32, #tpu.memory_space<vmem>>, vector<36x16xf32>
    %213 = arith.truncf %212 : vector<36x16xf32> to vector<36x16xbf16>
    %c5_209 = arith.constant 5 : index
    %c0_210 = arith.constant 0 : index
    %c0_211 = arith.constant 0 : index
    %214 = vector.load %arg10[%c5_209, %c0_210, %c0_211] : memref<6x16x32xbf16, #tpu.memory_space<vmem>>, vector<1x16x32xbf16>
    %215 = vector.shape_cast %214 : vector<1x16x32xbf16> to vector<16x32xbf16>
    %cst_212 = arith.constant dense<0.000000e+00> : vector<36x32xf32>
    %216 = tpu.matmul %213, %215, %cst_212 {dimension_numbers = #tpu.dot_dimension_numbers<[1], [0], [0], [1], [0, 0, 1, 1], [], []>} : vector<36x16xbf16>, vector<16x32xbf16>, vector<36x32xf32> -> vector<36x32xf32>
    %217 = arith.addf %211, %216 : vector<36x32xf32>
    %c0_213 = arith.constant 0 : index
    %c0_214 = arith.constant 0 : index
    %218 = vector.load %arg27[%c0_213, %c0_214] : memref<36x32xf32, #tpu.memory_space<vmem>>, vector<36x32xf32>
    tpu.vector_store %arg27[%c0_213, %c0_214], %217 {strides = array<i32>} : memref<36x32xf32, #tpu.memory_space<vmem>>, vector<36x32xf32>,
    %c0_215 = arith.constant 0 : index
    %c0_216 = arith.constant 0 : index
    %219 = tpu.strided_load %arg27[%c0_215, %c0_216] {strides = array<i32: 3, 1>} : memref<36x32xf32, #tpu.memory_space<vmem>>, vector<12x32xf32>
    %c1_217 = arith.constant 1 : index
    %c0_218 = arith.constant 0 : index
    %220 = tpu.strided_load %arg27[%c1_217, %c0_218] {strides = array<i32: 3, 1>} : memref<36x32xf32, #tpu.memory_space<vmem>>, vector<12x32xf32>
    %221 = arith.maximumf %219, %220 : vector<12x32xf32>
    %c2_219 = arith.constant 2 : index
    %c0_220 = arith.constant 0 : index
    %222 = tpu.strided_load %arg27[%c2_219, %c0_220] {strides = array<i32: 3, 1>} : memref<36x32xf32, #tpu.memory_space<vmem>>, vector<12x32xf32>
    %223 = arith.maximumf %221, %222 : vector<12x32xf32>
    %c0_221 = arith.constant 0 : index
    %c0_222 = arith.constant 0 : index
    %224 = vector.load %arg11[%c0_221, %c0_222] : memref<1x32xf32, #tpu.memory_space<vmem>>, vector<1x32xf32>
    %225 = vector.broadcast %224 : vector<1x32xf32> to vector<12x32xf32>
    %226 = arith.addf %223, %225 : vector<12x32xf32>
    %cst_223 = arith.constant 0.000000e+00 : f32
    %227 = vector.broadcast %cst_223 : f32 to vector<12x32xf32>
    %228 = arith.maximumf %226, %227 : vector<12x32xf32>
    %c0_224 = arith.constant 0 : index
    %c0_225 = arith.constant 0 : index
    %229 = vector.load %arg28[%c0_224, %c0_225] : memref<12x32xf32, #tpu.memory_space<vmem>>, vector<12x32xf32>
    tpu.vector_store %arg28[%c0_224, %c0_225], %228 {strides = array<i32>} : memref<12x32xf32, #tpu.memory_space<vmem>>, vector<12x32xf32>,
    %cst_226 = arith.constant 0.000000e+00 : f32
    %230 = vector.broadcast %cst_226 : f32 to vector<5x64xf32>
    %c0_227 = arith.constant 0 : index
    %c0_228 = arith.constant 0 : index
    %231 = vector.load %arg28[%c0_227, %c0_228] : memref<12x32xf32, #tpu.memory_space<vmem>>, vector<5x32xf32>
    %232 = arith.truncf %231 : vector<5x32xf32> to vector<5x32xbf16>
    %c0_229 = arith.constant 0 : index
    %c0_230 = arith.constant 0 : index
    %c0_231 = arith.constant 0 : index
    %233 = vector.load %arg12[%c0_229, %c0_230, %c0_231] : memref<6x32x64xbf16, #tpu.memory_space<vmem>>, vector<1x32x64xbf16>
    %234 = vector.shape_cast %233 : vector<1x32x64xbf16> to vector<32x64xbf16>
    %cst_232 = arith.constant dense<0.000000e+00> : vector<5x64xf32>
    %235 = tpu.matmul %232, %234, %cst_232 {dimension_numbers = #tpu.dot_dimension_numbers<[1], [0], [0], [1], [0, 0, 1, 1], [], []>} : vector<5x32xbf16>, vector<32x64xbf16>, vector<5x64xf32> -> vector<5x64xf32>
    %236 = arith.addf %230, %235 : vector<5x64xf32>
    %c1_233 = arith.constant 1 : index
    %c0_234 = arith.constant 0 : index
    %237 = vector.load %arg28[%c1_233, %c0_234] : memref<12x32xf32, #tpu.memory_space<vmem>>, vector<5x32xf32>
    %238 = arith.truncf %237 : vector<5x32xf32> to vector<5x32xbf16>
    %c1_235 = arith.constant 1 : index
    %c0_236 = arith.constant 0 : index
    %c0_237 = arith.constant 0 : index
    %239 = vector.load %arg12[%c1_235, %c0_236, %c0_237] : memref<6x32x64xbf16, #tpu.memory_space<vmem>>, vector<1x32x64xbf16>
    %240 = vector.shape_cast %239 : vector<1x32x64xbf16> to vector<32x64xbf16>
    %cst_238 = arith.constant dense<0.000000e+00> : vector<5x64xf32>
    %241 = tpu.matmul %238, %240, %cst_238 {dimension_numbers = #tpu.dot_dimension_numbers<[1], [0], [0], [1], [0, 0, 1, 1], [], []>} : vector<5x32xbf16>, vector<32x64xbf16>, vector<5x64xf32> -> vector<5x64xf32>
    %242 = arith.addf %236, %241 : vector<5x64xf32>
    %c2_239 = arith.constant 2 : index
    %c0_240 = arith.constant 0 : index
    %243 = vector.load %arg28[%c2_239, %c0_240] : memref<12x32xf32, #tpu.memory_space<vmem>>, vector<5x32xf32>
    %244 = arith.truncf %243 : vector<5x32xf32> to vector<5x32xbf16>
    %c2_241 = arith.constant 2 : index
    %c0_242 = arith.constant 0 : index
    %c0_243 = arith.constant 0 : index
    %245 = vector.load %arg12[%c2_241, %c0_242, %c0_243] : memref<6x32x64xbf16, #tpu.memory_space<vmem>>, vector<1x32x64xbf16>
    %246 = vector.shape_cast %245 : vector<1x32x64xbf16> to vector<32x64xbf16>
    %cst_244 = arith.constant dense<0.000000e+00> : vector<5x64xf32>
    %247 = tpu.matmul %244, %246, %cst_244 {dimension_numbers = #tpu.dot_dimension_numbers<[1], [0], [0], [1], [0, 0, 1, 1], [], []>} : vector<5x32xbf16>, vector<32x64xbf16>, vector<5x64xf32> -> vector<5x64xf32>
    %248 = arith.addf %242, %247 : vector<5x64xf32>
    %c3_245 = arith.constant 3 : index
    %c0_246 = arith.constant 0 : index
    %249 = vector.load %arg28[%c3_245, %c0_246] : memref<12x32xf32, #tpu.memory_space<vmem>>, vector<5x32xf32>
    %250 = arith.truncf %249 : vector<5x32xf32> to vector<5x32xbf16>
    %c3_247 = arith.constant 3 : index
    %c0_248 = arith.constant 0 : index
    %c0_249 = arith.constant 0 : index
    %251 = vector.load %arg12[%c3_247, %c0_248, %c0_249] : memref<6x32x64xbf16, #tpu.memory_space<vmem>>, vector<1x32x64xbf16>
    %252 = vector.shape_cast %251 : vector<1x32x64xbf16> to vector<32x64xbf16>
    %cst_250 = arith.constant dense<0.000000e+00> : vector<5x64xf32>
    %253 = tpu.matmul %250, %252, %cst_250 {dimension_numbers = #tpu.dot_dimension_numbers<[1], [0], [0], [1], [0, 0, 1, 1], [], []>} : vector<5x32xbf16>, vector<32x64xbf16>, vector<5x64xf32> -> vector<5x64xf32>
    %254 = arith.addf %248, %253 : vector<5x64xf32>
    %c4_251 = arith.constant 4 : index
    %c0_252 = arith.constant 0 : index
    %255 = vector.load %arg28[%c4_251, %c0_252] : memref<12x32xf32, #tpu.memory_space<vmem>>, vector<5x32xf32>
    %256 = arith.truncf %255 : vector<5x32xf32> to vector<5x32xbf16>
    %c4_253 = arith.constant 4 : index
    %c0_254 = arith.constant 0 : index
    %c0_255 = arith.constant 0 : index
    %257 = vector.load %arg12[%c4_253, %c0_254, %c0_255] : memref<6x32x64xbf16, #tpu.memory_space<vmem>>, vector<1x32x64xbf16>
    %258 = vector.shape_cast %257 : vector<1x32x64xbf16> to vector<32x64xbf16>
    %cst_256 = arith.constant dense<0.000000e+00> : vector<5x64xf32>
    %259 = tpu.matmul %256, %258, %cst_256 {dimension_numbers = #tpu.dot_dimension_numbers<[1], [0], [0], [1], [0, 0, 1, 1], [], []>} : vector<5x32xbf16>, vector<32x64xbf16>, vector<5x64xf32> -> vector<5x64xf32>
    %260 = arith.addf %254, %259 : vector<5x64xf32>
    %c5_257 = arith.constant 5 : index
    %c0_258 = arith.constant 0 : index
    %261 = vector.load %arg28[%c5_257, %c0_258] : memref<12x32xf32, #tpu.memory_space<vmem>>, vector<5x32xf32>
    %262 = arith.truncf %261 : vector<5x32xf32> to vector<5x32xbf16>
    %c5_259 = arith.constant 5 : index
    %c0_260 = arith.constant 0 : index
    %c0_261 = arith.constant 0 : index
    %263 = vector.load %arg12[%c5_259, %c0_260, %c0_261] : memref<6x32x64xbf16, #tpu.memory_space<vmem>>, vector<1x32x64xbf16>
    %264 = vector.shape_cast %263 : vector<1x32x64xbf16> to vector<32x64xbf16>
    %cst_262 = arith.constant dense<0.000000e+00> : vector<5x64xf32>
    %265 = tpu.matmul %262, %264, %cst_262 {dimension_numbers = #tpu.dot_dimension_numbers<[1], [0], [0], [1], [0, 0, 1, 1], [], []>} : vector<5x32xbf16>, vector<32x64xbf16>, vector<5x64xf32> -> vector<5x64xf32>
    %266 = arith.addf %260, %265 : vector<5x64xf32>
    %c0_263 = arith.constant 0 : index
    %c0_264 = arith.constant 0 : index
    %267 = vector.load %arg13[%c0_263, %c0_264] : memref<1x64xf32, #tpu.memory_space<vmem>>, vector<1x64xf32>
    %268 = vector.broadcast %267 : vector<1x64xf32> to vector<5x64xf32>
    %269 = arith.addf %266, %268 : vector<5x64xf32>
    %cst_265 = arith.constant 0.000000e+00 : f32
    %270 = vector.broadcast %cst_265 : f32 to vector<5x64xf32>
    %271 = arith.maximumf %269, %270 : vector<5x64xf32>
    %c0_266 = arith.constant 0 : index
    %c1_267 = arith.constant 1 : index
    %c0_268 = arith.constant 0 : index
    %c0_269 = arith.constant 0 : index
    %272 = vector.load %arg20[%c0_266, %c1_267, %c0_268, %c0_269] : memref<1x3x5x64xf32, #tpu.memory_space<vmem>>, vector<1x1x5x64xf32>
    %273 = vector.shape_cast %272 : vector<1x1x5x64xf32> to vector<5x64xf32>
    %274 = vector.shape_cast %271 : vector<5x64xf32> to vector<1x1x5x64xf32>
    tpu.vector_store %arg20[%c0_266, %c1_267, %c0_268, %c0_269], %274 {strides = array<i32>} : memref<1x3x5x64xf32, #tpu.memory_space<vmem>>, vector<1x1x5x64xf32>,
    %cst_270 = arith.constant 0.000000e+00 : f32
    %275 = vector.broadcast %cst_270 : f32 to vector<122x16xf32>
    %c0_271 = arith.constant 0 : index
    %c0_272 = arith.constant 0 : index
    %c0_273 = arith.constant 0 : index
    %276 = vector.load %arg1[%c0_271, %c0_272, %c0_273] : memref<1x128x4xf32, #tpu.memory_space<vmem>>, vector<1x122x4xf32>
    %277 = vector.shape_cast %276 : vector<1x122x4xf32> to vector<122x4xf32>
    %278 = arith.truncf %277 : vector<122x4xf32> to vector<122x4xbf16>
    %c0_274 = arith.constant 0 : index
    %c0_275 = arith.constant 0 : index
    %c0_276 = arith.constant 0 : index
    %279 = vector.load %arg14[%c0_274, %c0_275, %c0_276] : memref<7x4x16xbf16, #tpu.memory_space<vmem>>, vector<1x4x16xbf16>
    %280 = vector.shape_cast %279 : vector<1x4x16xbf16> to vector<4x16xbf16>
    %cst_277 = arith.constant dense<0.000000e+00> : vector<122x16xf32>
    %281 = tpu.matmul %278, %280, %cst_277 {dimension_numbers = #tpu.dot_dimension_numbers<[1], [0], [0], [1], [0, 0, 1, 1], [], []>} : vector<122x4xbf16>, vector<4x16xbf16>, vector<122x16xf32> -> vector<122x16xf32>
    %282 = arith.addf %275, %281 : vector<122x16xf32>
    %c0_278 = arith.constant 0 : index
    %c1_279 = arith.constant 1 : index
    %c0_280 = arith.constant 0 : index
    %283 = vector.load %arg1[%c0_278, %c1_279, %c0_280] : memref<1x128x4xf32, #tpu.memory_space<vmem>>, vector<1x122x4xf32>
    %284 = vector.shape_cast %283 : vector<1x122x4xf32> to vector<122x4xf32>
    %285 = arith.truncf %284 : vector<122x4xf32> to vector<122x4xbf16>
    %c1_281 = arith.constant 1 : index
    %c0_282 = arith.constant 0 : index
    %c0_283 = arith.constant 0 : index
    %286 = vector.load %arg14[%c1_281, %c0_282, %c0_283] : memref<7x4x16xbf16, #tpu.memory_space<vmem>>, vector<1x4x16xbf16>
    %287 = vector.shape_cast %286 : vector<1x4x16xbf16> to vector<4x16xbf16>
    %cst_284 = arith.constant dense<0.000000e+00> : vector<122x16xf32>
    %288 = tpu.matmul %285, %287, %cst_284 {dimension_numbers = #tpu.dot_dimension_numbers<[1], [0], [0], [1], [0, 0, 1, 1], [], []>} : vector<122x4xbf16>, vector<4x16xbf16>, vector<122x16xf32> -> vector<122x16xf32>
    %289 = arith.addf %282, %288 : vector<122x16xf32>
    %c0_285 = arith.constant 0 : index
    %c2_286 = arith.constant 2 : index
    %c0_287 = arith.constant 0 : index
    %290 = vector.load %arg1[%c0_285, %c2_286, %c0_287] : memref<1x128x4xf32, #tpu.memory_space<vmem>>, vector<1x122x4xf32>
    %291 = vector.shape_cast %290 : vector<1x122x4xf32> to vector<122x4xf32>
    %292 = arith.truncf %291 : vector<122x4xf32> to vector<122x4xbf16>
    %c2_288 = arith.constant 2 : index
    %c0_289 = arith.constant 0 : index
    %c0_290 = arith.constant 0 : index
    %293 = vector.load %arg14[%c2_288, %c0_289, %c0_290] : memref<7x4x16xbf16, #tpu.memory_space<vmem>>, vector<1x4x16xbf16>
    %294 = vector.shape_cast %293 : vector<1x4x16xbf16> to vector<4x16xbf16>
    %cst_291 = arith.constant dense<0.000000e+00> : vector<122x16xf32>
    %295 = tpu.matmul %292, %294, %cst_291 {dimension_numbers = #tpu.dot_dimension_numbers<[1], [0], [0], [1], [0, 0, 1, 1], [], []>} : vector<122x4xbf16>, vector<4x16xbf16>, vector<122x16xf32> -> vector<122x16xf32>
    %296 = arith.addf %289, %295 : vector<122x16xf32>
    %c0_292 = arith.constant 0 : index
    %c3_293 = arith.constant 3 : index
    %c0_294 = arith.constant 0 : index
    %297 = vector.load %arg1[%c0_292, %c3_293, %c0_294] : memref<1x128x4xf32, #tpu.memory_space<vmem>>, vector<1x122x4xf32>
    %298 = vector.shape_cast %297 : vector<1x122x4xf32> to vector<122x4xf32>
    %299 = arith.truncf %298 : vector<122x4xf32> to vector<122x4xbf16>
    %c3_295 = arith.constant 3 : index
    %c0_296 = arith.constant 0 : index
    %c0_297 = arith.constant 0 : index
    %300 = vector.load %arg14[%c3_295, %c0_296, %c0_297] : memref<7x4x16xbf16, #tpu.memory_space<vmem>>, vector<1x4x16xbf16>
    %301 = vector.shape_cast %300 : vector<1x4x16xbf16> to vector<4x16xbf16>
    %cst_298 = arith.constant dense<0.000000e+00> : vector<122x16xf32>
    %302 = tpu.matmul %299, %301, %cst_298 {dimension_numbers = #tpu.dot_dimension_numbers<[1], [0], [0], [1], [0, 0, 1, 1], [], []>} : vector<122x4xbf16>, vector<4x16xbf16>, vector<122x16xf32> -> vector<122x16xf32>
    %303 = arith.addf %296, %302 : vector<122x16xf32>
    %c0_299 = arith.constant 0 : index
    %c4_300 = arith.constant 4 : index
    %c0_301 = arith.constant 0 : index
    %304 = vector.load %arg1[%c0_299, %c4_300, %c0_301] : memref<1x128x4xf32, #tpu.memory_space<vmem>>, vector<1x122x4xf32>
    %305 = vector.shape_cast %304 : vector<1x122x4xf32> to vector<122x4xf32>
    %306 = arith.truncf %305 : vector<122x4xf32> to vector<122x4xbf16>
    %c4_302 = arith.constant 4 : index
    %c0_303 = arith.constant 0 : index
    %c0_304 = arith.constant 0 : index
    %307 = vector.load %arg14[%c4_302, %c0_303, %c0_304] : memref<7x4x16xbf16, #tpu.memory_space<vmem>>, vector<1x4x16xbf16>
    %308 = vector.shape_cast %307 : vector<1x4x16xbf16> to vector<4x16xbf16>
    %cst_305 = arith.constant dense<0.000000e+00> : vector<122x16xf32>
    %309 = tpu.matmul %306, %308, %cst_305 {dimension_numbers = #tpu.dot_dimension_numbers<[1], [0], [0], [1], [0, 0, 1, 1], [], []>} : vector<122x4xbf16>, vector<4x16xbf16>, vector<122x16xf32> -> vector<122x16xf32>
    %310 = arith.addf %303, %309 : vector<122x16xf32>
    %c0_306 = arith.constant 0 : index
    %c5_307 = arith.constant 5 : index
    %c0_308 = arith.constant 0 : index
    %311 = vector.load %arg1[%c0_306, %c5_307, %c0_308] : memref<1x128x4xf32, #tpu.memory_space<vmem>>, vector<1x122x4xf32>
    %312 = vector.shape_cast %311 : vector<1x122x4xf32> to vector<122x4xf32>
    %313 = arith.truncf %312 : vector<122x4xf32> to vector<122x4xbf16>
    %c5_309 = arith.constant 5 : index
    %c0_310 = arith.constant 0 : index
    %c0_311 = arith.constant 0 : index
    %314 = vector.load %arg14[%c5_309, %c0_310, %c0_311] : memref<7x4x16xbf16, #tpu.memory_space<vmem>>, vector<1x4x16xbf16>
    %315 = vector.shape_cast %314 : vector<1x4x16xbf16> to vector<4x16xbf16>
    %cst_312 = arith.constant dense<0.000000e+00> : vector<122x16xf32>
    %316 = tpu.matmul %313, %315, %cst_312 {dimension_numbers = #tpu.dot_dimension_numbers<[1], [0], [0], [1], [0, 0, 1, 1], [], []>} : vector<122x4xbf16>, vector<4x16xbf16>, vector<122x16xf32> -> vector<122x16xf32>
    %317 = arith.addf %310, %316 : vector<122x16xf32>
    %c0_313 = arith.constant 0 : index
    %c6 = arith.constant 6 : index
    %c0_314 = arith.constant 0 : index
    %318 = vector.load %arg1[%c0_313, %c6, %c0_314] : memref<1x128x4xf32, #tpu.memory_space<vmem>>, vector<1x122x4xf32>
    %319 = vector.shape_cast %318 : vector<1x122x4xf32> to vector<122x4xf32>
    %320 = arith.truncf %319 : vector<122x4xf32> to vector<122x4xbf16>
    %c6_315 = arith.constant 6 : index
    %c0_316 = arith.constant 0 : index
    %c0_317 = arith.constant 0 : index
    %321 = vector.load %arg14[%c6_315, %c0_316, %c0_317] : memref<7x4x16xbf16, #tpu.memory_space<vmem>>, vector<1x4x16xbf16>
    %322 = vector.shape_cast %321 : vector<1x4x16xbf16> to vector<4x16xbf16>
    %cst_318 = arith.constant dense<0.000000e+00> : vector<122x16xf32>
    %323 = tpu.matmul %320, %322, %cst_318 {dimension_numbers = #tpu.dot_dimension_numbers<[1], [0], [0], [1], [0, 0, 1, 1], [], []>} : vector<122x4xbf16>, vector<4x16xbf16>, vector<122x16xf32> -> vector<122x16xf32>
    %324 = arith.addf %317, %323 : vector<122x16xf32>
    %c0_319 = arith.constant 0 : index
    %c0_320 = arith.constant 0 : index
    %325 = vector.load %arg29[%c0_319, %c0_320] : memref<122x16xf32, #tpu.memory_space<vmem>>, vector<122x16xf32>
    tpu.vector_store %arg29[%c0_319, %c0_320], %324 {strides = array<i32>} : memref<122x16xf32, #tpu.memory_space<vmem>>, vector<122x16xf32>,
    %c0_321 = arith.constant 0 : index
    %c0_322 = arith.constant 0 : index
    %326 = tpu.strided_load %arg29[%c0_321, %c0_322] {strides = array<i32: 3, 1>} : memref<122x16xf32, #tpu.memory_space<vmem>>, vector<40x16xf32>
    %c1_323 = arith.constant 1 : index
    %c0_324 = arith.constant 0 : index
    %327 = tpu.strided_load %arg29[%c1_323, %c0_324] {strides = array<i32: 3, 1>} : memref<122x16xf32, #tpu.memory_space<vmem>>, vector<40x16xf32>
    %328 = arith.maximumf %326, %327 : vector<40x16xf32>
    %c2_325 = arith.constant 2 : index
    %c0_326 = arith.constant 0 : index
    %329 = tpu.strided_load %arg29[%c2_325, %c0_326] {strides = array<i32: 3, 1>} : memref<122x16xf32, #tpu.memory_space<vmem>>, vector<40x16xf32>
    %330 = arith.maximumf %328, %329 : vector<40x16xf32>
    %c0_327 = arith.constant 0 : index
    %c0_328 = arith.constant 0 : index
    %331 = vector.load %arg15[%c0_327, %c0_328] : memref<1x16xf32, #tpu.memory_space<vmem>>, vector<1x16xf32>
    %332 = vector.broadcast %331 : vector<1x16xf32> to vector<40x16xf32>
    %333 = arith.addf %330, %332 : vector<40x16xf32>
    %cst_329 = arith.constant 0.000000e+00 : f32
    %334 = vector.broadcast %cst_329 : f32 to vector<40x16xf32>
    %335 = arith.maximumf %333, %334 : vector<40x16xf32>
    %c0_330 = arith.constant 0 : index
    %c0_331 = arith.constant 0 : index
    %336 = vector.load %arg30[%c0_330, %c0_331] : memref<40x16xf32, #tpu.memory_space<vmem>>, vector<40x16xf32>
    tpu.vector_store %arg30[%c0_330, %c0_331], %335 {strides = array<i32>} : memref<40x16xf32, #tpu.memory_space<vmem>>, vector<40x16xf32>,
    %cst_332 = arith.constant 0.000000e+00 : f32
    %337 = vector.broadcast %cst_332 : f32 to vector<34x32xf32>
    %c0_333 = arith.constant 0 : index
    %c0_334 = arith.constant 0 : index
    %338 = vector.load %arg30[%c0_333, %c0_334] : memref<40x16xf32, #tpu.memory_space<vmem>>, vector<34x16xf32>
    %339 = arith.truncf %338 : vector<34x16xf32> to vector<34x16xbf16>
    %c0_335 = arith.constant 0 : index
    %c0_336 = arith.constant 0 : index
    %c0_337 = arith.constant 0 : index
    %340 = vector.load %arg16[%c0_335, %c0_336, %c0_337] : memref<7x16x32xbf16, #tpu.memory_space<vmem>>, vector<1x16x32xbf16>
    %341 = vector.shape_cast %340 : vector<1x16x32xbf16> to vector<16x32xbf16>
    %cst_338 = arith.constant dense<0.000000e+00> : vector<34x32xf32>
    %342 = tpu.matmul %339, %341, %cst_338 {dimension_numbers = #tpu.dot_dimension_numbers<[1], [0], [0], [1], [0, 0, 1, 1], [], []>} : vector<34x16xbf16>, vector<16x32xbf16>, vector<34x32xf32> -> vector<34x32xf32>
    %343 = arith.addf %337, %342 : vector<34x32xf32>
    %c1_339 = arith.constant 1 : index
    %c0_340 = arith.constant 0 : index
    %344 = vector.load %arg30[%c1_339, %c0_340] : memref<40x16xf32, #tpu.memory_space<vmem>>, vector<34x16xf32>
    %345 = arith.truncf %344 : vector<34x16xf32> to vector<34x16xbf16>
    %c1_341 = arith.constant 1 : index
    %c0_342 = arith.constant 0 : index
    %c0_343 = arith.constant 0 : index
    %346 = vector.load %arg16[%c1_341, %c0_342, %c0_343] : memref<7x16x32xbf16, #tpu.memory_space<vmem>>, vector<1x16x32xbf16>
    %347 = vector.shape_cast %346 : vector<1x16x32xbf16> to vector<16x32xbf16>
    %cst_344 = arith.constant dense<0.000000e+00> : vector<34x32xf32>
    %348 = tpu.matmul %345, %347, %cst_344 {dimension_numbers = #tpu.dot_dimension_numbers<[1], [0], [0], [1], [0, 0, 1, 1], [], []>} : vector<34x16xbf16>, vector<16x32xbf16>, vector<34x32xf32> -> vector<34x32xf32>
    %349 = arith.addf %343, %348 : vector<34x32xf32>
    %c2_345 = arith.constant 2 : index
    %c0_346 = arith.constant 0 : index
    %350 = vector.load %arg30[%c2_345, %c0_346] : memref<40x16xf32, #tpu.memory_space<vmem>>, vector<34x16xf32>
    %351 = arith.truncf %350 : vector<34x16xf32> to vector<34x16xbf16>
    %c2_347 = arith.constant 2 : index
    %c0_348 = arith.constant 0 : index
    %c0_349 = arith.constant 0 : index
    %352 = vector.load %arg16[%c2_347, %c0_348, %c0_349] : memref<7x16x32xbf16, #tpu.memory_space<vmem>>, vector<1x16x32xbf16>
    %353 = vector.shape_cast %352 : vector<1x16x32xbf16> to vector<16x32xbf16>
    %cst_350 = arith.constant dense<0.000000e+00> : vector<34x32xf32>
    %354 = tpu.matmul %351, %353, %cst_350 {dimension_numbers = #tpu.dot_dimension_numbers<[1], [0], [0], [1], [0, 0, 1, 1], [], []>} : vector<34x16xbf16>, vector<16x32xbf16>, vector<34x32xf32> -> vector<34x32xf32>
    %355 = arith.addf %349, %354 : vector<34x32xf32>
    %c3_351 = arith.constant 3 : index
    %c0_352 = arith.constant 0 : index
    %356 = vector.load %arg30[%c3_351, %c0_352] : memref<40x16xf32, #tpu.memory_space<vmem>>, vector<34x16xf32>
    %357 = arith.truncf %356 : vector<34x16xf32> to vector<34x16xbf16>
    %c3_353 = arith.constant 3 : index
    %c0_354 = arith.constant 0 : index
    %c0_355 = arith.constant 0 : index
    %358 = vector.load %arg16[%c3_353, %c0_354, %c0_355] : memref<7x16x32xbf16, #tpu.memory_space<vmem>>, vector<1x16x32xbf16>
    %359 = vector.shape_cast %358 : vector<1x16x32xbf16> to vector<16x32xbf16>
    %cst_356 = arith.constant dense<0.000000e+00> : vector<34x32xf32>
    %360 = tpu.matmul %357, %359, %cst_356 {dimension_numbers = #tpu.dot_dimension_numbers<[1], [0], [0], [1], [0, 0, 1, 1], [], []>} : vector<34x16xbf16>, vector<16x32xbf16>, vector<34x32xf32> -> vector<34x32xf32>
    %361 = arith.addf %355, %360 : vector<34x32xf32>
    %c4_357 = arith.constant 4 : index
    %c0_358 = arith.constant 0 : index
    %362 = vector.load %arg30[%c4_357, %c0_358] : memref<40x16xf32, #tpu.memory_space<vmem>>, vector<34x16xf32>
    %363 = arith.truncf %362 : vector<34x16xf32> to vector<34x16xbf16>
    %c4_359 = arith.constant 4 : index
    %c0_360 = arith.constant 0 : index
    %c0_361 = arith.constant 0 : index
    %364 = vector.load %arg16[%c4_359, %c0_360, %c0_361] : memref<7x16x32xbf16, #tpu.memory_space<vmem>>, vector<1x16x32xbf16>
    %365 = vector.shape_cast %364 : vector<1x16x32xbf16> to vector<16x32xbf16>
    %cst_362 = arith.constant dense<0.000000e+00> : vector<34x32xf32>
    %366 = tpu.matmul %363, %365, %cst_362 {dimension_numbers = #tpu.dot_dimension_numbers<[1], [0], [0], [1], [0, 0, 1, 1], [], []>} : vector<34x16xbf16>, vector<16x32xbf16>, vector<34x32xf32> -> vector<34x32xf32>
    %367 = arith.addf %361, %366 : vector<34x32xf32>
    %c5_363 = arith.constant 5 : index
    %c0_364 = arith.constant 0 : index
    %368 = vector.load %arg30[%c5_363, %c0_364] : memref<40x16xf32, #tpu.memory_space<vmem>>, vector<34x16xf32>
    %369 = arith.truncf %368 : vector<34x16xf32> to vector<34x16xbf16>
    %c5_365 = arith.constant 5 : index
    %c0_366 = arith.constant 0 : index
    %c0_367 = arith.constant 0 : index
    %370 = vector.load %arg16[%c5_365, %c0_366, %c0_367] : memref<7x16x32xbf16, #tpu.memory_space<vmem>>, vector<1x16x32xbf16>
    %371 = vector.shape_cast %370 : vector<1x16x32xbf16> to vector<16x32xbf16>
    %cst_368 = arith.constant dense<0.000000e+00> : vector<34x32xf32>
    %372 = tpu.matmul %369, %371, %cst_368 {dimension_numbers = #tpu.dot_dimension_numbers<[1], [0], [0], [1], [0, 0, 1, 1], [], []>} : vector<34x16xbf16>, vector<16x32xbf16>, vector<34x32xf32> -> vector<34x32xf32>
    %373 = arith.addf %367, %372 : vector<34x32xf32>
    %c6_369 = arith.constant 6 : index
    %c0_370 = arith.constant 0 : index
    %374 = vector.load %arg30[%c6_369, %c0_370] : memref<40x16xf32, #tpu.memory_space<vmem>>, vector<34x16xf32>
    %375 = arith.truncf %374 : vector<34x16xf32> to vector<34x16xbf16>
    %c6_371 = arith.constant 6 : index
    %c0_372 = arith.constant 0 : index
    %c0_373 = arith.constant 0 : index
    %376 = vector.load %arg16[%c6_371, %c0_372, %c0_373] : memref<7x16x32xbf16, #tpu.memory_space<vmem>>, vector<1x16x32xbf16>
    %377 = vector.shape_cast %376 : vector<1x16x32xbf16> to vector<16x32xbf16>
    %cst_374 = arith.constant dense<0.000000e+00> : vector<34x32xf32>
    %378 = tpu.matmul %375, %377, %cst_374 {dimension_numbers = #tpu.dot_dimension_numbers<[1], [0], [0], [1], [0, 0, 1, 1], [], []>} : vector<34x16xbf16>, vector<16x32xbf16>, vector<34x32xf32> -> vector<34x32xf32>
    %379 = arith.addf %373, %378 : vector<34x32xf32>
    %c0_375 = arith.constant 0 : index
    %c0_376 = arith.constant 0 : index
    %380 = vector.load %arg31[%c0_375, %c0_376] : memref<34x32xf32, #tpu.memory_space<vmem>>, vector<34x32xf32>
    tpu.vector_store %arg31[%c0_375, %c0_376], %379 {strides = array<i32>} : memref<34x32xf32, #tpu.memory_space<vmem>>, vector<34x32xf32>,
    %c0_377 = arith.constant 0 : index
    %c0_378 = arith.constant 0 : index
    %381 = tpu.strided_load %arg31[%c0_377, %c0_378] {strides = array<i32: 3, 1>} : memref<34x32xf32, #tpu.memory_space<vmem>>, vector<11x32xf32>
    %c1_379 = arith.constant 1 : index
    %c0_380 = arith.constant 0 : index
    %382 = tpu.strided_load %arg31[%c1_379, %c0_380] {strides = array<i32: 3, 1>} : memref<34x32xf32, #tpu.memory_space<vmem>>, vector<11x32xf32>
    %383 = arith.maximumf %381, %382 : vector<11x32xf32>
    %c2_381 = arith.constant 2 : index
    %c0_382 = arith.constant 0 : index
    %384 = tpu.strided_load %arg31[%c2_381, %c0_382] {strides = array<i32: 3, 1>} : memref<34x32xf32, #tpu.memory_space<vmem>>, vector<11x32xf32>
    %385 = arith.maximumf %383, %384 : vector<11x32xf32>
    %c0_383 = arith.constant 0 : index
    %c0_384 = arith.constant 0 : index
    %386 = vector.load %arg17[%c0_383, %c0_384] : memref<1x32xf32, #tpu.memory_space<vmem>>, vector<1x32xf32>
    %387 = vector.broadcast %386 : vector<1x32xf32> to vector<11x32xf32>
    %388 = arith.addf %385, %387 : vector<11x32xf32>
    %cst_385 = arith.constant 0.000000e+00 : f32
    %389 = vector.broadcast %cst_385 : f32 to vector<11x32xf32>
    %390 = arith.maximumf %388, %389 : vector<11x32xf32>
    %c0_386 = arith.constant 0 : index
    %c0_387 = arith.constant 0 : index
    %391 = vector.load %arg32[%c0_386, %c0_387] : memref<11x32xf32, #tpu.memory_space<vmem>>, vector<11x32xf32>
    tpu.vector_store %arg32[%c0_386, %c0_387], %390 {strides = array<i32>} : memref<11x32xf32, #tpu.memory_space<vmem>>, vector<11x32xf32>,
    %cst_388 = arith.constant 0.000000e+00 : f32
    %392 = vector.broadcast %cst_388 : f32 to vector<5x64xf32>
    %c0_389 = arith.constant 0 : index
    %c0_390 = arith.constant 0 : index
    %393 = vector.load %arg32[%c0_389, %c0_390] : memref<11x32xf32, #tpu.memory_space<vmem>>, vector<5x32xf32>
    %394 = arith.truncf %393 : vector<5x32xf32> to vector<5x32xbf16>
    %c0_391 = arith.constant 0 : index
    %c0_392 = arith.constant 0 : index
    %c0_393 = arith.constant 0 : index
    %395 = vector.load %arg18[%c0_391, %c0_392, %c0_393] : memref<7x32x64xbf16, #tpu.memory_space<vmem>>, vector<1x32x64xbf16>
    %396 = vector.shape_cast %395 : vector<1x32x64xbf16> to vector<32x64xbf16>
    %cst_394 = arith.constant dense<0.000000e+00> : vector<5x64xf32>
    %397 = tpu.matmul %394, %396, %cst_394 {dimension_numbers = #tpu.dot_dimension_numbers<[1], [0], [0], [1], [0, 0, 1, 1], [], []>} : vector<5x32xbf16>, vector<32x64xbf16>, vector<5x64xf32> -> vector<5x64xf32>
    %398 = arith.addf %392, %397 : vector<5x64xf32>
    %c1_395 = arith.constant 1 : index
    %c0_396 = arith.constant 0 : index
    %399 = vector.load %arg32[%c1_395, %c0_396] : memref<11x32xf32, #tpu.memory_space<vmem>>, vector<5x32xf32>
    %400 = arith.truncf %399 : vector<5x32xf32> to vector<5x32xbf16>
    %c1_397 = arith.constant 1 : index
    %c0_398 = arith.constant 0 : index
    %c0_399 = arith.constant 0 : index
    %401 = vector.load %arg18[%c1_397, %c0_398, %c0_399] : memref<7x32x64xbf16, #tpu.memory_space<vmem>>, vector<1x32x64xbf16>
    %402 = vector.shape_cast %401 : vector<1x32x64xbf16> to vector<32x64xbf16>
    %cst_400 = arith.constant dense<0.000000e+00> : vector<5x64xf32>
    %403 = tpu.matmul %400, %402, %cst_400 {dimension_numbers = #tpu.dot_dimension_numbers<[1], [0], [0], [1], [0, 0, 1, 1], [], []>} : vector<5x32xbf16>, vector<32x64xbf16>, vector<5x64xf32> -> vector<5x64xf32>
    %404 = arith.addf %398, %403 : vector<5x64xf32>
    %c2_401 = arith.constant 2 : index
    %c0_402 = arith.constant 0 : index
    %405 = vector.load %arg32[%c2_401, %c0_402] : memref<11x32xf32, #tpu.memory_space<vmem>>, vector<5x32xf32>
    %406 = arith.truncf %405 : vector<5x32xf32> to vector<5x32xbf16>
    %c2_403 = arith.constant 2 : index
    %c0_404 = arith.constant 0 : index
    %c0_405 = arith.constant 0 : index
    %407 = vector.load %arg18[%c2_403, %c0_404, %c0_405] : memref<7x32x64xbf16, #tpu.memory_space<vmem>>, vector<1x32x64xbf16>
    %408 = vector.shape_cast %407 : vector<1x32x64xbf16> to vector<32x64xbf16>
    %cst_406 = arith.constant dense<0.000000e+00> : vector<5x64xf32>
    %409 = tpu.matmul %406, %408, %cst_406 {dimension_numbers = #tpu.dot_dimension_numbers<[1], [0], [0], [1], [0, 0, 1, 1], [], []>} : vector<5x32xbf16>, vector<32x64xbf16>, vector<5x64xf32> -> vector<5x64xf32>
    %410 = arith.addf %404, %409 : vector<5x64xf32>
    %c3_407 = arith.constant 3 : index
    %c0_408 = arith.constant 0 : index
    %411 = vector.load %arg32[%c3_407, %c0_408] : memref<11x32xf32, #tpu.memory_space<vmem>>, vector<5x32xf32>
    %412 = arith.truncf %411 : vector<5x32xf32> to vector<5x32xbf16>
    %c3_409 = arith.constant 3 : index
    %c0_410 = arith.constant 0 : index
    %c0_411 = arith.constant 0 : index
    %413 = vector.load %arg18[%c3_409, %c0_410, %c0_411] : memref<7x32x64xbf16, #tpu.memory_space<vmem>>, vector<1x32x64xbf16>
    %414 = vector.shape_cast %413 : vector<1x32x64xbf16> to vector<32x64xbf16>
    %cst_412 = arith.constant dense<0.000000e+00> : vector<5x64xf32>
    %415 = tpu.matmul %412, %414, %cst_412 {dimension_numbers = #tpu.dot_dimension_numbers<[1], [0], [0], [1], [0, 0, 1, 1], [], []>} : vector<5x32xbf16>, vector<32x64xbf16>, vector<5x64xf32> -> vector<5x64xf32>
    %416 = arith.addf %410, %415 : vector<5x64xf32>
    %c4_413 = arith.constant 4 : index
    %c0_414 = arith.constant 0 : index
    %417 = vector.load %arg32[%c4_413, %c0_414] : memref<11x32xf32, #tpu.memory_space<vmem>>, vector<5x32xf32>
    %418 = arith.truncf %417 : vector<5x32xf32> to vector<5x32xbf16>
    %c4_415 = arith.constant 4 : index
    %c0_416 = arith.constant 0 : index
    %c0_417 = arith.constant 0 : index
    %419 = vector.load %arg18[%c4_415, %c0_416, %c0_417] : memref<7x32x64xbf16, #tpu.memory_space<vmem>>, vector<1x32x64xbf16>
    %420 = vector.shape_cast %419 : vector<1x32x64xbf16> to vector<32x64xbf16>
    %cst_418 = arith.constant dense<0.000000e+00> : vector<5x64xf32>
    %421 = tpu.matmul %418, %420, %cst_418 {dimension_numbers = #tpu.dot_dimension_numbers<[1], [0], [0], [1], [0, 0, 1, 1], [], []>} : vector<5x32xbf16>, vector<32x64xbf16>, vector<5x64xf32> -> vector<5x64xf32>
    %422 = arith.addf %416, %421 : vector<5x64xf32>
    %c5_419 = arith.constant 5 : index
    %c0_420 = arith.constant 0 : index
    %423 = vector.load %arg32[%c5_419, %c0_420] : memref<11x32xf32, #tpu.memory_space<vmem>>, vector<5x32xf32>
    %424 = arith.truncf %423 : vector<5x32xf32> to vector<5x32xbf16>
    %c5_421 = arith.constant 5 : index
    %c0_422 = arith.constant 0 : index
    %c0_423 = arith.constant 0 : index
    %425 = vector.load %arg18[%c5_421, %c0_422, %c0_423] : memref<7x32x64xbf16, #tpu.memory_space<vmem>>, vector<1x32x64xbf16>
    %426 = vector.shape_cast %425 : vector<1x32x64xbf16> to vector<32x64xbf16>
    %cst_424 = arith.constant dense<0.000000e+00> : vector<5x64xf32>
    %427 = tpu.matmul %424, %426, %cst_424 {dimension_numbers = #tpu.dot_dimension_numbers<[1], [0], [0], [1], [0, 0, 1, 1], [], []>} : vector<5x32xbf16>, vector<32x64xbf16>, vector<5x64xf32> -> vector<5x64xf32>
    %428 = arith.addf %422, %427 : vector<5x64xf32>
    %c6_425 = arith.constant 6 : index
    %c0_426 = arith.constant 0 : index
    %429 = vector.load %arg32[%c6_425, %c0_426] : memref<11x32xf32, #tpu.memory_space<vmem>>, vector<5x32xf32>
    %430 = arith.truncf %429 : vector<5x32xf32> to vector<5x32xbf16>
    %c6_427 = arith.constant 6 : index
    %c0_428 = arith.constant 0 : index
    %c0_429 = arith.constant 0 : index
    %431 = vector.load %arg18[%c6_427, %c0_428, %c0_429] : memref<7x32x64xbf16, #tpu.memory_space<vmem>>, vector<1x32x64xbf16>
    %432 = vector.shape_cast %431 : vector<1x32x64xbf16> to vector<32x64xbf16>
    %cst_430 = arith.constant dense<0.000000e+00> : vector<5x64xf32>
    %433 = tpu.matmul %430, %432, %cst_430 {dimension_numbers = #tpu.dot_dimension_numbers<[1], [0], [0], [1], [0, 0, 1, 1], [], []>} : vector<5x32xbf16>, vector<32x64xbf16>, vector<5x64xf32> -> vector<5x64xf32>
    %434 = arith.addf %428, %433 : vector<5x64xf32>
    %c0_431 = arith.constant 0 : index
    %c0_432 = arith.constant 0 : index
    %435 = vector.load %arg19[%c0_431, %c0_432] : memref<1x64xf32, #tpu.memory_space<vmem>>, vector<1x64xf32>
    %436 = vector.broadcast %435 : vector<1x64xf32> to vector<5x64xf32>
    %437 = arith.addf %434, %436 : vector<5x64xf32>
    %cst_433 = arith.constant 0.000000e+00 : f32
    %438 = vector.broadcast %cst_433 : f32 to vector<5x64xf32>
    %439 = arith.maximumf %437, %438 : vector<5x64xf32>
    %c0_434 = arith.constant 0 : index
    %c2_435 = arith.constant 2 : index
    %c0_436 = arith.constant 0 : index
    %c0_437 = arith.constant 0 : index
    %440 = vector.load %arg20[%c0_434, %c2_435, %c0_436, %c0_437] : memref<1x3x5x64xf32, #tpu.memory_space<vmem>>, vector<1x1x5x64xf32>
    %441 = vector.shape_cast %440 : vector<1x1x5x64xf32> to vector<5x64xf32>
    %442 = vector.shape_cast %439 : vector<5x64xf32> to vector<1x1x5x64xf32>
    tpu.vector_store %arg20[%c0_434, %c2_435, %c0_436, %c0_437], %442 {strides = array<i32>} : memref<1x3x5x64xf32, #tpu.memory_space<vmem>>, vector<1x1x5x64xf32>,
    return
  }
  func.func @transform_0(%arg0: i32) -> (i32, i32, i32) {
    %c0_i32 = arith.constant 0 : i32
    %c0_i32_0 = arith.constant 0 : i32
    %c0_i32_1 = arith.constant 0 : i32
    return %arg0, %c0_i32, %c0_i32_0 : i32, i32, i32
  }
  func.func @transform_1(%arg0: i32) -> (i32, i32, i32) {
    %c0_i32 = arith.constant 0 : i32
    %c0_i32_0 = arith.constant 0 : i32
    %c0_i32_1 = arith.constant 0 : i32
    %c0_i32_2 = arith.constant 0 : i32
    return %c0_i32, %c0_i32_0, %c0_i32_1 : i32, i32, i32
  }
  func.func @transform_2(%arg0: i32) -> (i32, i32) {
    %c0_i32 = arith.constant 0 : i32
    %c0_i32_0 = arith.constant 0 : i32
    %c0_i32_1 = arith.constant 0 : i32
    return %c0_i32, %c0_i32_0 : i32, i32
  }
  func.func @transform_3(%arg0: i32) -> (i32, i32, i32) {
    %c0_i32 = arith.constant 0 : i32
    %c0_i32_0 = arith.constant 0 : i32
    %c0_i32_1 = arith.constant 0 : i32
    %c0_i32_2 = arith.constant 0 : i32
    return %c0_i32, %c0_i32_0, %c0_i32_1 : i32, i32, i32
  }
  func.func @transform_4(%arg0: i32) -> (i32, i32) {
    %c0_i32 = arith.constant 0 : i32
    %c0_i32_0 = arith.constant 0 : i32
    %c0_i32_1 = arith.constant 0 : i32
    return %c0_i32, %c0_i32_0 : i32, i32
  }
  func.func @transform_5(%arg0: i32) -> (i32, i32, i32) {
    %c0_i32 = arith.constant 0 : i32
    %c0_i32_0 = arith.constant 0 : i32
    %c0_i32_1 = arith.constant 0 : i32
    %c0_i32_2 = arith.constant 0 : i32
    return %c0_i32, %c0_i32_0, %c0_i32_1 : i32, i32, i32
  }
  func.func @transform_6(%arg0: i32) -> (i32, i32) {
    %c0_i32 = arith.constant 0 : i32
    %c0_i32_0 = arith.constant 0 : i32
    %c0_i32_1 = arith.constant 0 : i32
    return %c0_i32, %c0_i32_0 : i32, i32
  }
  func.func @transform_7(%arg0: i32) -> (i32, i32, i32) {
    %c0_i32 = arith.constant 0 : i32
    %c0_i32_0 = arith.constant 0 : i32
    %c0_i32_1 = arith.constant 0 : i32
    %c0_i32_2 = arith.constant 0 : i32
    return %c0_i32, %c0_i32_0, %c0_i32_1 : i32, i32, i32
  }
  func.func @transform_8(%arg0: i32) -> (i32, i32) {
    %c0_i32 = arith.constant 0 : i32
    %c0_i32_0 = arith.constant 0 : i32
    %c0_i32_1 = arith.constant 0 : i32
    return %c0_i32, %c0_i32_0 : i32, i32
  }
  func.func @transform_9(%arg0: i32) -> (i32, i32, i32) {
    %c0_i32 = arith.constant 0 : i32
    %c0_i32_0 = arith.constant 0 : i32
    %c0_i32_1 = arith.constant 0 : i32
    %c0_i32_2 = arith.constant 0 : i32
    return %c0_i32, %c0_i32_0, %c0_i32_1 : i32, i32, i32
  }
  func.func @transform_10(%arg0: i32) -> (i32, i32) {
    %c0_i32 = arith.constant 0 : i32
    %c0_i32_0 = arith.constant 0 : i32
    %c0_i32_1 = arith.constant 0 : i32
    return %c0_i32, %c0_i32_0 : i32, i32
  }
  func.func @transform_11(%arg0: i32) -> (i32, i32, i32) {
    %c0_i32 = arith.constant 0 : i32
    %c0_i32_0 = arith.constant 0 : i32
    %c0_i32_1 = arith.constant 0 : i32
    %c0_i32_2 = arith.constant 0 : i32
    return %c0_i32, %c0_i32_0, %c0_i32_1 : i32, i32, i32
  }
  func.func @transform_12(%arg0: i32) -> (i32, i32) {
    %c0_i32 = arith.constant 0 : i32
    %c0_i32_0 = arith.constant 0 : i32
    %c0_i32_1 = arith.constant 0 : i32
    return %c0_i32, %c0_i32_0 : i32, i32
  }
  func.func @transform_13(%arg0: i32) -> (i32, i32, i32) {
    %c0_i32 = arith.constant 0 : i32
    %c0_i32_0 = arith.constant 0 : i32
    %c0_i32_1 = arith.constant 0 : i32
    %c0_i32_2 = arith.constant 0 : i32
    return %c0_i32, %c0_i32_0, %c0_i32_1 : i32, i32, i32
  }
  func.func @transform_14(%arg0: i32) -> (i32, i32) {
    %c0_i32 = arith.constant 0 : i32
    %c0_i32_0 = arith.constant 0 : i32
    %c0_i32_1 = arith.constant 0 : i32
    return %c0_i32, %c0_i32_0 : i32, i32
  }
  func.func @transform_15(%arg0: i32) -> (i32, i32, i32) {
    %c0_i32 = arith.constant 0 : i32
    %c0_i32_0 = arith.constant 0 : i32
    %c0_i32_1 = arith.constant 0 : i32
    %c0_i32_2 = arith.constant 0 : i32
    return %c0_i32, %c0_i32_0, %c0_i32_1 : i32, i32, i32
  }
  func.func @transform_16(%arg0: i32) -> (i32, i32) {
    %c0_i32 = arith.constant 0 : i32
    %c0_i32_0 = arith.constant 0 : i32
    %c0_i32_1 = arith.constant 0 : i32
    return %c0_i32, %c0_i32_0 : i32, i32
  }
  func.func @transform_17(%arg0: i32) -> (i32, i32, i32) {
    %c0_i32 = arith.constant 0 : i32
    %c0_i32_0 = arith.constant 0 : i32
    %c0_i32_1 = arith.constant 0 : i32
    %c0_i32_2 = arith.constant 0 : i32
    return %c0_i32, %c0_i32_0, %c0_i32_1 : i32, i32, i32
  }
  func.func @transform_18(%arg0: i32) -> (i32, i32) {
    %c0_i32 = arith.constant 0 : i32
    %c0_i32_0 = arith.constant 0 : i32
    %c0_i32_1 = arith.constant 0 : i32
    return %c0_i32, %c0_i32_0 : i32, i32
  }
  func.func @transform_19(%arg0: i32) -> (i32, i32, i32, i32) {
    %c0_i32 = arith.constant 0 : i32
    %c0_i32_0 = arith.constant 0 : i32
    %c0_i32_1 = arith.constant 0 : i32
    %c0_i32_2 = arith.constant 0 : i32
    return %arg0, %c0_i32, %c0_i32_0, %c0_i32_1 : i32, i32, i32, i32
  }
}

</mosaic_0001>

<llo_original>
// kernel: _lambda_.1
$region0: #{_lambda_.1}
  #allocation0 [shape = 'u32[]', space=smem, size = 0x4, offset = 0x4, fixed_abs, tag = 'smem constant byte address 0x4 - core index']
  #allocation1 [shape = 'u32[144,128]{1,0:T(1,128)}', space=vmem, size = 0x12000, scoped, tag = 'internal scratch']
  #allocation2 [shape = 'f32[124,16]{1,0:T(8,128)}', space=vmem, size = 0x10000, scoped, tag = 'scratch operand']
  #allocation3 [shape = 'f32[62,16]{1,0:T(8,128)}', space=vmem, size = 0x8000, scoped, tag = 'scratch operand']
  #allocation4 [shape = 'f32[58,32]{1,0:T(8,128)}', space=vmem, size = 0x8000, scoped, tag = 'scratch operand']
  #allocation5 [shape = 'f32[29,32]{1,0:T(8,128)}', space=vmem, size = 0x4000, scoped, tag = 'scratch operand']
  #allocation6 [shape = 'f32[123,16]{1,0:T(8,128)}', space=vmem, size = 0x10000, scoped, tag = 'scratch operand']
  #allocation7 [shape = 'f32[41,16]{1,0:T(8,128)}', space=vmem, size = 0x6000, scoped, tag = 'scratch operand']
  #allocation8 [shape = 'f32[36,32]{1,0:T(8,128)}', space=vmem, size = 0x5000, scoped, tag = 'scratch operand']
  #allocation9 [shape = 'f32[12,32]{1,0:T(8,128)}', space=vmem, size = 0x2000, scoped, tag = 'scratch operand']
  #allocation10 [shape = 'f32[122,16]{1,0:T(8,128)}', space=vmem, size = 0x10000, scoped, tag = 'scratch operand']
  #allocation11 [shape = 'f32[40,16]{1,0:T(8,128)}', space=vmem, size = 0x5000, scoped, tag = 'scratch operand']
  #allocation12 [shape = 'f32[34,32]{1,0:T(8,128)}', space=vmem, size = 0x5000, scoped, tag = 'scratch operand']
  #allocation13 [shape = 'f32[11,32]{1,0:T(8,128)}', space=vmem, size = 0x2000, scoped, tag = 'scratch operand']
  %s0 = inlined_call_operand.vmem [shape: f32[2,128,4], index: 0, kind: input, shape index: {}]
  %s1 = inlined_call_operand.hbm [shape: bf16[5,4,16], index: 1, kind: input, shape index: {}]
  %s2 = inlined_call_operand.vmem [shape: f32[1,16], index: 2, kind: input, shape index: {}]
  %s3 = inlined_call_operand.hbm [shape: bf16[5,16,32], index: 3, kind: input, shape index: {}]
  %s4 = inlined_call_operand.vmem [shape: f32[1,32], index: 4, kind: input, shape index: {}]
  %s5 = inlined_call_operand.vmem [shape: bf16[5,32,64], index: 5, kind: input, shape index: {}]
  %s6 = inlined_call_operand.vmem [shape: f32[1,64], index: 6, kind: input, shape index: {}]
  %s7 = inlined_call_operand.hbm [shape: bf16[6,4,16], index: 7, kind: input, shape index: {}]
  %s8 = inlined_call_operand.hbm [shape: f32[1,16], index: 8, kind: input, shape index: {}]
  %s9 = inlined_call_operand.vmem [shape: bf16[6,16,32], index: 9, kind: input, shape index: {}]
  %s10 = inlined_call_operand.hbm [shape: f32[1,32], index: 10, kind: input, shape index: {}]
  %s11 = inlined_call_operand.vmem [shape: bf16[6,32,64], index: 11, kind: input, shape index: {}]
  %s12 = inlined_call_operand.hbm [shape: f32[1,64], index: 12, kind: input, shape index: {}]
  %s13 = inlined_call_operand.hbm [shape: bf16[7,4,16], index: 13, kind: input, shape index: {}]
  %s14 = inlined_call_operand.hbm [shape: f32[1,16], index: 14, kind: input, shape index: {}]
  %s15 = inlined_call_operand.hbm [shape: bf16[7,16,32], index: 15, kind: input, shape index: {}]
  %s16 = inlined_call_operand.hbm [shape: f32[1,32], index: 16, kind: input, shape index: {}]
  %s17 = inlined_call_operand.vmem [shape: bf16[7,32,64], index: 17, kind: input, shape index: {}]
  %s18 = inlined_call_operand.hbm [shape: f32[1,64], index: 18, kind: input, shape index: {}]
  %s19 = inlined_call_operand.vmem [shape: f32[2,3,5,64], index: 19, kind: output, shape index: {}]
  %s20 = sld [smem:[#allocation0]]
  $region153: #{_lambda_.1} parent=0
    _
  %s22 = ssub.s32 1, %s20
  %s23 = scalar_select 0, %s22, %s20
  $region1: #{_lambda_.1} parent=0
    #allocation14 [shape = 'u8[5120]{0}', space=vmem, size = 0x1400, scoped, tag = 'input window, operand 1, single buffered']
    #allocation15 [shape = 's32[2]{0}', space=sflag, size = 0x8, scoped, tag = 'scoped memory for _lambda_.1']
    #allocation16 [shape = 'u8[20480]{0}', space=vmem, size = 0x5000, scoped, tag = 'input window, operand 3, single buffered']
    #allocation17 [shape = 's32[1]{0}', space=sflag, size = 0x4, scoped, tag = 'scoped memory for _lambda_.1']
    #allocation18 [shape = 'u8[6144]{0}', space=vmem, size = 0x1800, scoped, tag = 'input window, operand 7, single buffered']
    #allocation19 [shape = 'u8[512]{0}', space=vmem, size = 0x400, scoped, tag = 'input window, operand 8, single buffered']
    #allocation20 [shape = 's32[1]{0}', space=sflag, size = 0x4, scoped, tag = 'scoped memory for _lambda_.1']
    #allocation21 [shape = 'u8[512]{0}', space=vmem, size = 0x400, scoped, tag = 'input window, operand 10, single buffered']
    #allocation22 [shape = 'u8[512]{0}', space=vmem, size = 0x400, scoped, tag = 'input window, operand 12, single buffered']
    #allocation23 [shape = 's32[1]{0}', space=sflag, size = 0x4, scoped, tag = 'scoped memory for _lambda_.1']
    #allocation24 [shape = 'u8[7168]{0}', space=vmem, size = 0x1c00, scoped, tag = 'input window, operand 13, single buffered']
    #allocation25 [shape = 'u8[512]{0}', space=vmem, size = 0x400, scoped, tag = 'input window, operand 14, single buffered']
    #allocation26 [shape = 's32[1]{0}', space=sflag, size = 0x4, scoped, tag = 'scoped memory for _lambda_.1']
    #allocation27 [shape = 'u8[28672]{0}', space=vmem, size = 0x7000, scoped, tag = 'input window, operand 15, single buffered']
    #allocation28 [shape = 'u8[512]{0}', space=vmem, size = 0x400, scoped, tag = 'input window, operand 16, single buffered']
    #allocation29 [shape = 's32[1]{0}', space=sflag, size = 0x4, scoped, tag = 'scoped memory for _lambda_.1']
    #allocation30 [shape = 'u8[512]{0}', space=vmem, size = 0x400, scoped, tag = 'input window, operand 18, single buffered']
    %24 = vsyncpa [#allocation15], 0
    %25 = vsyncpa [#allocation17], 0
    %26 = vsyncpa [#allocation20], 0
    %27 = vsyncpa [#allocation23], 0
    %28 = vsyncpa [#allocation26], 0
    %29 = vsyncpa [#allocation29], 0
    loop: start=0, step=1, limit=4
    $region2: #{_lambda_.1} parent=1 // loop_pre_header
      _
    $region3: #{_lambda_.1} parent=1 // loop_header
      %s31 = sphi 0, %s35
      %p32 = scmp.ge.s32.totalorder %s31, 4
      %s41 = sphi 0, %s43
      %s44 = sphi 0, %s41
      %s45 = sphi 0, %s44
      %s61 = sphi 0, %s45
      %s65 = sphi 0, %s65
      %s67 = sphi 0, %s65
      %s68 = sphi 0, %s67
      %s82 = sphi 0, %s68
      %s86 = sphi 0, %s86
      %s88 = sphi 0, %s86
      %s89 = sphi 0, %s88
      %s103 = sphi 0, %s89
      %s107 = sphi 0, %s107
      %s109 = sphi 0, %s107
      %s110 = sphi 0, %s109
      %s124 = sphi 0, %s110
      %s128 = sphi 0, %s128
      %s130 = sphi 0, %s128
      %s131 = sphi 0, %s130
      %s145 = sphi 0, %s131
      %s149 = sphi 0, %s149
      %s151 = sphi 0, %s149
      %s152 = sphi 0, %s151
      %s166 = sphi 0, %s152
      %s170 = sphi 0, %s170
      %s172 = sphi 0, %s170
      %s173 = sphi 0, %s172
      %s187 = sphi 0, %s173
      %s191 = sphi 0, %s191
      %s193 = sphi 0, %s191
      %s194 = sphi 0, %s193
      %s208 = sphi 0, %s194
      %s212 = sphi 0, %s212
      %s214 = sphi 0, %s212
      %s215 = sphi 0, %s214
      %s229 = sphi 0, %s215
      %s233 = sphi 0, %s233
      %s235 = sphi 0, %s233
      %s236 = sphi 0, %s235
      %s250 = sphi 0, %s236
      %s254 = sphi 0, %s254
      %s256 = sphi 0, %s254
      %s257 = sphi 0, %s256
      %s271 = sphi 0, %s257
      %s275 = sphi 0, %s275
      %s277 = sphi 0, %s275
      %s278 = sphi 0, %s277
      %s292 = sphi 0, %s278
      %s296 = sphi 0, %s296
      %s298 = sphi 0, %s296
      %s299 = sphi 0, %s298
      %s313 = sphi 0, %s299
      %s317 = sphi 0, %s317
      %s319 = sphi 0, %s317
      %s320 = sphi 0, %s319
      %s334 = sphi 0, %s320
      %s338 = sphi 0, %s338
      %s340 = sphi 0, %s338
      %s341 = sphi 0, %s340
      %s355 = sphi 0, %s341
      %s359 = sphi 0, %s359
      %s361 = sphi 0, %s359
      %s362 = sphi 0, %s361
      %s376 = sphi 0, %s362
      %s380 = sphi 0, %s380
      %s382 = sphi 0, %s380
      %s383 = sphi 0, %s382
      %s397 = sphi 0, %s383
      %s401 = sphi 0, %s401
      %s403 = sphi 0, %s401
      %s404 = sphi 0, %s403
      %s418 = sphi 0, %s404
      %s422 = sphi 0, %s422
      %s424 = sphi 0, %s422
      %s425 = sphi 0, %s424
      %s439 = sphi 0, %s425
      %s445 = sphi 0, %s447
      %s448 = sphi 0, %s445
      %s449 = sphi 0, %s448
      %s465 = sphi 0, %s449
    $region4: #{_lambda_.1} parent=1 // loop_header_branch
      %34 = sbr.rel (%p32) target = $region8
    $region5: #{_lambda_.1} parent=1 // loop_body
      %s36 = ssub.s32 %s31, 1
      %s37 = ssub.s32 %s31, 2
      %s38 = sadd.s32 %s31, 1
      %s39 = ssub.s32 %s31, %s38
      %p40 = scmp.eq.s32.totalorder %s39, 0
      %s42 = sadd.s32 %s41, 1
      %s43 = scalar_select %p40, %s41, %s42
      %p46 = pneg %p40
      %p47 = scmp.eq.s32.totalorder %s31, 1
      %p48 = por %p46, %p47
      %p49 = scmp.ne.s32.totalorder %s41, %s44
      %p50 = scmp.eq.s32.totalorder %s31, 0
      %p51 = por %p49, %p50
      %p52 = scmp.ne.s32.totalorder %s41, %s44
      %p53 = scmp.eq.s32.totalorder %s36, 1
      %p54 = por %p52, %p53
      %p55 = scmp.ne.s32.totalorder %s44, %s45
      %p56 = scmp.eq.s32.totalorder %s36, 0
      %p57 = por %p55, %p56
      %p58 = scmp.ne.s32.totalorder %s44, %s45
      %p59 = scmp.eq.s32.totalorder %s37, 1
      %p60 = por %p58, %p59
      %p62 = scmp.ne.s32.totalorder %s45, %s61
      %p63 = scmp.eq.s32.totalorder %s37, 0
      %p64 = por %p62, %p63
      %s66 = sadd.s32 %s65, 1
      %p69 = scmp.eq.s32.totalorder %s31, 1
      %p70 = scmp.ne.s32.totalorder %s65, %s67
      %p71 = scmp.eq.s32.totalorder %s31, 0
      %p72 = por %p70, %p71
      %p73 = scmp.ne.s32.totalorder %s65, %s67
      %p74 = scmp.eq.s32.totalorder %s36, 1
      %p75 = por %p73, %p74
      %p76 = scmp.ne.s32.totalorder %s67, %s68
      %p77 = scmp.eq.s32.totalorder %s36, 0
      %p78 = por %p76, %p77
      %p79 = scmp.ne.s32.totalorder %s67, %s68
      %p80 = scmp.eq.s32.totalorder %s37, 1
      %p81 = por %p79, %p80
      %p83 = scmp.ne.s32.totalorder %s68, %s82
      %p84 = scmp.eq.s32.totalorder %s37, 0
      %p85 = por %p83, %p84
      %s87 = sadd.s32 %s86, 1
      %p90 = scmp.eq.s32.totalorder %s31, 1
      %p91 = scmp.ne.s32.totalorder %s86, %s88
      %p92 = scmp.eq.s32.totalorder %s31, 0
      %p93 = por %p91, %p92
      %p94 = scmp.ne.s32.totalorder %s86, %s88
      %p95 = scmp.eq.s32.totalorder %s36, 1
      %p96 = por %p94, %p95
      %p97 = scmp.ne.s32.totalorder %s88, %s89
      %p98 = scmp.eq.s32.totalorder %s36, 0
      %p99 = por %p97, %p98
      %p100 = scmp.ne.s32.totalorder %s88, %s89
      %p101 = scmp.eq.s32.totalorder %s37, 1
      %p102 = por %p100, %p101
      %p104 = scmp.ne.s32.totalorder %s89, %s103
      %p105 = scmp.eq.s32.totalorder %s37, 0
      %p106 = por %p104, %p105
      %s108 = sadd.s32 %s107, 1
      %p111 = scmp.eq.s32.totalorder %s31, 1
      %p112 = scmp.ne.s32.totalorder %s107, %s109
      %p113 = scmp.eq.s32.totalorder %s31, 0
      %p114 = por %p112, %p113
      %p115 = scmp.ne.s32.totalorder %s107, %s109
      %p116 = scmp.eq.s32.totalorder %s36, 1
      %p117 = por %p115, %p116
      %p118 = scmp.ne.s32.totalorder %s109, %s110
      %p119 = scmp.eq.s32.totalorder %s36, 0
      %p120 = por %p118, %p119
      %p121 = scmp.ne.s32.totalorder %s109, %s110
      %p122 = scmp.eq.s32.totalorder %s37, 1
      %p123 = por %p121, %p122
      %p125 = scmp.ne.s32.totalorder %s110, %s124
      %p126 = scmp.eq.s32.totalorder %s37, 0
      %p127 = por %p125, %p126
      %s129 = sadd.s32 %s128, 1
      %p132 = scmp.eq.s32.totalorder %s31, 1
      %p133 = scmp.ne.s32.totalorder %s128, %s130
      %p134 = scmp.eq.s32.totalorder %s31, 0
      %p135 = por %p133, %p134
      %p136 = scmp.ne.s32.totalorder %s128, %s130
      %p137 = scmp.eq.s32.totalorder %s36, 1
      %p138 = por %p136, %p137
      %p139 = scmp.ne.s32.totalorder %s130, %s131
      %p140 = scmp.eq.s32.totalorder %s36, 0
      %p141 = por %p139, %p140
      %p142 = scmp.ne.s32.totalorder %s130, %s131
      %p143 = scmp.eq.s32.totalorder %s37, 1
      %p144 = por %p142, %p143
      %p146 = scmp.ne.s32.totalorder %s131, %s145
      %p147 = scmp.eq.s32.totalorder %s37, 0
      %p148 = por %p146, %p147
      %s150 = sadd.s32 %s149, 1
      %p153 = scmp.eq.s32.totalorder %s31, 1
      %p154 = scmp.ne.s32.totalorder %s149, %s151
      %p155 = scmp.eq.s32.totalorder %s31, 0
      %p156 = por %p154, %p155
      %p157 = scmp.ne.s32.totalorder %s149, %s151
      %p158 = scmp.eq.s32.totalorder %s36, 1
      %p159 = por %p157, %p158
      %p160 = scmp.ne.s32.totalorder %s151, %s152
      %p161 = scmp.eq.s32.totalorder %s36, 0
      %p162 = por %p160, %p161
      %p163 = scmp.ne.s32.totalorder %s151, %s152
      %p164 = scmp.eq.s32.totalorder %s37, 1
      %p165 = por %p163, %p164
      %p167 = scmp.ne.s32.totalorder %s152, %s166
      %p168 = scmp.eq.s32.totalorder %s37, 0
      %p169 = por %p167, %p168
      %s171 = sadd.s32 %s170, 1
      %p174 = scmp.eq.s32.totalorder %s31, 1
      %p175 = scmp.ne.s32.totalorder %s170, %s172
      %p176 = scmp.eq.s32.totalorder %s31, 0
      %p177 = por %p175, %p176
      %p178 = scmp.ne.s32.totalorder %s170, %s172
      %p179 = scmp.eq.s32.totalorder %s36, 1
      %p180 = por %p178, %p179
      %p181 = scmp.ne.s32.totalorder %s172, %s173
      %p182 = scmp.eq.s32.totalorder %s36, 0
      %p183 = por %p181, %p182
      %p184 = scmp.ne.s32.totalorder %s172, %s173
      %p185 = scmp.eq.s32.totalorder %s37, 1
      %p186 = por %p184, %p185
      %p188 = scmp.ne.s32.totalorder %s173, %s187
      %p189 = scmp.eq.s32.totalorder %s37, 0
      %p190 = por %p188, %p189
      %s192 = sadd.s32 %s191, 1
      %p195 = scmp.eq.s32.totalorder %s31, 1
      %p196 = scmp.ne.s32.totalorder %s191, %s193
      %p197 = scmp.eq.s32.totalorder %s31, 0
      %p198 = por %p196, %p197
      %p199 = scmp.ne.s32.totalorder %s191, %s193
      %p200 = scmp.eq.s32.totalorder %s36, 1
      %p201 = por %p199, %p200
      %p202 = scmp.ne.s32.totalorder %s193, %s194
      %p203 = scmp.eq.s32.totalorder %s36, 0
      %p204 = por %p202, %p203
      %p205 = scmp.ne.s32.totalorder %s193, %s194
      %p206 = scmp.eq.s32.totalorder %s37, 1
      %p207 = por %p205, %p206
      %p209 = scmp.ne.s32.totalorder %s194, %s208
      %p210 = scmp.eq.s32.totalorder %s37, 0
      %p211 = por %p209, %p210
      %s213 = sadd.s32 %s212, 1
      %p216 = scmp.eq.s32.totalorder %s31, 1
      %p217 = scmp.ne.s32.totalorder %s212, %s214
      %p218 = scmp.eq.s32.totalorder %s31, 0
      %p219 = por %p217, %p218
      %p220 = scmp.ne.s32.totalorder %s212, %s214
      %p221 = scmp.eq.s32.totalorder %s36, 1
      %p222 = por %p220, %p221
      %p223 = scmp.ne.s32.totalorder %s214, %s215
      %p224 = scmp.eq.s32.totalorder %s36, 0
      %p225 = por %p223, %p224
      %p226 = scmp.ne.s32.totalorder %s214, %s215
      %p227 = scmp.eq.s32.totalorder %s37, 1
      %p228 = por %p226, %p227
      %p230 = scmp.ne.s32.totalorder %s215, %s229
      %p231 = scmp.eq.s32.totalorder %s37, 0
      %p232 = por %p230, %p231
      %s234 = sadd.s32 %s233, 1
      %p237 = scmp.eq.s32.totalorder %s31, 1
      %p238 = scmp.ne.s32.totalorder %s233, %s235
      %p239 = scmp.eq.s32.totalorder %s31, 0
      %p240 = por %p238, %p239
      %p241 = scmp.ne.s32.totalorder %s233, %s235
      %p242 = scmp.eq.s32.totalorder %s36, 1
      %p243 = por %p241, %p242
      %p244 = scmp.ne.s32.totalorder %s235, %s236
      %p245 = scmp.eq.s32.totalorder %s36, 0
      %p246 = por %p244, %p245
      %p247 = scmp.ne.s32.totalorder %s235, %s236
      %p248 = scmp.eq.s32.totalorder %s37, 1
      %p249 = por %p247, %p248
      %p251 = scmp.ne.s32.totalorder %s236, %s250
      %p252 = scmp.eq.s32.totalorder %s37, 0
      %p253 = por %p251, %p252
      %s255 = sadd.s32 %s254, 1
      %p258 = scmp.eq.s32.totalorder %s31, 1
      %p259 = scmp.ne.s32.totalorder %s254, %s256
      %p260 = scmp.eq.s32.totalorder %s31, 0
      %p261 = por %p259, %p260
      %p262 = scmp.ne.s32.totalorder %s254, %s256
      %p263 = scmp.eq.s32.totalorder %s36, 1
      %p264 = por %p262, %p263
      %p265 = scmp.ne.s32.totalorder %s256, %s257
      %p266 = scmp.eq.s32.totalorder %s36, 0
      %p267 = por %p265, %p266
      %p268 = scmp.ne.s32.totalorder %s256, %s257
      %p269 = scmp.eq.s32.totalorder %s37, 1
      %p270 = por %p268, %p269
      %p272 = scmp.ne.s32.totalorder %s257, %s271
      %p273 = scmp.eq.s32.totalorder %s37, 0
      %p274 = por %p272, %p273
      %s276 = sadd.s32 %s275, 1
      %p279 = scmp.eq.s32.totalorder %s31, 1
      %p280 = scmp.ne.s32.totalorder %s275, %s277
      %p281 = scmp.eq.s32.totalorder %s31, 0
      %p282 = por %p280, %p281
      %p283 = scmp.ne.s32.totalorder %s275, %s277
      %p284 = scmp.eq.s32.totalorder %s36, 1
      %p285 = por %p283, %p284
      %p286 = scmp.ne.s32.totalorder %s277, %s278
      %p287 = scmp.eq.s32.totalorder %s36, 0
      %p288 = por %p286, %p287
      %p289 = scmp.ne.s32.totalorder %s277, %s278
      %p290 = scmp.eq.s32.totalorder %s37, 1
      %p291 = por %p289, %p290
      %p293 = scmp.ne.s32.totalorder %s278, %s292
      %p294 = scmp.eq.s32.totalorder %s37, 0
      %p295 = por %p293, %p294
      %s297 = sadd.s32 %s296, 1
      %p300 = scmp.eq.s32.totalorder %s31, 1
      %p301 = scmp.ne.s32.totalorder %s296, %s298
      %p302 = scmp.eq.s32.totalorder %s31, 0
      %p303 = por %p301, %p302
      %p304 = scmp.ne.s32.totalorder %s296, %s298
      %p305 = scmp.eq.s32.totalorder %s36, 1
      %p306 = por %p304, %p305
      %p307 = scmp.ne.s32.totalorder %s298, %s299
      %p308 = scmp.eq.s32.totalorder %s36, 0
      %p309 = por %p307, %p308
      %p310 = scmp.ne.s32.totalorder %s298, %s299
      %p311 = scmp.eq.s32.totalorder %s37, 1
      %p312 = por %p310, %p311
      %p314 = scmp.ne.s32.totalorder %s299, %s313
      %p315 = scmp.eq.s32.totalorder %s37, 0
      %p316 = por %p314, %p315
      %s318 = sadd.s32 %s317, 1
      %p321 = scmp.eq.s32.totalorder %s31, 1
      %p322 = scmp.ne.s32.totalorder %s317, %s319
      %p323 = scmp.eq.s32.totalorder %s31, 0
      %p324 = por %p322, %p323
      %p325 = scmp.ne.s32.totalorder %s317, %s319
      %p326 = scmp.eq.s32.totalorder %s36, 1
      %p327 = por %p325, %p326
      %p328 = scmp.ne.s32.totalorder %s319, %s320
      %p329 = scmp.eq.s32.totalorder %s36, 0
      %p330 = por %p328, %p329
      %p331 = scmp.ne.s32.totalorder %s319, %s320
      %p332 = scmp.eq.s32.totalorder %s37, 1
      %p333 = por %p331, %p332
      %p335 = scmp.ne.s32.totalorder %s320, %s334
      %p336 = scmp.eq.s32.totalorder %s37, 0
      %p337 = por %p335, %p336
      %s339 = sadd.s32 %s338, 1
      %p342 = scmp.eq.s32.totalorder %s31, 1
      %p343 = scmp.ne.s32.totalorder %s338, %s340
      %p344 = scmp.eq.s32.totalorder %s31, 0
      %p345 = por %p343, %p344
      %p346 = scmp.ne.s32.totalorder %s338, %s340
      %p347 = scmp.eq.s32.totalorder %s36, 1
      %p348 = por %p346, %p347
      %p349 = scmp.ne.s32.totalorder %s340, %s341
      %p350 = scmp.eq.s32.totalorder %s36, 0
      %p351 = por %p349, %p350
      %p352 = scmp.ne.s32.totalorder %s340, %s341
      %p353 = scmp.eq.s32.totalorder %s37, 1
      %p354 = por %p352, %p353
      %p356 = scmp.ne.s32.totalorder %s341, %s355
      %p357 = scmp.eq.s32.totalorder %s37, 0
      %p358 = por %p356, %p357
      %s360 = sadd.s32 %s359, 1
      %p363 = scmp.eq.s32.totalorder %s31, 1
      %p364 = scmp.ne.s32.totalorder %s359, %s361
      %p365 = scmp.eq.s32.totalorder %s31, 0
      %p366 = por %p364, %p365
      %p367 = scmp.ne.s32.totalorder %s359, %s361
      %p368 = scmp.eq.s32.totalorder %s36, 1
      %p369 = por %p367, %p368
      %p370 = scmp.ne.s32.totalorder %s361, %s362
      %p371 = scmp.eq.s32.totalorder %s36, 0
      %p372 = por %p370, %p371
      %p373 = scmp.ne.s32.totalorder %s361, %s362
      %p374 = scmp.eq.s32.totalorder %s37, 1
      %p375 = por %p373, %p374
      %p377 = scmp.ne.s32.totalorder %s362, %s376
      %p378 = scmp.eq.s32.totalorder %s37, 0
      %p379 = por %p377, %p378
      %s381 = sadd.s32 %s380, 1
      %p384 = scmp.eq.s32.totalorder %s31, 1
      %p385 = scmp.ne.s32.totalorder %s380, %s382
      %p386 = scmp.eq.s32.totalorder %s31, 0
      %p387 = por %p385, %p386
      %p388 = scmp.ne.s32.totalorder %s380, %s382
      %p389 = scmp.eq.s32.totalorder %s36, 1
      %p390 = por %p388, %p389
      %p391 = scmp.ne.s32.totalorder %s382, %s383
      %p392 = scmp.eq.s32.totalorder %s36, 0
      %p393 = por %p391, %p392
      %p394 = scmp.ne.s32.totalorder %s382, %s383
      %p395 = scmp.eq.s32.totalorder %s37, 1
      %p396 = por %p394, %p395
      %p398 = scmp.ne.s32.totalorder %s383, %s397
      %p399 = scmp.eq.s32.totalorder %s37, 0
      %p400 = por %p398, %p399
      %s402 = sadd.s32 %s401, 1
      %p405 = scmp.eq.s32.totalorder %s31, 1
      %p406 = scmp.ne.s32.totalorder %s401, %s403
      %p407 = scmp.eq.s32.totalorder %s31, 0
      %p408 = por %p406, %p407
      %p409 = scmp.ne.s32.totalorder %s401, %s403
      %p410 = scmp.eq.s32.totalorder %s36, 1
      %p411 = por %p409, %p410
      %p412 = scmp.ne.s32.totalorder %s403, %s404
      %p413 = scmp.eq.s32.totalorder %s36, 0
      %p414 = por %p412, %p413
      %p415 = scmp.ne.s32.totalorder %s403, %s404
      %p416 = scmp.eq.s32.totalorder %s37, 1
      %p417 = por %p415, %p416
      %p419 = scmp.ne.s32.totalorder %s404, %s418
      %p420 = scmp.eq.s32.totalorder %s37, 0
      %p421 = por %p419, %p420
      %s423 = sadd.s32 %s422, 1
      %p426 = scmp.eq.s32.totalorder %s31, 1
      %p427 = scmp.ne.s32.totalorder %s422, %s424
      %p428 = scmp.eq.s32.totalorder %s31, 0
      %p429 = por %p427, %p428
      %p430 = scmp.ne.s32.totalorder %s422, %s424
      %p431 = scmp.eq.s32.totalorder %s36, 1
      %p432 = por %p430, %p431
      %p433 = scmp.ne.s32.totalorder %s424, %s425
      %p434 = scmp.eq.s32.totalorder %s36, 0
      %p435 = por %p433, %p434
      %p436 = scmp.ne.s32.totalorder %s424, %s425
      %p437 = scmp.eq.s32.totalorder %s37, 1
      %p438 = por %p436, %p437
      %p440 = scmp.ne.s32.totalorder %s425, %s439
      %p441 = scmp.eq.s32.totalorder %s37, 0
      %p442 = por %p440, %p441
      %s443 = ssub.s32 %s31, %s38
      %p444 = scmp.eq.s32.totalorder %s443, 0
      %s446 = sadd.s32 %s445, 1
      %s447 = scalar_select %p444, %s445, %s446
      %p450 = pneg %p444
      %p451 = scmp.eq.s32.totalorder %s31, 1
      %p452 = por %p450, %p451
      %p453 = scmp.ne.s32.totalorder %s445, %s448
      %p454 = scmp.eq.s32.totalorder %s31, 0
      %p455 = por %p453, %p454
      %p456 = scmp.ne.s32.totalorder %s445, %s448
      %p457 = scmp.eq.s32.totalorder %s36, 1
      %p458 = por %p456, %p457
      %p459 = scmp.ne.s32.totalorder %s448, %s449
      %p460 = scmp.eq.s32.totalorder %s36, 0
      %p461 = por %p459, %p460
      %p462 = scmp.ne.s32.totalorder %s448, %s449
      %p463 = scmp.eq.s32.totalorder %s37, 1
      %p464 = por %p462, %p463
      %p466 = scmp.ne.s32.totalorder %s449, %s465
      %p467 = scmp.eq.s32.totalorder %s37, 0
      %p468 = por %p466, %p467
      %p469 = scmp.le.s32.totalorder 1, %s31
      %p470 = scmp.lt.s32.totalorder %s31, 3
      %p471 = pnand %p469, %p470
      %p472 = pneg %p471
      // Predicated region
      $region9: #{_lambda_.1} parent=5 // pred_check
        _
      $region10: #{_lambda_.1} parent=5 // pred_check_branch
        %474 = sbr.rel (%p471) target = $region12
      $region11: #{_lambda_.1} parent=5 // pred_region
        %s475 = ssub.s32 %s31, 1
        // Predicated region
        $region13: #{_lambda_.1} parent=11 // pred_check
          %p476 = pneg %p78
        $region14: #{_lambda_.1} parent=11 // pred_check_branch
          %478 = sbr.rel (%p476) target = $region16
        $region15: #{_lambda_.1} parent=11 // pred_region
          %s480 = ssub.s32 160, 160
          %481 = vsyncadd [#allocation15], %s480
          %s482 = sshll.u32 [#allocation14], 4
          %s483 = int_to_ptr.vmem [resolvable:$true] %s482
          %488 = dma.hbm_to_vmem [thread:$0]  %s1, 160, %s483, [#allocation15], 32, 32, 2
        $region16: #{_lambda_.1} parent=11 // pred_fallthru
          _
        // Predicated region
        $region17: #{_lambda_.1} parent=11 // pred_check
          %p489 = pneg %p99
        $region18: #{_lambda_.1} parent=11 // pred_check_branch
          %491 = sbr.rel (%p489) target = $region20
        $region19: #{_lambda_.1} parent=11 // pred_region
          _
        $region20: #{_lambda_.1} parent=11 // pred_fallthru
          _
        // Predicated region
        $region21: #{_lambda_.1} parent=11 // pred_check
          %p492 = pneg %p120
        $region22: #{_lambda_.1} parent=11 // pred_check_branch
          %494 = sbr.rel (%p492) target = $region24
        $region23: #{_lambda_.1} parent=11 // pred_region
          %s496 = ssub.s32 640, 640
          %497 = vsyncadd [#allocation17], %s496
          %s498 = sshll.u32 [#allocation16], 4
          %s499 = int_to_ptr.vmem [resolvable:$true] %s498
          %504 = dma.hbm_to_vmem [thread:$0]  %s3, 640, %s499, [#allocation17], 64, 64, 4
        $region24: #{_lambda_.1} parent=11 // pred_fallthru
          _
        // Predicated region
        $region25: #{_lambda_.1} parent=11 // pred_check
          %p505 = pneg %p141
        $region26: #{_lambda_.1} parent=11 // pred_check_branch
          %507 = sbr.rel (%p505) target = $region28
        $region27: #{_lambda_.1} parent=11 // pred_region
          _
        $region28: #{_lambda_.1} parent=11 // pred_fallthru
          _
        // Predicated region
        $region29: #{_lambda_.1} parent=11 // pred_check
          %p508 = pneg %p162
        $region30: #{_lambda_.1} parent=11 // pred_check_branch
          %510 = sbr.rel (%p508) target = $region32
        $region31: #{_lambda_.1} parent=11 // pred_region
          _
        $region32: #{_lambda_.1} parent=11 // pred_fallthru
          _
        // Predicated region
        $region33: #{_lambda_.1} parent=11 // pred_check
          %p511 = pneg %p183
        $region34: #{_lambda_.1} parent=11 // pred_check_branch
          %513 = sbr.rel (%p511) target = $region36
        $region35: #{_lambda_.1} parent=11 // pred_region
          _
        $region36: #{_lambda_.1} parent=11 // pred_fallthru
          _
        // Predicated region
        $region37: #{_lambda_.1} parent=11 // pred_check
          %p514 = pneg %p204
        $region38: #{_lambda_.1} parent=11 // pred_check_branch
          %516 = sbr.rel (%p514) target = $region40
        $region39: #{_lambda_.1} parent=11 // pred_region
          %s518 = ssub.s32 192, 192
          %519 = vsyncadd [#allocation17], %s518
          %s520 = sshll.u32 [#allocation18], 4
          %s521 = int_to_ptr.vmem [resolvable:$true] %s520
          %526 = dma.hbm_to_vmem [thread:$0]  %s7, 192, %s521, [#allocation17], 32, 32, 2
        $region40: #{_lambda_.1} parent=11 // pred_fallthru
          _
        // Predicated region
        $region41: #{_lambda_.1} parent=11 // pred_check
          %p527 = pneg %p225
        $region42: #{_lambda_.1} parent=11 // pred_check_branch
          %529 = sbr.rel (%p527) target = $region44
        $region43: #{_lambda_.1} parent=11 // pred_region
          %s531 = ssub.s32 16, 16
          %532 = vsyncadd [#allocation20], %s531
          %s534 = sshll.u32 [#allocation19], 4
          %s535 = int_to_ptr.vmem [resolvable:$true] %s534
          %537 = dma.hbm_to_vmem [thread:$0]  %s8, 16, %s535, [#allocation20]
        $region44: #{_lambda_.1} parent=11 // pred_fallthru
          _
        // Predicated region
        $region45: #{_lambda_.1} parent=11 // pred_check
          %p538 = pneg %p246
        $region46: #{_lambda_.1} parent=11 // pred_check_branch
          %540 = sbr.rel (%p538) target = $region48
        $region47: #{_lambda_.1} parent=11 // pred_region
          _
        $region48: #{_lambda_.1} parent=11 // pred_fallthru
          _
        // Predicated region
        $region49: #{_lambda_.1} parent=11 // pred_check
          %p541 = pneg %p267
        $region50: #{_lambda_.1} parent=11 // pred_check_branch
          %543 = sbr.rel (%p541) target = $region52
        $region51: #{_lambda_.1} parent=11 // pred_region
          %s545 = ssub.s32 16, 16
          %546 = vsyncadd [#allocation20], %s545
          %s548 = sshll.u32 [#allocation21], 4
          %s549 = int_to_ptr.vmem [resolvable:$true] %s548
          %551 = dma.hbm_to_vmem [thread:$0]  %s10, 16, %s549, [#allocation20]
        $region52: #{_lambda_.1} parent=11 // pred_fallthru
          _
        // Predicated region
        $region53: #{_lambda_.1} parent=11 // pred_check
          %p552 = pneg %p288
        $region54: #{_lambda_.1} parent=11 // pred_check_branch
          %554 = sbr.rel (%p552) target = $region56
        $region55: #{_lambda_.1} parent=11 // pred_region
          _
        $region56: #{_lambda_.1} parent=11 // pred_fallthru
          _
        // Predicated region
        $region57: #{_lambda_.1} parent=11 // pred_check
          %p555 = pneg %p309
        $region58: #{_lambda_.1} parent=11 // pred_check_branch
          %557 = sbr.rel (%p555) target = $region60
        $region59: #{_lambda_.1} parent=11 // pred_region
          %s559 = ssub.s32 16, 16
          %560 = vsyncadd [#allocation23], %s559
          %s562 = sshll.u32 [#allocation22], 4
          %s563 = int_to_ptr.vmem [resolvable:$true] %s562
          %565 = dma.hbm_to_vmem [thread:$0]  %s12, 16, %s563, [#allocation23]
        $region60: #{_lambda_.1} parent=11 // pred_fallthru
          _
        // Predicated region
        $region61: #{_lambda_.1} parent=11 // pred_check
          %p566 = pneg %p330
        $region62: #{_lambda_.1} parent=11 // pred_check_branch
          %568 = sbr.rel (%p566) target = $region64
        $region63: #{_lambda_.1} parent=11 // pred_region
          %s570 = ssub.s32 224, 224
          %571 = vsyncadd [#allocation23], %s570
          %s572 = sshll.u32 [#allocation24], 4
          %s573 = int_to_ptr.vmem [resolvable:$true] %s572
          %578 = dma.hbm_to_vmem [thread:$0]  %s13, 224, %s573, [#allocation23], 32, 32, 2
        $region64: #{_lambda_.1} parent=11 // pred_fallthru
          _
        // Predicated region
        $region65: #{_lambda_.1} parent=11 // pred_check
          %p579 = pneg %p351
        $region66: #{_lambda_.1} parent=11 // pred_check_branch
          %581 = sbr.rel (%p579) target = $region68
        $region67: #{_lambda_.1} parent=11 // pred_region
          %s583 = ssub.s32 16, 16
          %584 = vsyncadd [#allocation26], %s583
          %s586 = sshll.u32 [#allocation25], 4
          %s587 = int_to_ptr.vmem [resolvable:$true] %s586
          %589 = dma.hbm_to_vmem [thread:$0]  %s14, 16, %s587, [#allocation26]
        $region68: #{_lambda_.1} parent=11 // pred_fallthru
          _
        // Predicated region
        $region69: #{_lambda_.1} parent=11 // pred_check
          %p590 = pneg %p372
        $region70: #{_lambda_.1} parent=11 // pred_check_branch
          %592 = sbr.rel (%p590) target = $region72
        $region71: #{_lambda_.1} parent=11 // pred_region
          %s594 = ssub.s32 896, 896
          %595 = vsyncadd [#allocation26], %s594
          %s596 = sshll.u32 [#allocation27], 4
          %s597 = int_to_ptr.vmem [resolvable:$true] %s596
          %602 = dma.hbm_to_vmem [thread:$0]  %s15, 896, %s597, [#allocation26], 64, 64, 4
        $region72: #{_lambda_.1} parent=11 // pred_fallthru
          _
        // Predicated region
        $region73: #{_lambda_.1} parent=11 // pred_check
          %p603 = pneg %p393
        $region74: #{_lambda_.1} parent=11 // pred_check_branch
          %605 = sbr.rel (%p603) target = $region76
        $region75: #{_lambda_.1} parent=11 // pred_region
          %s607 = ssub.s32 16, 16
          %608 = vsyncadd [#allocation29], %s607
          %s610 = sshll.u32 [#allocation28], 4
          %s611 = int_to_ptr.vmem [resolvable:$true] %s610
          %613 = dma.hbm_to_vmem [thread:$0]  %s16, 16, %s611, [#allocation29]
        $region76: #{_lambda_.1} parent=11 // pred_fallthru
          _
        // Predicated region
        $region77: #{_lambda_.1} parent=11 // pred_check
          %p614 = pneg %p414
        $region78: #{_lambda_.1} parent=11 // pred_check_branch
          %616 = sbr.rel (%p614) target = $region80
        $region79: #{_lambda_.1} parent=11 // pred_region
          _
        $region80: #{_lambda_.1} parent=11 // pred_fallthru
          _
        // Predicated region
        $region81: #{_lambda_.1} parent=11 // pred_check
          %p617 = pneg %p435
        $region82: #{_lambda_.1} parent=11 // pred_check_branch
          %619 = sbr.rel (%p617) target = $region84
        $region83: #{_lambda_.1} parent=11 // pred_region
          %s621 = ssub.s32 16, 16
          %622 = vsyncadd [#allocation29], %s621
          %s624 = sshll.u32 [#allocation30], 4
          %s625 = int_to_ptr.vmem [resolvable:$true] %s624
          %627 = dma.hbm_to_vmem [thread:$0]  %s18, 16, %s625, [#allocation29]
        $region84: #{_lambda_.1} parent=11 // pred_fallthru
          _
      $region12: #{_lambda_.1} parent=5 // pred_fallthru
        _
      %p628 = scmp.lt.s32.totalorder %s31, 2
      // Predicated region
      $region85: #{_lambda_.1} parent=5 // pred_check
        %p629 = pneg %p628
      $region86: #{_lambda_.1} parent=5 // pred_check_branch
        %631 = sbr.rel (%p629) target = $region88
      $region87: #{_lambda_.1} parent=5 // pred_region
        // Predicated region
        $region89: #{_lambda_.1} parent=87 // pred_check
          %p632 = pneg %p51
        $region90: #{_lambda_.1} parent=87 // pred_check_branch
          %634 = sbr.rel (%p632) target = $region92
        $region91: #{_lambda_.1} parent=87 // pred_region
          %p635 = scmp.lt.s32.totalorder %s31, 1
          %s636 = scalar_select %p635, %s31, 1
          %s637 = smul.addr %s636, 16
          %s638 = smul.addr %s637, 8
          %s639 = scalar_lea.vmem %s0, %s638
        $region92: #{_lambda_.1} parent=87 // pred_fallthru
          _
      $region88: #{_lambda_.1} parent=5 // pred_fallthru
        _
      %p640 = scmp.le.s32.totalorder 1, %s31
      %p641 = scmp.lt.s32.totalorder %s31, 3
      %p642 = pnand %p640, %p641
      %p643 = pneg %p642
      // Predicated region
      $region93: #{_lambda_.1} parent=5 // pred_check
        _
      $region94: #{_lambda_.1} parent=5 // pred_check_branch
        %645 = sbr.rel (%p642) target = $region96
      $region95: #{_lambda_.1} parent=5 // pred_region
        %s646 = ssub.s32 %s31, 1
        // Predicated region
        $region97: #{_lambda_.1} parent=95 // pred_check
          %p647 = pneg %p78
        $region98: #{_lambda_.1} parent=95 // pred_check_branch
          %649 = sbr.rel (%p647) target = $region100
        $region99: #{_lambda_.1} parent=95 // pred_region
          %650 = dma.done [#allocation15], 160
        $region100: #{_lambda_.1} parent=95 // pred_fallthru
          _
        // Predicated region
        $region101: #{_lambda_.1} parent=95 // pred_check
          %p651 = pneg %p120
        $region102: #{_lambda_.1} parent=95 // pred_check_branch
          %653 = sbr.rel (%p651) target = $region104
        $region103: #{_lambda_.1} parent=95 // pred_region
          %654 = dma.done [#allocation17], 640
        $region104: #{_lambda_.1} parent=95 // pred_fallthru
          _
        // Predicated region
        $region105: #{_lambda_.1} parent=95 // pred_check
          %p655 = pneg %p204
        $region106: #{_lambda_.1} parent=95 // pred_check_branch
          %657 = sbr.rel (%p655) target = $region108
        $region107: #{_lambda_.1} parent=95 // pred_region
          %658 = dma.done [#allocation17], 192
        $region108: #{_lambda_.1} parent=95 // pred_fallthru
          _
        // Predicated region
        $region109: #{_lambda_.1} parent=95 // pred_check
          %p659 = pneg %p225
        $region110: #{_lambda_.1} parent=95 // pred_check_branch
          %661 = sbr.rel (%p659) target = $region112
        $region111: #{_lambda_.1} parent=95 // pred_region
          %662 = dma.done [#allocation20], 16
        $region112: #{_lambda_.1} parent=95 // pred_fallthru
          _
        // Predicated region
        $region113: #{_lambda_.1} parent=95 // pred_check
          %p663 = pneg %p267
        $region114: #{_lambda_.1} parent=95 // pred_check_branch
          %665 = sbr.rel (%p663) target = $region116
        $region115: #{_lambda_.1} parent=95 // pred_region
          %666 = dma.done [#allocation20], 16
        $region116: #{_lambda_.1} parent=95 // pred_fallthru
          _
        // Predicated region
        $region117: #{_lambda_.1} parent=95 // pred_check
          %p667 = pneg %p309
        $region118: #{_lambda_.1} parent=95 // pred_check_branch
          %669 = sbr.rel (%p667) target = $region120
        $region119: #{_lambda_.1} parent=95 // pred_region
          %670 = dma.done [#allocation23], 16
        $region120: #{_lambda_.1} parent=95 // pred_fallthru
          _
        // Predicated region
        $region121: #{_lambda_.1} parent=95 // pred_check
          %p671 = pneg %p330
        $region122: #{_lambda_.1} parent=95 // pred_check_branch
          %673 = sbr.rel (%p671) target = $region124
        $region123: #{_lambda_.1} parent=95 // pred_region
          %674 = dma.done [#allocation23], 224
        $region124: #{_lambda_.1} parent=95 // pred_fallthru
          _
        // Predicated region
        $region125: #{_lambda_.1} parent=95 // pred_check
          %p675 = pneg %p351
        $region126: #{_lambda_.1} parent=95 // pred_check_branch
          %677 = sbr.rel (%p675) target = $region128
        $region127: #{_lambda_.1} parent=95 // pred_region
          %678 = dma.done [#allocation26], 16
        $region128: #{_lambda_.1} parent=95 // pred_fallthru
          _
        // Predicated region
        $region129: #{_lambda_.1} parent=95 // pred_check
          %p679 = pneg %p372
        $region130: #{_lambda_.1} parent=95 // pred_check_branch
          %681 = sbr.rel (%p679) target = $region132
        $region131: #{_lambda_.1} parent=95 // pred_region
          %682 = dma.done [#allocation26], 896
        $region132: #{_lambda_.1} parent=95 // pred_fallthru
          _
        // Predicated region
        $region133: #{_lambda_.1} parent=95 // pred_check
          %p683 = pneg %p393
        $region134: #{_lambda_.1} parent=95 // pred_check_branch
          %685 = sbr.rel (%p683) target = $region136
        $region135: #{_lambda_.1} parent=95 // pred_region
          %686 = dma.done [#allocation29], 16
        $region136: #{_lambda_.1} parent=95 // pred_fallthru
          _
        // Predicated region
        $region137: #{_lambda_.1} parent=95 // pred_check
          %p687 = pneg %p435
        $region138: #{_lambda_.1} parent=95 // pred_check_branch
          %689 = sbr.rel (%p687) target = $region140
        $region139: #{_lambda_.1} parent=95 // pred_region
          %690 = dma.done [#allocation29], 16
        $region140: #{_lambda_.1} parent=95 // pred_fallthru
          _
        %p691 = scmp.lt.s32.totalorder %s36, 1
        %s692 = scalar_select %p691, %s36, 1
        %s693 = smul.addr %s692, 16
        %s694 = smul.addr %s693, 8
        %s695 = scalar_lea.vmem %s0, %s694
        %p696 = pneg %p57
        %p697 = pneg %p54
        %p698 = pneg %p78
        %p699 = pneg %p75
        %p700 = pneg %p99
        %p701 = pneg %p96
        %p702 = pneg %p120
        %p703 = pneg %p117
        %p704 = pneg %p141
        %p705 = pneg %p138
        %p706 = pneg %p162
        %p707 = pneg %p159
        %p708 = pneg %p183
        %p709 = pneg %p180
        %p710 = pneg %p204
        %p711 = pneg %p201
        %p712 = pneg %p225
        %p713 = pneg %p222
        %p714 = pneg %p246
        %p715 = pneg %p243
        %p716 = pneg %p267
        %p717 = pneg %p264
        %p718 = pneg %p288
        %p719 = pneg %p285
        %p720 = pneg %p309
        %p721 = pneg %p306
        %p722 = pneg %p330
        %p723 = pneg %p327
        %p724 = pneg %p351
        %p725 = pneg %p348
        %p726 = pneg %p372
        %p727 = pneg %p369
        %p728 = pneg %p393
        %p729 = pneg %p390
        %p730 = pneg %p414
        %p731 = pneg %p411
        %p732 = pneg %p435
        %p733 = pneg %p432
        %p734 = pneg %p461
        %p735 = pneg %p458
        %p736 = scmp.lt.s32.totalorder %s36, 1
        %s737 = scalar_select %p736, %s36, 1
        %s738 = smul.addr %s737, 3
        %s739 = smul.addr %s738, 8
        %s740 = scalar_lea.vmem %s19, %s739
        %p741 = scmp.lt.s32.totalorder %s36, 1
        %s742 = scalar_select %p741, %s36, 1
        %s743 = smul.addr %s742, 16
        %s744 = smul.addr %s743, 8
        %s745 = scalar_lea.vmem %s0, %s744
        %p746 = scmp.lt.s32.totalorder %s36, 1
        %s747 = scalar_select %p746, %s36, 1
        %s748 = smul.addr %s747, 3
        %s749 = smul.addr %s748, 8
        %s750 = scalar_lea.vmem %s19, %s749
        %v752 = vld [vmem:[%s745] sm:$0xff]
        %v753 = vld [vmem:[%s745 + $0x8] sm:$0xff]
        %v754 = vld [vmem:[%s745 + $0x10] sm:$0xff]
        %v755 = vld [vmem:[%s745 + $0x18] sm:$0xff]
        %v756 = vld [vmem:[%s745 + $0x20] sm:$0xff]
        %v757 = vld [vmem:[%s745 + $0x28] sm:$0xff]
        %v758 = vld [vmem:[%s745 + $0x30] sm:$0xff]
        %v759 = vld [vmem:[%s745 + $0x38] sm:$0xff]
        %v760 = vld [vmem:[%s745 + $0x40] sm:$0xff]
        %v761 = vld [vmem:[%s745 + $0x48] sm:$0xff]
        %v762 = vld [vmem:[%s745 + $0x50] sm:$0xff]
        %v763 = vld [vmem:[%s745 + $0x58] sm:$0xff]
        %v764 = vld [vmem:[%s745 + $0x60] sm:$0xff]
        %v765 = vld [vmem:[%s745 + $0x68] sm:$0xff]
        %v766 = vld [vmem:[%s745 + $0x70] sm:$0xff]
        %v767 = vld [vmem:[%s745 + $0x78] sm:$0xf]
        %v768 = vpack.c.bf16 %v753, %v752
        %v769 = vpack.c.bf16 %v755, %v754
        %v770 = vpack.c.bf16 %v757, %v756
        %v771 = vpack.c.bf16 %v759, %v758
        %v772 = vpack.c.bf16 %v761, %v760
        %v773 = vpack.c.bf16 %v763, %v762
        %v774 = vpack.c.bf16 %v765, %v764
        %v775 = vpack.c.bf16 %v767, %v766
        %v776 = vld [vmem:[#allocation14] sm:$0x3]
        %v777 = vld [vmem:[%s745 + $0x1] sm:$0xff]
        %v778 = vld [vmem:[%s745 + $0x9] sm:$0xff]
        %v779 = vld [vmem:[%s745 + $0x11] sm:$0xff]
        %v780 = vld [vmem:[%s745 + $0x19] sm:$0xff]
        %v781 = vld [vmem:[%s745 + $0x21] sm:$0xff]
        %v782 = vld [vmem:[%s745 + $0x29] sm:$0xff]
        %v783 = vld [vmem:[%s745 + $0x31] sm:$0xff]
        %v784 = vld [vmem:[%s745 + $0x39] sm:$0xff]
        %v785 = vld [vmem:[%s745 + $0x41] sm:$0xff]
        %v786 = vld [vmem:[%s745 + $0x49] sm:$0xff]
        %v787 = vld [vmem:[%s745 + $0x51] sm:$0xff]
        %v788 = vld [vmem:[%s745 + $0x59] sm:$0xff]
        %v789 = vld [vmem:[%s745 + $0x61] sm:$0xff]
        %v790 = vld [vmem:[%s745 + $0x69] sm:$0xff]
        %v791 = vld [vmem:[%s745 + $0x71] sm:$0xff]
        %v792 = vld [vmem:[%s745 + $0x79] sm:$0xf]
        %v793 = vpack.c.bf16 %v778, %v777
        %v794 = vpack.c.bf16 %v780, %v779
        %v795 = vpack.c.bf16 %v782, %v781
        %v796 = vpack.c.bf16 %v784, %v783
        %v797 = vpack.c.bf16 %v786, %v785
        %v798 = vpack.c.bf16 %v788, %v787
        %v799 = vpack.c.bf16 %v790, %v789
        %v800 = vpack.c.bf16 %v792, %v791
        %s801 = scalar_lea.vmem [#allocation14], 2
        %v802 = vld [vmem:[%s801] sm:$0x3]
        %vm803 = vcmask 31744
        %v805 = vsel %vm803, %v793, 0
        %v808 = vsel %vm803, %v794, 0
        %v811 = vsel %vm803, %v795, 0
        %v814 = vsel %vm803, %v796, 0
        %v817 = vsel %vm803, %v797, 0
        %v820 = vsel %vm803, %v798, 0
        %v823 = vsel %vm803, %v799, 0
        %v826 = vsel %vm803, %v800, 0
        %vm828 = vcmask 1041408
        %v830 = vsel %vm828, %v802, 0
        %832 = vmatprep.subr.bf16.mxu0 0
        %833 = vmatpush1.bf16.msra.mxu0 %v830
        %834 = vmatprep.subr.bf16.mxu0 0
        %835 = vmatpush1.bf16.msra.mxu0 0
        %836 = vmatprep.subr.bf16.mxu0 0
        %837 = vmatpush1.bf16.msra.mxu0 0
        %838 = vmatprep.subr.bf16.mxu0 0
        %839 = vmatpush1.bf16.msra.mxu0 0
        %840 = vmatprep.subr.bf16.mxu0 0
        %841 = vmatpush1.bf16.msra.mxu0 0
        %842 = vmatprep.subr.bf16.mxu0 0
        %843 = vmatpush1.bf16.msra.mxu0 0
        %844 = vmatprep.subr.bf16.mxu0 0
        %845 = vmatpush1.bf16.msra.mxu0 0
        %846 = vmatprep.subr.bf16.mxu0 0
        %847 = vmatpush1.bf16.msra.mxu0 0
        %848 = vmatprep.subr.bf16.mxu0 0
        %849 = vmatpush1.bf16.msra.mxu0 0
        %850 = vmatprep.subr.bf16.mxu0 0
        %851 = vmatpush1.bf16.msra.mxu0 0
        %852 = vmatprep.subr.bf16.mxu0 0
        %853 = vmatpush1.bf16.msra.mxu0 0
        %854 = vmatprep.subr.bf16.mxu0 0
        %855 = vmatpush1.bf16.msra.mxu0 0
        %856 = vmatprep.subr.bf16.mxu0 0
        %857 = vmatpush1.bf16.msra.mxu0 0
        %858 = vmatprep.subr.bf16.mxu0 0
        %859 = vmatpush1.bf16.msra.mxu0 0
        %860 = vmatprep.subr.bf16.mxu0 0
        %861 = vmatpush1.bf16.msra.mxu0 0
        %862 = vmatprep.subr.bf16.mxu0 0
        %863 = vmatpush1.bf16.msra.mxu0 0
        %864 = vmatprep.mubr.bf16.mxu0 0
        %865 = vmatmul.mubr.bf16.gmra.mrb[0].mxu0 %v805
        %v866 = vpop.f32.mrb[0].mxu0
        %v867 = vadd.f32 0.0, %v866
        %v868 = vpop.f32.mrb[0].mxu0
        %v869 = vpop.f32.mrb[0].mxu0
        %v870 = vadd.f32 0.0, %v869
        %v871 = vpop.f32.mrb[0].mxu0
        %872 = vmatprep.mubr.bf16.mxu0 0
        %873 = vmatmul.mubr.bf16.gmra.mrb[0].mxu0 %v808
        %v874 = vpop.f32.mrb[0].mxu0
        %v875 = vadd.f32 0.0, %v874
        %v876 = vpop.f32.mrb[0].mxu0
        %v877 = vpop.f32.mrb[0].mxu0
        %v878 = vadd.f32 0.0, %v877
        %v879 = vpop.f32.mrb[0].mxu0
        %880 = vmatprep.mubr.bf16.mxu0 0
        %881 = vmatmul.mubr.bf16.gmra.mrb[0].mxu0 %v811
        %v882 = vpop.f32.mrb[0].mxu0
        %v883 = vadd.f32 0.0, %v882
        %v884 = vpop.f32.mrb[0].mxu0
        %v885 = vpop.f32.mrb[0].mxu0
        %v886 = vadd.f32 0.0, %v885
        %v887 = vpop.f32.mrb[0].mxu0
        %888 = vmatprep.mubr.bf16.mxu0 0
        %889 = vmatmul.mubr.bf16.gmra.mrb[0].mxu0 %v814
        %v890 = vpop.f32.mrb[0].mxu0
        %v891 = vadd.f32 0.0, %v890
        %v892 = vpop.f32.mrb[0].mxu0
        %v893 = vpop.f32.mrb[0].mxu0
        %v894 = vadd.f32 0.0, %v893
        %v895 = vpop.f32.mrb[0].mxu0
        %896 = vmatprep.mubr.bf16.mxu0 0
        %897 = vmatmul.mubr.bf16.gmra.mrb[0].mxu0 %v817
        %v898 = vpop.f32.mrb[0].mxu0
        %v899 = vadd.f32 0.0, %v898
        %v900 = vpop.f32.mrb[0].mxu0
        %v901 = vpop.f32.mrb[0].mxu0
        %v902 = vadd.f32 0.0, %v901
        %v903 = vpop.f32.mrb[0].mxu0
        %904 = vmatprep.mubr.bf16.mxu0 0
        %905 = vmatmul.mubr.bf16.gmra.mrb[0].mxu0 %v820
        %v906 = vpop.f32.mrb[0].mxu0
        %v907 = vadd.f32 0.0, %v906
        %v908 = vpop.f32.mrb[0].mxu0
        %v909 = vpop.f32.mrb[0].mxu0
        %v910 = vadd.f32 0.0, %v909
        %v911 = vpop.f32.mrb[0].mxu0
        %912 = vmatprep.mubr.bf16.mxu0 0
        %913 = vmatmul.mubr.bf16.gmra.mrb[0].mxu0 %v823
        %v914 = vpop.f32.mrb[0].mxu0
        %v915 = vadd.f32 0.0, %v914
        %v916 = vpop.f32.mrb[0].mxu0
        %v917 = vpop.f32.mrb[0].mxu0
        %v918 = vadd.f32 0.0, %v917
        %v919 = vpop.f32.mrb[0].mxu0
        %920 = vmatprep.mubr.bf16.mxu0 0
        %921 = vmatmul.mubr.bf16.gmra.mrb[0].mxu0 %v826
        %v922 = vpop.f32.mrb[0].mxu0
        %v923 = vadd.f32 0.0, %v922
        %v924 = vpop.f32.mrb[0].mxu0
        %v925 = vpop.f32.mrb[0].mxu0
        %v926 = vadd.f32 0.0, %v925
        %v927 = vpop.f32.mrb[0].mxu0
        %928 = vdwg.mxu0
        %v930 = vsel %vm803, %v768, 0
        %v933 = vsel %vm803, %v769, 0
        %v936 = vsel %vm803, %v770, 0
        %v939 = vsel %vm803, %v771, 0
        %v942 = vsel %vm803, %v772, 0
        %v945 = vsel %vm803, %v773, 0
        %v948 = vsel %vm803, %v774, 0
        %v951 = vsel %vm803, %v775, 0
        %v954 = vsel %vm828, %v776, 0
        %956 = vmatprep.subr.bf16.mxu0 0
        %957 = vmatpush1.bf16.msra.mxu0 %v954
        %958 = vmatprep.subr.bf16.mxu0 0
        %959 = vmatpush1.bf16.msra.mxu0 0
        %960 = vmatprep.subr.bf16.mxu0 0
        %961 = vmatpush1.bf16.msra.mxu0 0
        %962 = vmatprep.subr.bf16.mxu0 0
        %963 = vmatpush1.bf16.msra.mxu0 0
        %964 = vmatprep.subr.bf16.mxu0 0
        %965 = vmatpush1.bf16.msra.mxu0 0
        %966 = vmatprep.subr.bf16.mxu0 0
        %967 = vmatpush1.bf16.msra.mxu0 0
        %968 = vmatprep.subr.bf16.mxu0 0
        %969 = vmatpush1.bf16.msra.mxu0 0
        %970 = vmatprep.subr.bf16.mxu0 0
        %971 = vmatpush1.bf16.msra.mxu0 0
        %972 = vmatprep.subr.bf16.mxu0 0
        %973 = vmatpush1.bf16.msra.mxu0 0
        %974 = vmatprep.subr.bf16.mxu0 0
        %975 = vmatpush1.bf16.msra.mxu0 0
        %976 = vmatprep.subr.bf16.mxu0 0
        %977 = vmatpush1.bf16.msra.mxu0 0
        %978 = vmatprep.subr.bf16.mxu0 0
        %979 = vmatpush1.bf16.msra.mxu0 0
        %980 = vmatprep.subr.bf16.mxu0 0
        %981 = vmatpush1.bf16.msra.mxu0 0
        %982 = vmatprep.subr.bf16.mxu0 0
        %983 = vmatpush1.bf16.msra.mxu0 0
        %984 = vmatprep.subr.bf16.mxu0 0
        %985 = vmatpush1.bf16.msra.mxu0 0
        %986 = vmatprep.subr.bf16.mxu0 0
        %987 = vmatpush1.bf16.msra.mxu0 0
        %988 = vmatprep.mubr.bf16.mxu0 0
        %989 = vmatmul.mubr.bf16.gmra.mrb[0].mxu0 %v930
        %v990 = vpop.f32.mrb[0].mxu0
        %v991 = vadd.f32 %v867, %v990
        %v992 = vpop.f32.mrb[0].mxu0
        %v993 = vpop.f32.mrb[0].mxu0
        %v994 = vadd.f32 %v870, %v993
        %v995 = vpop.f32.mrb[0].mxu0
        %996 = vmatprep.mubr.bf16.mxu0 0
        %997 = vmatmul.mubr.bf16.gmra.mrb[0].mxu0 %v933
        %v998 = vpop.f32.mrb[0].mxu0
        %v999 = vadd.f32 %v875, %v998
        %v1000 = vpop.f32.mrb[0].mxu0
        %v1001 = vpop.f32.mrb[0].mxu0
        %v1002 = vadd.f32 %v878, %v1001
        %v1003 = vpop.f32.mrb[0].mxu0
        %1004 = vmatprep.mubr.bf16.mxu0 0
        %1005 = vmatmul.mubr.bf16.gmra.mrb[0].mxu0 %v936
        %v1006 = vpop.f32.mrb[0].mxu0
        %v1007 = vadd.f32 %v883, %v1006
        %v1008 = vpop.f32.mrb[0].mxu0
        %v1009 = vpop.f32.mrb[0].mxu0
        %v1010 = vadd.f32 %v886, %v1009
        %v1011 = vpop.f32.mrb[0].mxu0
        %1012 = vmatprep.mubr.bf16.mxu0 0
        %1013 = vmatmul.mubr.bf16.gmra.mrb[0].mxu0 %v939
        %v1014 = vpop.f32.mrb[0].mxu0
        %v1015 = vadd.f32 %v891, %v1014
        %v1016 = vpop.f32.mrb[0].mxu0
        %v1017 = vpop.f32.mrb[0].mxu0
        %v1018 = vadd.f32 %v894, %v1017
        %v1019 = vpop.f32.mrb[0].mxu0
        %1020 = vmatprep.mubr.bf16.mxu0 0
        %1021 = vmatmul.mubr.bf16.gmra.mrb[0].mxu0 %v942
        %v1022 = vpop.f32.mrb[0].mxu0
        %v1023 = vadd.f32 %v899, %v1022
        %v1024 = vpop.f32.mrb[0].mxu0
        %v1025 = vpop.f32.mrb[0].mxu0
        %v1026 = vadd.f32 %v902, %v1025
        %v1027 = vpop.f32.mrb[0].mxu0
        %1028 = vmatprep.mubr.bf16.mxu0 0
        %1029 = vmatmul.mubr.bf16.gmra.mrb[0].mxu0 %v945
        %v1030 = vpop.f32.mrb[0].mxu0
        %v1031 = vadd.f32 %v907, %v1030
        %v1032 = vpop.f32.mrb[0].mxu0
        %v1033 = vpop.f32.mrb[0].mxu0
        %v1034 = vadd.f32 %v910, %v1033
        %v1035 = vpop.f32.mrb[0].mxu0
        %1036 = vmatprep.mubr.bf16.mxu0 0
        %1037 = vmatmul.mubr.bf16.gmra.mrb[0].mxu0 %v948
        %v1038 = vpop.f32.mrb[0].mxu0
        %v1039 = vadd.f32 %v915, %v1038
        %v1040 = vpop.f32.mrb[0].mxu0
        %v1041 = vpop.f32.mrb[0].mxu0
        %v1042 = vadd.f32 %v918, %v1041
        %v1043 = vpop.f32.mrb[0].mxu0
        %1044 = vmatprep.mubr.bf16.mxu0 0
        %1045 = vmatmul.mubr.bf16.gmra.mrb[0].mxu0 %v951
        %v1046 = vpop.f32.mrb[0].mxu0
        %v1047 = vadd.f32 %v923, %v1046
        %v1048 = vpop.f32.mrb[0].mxu0
        %v1049 = vpop.f32.mrb[0].mxu0
        %v1050 = vadd.f32 %v926, %v1049
        %v1051 = vpop.f32.mrb[0].mxu0
        %1052 = vdwg.mxu0
        %v1053 = vld [vmem:[%s745 + $0x2] sm:$0xff]
        %v1054 = vld [vmem:[%s745 + $0xa] sm:$0xff]
        %v1055 = vld [vmem:[%s745 + $0x12] sm:$0xff]
        %v1056 = vld [vmem:[%s745 + $0x1a] sm:$0xff]
        %v1057 = vld [vmem:[%s745 + $0x22] sm:$0xff]
        %v1058 = vld [vmem:[%s745 + $0x2a] sm:$0xff]
        %v1059 = vld [vmem:[%s745 + $0x32] sm:$0xff]
        %v1060 = vld [vmem:[%s745 + $0x3a] sm:$0xff]
        %v1061 = vld [vmem:[%s745 + $0x42] sm:$0xff]
        %v1062 = vld [vmem:[%s745 + $0x4a] sm:$0xff]
        %v1063 = vld [vmem:[%s745 + $0x52] sm:$0xff]
        %v1064 = vld [vmem:[%s745 + $0x5a] sm:$0xff]
        %v1065 = vld [vmem:[%s745 + $0x62] sm:$0xff]
        %v1066 = vld [vmem:[%s745 + $0x6a] sm:$0xff]
        %v1067 = vld [vmem:[%s745 + $0x72] sm:$0xff]
        %v1068 = vld [vmem:[%s745 + $0x7a] sm:$0xf]
        %v1069 = vpack.c.bf16 %v1054, %v1053
        %v1070 = vpack.c.bf16 %v1056, %v1055
        %v1071 = vpack.c.bf16 %v1058, %v1057
        %v1072 = vpack.c.bf16 %v1060, %v1059
        %v1073 = vpack.c.bf16 %v1062, %v1061
        %v1074 = vpack.c.bf16 %v1064, %v1063
        %v1075 = vpack.c.bf16 %v1066, %v1065
        %v1076 = vpack.c.bf16 %v1068, %v1067
        %s1077 = scalar_lea.vmem [#allocation14], 4
        %v1078 = vld [vmem:[%s1077] sm:$0x3]
        %v1080 = vsel %vm803, %v1069, 0
        %v1083 = vsel %vm803, %v1070, 0
        %v1086 = vsel %vm803, %v1071, 0
        %v1089 = vsel %vm803, %v1072, 0
        %v1092 = vsel %vm803, %v1073, 0
        %v1095 = vsel %vm803, %v1074, 0
        %v1098 = vsel %vm803, %v1075, 0
        %v1101 = vsel %vm803, %v1076, 0
        %v1104 = vsel %vm828, %v1078, 0
        %1106 = vmatprep.subr.bf16.mxu0 0
        %1107 = vmatpush1.bf16.msra.mxu0 %v1104
        %1108 = vmatprep.subr.bf16.mxu0 0
        %1109 = vmatpush1.bf16.msra.mxu0 0
        %1110 = vmatprep.subr.bf16.mxu0 0
        %1111 = vmatpush1.bf16.msra.mxu0 0
        %1112 = vmatprep.subr.bf16.mxu0 0
        %1113 = vmatpush1.bf16.msra.mxu0 0
        %1114 = vmatprep.subr.bf16.mxu0 0
        %1115 = vmatpush1.bf16.msra.mxu0 0
        %1116 = vmatprep.subr.bf16.mxu0 0
        %1117 = vmatpush1.bf16.msra.mxu0 0
        %1118 = vmatprep.subr.bf16.mxu0 0
        %1119 = vmatpush1.bf16.msra.mxu0 0
        %1120 = vmatprep.subr.bf16.mxu0 0
        %1121 = vmatpush1.bf16.msra.mxu0 0
        %1122 = vmatprep.subr.bf16.mxu0 0
        %1123 = vmatpush1.bf16.msra.mxu0 0
        %1124 = vmatprep.subr.bf16.mxu0 0
        %1125 = vmatpush1.bf16.msra.mxu0 0
        %1126 = vmatprep.subr.bf16.mxu0 0
        %1127 = vmatpush1.bf16.msra.mxu0 0
        %1128 = vmatprep.subr.bf16.mxu0 0
        %1129 = vmatpush1.bf16.msra.mxu0 0
        %1130 = vmatprep.subr.bf16.mxu0 0
        %1131 = vmatpush1.bf16.msra.mxu0 0
        %1132 = vmatprep.subr.bf16.mxu0 0
        %1133 = vmatpush1.bf16.msra.mxu0 0
        %1134 = vmatprep.subr.bf16.mxu0 0
        %1135 = vmatpush1.bf16.msra.mxu0 0
        %1136 = vmatprep.subr.bf16.mxu0 0
        %1137 = vmatpush1.bf16.msra.mxu0 0
        %1138 = vmatprep.mubr.bf16.mxu0 0
        %1139 = vmatmul.mubr.bf16.gmra.mrb[0].mxu0 %v1080
        %v1140 = vpop.f32.mrb[0].mxu0
        %v1141 = vadd.f32 0.0, %v1140
        %v1142 = vpop.f32.mrb[0].mxu0
        %v1143 = vpop.f32.mrb[0].mxu0
        %v1144 = vadd.f32 0.0, %v1143
        %v1145 = vpop.f32.mrb[0].mxu0
        %1146 = vmatprep.mubr.bf16.mxu0 0
        %1147 = vmatmul.mubr.bf16.gmra.mrb[0].mxu0 %v1083
        %v1148 = vpop.f32.mrb[0].mxu0
        %v1149 = vadd.f32 0.0, %v1148
        %v1150 = vpop.f32.mrb[0].mxu0
        %v1151 = vpop.f32.mrb[0].mxu0
        %v1152 = vadd.f32 0.0, %v1151
        %v1153 = vpop.f32.mrb[0].mxu0
        %1154 = vmatprep.mubr.bf16.mxu0 0
        %1155 = vmatmul.mubr.bf16.gmra.mrb[0].mxu0 %v1086
        %v1156 = vpop.f32.mrb[0].mxu0
        %v1157 = vadd.f32 0.0, %v1156
        %v1158 = vpop.f32.mrb[0].mxu0
        %v1159 = vpop.f32.mrb[0].mxu0
        %v1160 = vadd.f32 0.0, %v1159
        %v1161 = vpop.f32.mrb[0].mxu0
        %1162 = vmatprep.mubr.bf16.mxu0 0
        %1163 = vmatmul.mubr.bf16.gmra.mrb[0].mxu0 %v1089
        %v1164 = vpop.f32.mrb[0].mxu0
        %v1165 = vadd.f32 0.0, %v1164
        %v1166 = vpop.f32.mrb[0].mxu0
        %v1167 = vpop.f32.mrb[0].mxu0
        %v1168 = vadd.f32 0.0, %v1167
        %v1169 = vpop.f32.mrb[0].mxu0
        %1170 = vmatprep.mubr.bf16.mxu0 0
        %1171 = vmatmul.mubr.bf16.gmra.mrb[0].mxu0 %v1092
        %v1172 = vpop.f32.mrb[0].mxu0
        %v1173 = vadd.f32 0.0, %v1172
        %v1174 = vpop.f32.mrb[0].mxu0
        %v1175 = vpop.f32.mrb[0].mxu0
        %v1176 = vadd.f32 0.0, %v1175
        %v1177 = vpop.f32.mrb[0].mxu0
        %1178 = vmatprep.mubr.bf16.mxu0 0
        %1179 = vmatmul.mubr.bf16.gmra.mrb[0].mxu0 %v1095
        %v1180 = vpop.f32.mrb[0].mxu0
        %v1181 = vadd.f32 0.0, %v1180
        %v1182 = vpop.f32.mrb[0].mxu0
        %v1183 = vpop.f32.mrb[0].mxu0
        %v1184 = vadd.f32 0.0, %v1183
        %v1185 = vpop.f32.mrb[0].mxu0
        %1186 = vmatprep.mubr.bf16.mxu0 0
        %1187 = vmatmul.mubr.bf16.gmra.mrb[0].mxu0 %v1098
        %v1188 = vpop.f32.mrb[0].mxu0
        %v1189 = vadd.f32 0.0, %v1188
        %v1190 = vpop.f32.mrb[0].mxu0
        %v1191 = vpop.f32.mrb[0].mxu0
        %v1192 = vadd.f32 0.0, %v1191
        %v1193 = vpop.f32.mrb[0].mxu0
        %1194 = vmatprep.mubr.bf16.mxu0 0
        %1195 = vmatmul.mubr.bf16.gmra.mrb[0].mxu0 %v1101
        %v1196 = vpop.f32.mrb[0].mxu0
        %v1197 = vadd.f32 0.0, %v1196
        %v1198 = vpop.f32.mrb[0].mxu0
        %v1199 = vpop.f32.mrb[0].mxu0
        %v1200 = vadd.f32 0.0, %v1199
        %v1201 = vpop.f32.mrb[0].mxu0
        %1202 = vdwg.mxu0
        %v1203 = vadd.f32 %v991, %v1141
        %v1204 = vadd.f32 %v994, %v1144
        %v1205 = vadd.f32 %v999, %v1149
        %v1206 = vadd.f32 %v1002, %v1152
        %v1207 = vadd.f32 %v1007, %v1157
        %v1208 = vadd.f32 %v1010, %v1160
        %v1209 = vadd.f32 %v1015, %v1165
        %v1210 = vadd.f32 %v1018, %v1168
        %v1211 = vadd.f32 %v1023, %v1173
        %v1212 = vadd.f32 %v1026, %v1176
        %v1213 = vadd.f32 %v1031, %v1181
        %v1214 = vadd.f32 %v1034, %v1184
        %v1215 = vadd.f32 %v1039, %v1189
        %v1216 = vadd.f32 %v1042, %v1192
        %v1217 = vadd.f32 %v1047, %v1197
        %v1218 = vadd.f32 %v1050, %v1200
        %v1219 = vld [vmem:[%s745 + $0x3] sm:$0xff]
        %v1220 = vld [vmem:[%s745 + $0xb] sm:$0xff]
        %v1221 = vld [vmem:[%s745 + $0x13] sm:$0xff]
        %v1222 = vld [vmem:[%s745 + $0x1b] sm:$0xff]
        %v1223 = vld [vmem:[%s745 + $0x23] sm:$0xff]
        %v1224 = vld [vmem:[%s745 + $0x2b] sm:$0xff]
        %v1225 = vld [vmem:[%s745 + $0x33] sm:$0xff]
        %v1226 = vld [vmem:[%s745 + $0x3b] sm:$0xff]
        %v1227 = vld [vmem:[%s745 + $0x43] sm:$0xff]
        %v1228 = vld [vmem:[%s745 + $0x4b] sm:$0xff]
        %v1229 = vld [vmem:[%s745 + $0x53] sm:$0xff]
        %v1230 = vld [vmem:[%s745 + $0x5b] sm:$0xff]
        %v1231 = vld [vmem:[%s745 + $0x63] sm:$0xff]
        %v1232 = vld [vmem:[%s745 + $0x6b] sm:$0xff]
        %v1233 = vld [vmem:[%s745 + $0x73] sm:$0xff]
        %v1234 = vld [vmem:[%s745 + $0x7b] sm:$0xf]
        %v1235 = vpack.c.bf16 %v1220, %v1219
        %v1236 = vpack.c.bf16 %v1222, %v1221
        %v1237 = vpack.c.bf16 %v1224, %v1223
        %v1238 = vpack.c.bf16 %v1226, %v1225
        %v1239 = vpack.c.bf16 %v1228, %v1227
        %v1240 = vpack.c.bf16 %v1230, %v1229
        %v1241 = vpack.c.bf16 %v1232, %v1231
        %v1242 = vpack.c.bf16 %v1234, %v1233
        %s1243 = scalar_lea.vmem [#allocation14], 6
        %v1244 = vld [vmem:[%s1243] sm:$0x3]
        %v1246 = vsel %vm803, %v1235, 0
        %v1249 = vsel %vm803, %v1236, 0
        %v1252 = vsel %vm803, %v1237, 0
        %v1255 = vsel %vm803, %v1238, 0
        %v1258 = vsel %vm803, %v1239, 0
        %v1261 = vsel %vm803, %v1240, 0
        %v1264 = vsel %vm803, %v1241, 0
        %v1267 = vsel %vm803, %v1242, 0
        %v1270 = vsel %vm828, %v1244, 0
        %1272 = vmatprep.subr.bf16.mxu0 0
        %1273 = vmatpush1.bf16.msra.mxu0 %v1270
        %1274 = vmatprep.subr.bf16.mxu0 0
        %1275 = vmatpush1.bf16.msra.mxu0 0
        %1276 = vmatprep.subr.bf16.mxu0 0
        %1277 = vmatpush1.bf16.msra.mxu0 0
        %1278 = vmatprep.subr.bf16.mxu0 0
        %1279 = vmatpush1.bf16.msra.mxu0 0
        %1280 = vmatprep.subr.bf16.mxu0 0
        %1281 = vmatpush1.bf16.msra.mxu0 0
        %1282 = vmatprep.subr.bf16.mxu0 0
        %1283 = vmatpush1.bf16.msra.mxu0 0
        %1284 = vmatprep.subr.bf16.mxu0 0
        %1285 = vmatpush1.bf16.msra.mxu0 0
        %1286 = vmatprep.subr.bf16.mxu0 0
        %1287 = vmatpush1.bf16.msra.mxu0 0
        %1288 = vmatprep.subr.bf16.mxu0 0
        %1289 = vmatpush1.bf16.msra.mxu0 0
        %1290 = vmatprep.subr.bf16.mxu0 0
        %1291 = vmatpush1.bf16.msra.mxu0 0
        %1292 = vmatprep.subr.bf16.mxu0 0
        %1293 = vmatpush1.bf16.msra.mxu0 0
        %1294 = vmatprep.subr.bf16.mxu0 0
        %1295 = vmatpush1.bf16.msra.mxu0 0
        %1296 = vmatprep.subr.bf16.mxu0 0
        %1297 = vmatpush1.bf16.msra.mxu0 0
        %1298 = vmatprep.subr.bf16.mxu0 0
        %1299 = vmatpush1.bf16.msra.mxu0 0
        %1300 = vmatprep.subr.bf16.mxu0 0
        %1301 = vmatpush1.bf16.msra.mxu0 0
        %1302 = vmatprep.subr.bf16.mxu0 0
        %1303 = vmatpush1.bf16.msra.mxu0 0
        %1304 = vmatprep.mubr.bf16.mxu0 0
        %1305 = vmatmul.mubr.bf16.gmra.mrb[0].mxu0 %v1246
        %v1306 = vpop.f32.mrb[0].mxu0
        %v1307 = vadd.f32 0.0, %v1306
        %v1308 = vpop.f32.mrb[0].mxu0
        %v1309 = vpop.f32.mrb[0].mxu0
        %v1310 = vadd.f32 0.0, %v1309
        %v1311 = vpop.f32.mrb[0].mxu0
        %1312 = vmatprep.mubr.bf16.mxu0 0
        %1313 = vmatmul.mubr.bf16.gmra.mrb[0].mxu0 %v1249
        %v1314 = vpop.f32.mrb[0].mxu0
        %v1315 = vadd.f32 0.0, %v1314
        %v1316 = vpop.f32.mrb[0].mxu0
        %v1317 = vpop.f32.mrb[0].mxu0
        %v1318 = vadd.f32 0.0, %v1317
        %v1319 = vpop.f32.mrb[0].mxu0
        %1320 = vmatprep.mubr.bf16.mxu0 0
        %1321 = vmatmul.mubr.bf16.gmra.mrb[0].mxu0 %v1252
        %v1322 = vpop.f32.mrb[0].mxu0
        %v1323 = vadd.f32 0.0, %v1322
        %v1324 = vpop.f32.mrb[0].mxu0
        %v1325 = vpop.f32.mrb[0].mxu0
        %v1326 = vadd.f32 0.0, %v1325
        %v1327 = vpop.f32.mrb[0].mxu0
        %1328 = vmatprep.mubr.bf16.mxu0 0
        %1329 = vmatmul.mubr.bf16.gmra.mrb[0].mxu0 %v1255
        %v1330 = vpop.f32.mrb[0].mxu0
        %v1331 = vadd.f32 0.0, %v1330
        %v1332 = vpop.f32.mrb[0].mxu0
        %v1333 = vpop.f32.mrb[0].mxu0
        %v1334 = vadd.f32 0.0, %v1333
        %v1335 = vpop.f32.mrb[0].mxu0
        %1336 = vmatprep.mubr.bf16.mxu0 0
        %1337 = vmatmul.mubr.bf16.gmra.mrb[0].mxu0 %v1258
        %v1338 = vpop.f32.mrb[0].mxu0
        %v1339 = vadd.f32 0.0, %v1338
        %v1340 = vpop.f32.mrb[0].mxu0
        %v1341 = vpop.f32.mrb[0].mxu0
        %v1342 = vadd.f32 0.0, %v1341
        %v1343 = vpop.f32.mrb[0].mxu0
        %1344 = vmatprep.mubr.bf16.mxu0 0
        %1345 = vmatmul.mubr.bf16.gmra.mrb[0].mxu0 %v1261
        %v1346 = vpop.f32.mrb[0].mxu0
        %v1347 = vadd.f32 0.0, %v1346
        %v1348 = vpop.f32.mrb[0].mxu0
        %v1349 = vpop.f32.mrb[0].mxu0
        %v1350 = vadd.f32 0.0, %v1349
        %v1351 = vpop.f32.mrb[0].mxu0
        %1352 = vmatprep.mubr.bf16.mxu0 0
        %1353 = vmatmul.mubr.bf16.gmra.mrb[0].mxu0 %v1264
        %v1354 = vpop.f32.mrb[0].mxu0
        %v1355 = vadd.f32 0.0, %v1354
        %v1356 = vpop.f32.mrb[0].mxu0
        %v1357 = vpop.f32.mrb[0].mxu0
        %v1358 = vadd.f32 0.0, %v1357
        %v1359 = vpop.f32.mrb[0].mxu0
        %1360 = vmatprep.mubr.bf16.mxu0 0
        %1361 = vmatmul.mubr.bf16.gmra.mrb[0].mxu0 %v1267
        %v1362 = vpop.f32.mrb[0].mxu0
        %v1363 = vadd.f32 0.0, %v1362
        %v1364 = vpop.f32.mrb[0].mxu0
        %v1365 = vpop.f32.mrb[0].mxu0
        %v1366 = vadd.f32 0.0, %v1365
        %v1367 = vpop.f32.mrb[0].mxu0
        %1368 = vdwg.mxu0
        %v1369 = vadd.f32 %v1203, %v1307
        %v1370 = vadd.f32 %v1204, %v1310
        %v1371 = vadd.f32 %v1205, %v1315
        %v1372 = vadd.f32 %v1206, %v1318
        %v1373 = vadd.f32 %v1207, %v1323
        %v1374 = vadd.f32 %v1208, %v1326
        %v1375 = vadd.f32 %v1209, %v1331
        %v1376 = vadd.f32 %v1210, %v1334
        %v1377 = vadd.f32 %v1211, %v1339
        %v1378 = vadd.f32 %v1212, %v1342
        %v1379 = vadd.f32 %v1213, %v1347
        %v1380 = vadd.f32 %v1214, %v1350
        %v1381 = vadd.f32 %v1215, %v1355
        %v1382 = vadd.f32 %v1216, %v1358
        %v1383 = vadd.f32 %v1217, %v1363
        %v1384 = vadd.f32 %v1218, %v1366
        %v1385 = vld [vmem:[%s745 + $0x4] sm:$0xff]
        %v1386 = vld [vmem:[%s745 + $0xc] sm:$0xff]
        %v1387 = vld [vmem:[%s745 + $0x14] sm:$0xff]
        %v1388 = vld [vmem:[%s745 + $0x1c] sm:$0xff]
        %v1389 = vld [vmem:[%s745 + $0x24] sm:$0xff]
        %v1390 = vld [vmem:[%s745 + $0x2c] sm:$0xff]
        %v1391 = vld [vmem:[%s745 + $0x34] sm:$0xff]
        %v1392 = vld [vmem:[%s745 + $0x3c] sm:$0xff]
        %v1393 = vld [vmem:[%s745 + $0x44] sm:$0xff]
        %v1394 = vld [vmem:[%s745 + $0x4c] sm:$0xff]
        %v1395 = vld [vmem:[%s745 + $0x54] sm:$0xff]
        %v1396 = vld [vmem:[%s745 + $0x5c] sm:$0xff]
        %v1397 = vld [vmem:[%s745 + $0x64] sm:$0xff]
        %v1398 = vld [vmem:[%s745 + $0x6c] sm:$0xff]
        %v1399 = vld [vmem:[%s745 + $0x74] sm:$0xff]
        %v1400 = vld [vmem:[%s745 + $0x7c] sm:$0xf]
        %v1401 = vpack.c.bf16 %v1386, %v1385
        %v1402 = vpack.c.bf16 %v1388, %v1387
        %v1403 = vpack.c.bf16 %v1390, %v1389
        %v1404 = vpack.c.bf16 %v1392, %v1391
        %v1405 = vpack.c.bf16 %v1394, %v1393
        %v1406 = vpack.c.bf16 %v1396, %v1395
        %v1407 = vpack.c.bf16 %v1398, %v1397
        %v1408 = vpack.c.bf16 %v1400, %v1399
        %s1409 = scalar_lea.vmem [#allocation14], 8
        %v1410 = vld [vmem:[%s1409] sm:$0x3]
        %v1412 = vsel %vm803, %v1401, 0
        %v1415 = vsel %vm803, %v1402, 0
        %v1418 = vsel %vm803, %v1403, 0
        %v1421 = vsel %vm803, %v1404, 0
        %v1424 = vsel %vm803, %v1405, 0
        %v1427 = vsel %vm803, %v1406, 0
        %v1430 = vsel %vm803, %v1407, 0
        %v1433 = vsel %vm803, %v1408, 0
        %v1436 = vsel %vm828, %v1410, 0
        %1438 = vmatprep.subr.bf16.mxu0 0
        %1439 = vmatpush1.bf16.msra.mxu0 %v1436
        %1440 = vmatprep.subr.bf16.mxu0 0
        %1441 = vmatpush1.bf16.msra.mxu0 0
        %1442 = vmatprep.subr.bf16.mxu0 0
        %1443 = vmatpush1.bf16.msra.mxu0 0
        %1444 = vmatprep.subr.bf16.mxu0 0
        %1445 = vmatpush1.bf16.msra.mxu0 0
        %1446 = vmatprep.subr.bf16.mxu0 0
        %1447 = vmatpush1.bf16.msra.mxu0 0
        %1448 = vmatprep.subr.bf16.mxu0 0
        %1449 = vmatpush1.bf16.msra.mxu0 0
        %1450 = vmatprep.subr.bf16.mxu0 0
        %1451 = vmatpush1.bf16.msra.mxu0 0
        %1452 = vmatprep.subr.bf16.mxu0 0
        %1453 = vmatpush1.bf16.msra.mxu0 0
        %1454 = vmatprep.subr.bf16.mxu0 0
        %1455 = vmatpush1.bf16.msra.mxu0 0
        %1456 = vmatprep.subr.bf16.mxu0 0
        %1457 = vmatpush1.bf16.msra.mxu0 0
        %1458 = vmatprep.subr.bf16.mxu0 0
        %1459 = vmatpush1.bf16.msra.mxu0 0
        %1460 = vmatprep.subr.bf16.mxu0 0
        %1461 = vmatpush1.bf16.msra.mxu0 0
        %1462 = vmatprep.subr.bf16.mxu0 0
        %1463 = vmatpush1.bf16.msra.mxu0 0
        %1464 = vmatprep.subr.bf16.mxu0 0
        %1465 = vmatpush1.bf16.msra.mxu0 0
        %1466 = vmatprep.subr.bf16.mxu0 0
        %1467 = vmatpush1.bf16.msra.mxu0 0
        %1468 = vmatprep.subr.bf16.mxu0 0
        %1469 = vmatpush1.bf16.msra.mxu0 0
        %1470 = vmatprep.mubr.bf16.mxu0 0
        %1471 = vmatmul.mubr.bf16.gmra.mrb[0].mxu0 %v1412
        %v1472 = vpop.f32.mrb[0].mxu0
        %v1473 = vadd.f32 0.0, %v1472
        %v1474 = vpop.f32.mrb[0].mxu0
        %v1475 = vpop.f32.mrb[0].mxu0
        %v1476 = vadd.f32 0.0, %v1475
        %v1477 = vpop.f32.mrb[0].mxu0
        %1478 = vmatprep.mubr.bf16.mxu0 0
        %1479 = vmatmul.mubr.bf16.gmra.mrb[0].mxu0 %v1415
        %v1480 = vpop.f32.mrb[0].mxu0
        %v1481 = vadd.f32 0.0, %v1480
        %v1482 = vpop.f32.mrb[0].mxu0
        %v1483 = vpop.f32.mrb[0].mxu0
        %v1484 = vadd.f32 0.0, %v1483
        %v1485 = vpop.f32.mrb[0].mxu0
        %1486 = vmatprep.mubr.bf16.mxu0 0
        %1487 = vmatmul.mubr.bf16.gmra.mrb[0].mxu0 %v1418
        %v1488 = vpop.f32.mrb[0].mxu0
        %v1489 = vadd.f32 0.0, %v1488
        %v1490 = vpop.f32.mrb[0].mxu0
        %v1491 = vpop.f32.mrb[0].mxu0
        %v1492 = vadd.f32 0.0, %v1491
        %v1493 = vpop.f32.mrb[0].mxu0
        %1494 = vmatprep.mubr.bf16.mxu0 0
        %1495 = vmatmul.mubr.bf16.gmra.mrb[0].mxu0 %v1421
        %v1496 = vpop.f32.mrb[0].mxu0
        %v1497 = vadd.f32 0.0, %v1496
        %v1498 = vpop.f32.mrb[0].mxu0
        %v1499 = vpop.f32.mrb[0].mxu0
        %v1500 = vadd.f32 0.0, %v1499
        %v1501 = vpop.f32.mrb[0].mxu0
        %1502 = vmatprep.mubr.bf16.mxu0 0
        %1503 = vmatmul.mubr.bf16.gmra.mrb[0].mxu0 %v1424
        %v1504 = vpop.f32.mrb[0].mxu0
        %v1505 = vadd.f32 0.0, %v1504
        %v1506 = vpop.f32.mrb[0].mxu0
        %v1507 = vpop.f32.mrb[0].mxu0
        %v1508 = vadd.f32 0.0, %v1507
        %v1509 = vpop.f32.mrb[0].mxu0
        %1510 = vmatprep.mubr.bf16.mxu0 0
        %1511 = vmatmul.mubr.bf16.gmra.mrb[0].mxu0 %v1427
        %v1512 = vpop.f32.mrb[0].mxu0
        %v1513 = vadd.f32 0.0, %v1512
        %v1514 = vpop.f32.mrb[0].mxu0
        %v1515 = vpop.f32.mrb[0].mxu0
        %v1516 = vadd.f32 0.0, %v1515
        %v1517 = vpop.f32.mrb[0].mxu0
        %1518 = vmatprep.mubr.bf16.mxu0 0
        %1519 = vmatmul.mubr.bf16.gmra.mrb[0].mxu0 %v1430
        %v1520 = vpop.f32.mrb[0].mxu0
        %v1521 = vadd.f32 0.0, %v1520
        %v1522 = vpop.f32.mrb[0].mxu0
        %v1523 = vpop.f32.mrb[0].mxu0
        %v1524 = vadd.f32 0.0, %v1523
        %v1525 = vpop.f32.mrb[0].mxu0
        %1526 = vmatprep.mubr.bf16.mxu0 0
        %1527 = vmatmul.mubr.bf16.gmra.mrb[0].mxu0 %v1433
        %v1528 = vpop.f32.mrb[0].mxu0
        %v1529 = vadd.f32 0.0, %v1528
        %v1530 = vpop.f32.mrb[0].mxu0
        %v1531 = vpop.f32.mrb[0].mxu0
        %v1532 = vadd.f32 0.0, %v1531
        %v1533 = vpop.f32.mrb[0].mxu0
        %1534 = vdwg.mxu0
        %v1535 = vadd.f32 %v1369, %v1473
        %v1536 = vadd.f32 %v1370, %v1476
        %v1537 = vadd.f32 %v1371, %v1481
        %v1538 = vadd.f32 %v1372, %v1484
        %v1539 = vadd.f32 %v1373, %v1489
        %v1540 = vadd.f32 %v1374, %v1492
        %v1541 = vadd.f32 %v1375, %v1497
        %v1542 = vadd.f32 %v1376, %v1500
        %v1543 = vadd.f32 %v1377, %v1505
        %v1544 = vadd.f32 %v1378, %v1508
        %v1545 = vadd.f32 %v1379, %v1513
        %v1546 = vadd.f32 %v1380, %v1516
        %v1547 = vadd.f32 %v1381, %v1521
        %v1548 = vadd.f32 %v1382, %v1524
        %v1549 = vadd.f32 %v1383, %v1529
        %v1550 = vadd.f32 %v1384, %v1532
        %vm1551 = vcmask 130048
        %1552 = vst.msk [vmem:[#allocation2] sm:$0xff] %vm1551, %v1535
        %1553 = vst.msk [vmem:[#allocation2 + $0x8] sm:$0xff] %vm1551, %v1536
        %1554 = vst.msk [vmem:[#allocation2 + $0x10] sm:$0xff] %vm1551, %v1537
        %1555 = vst.msk [vmem:[#allocation2 + $0x18] sm:$0xff] %vm1551, %v1538
        %1556 = vst.msk [vmem:[#allocation2 + $0x20] sm:$0xff] %vm1551, %v1539
        %1557 = vst.msk [vmem:[#allocation2 + $0x28] sm:$0xff] %vm1551, %v1540
        %1558 = vst.msk [vmem:[#allocation2 + $0x30] sm:$0xff] %vm1551, %v1541
        %1559 = vst.msk [vmem:[#allocation2 + $0x38] sm:$0xff] %vm1551, %v1542
        %1560 = vst.msk [vmem:[#allocation2 + $0x40] sm:$0xff] %vm1551, %v1543
        %1561 = vst.msk [vmem:[#allocation2 + $0x48] sm:$0xff] %vm1551, %v1544
        %1562 = vst.msk [vmem:[#allocation2 + $0x50] sm:$0xff] %vm1551, %v1545
        %1563 = vst.msk [vmem:[#allocation2 + $0x58] sm:$0xff] %vm1551, %v1546
        %1564 = vst.msk [vmem:[#allocation2 + $0x60] sm:$0xff] %vm1551, %v1547
        %1565 = vst.msk [vmem:[#allocation2 + $0x68] sm:$0xff] %vm1551, %v1548
        %1566 = vst.msk [vmem:[#allocation2 + $0x70] sm:$0xff] %vm1551, %v1549
        %vm1567 = vcmask 125952
        %1568 = vst.msk [vmem:[#allocation2 + $0x78] sm:$0xf] %vm1567, %v1550
        %v1569 = vld [vmem:[#allocation2] ss:$2 sm:$0xff]
        %s1570 = scalar_lea.vmem [#allocation2], 16
        %v1571 = vld [vmem:[%s1570] ss:$2 sm:$0xff]
        %s1572 = scalar_lea.vmem [#allocation2], 32
        %v1573 = vld [vmem:[%s1572] ss:$2 sm:$0xff]
        %s1574 = scalar_lea.vmem [#allocation2], 48
        %v1575 = vld [vmem:[%s1574] ss:$2 sm:$0xff]
        %s1576 = scalar_lea.vmem [#allocation2], 64
        %v1577 = vld [vmem:[%s1576] ss:$2 sm:$0xff]
        %s1578 = scalar_lea.vmem [#allocation2], 80
        %v1579 = vld [vmem:[%s1578] ss:$2 sm:$0xff]
        %s1580 = scalar_lea.vmem [#allocation2], 96
        %v1581 = vld [vmem:[%s1580] ss:$2 sm:$0xff]
        %s1582 = scalar_lea.vmem [#allocation2], 112
        %v1583 = vld [vmem:[%s1582] ss:$2 sm:$0x3f]
        %s1584 = scalar_lea.vmem [#allocation2], 1
        %v1585 = vld [vmem:[%s1584] ss:$2 sm:$0xff]
        %s1586 = scalar_lea.vmem [#allocation2], 17
        %v1587 = vld [vmem:[%s1586] ss:$2 sm:$0xff]
        %s1588 = scalar_lea.vmem [#allocation2], 33
        %v1589 = vld [vmem:[%s1588] ss:$2 sm:$0xff]
        %s1590 = scalar_lea.vmem [#allocation2], 49
        %v1591 = vld [vmem:[%s1590] ss:$2 sm:$0xff]
        %s1592 = scalar_lea.vmem [#allocation2], 65
        %v1593 = vld [vmem:[%s1592] ss:$2 sm:$0xff]
        %s1594 = scalar_lea.vmem [#allocation2], 81
        %v1595 = vld [vmem:[%s1594] ss:$2 sm:$0xff]
        %s1596 = scalar_lea.vmem [#allocation2], 97
        %v1597 = vld [vmem:[%s1596] ss:$2 sm:$0xff]
        %s1598 = scalar_lea.vmem [#allocation2], 113
        %v1599 = vld [vmem:[%s1598] ss:$2 sm:$0x3f]
        %v1600 = vmax.f32 %v1569, %v1585
        %v1601 = vmax.f32 %v1571, %v1587
        %v1602 = vmax.f32 %v1573, %v1589
        %v1603 = vmax.f32 %v1575, %v1591
        %v1604 = vmax.f32 %v1577, %v1593
        %v1605 = vmax.f32 %v1579, %v1595
        %v1606 = vmax.f32 %v1581, %v1597
        %v1607 = vmax.f32 %v1583, %v1599
        %v1608 = vld [vmem:[%s2] sm:$0x1]
        %v1610 = vlaneseq
        %v1611 = vshrl.u32 %v1610, 7
        %v1612 = vsub.s32 0, %v1611
        %v1613 = vrot.slane %v1608, %v1612
        %v1615 = vadd.f32 %v1600, %v1613
        %v1616 = vadd.f32 %v1601, %v1613
        %v1617 = vadd.f32 %v1602, %v1613
        %v1618 = vadd.f32 %v1603, %v1613
        %v1619 = vadd.f32 %v1604, %v1613
        %v1620 = vadd.f32 %v1605, %v1613
        %v1621 = vadd.f32 %v1606, %v1613
        %v1622 = vadd.f32 %v1607, %v1613
        %v1623 = vmax.f32 %v1615, 0.0
        %v1624 = vmax.f32 %v1616, 0.0
        %v1625 = vmax.f32 %v1617, 0.0
        %v1626 = vmax.f32 %v1618, 0.0
        %v1627 = vmax.f32 %v1619, 0.0
        %v1628 = vmax.f32 %v1620, 0.0
        %v1629 = vmax.f32 %v1621, 0.0
        %v1630 = vmax.f32 %v1622, 0.0
        %1631 = vst.msk [vmem:[#allocation3] sm:$0xff] %vm1551, %v1623
        %1632 = vst.msk [vmem:[#allocation3 + $0x8] sm:$0xff] %vm1551, %v1624
        %1633 = vst.msk [vmem:[#allocation3 + $0x10] sm:$0xff] %vm1551, %v1625
        %1634 = vst.msk [vmem:[#allocation3 + $0x18] sm:$0xff] %vm1551, %v1626
        %1635 = vst.msk [vmem:[#allocation3 + $0x20] sm:$0xff] %vm1551, %v1627
        %1636 = vst.msk [vmem:[#allocation3 + $0x28] sm:$0xff] %vm1551, %v1628
        %1637 = vst.msk [vmem:[#allocation3 + $0x30] sm:$0xff] %vm1551, %v1629
        %vm1638 = vcmask 128000
        %1639 = vst.msk [vmem:[#allocation3 + $0x38] sm:$0x3f] %vm1638, %v1630
        %v1640 = vld [vmem:[#allocation3] sm:$0xff]
        %v1641 = vld [vmem:[#allocation3 + $0x8] sm:$0xff]
        %v1642 = vld [vmem:[#allocation3 + $0x10] sm:$0xff]
        %v1643 = vld [vmem:[#allocation3 + $0x18] sm:$0xff]
        %v1644 = vld [vmem:[#allocation3 + $0x20] sm:$0xff]
        %v1645 = vld [vmem:[#allocation3 + $0x28] sm:$0xff]
        %v1646 = vld [vmem:[#allocation3 + $0x30] sm:$0xff]
        %v1647 = vld [vmem:[#allocation3 + $0x38] sm:$0x3]
        %v1648 = vpack.c.bf16 %v1641, %v1640
        %v1649 = vpack.c.bf16 %v1643, %v1642
        %v1650 = vpack.c.bf16 %v1645, %v1644
        %v1651 = vpack.c.bf16 %v1647, %v1646
        %v1652 = vld [vmem:[#allocation16] sm:$0xf]
        %v1653 = vld [vmem:[#allocation16 + $0x4] sm:$0xf]
        %v1654 = vld [vmem:[#allocation3 + $0x1] sm:$0xff]
        %v1655 = vld [vmem:[#allocation3 + $0x9] sm:$0xff]
        %v1656 = vld [vmem:[#allocation3 + $0x11] sm:$0xff]
        %v1657 = vld [vmem:[#allocation3 + $0x19] sm:$0xff]
        %v1658 = vld [vmem:[#allocation3 + $0x21] sm:$0xff]
        %v1659 = vld [vmem:[#allocation3 + $0x29] sm:$0xff]
        %v1660 = vld [vmem:[#allocation3 + $0x31] sm:$0xff]
        %v1661 = vld [vmem:[#allocation3 + $0x39] sm:$0x3]
        %v1662 = vpack.c.bf16 %v1655, %v1654
        %v1663 = vpack.c.bf16 %v1657, %v1656
        %v1664 = vpack.c.bf16 %v1659, %v1658
        %v1665 = vpack.c.bf16 %v1661, %v1660
        %s1666 = scalar_lea.vmem [#allocation16], 8
        %v1667 = vld [vmem:[%s1666] sm:$0xf]
        %v1668 = vld [vmem:[%s1666 + $0x4] sm:$0xf]
        %v1671 = vunpack.c.l.b16 %v1667
        %v1672 = vunpack.c.l.b16 %v1668
        %v1673 = vpack.c.b16 %v1672, %v1671
        %v1676 = vsel %vm1551, %v1662, 0
        %v1679 = vsel %vm1551, %v1663, 0
        %v1682 = vsel %vm1551, %v1664, 0
        %v1685 = vsel %vm1551, %v1665, 0
        %1687 = vmatprep.subr.bf16.mxu0 0
        %1688 = vmatpush1.bf16.msra.mxu0 %v1673
        %1689 = vmatprep.subr.bf16.mxu0 0
        %1690 = vmatpush1.bf16.msra.mxu0 0
        %1691 = vmatprep.subr.bf16.mxu0 0
        %1692 = vmatpush1.bf16.msra.mxu0 0
        %1693 = vmatprep.subr.bf16.mxu0 0
        %1694 = vmatpush1.bf16.msra.mxu0 0
        %1695 = vmatprep.subr.bf16.mxu0 0
        %1696 = vmatpush1.bf16.msra.mxu0 0
        %1697 = vmatprep.subr.bf16.mxu0 0
        %1698 = vmatpush1.bf16.msra.mxu0 0
        %1699 = vmatprep.subr.bf16.mxu0 0
        %1700 = vmatpush1.bf16.msra.mxu0 0
        %1701 = vmatprep.subr.bf16.mxu0 0
        %1702 = vmatpush1.bf16.msra.mxu0 0
        %1703 = vmatprep.subr.bf16.mxu0 0
        %1704 = vmatpush1.bf16.msra.mxu0 0
        %1705 = vmatprep.subr.bf16.mxu0 0
        %1706 = vmatpush1.bf16.msra.mxu0 0
        %1707 = vmatprep.subr.bf16.mxu0 0
        %1708 = vmatpush1.bf16.msra.mxu0 0
        %1709 = vmatprep.subr.bf16.mxu0 0
        %1710 = vmatpush1.bf16.msra.mxu0 0
        %1711 = vmatprep.subr.bf16.mxu0 0
        %1712 = vmatpush1.bf16.msra.mxu0 0
        %1713 = vmatprep.subr.bf16.mxu0 0
        %1714 = vmatpush1.bf16.msra.mxu0 0
        %1715 = vmatprep.subr.bf16.mxu0 0
        %1716 = vmatpush1.bf16.msra.mxu0 0
        %1717 = vmatprep.subr.bf16.mxu0 0
        %1718 = vmatpush1.bf16.msra.mxu0 0
        %1719 = vmatprep.mubr.bf16.mxu0 0
        %1720 = vmatmul.mubr.bf16.gmra.mrb[0].mxu0 %v1676
        %v1721 = vpop.f32.mrb[0].mxu0
        %v1722 = vadd.f32 0.0, %v1721
        %v1723 = vpop.f32.mrb[0].mxu0
        %v1724 = vpop.f32.mrb[0].mxu0
        %v1725 = vadd.f32 0.0, %v1724
        %v1726 = vpop.f32.mrb[0].mxu0
        %1727 = vmatprep.mubr.bf16.mxu0 0
        %1728 = vmatmul.mubr.bf16.gmra.mrb[0].mxu0 %v1679
        %v1729 = vpop.f32.mrb[0].mxu0
        %v1730 = vadd.f32 0.0, %v1729
        %v1731 = vpop.f32.mrb[0].mxu0
        %v1732 = vpop.f32.mrb[0].mxu0
        %v1733 = vadd.f32 0.0, %v1732
        %v1734 = vpop.f32.mrb[0].mxu0
        %1735 = vmatprep.mubr.bf16.mxu0 0
        %1736 = vmatmul.mubr.bf16.gmra.mrb[0].mxu0 %v1682
        %v1737 = vpop.f32.mrb[0].mxu0
        %v1738 = vadd.f32 0.0, %v1737
        %v1739 = vpop.f32.mrb[0].mxu0
        %v1740 = vpop.f32.mrb[0].mxu0
        %v1741 = vadd.f32 0.0, %v1740
        %v1742 = vpop.f32.mrb[0].mxu0
        %1743 = vmatprep.mubr.bf16.mxu0 0
        %1744 = vmatmul.mubr.bf16.gmra.mrb[0].mxu0 %v1685
        %v1745 = vpop.f32.mrb[0].mxu0
        %v1746 = vadd.f32 0.0, %v1745
        %v1747 = vpop.f32.mrb[0].mxu0
        %v1748 = vpop.f32.mrb[0].mxu0
        %v1749 = vadd.f32 0.0, %v1748
        %v1750 = vpop.f32.mrb[0].mxu0
        %1751 = vdwg.mxu0
        %v1754 = vunpack.c.l.b16 %v1652
        %v1755 = vunpack.c.l.b16 %v1653
        %v1756 = vpack.c.b16 %v1755, %v1754
        %v1759 = vsel %vm1551, %v1648, 0
        %v1762 = vsel %vm1551, %v1649, 0
        %v1765 = vsel %vm1551, %v1650, 0
        %v1768 = vsel %vm1551, %v1651, 0
        %1770 = vmatprep.subr.bf16.mxu0 0
        %1771 = vmatpush1.bf16.msra.mxu0 %v1756
        %1772 = vmatprep.subr.bf16.mxu0 0
        %1773 = vmatpush1.bf16.msra.mxu0 0
        %1774 = vmatprep.subr.bf16.mxu0 0
        %1775 = vmatpush1.bf16.msra.mxu0 0
        %1776 = vmatprep.subr.bf16.mxu0 0
        %1777 = vmatpush1.bf16.msra.mxu0 0
        %1778 = vmatprep.subr.bf16.mxu0 0
        %1779 = vmatpush1.bf16.msra.mxu0 0
        %1780 = vmatprep.subr.bf16.mxu0 0
        %1781 = vmatpush1.bf16.msra.mxu0 0
        %1782 = vmatprep.subr.bf16.mxu0 0
        %1783 = vmatpush1.bf16.msra.mxu0 0
        %1784 = vmatprep.subr.bf16.mxu0 0
        %1785 = vmatpush1.bf16.msra.mxu0 0
        %1786 = vmatprep.subr.bf16.mxu0 0
        %1787 = vmatpush1.bf16.msra.mxu0 0
        %1788 = vmatprep.subr.bf16.mxu0 0
        %1789 = vmatpush1.bf16.msra.mxu0 0
        %1790 = vmatprep.subr.bf16.mxu0 0
        %1791 = vmatpush1.bf16.msra.mxu0 0
        %1792 = vmatprep.subr.bf16.mxu0 0
        %1793 = vmatpush1.bf16.msra.mxu0 0
        %1794 = vmatprep.subr.bf16.mxu0 0
        %1795 = vmatpush1.bf16.msra.mxu0 0
        %1796 = vmatprep.subr.bf16.mxu0 0
        %1797 = vmatpush1.bf16.msra.mxu0 0
        %1798 = vmatprep.subr.bf16.mxu0 0
        %1799 = vmatpush1.bf16.msra.mxu0 0
        %1800 = vmatprep.subr.bf16.mxu0 0
        %1801 = vmatpush1.bf16.msra.mxu0 0
        %1802 = vmatprep.mubr.bf16.mxu0 0
        %1803 = vmatmul.mubr.bf16.gmra.mrb[0].mxu0 %v1759
        %v1804 = vpop.f32.mrb[0].mxu0
        %v1805 = vadd.f32 %v1722, %v1804
        %v1806 = vpop.f32.mrb[0].mxu0
        %v1807 = vpop.f32.mrb[0].mxu0
        %v1808 = vadd.f32 %v1725, %v1807
        %v1809 = vpop.f32.mrb[0].mxu0
        %1810 = vmatprep.mubr.bf16.mxu0 0
        %1811 = vmatmul.mubr.bf16.gmra.mrb[0].mxu0 %v1762
        %v1812 = vpop.f32.mrb[0].mxu0
        %v1813 = vadd.f32 %v1730, %v1812
        %v1814 = vpop.f32.mrb[0].mxu0
        %v1815 = vpop.f32.mrb[0].mxu0
        %v1816 = vadd.f32 %v1733, %v1815
        %v1817 = vpop.f32.mrb[0].mxu0
        %1818 = vmatprep.mubr.bf16.mxu0 0
        %1819 = vmatmul.mubr.bf16.gmra.mrb[0].mxu0 %v1765
        %v1820 = vpop.f32.mrb[0].mxu0
        %v1821 = vadd.f32 %v1738, %v1820
        %v1822 = vpop.f32.mrb[0].mxu0
        %v1823 = vpop.f32.mrb[0].mxu0
        %v1824 = vadd.f32 %v1741, %v1823
        %v1825 = vpop.f32.mrb[0].mxu0
        %1826 = vmatprep.mubr.bf16.mxu0 0
        %1827 = vmatmul.mubr.bf16.gmra.mrb[0].mxu0 %v1768
        %v1828 = vpop.f32.mrb[0].mxu0
        %v1829 = vadd.f32 %v1746, %v1828
        %v1830 = vpop.f32.mrb[0].mxu0
        %v1831 = vpop.f32.mrb[0].mxu0
        %v1832 = vadd.f32 %v1749, %v1831
        %v1833 = vpop.f32.mrb[0].mxu0
        %1834 = vdwg.mxu0
        %v1835 = vld [vmem:[#allocation3 + $0x2] sm:$0xff]
        %v1836 = vld [vmem:[#allocation3 + $0xa] sm:$0xff]
        %v1837 = vld [vmem:[#allocation3 + $0x12] sm:$0xff]
        %v1838 = vld [vmem:[#allocation3 + $0x1a] sm:$0xff]
        %v1839 = vld [vmem:[#allocation3 + $0x22] sm:$0xff]
        %v1840 = vld [vmem:[#allocation3 + $0x2a] sm:$0xff]
        %v1841 = vld [vmem:[#allocation3 + $0x32] sm:$0xff]
        %v1842 = vld [vmem:[#allocation3 + $0x3a] sm:$0x3]
        %v1843 = vpack.c.bf16 %v1836, %v1835
        %v1844 = vpack.c.bf16 %v1838, %v1837
        %v1845 = vpack.c.bf16 %v1840, %v1839
        %v1846 = vpack.c.bf16 %v1842, %v1841
        %s1847 = scalar_lea.vmem [#allocation16], 16
        %v1848 = vld [vmem:[%s1847] sm:$0xf]
        %v1849 = vld [vmem:[%s1847 + $0x4] sm:$0xf]
        %v1852 = vunpack.c.l.b16 %v1848
        %v1853 = vunpack.c.l.b16 %v1849
        %v1854 = vpack.c.b16 %v1853, %v1852
        %v1857 = vsel %vm1551, %v1843, 0
        %v1860 = vsel %vm1551, %v1844, 0
        %v1863 = vsel %vm1551, %v1845, 0
        %v1866 = vsel %vm1551, %v1846, 0
        %1868 = vmatprep.subr.bf16.mxu0 0
        %1869 = vmatpush1.bf16.msra.mxu0 %v1854
        %1870 = vmatprep.subr.bf16.mxu0 0
        %1871 = vmatpush1.bf16.msra.mxu0 0
        %1872 = vmatprep.subr.bf16.mxu0 0
        %1873 = vmatpush1.bf16.msra.mxu0 0
        %1874 = vmatprep.subr.bf16.mxu0 0
        %1875 = vmatpush1.bf16.msra.mxu0 0
        %1876 = vmatprep.subr.bf16.mxu0 0
        %1877 = vmatpush1.bf16.msra.mxu0 0
        %1878 = vmatprep.subr.bf16.mxu0 0
        %1879 = vmatpush1.bf16.msra.mxu0 0
        %1880 = vmatprep.subr.bf16.mxu0 0
        %1881 = vmatpush1.bf16.msra.mxu0 0
        %1882 = vmatprep.subr.bf16.mxu0 0
        %1883 = vmatpush1.bf16.msra.mxu0 0
        %1884 = vmatprep.subr.bf16.mxu0 0
        %1885 = vmatpush1.bf16.msra.mxu0 0
        %1886 = vmatprep.subr.bf16.mxu0 0
        %1887 = vmatpush1.bf16.msra.mxu0 0
        %1888 = vmatprep.subr.bf16.mxu0 0
        %1889 = vmatpush1.bf16.msra.mxu0 0
        %1890 = vmatprep.subr.bf16.mxu0 0
        %1891 = vmatpush1.bf16.msra.mxu0 0
        %1892 = vmatprep.subr.bf16.mxu0 0
        %1893 = vmatpush1.bf16.msra.mxu0 0
        %1894 = vmatprep.subr.bf16.mxu0 0
        %1895 = vmatpush1.bf16.msra.mxu0 0
        %1896 = vmatprep.subr.bf16.mxu0 0
        %1897 = vmatpush1.bf16.msra.mxu0 0
        %1898 = vmatprep.subr.bf16.mxu0 0
        %1899 = vmatpush1.bf16.msra.mxu0 0
        %1900 = vmatprep.mubr.bf16.mxu0 0
        %1901 = vmatmul.mubr.bf16.gmra.mrb[0].mxu0 %v1857
        %v1902 = vpop.f32.mrb[0].mxu0
        %v1903 = vadd.f32 0.0, %v1902
        %v1904 = vpop.f32.mrb[0].mxu0
        %v1905 = vpop.f32.mrb[0].mxu0
        %v1906 = vadd.f32 0.0, %v1905
        %v1907 = vpop.f32.mrb[0].mxu0
        %1908 = vmatprep.mubr.bf16.mxu0 0
        %1909 = vmatmul.mubr.bf16.gmra.mrb[0].mxu0 %v1860
        %v1910 = vpop.f32.mrb[0].mxu0
        %v1911 = vadd.f32 0.0, %v1910
        %v1912 = vpop.f32.mrb[0].mxu0
        %v1913 = vpop.f32.mrb[0].mxu0
        %v1914 = vadd.f32 0.0, %v1913
        %v1915 = vpop.f32.mrb[0].mxu0
        %1916 = vmatprep.mubr.bf16.mxu0 0
        %1917 = vmatmul.mubr.bf16.gmra.mrb[0].mxu0 %v1863
        %v1918 = vpop.f32.mrb[0].mxu0
        %v1919 = vadd.f32 0.0, %v1918
        %v1920 = vpop.f32.mrb[0].mxu0
        %v1921 = vpop.f32.mrb[0].mxu0
        %v1922 = vadd.f32 0.0, %v1921
        %v1923 = vpop.f32.mrb[0].mxu0
        %1924 = vmatprep.mubr.bf16.mxu0 0
        %1925 = vmatmul.mubr.bf16.gmra.mrb[0].mxu0 %v1866
        %v1926 = vpop.f32.mrb[0].mxu0
        %v1927 = vadd.f32 0.0, %v1926
        %v1928 = vpop.f32.mrb[0].mxu0
        %v1929 = vpop.f32.mrb[0].mxu0
        %v1930 = vadd.f32 0.0, %v1929
        %v1931 = vpop.f32.mrb[0].mxu0
        %1932 = vdwg.mxu0
        %v1933 = vadd.f32 %v1805, %v1903
        %v1934 = vadd.f32 %v1808, %v1906
        %v1935 = vadd.f32 %v1813, %v1911
        %v1936 = vadd.f32 %v1816, %v1914
        %v1937 = vadd.f32 %v1821, %v1919
        %v1938 = vadd.f32 %v1824, %v1922
        %v1939 = vadd.f32 %v1829, %v1927
        %v1940 = vadd.f32 %v1832, %v1930
        %v1941 = vld [vmem:[#allocation3 + $0x3] sm:$0xff]
        %v1942 = vld [vmem:[#allocation3 + $0xb] sm:$0xff]
        %v1943 = vld [vmem:[#allocation3 + $0x13] sm:$0xff]
        %v1944 = vld [vmem:[#allocation3 + $0x1b] sm:$0xff]
        %v1945 = vld [vmem:[#allocation3 + $0x23] sm:$0xff]
        %v1946 = vld [vmem:[#allocation3 + $0x2b] sm:$0xff]
        %v1947 = vld [vmem:[#allocation3 + $0x33] sm:$0xff]
        %v1948 = vld [vmem:[#allocation3 + $0x3b] sm:$0x3]
        %v1949 = vpack.c.bf16 %v1942, %v1941
        %v1950 = vpack.c.bf16 %v1944, %v1943
        %v1951 = vpack.c.bf16 %v1946, %v1945
        %v1952 = vpack.c.bf16 %v1948, %v1947
        %s1953 = scalar_lea.vmem [#allocation16], 24
        %v1954 = vld [vmem:[%s1953] sm:$0xf]
        %v1955 = vld [vmem:[%s1953 + $0x4] sm:$0xf]
        %v1958 = vunpack.c.l.b16 %v1954
        %v1959 = vunpack.c.l.b16 %v1955
        %v1960 = vpack.c.b16 %v1959, %v1958
        %v1963 = vsel %vm1551, %v1949, 0
        %v1966 = vsel %vm1551, %v1950, 0
        %v1969 = vsel %vm1551, %v1951, 0
        %v1972 = vsel %vm1551, %v1952, 0
        %1974 = vmatprep.subr.bf16.mxu0 0
        %1975 = vmatpush1.bf16.msra.mxu0 %v1960
        %1976 = vmatprep.subr.bf16.mxu0 0
        %1977 = vmatpush1.bf16.msra.mxu0 0
        %1978 = vmatprep.subr.bf16.mxu0 0
        %1979 = vmatpush1.bf16.msra.mxu0 0
        %1980 = vmatprep.subr.bf16.mxu0 0
        %1981 = vmatpush1.bf16.msra.mxu0 0
        %1982 = vmatprep.subr.bf16.mxu0 0
        %1983 = vmatpush1.bf16.msra.mxu0 0
        %1984 = vmatprep.subr.bf16.mxu0 0
        %1985 = vmatpush1.bf16.msra.mxu0 0
        %1986 = vmatprep.subr.bf16.mxu0 0
        %1987 = vmatpush1.bf16.msra.mxu0 0
        %1988 = vmatprep.subr.bf16.mxu0 0
        %1989 = vmatpush1.bf16.msra.mxu0 0
        %1990 = vmatprep.subr.bf16.mxu0 0
        %1991 = vmatpush1.bf16.msra.mxu0 0
        %1992 = vmatprep.subr.bf16.mxu0 0
        %1993 = vmatpush1.bf16.msra.mxu0 0
        %1994 = vmatprep.subr.bf16.mxu0 0
        %1995 = vmatpush1.bf16.msra.mxu0 0
        %1996 = vmatprep.subr.bf16.mxu0 0
        %1997 = vmatpush1.bf16.msra.mxu0 0
        %1998 = vmatprep.subr.bf16.mxu0 0
        %1999 = vmatpush1.bf16.msra.mxu0 0
        %2000 = vmatprep.subr.bf16.mxu0 0
        %2001 = vmatpush1.bf16.msra.mxu0 0
        %2002 = vmatprep.subr.bf16.mxu0 0
        %2003 = vmatpush1.bf16.msra.mxu0 0
        %2004 = vmatprep.subr.bf16.mxu0 0
        %2005 = vmatpush1.bf16.msra.mxu0 0
        %2006 = vmatprep.mubr.bf16.mxu0 0
        %2007 = vmatmul.mubr.bf16.gmra.mrb[0].mxu0 %v1963
        %v2008 = vpop.f32.mrb[0].mxu0
        %v2009 = vadd.f32 0.0, %v2008
        %v2010 = vpop.f32.mrb[0].mxu0
        %v2011 = vpop.f32.mrb[0].mxu0
        %v2012 = vadd.f32 0.0, %v2011
        %v2013 = vpop.f32.mrb[0].mxu0
        %2014 = vmatprep.mubr.bf16.mxu0 0
        %2015 = vmatmul.mubr.bf16.gmra.mrb[0].mxu0 %v1966
        %v2016 = vpop.f32.mrb[0].mxu0
        %v2017 = vadd.f32 0.0, %v2016
        %v2018 = vpop.f32.mrb[0].mxu0
        %v2019 = vpop.f32.mrb[0].mxu0
        %v2020 = vadd.f32 0.0, %v2019
        %v2021 = vpop.f32.mrb[0].mxu0
        %2022 = vmatprep.mubr.bf16.mxu0 0
        %2023 = vmatmul.mubr.bf16.gmra.mrb[0].mxu0 %v1969
        %v2024 = vpop.f32.mrb[0].mxu0
        %v2025 = vadd.f32 0.0, %v2024
        %v2026 = vpop.f32.mrb[0].mxu0
        %v2027 = vpop.f32.mrb[0].mxu0
        %v2028 = vadd.f32 0.0, %v2027
        %v2029 = vpop.f32.mrb[0].mxu0
        %2030 = vmatprep.mubr.bf16.mxu0 0
        %2031 = vmatmul.mubr.bf16.gmra.mrb[0].mxu0 %v1972
        %v2032 = vpop.f32.mrb[0].mxu0
        %v2033 = vadd.f32 0.0, %v2032
        %v2034 = vpop.f32.mrb[0].mxu0
        %v2035 = vpop.f32.mrb[0].mxu0
        %v2036 = vadd.f32 0.0, %v2035
        %v2037 = vpop.f32.mrb[0].mxu0
        %2038 = vdwg.mxu0
        %v2039 = vadd.f32 %v1933, %v2009
        %v2040 = vadd.f32 %v1934, %v2012
        %v2041 = vadd.f32 %v1935, %v2017
        %v2042 = vadd.f32 %v1936, %v2020
        %v2043 = vadd.f32 %v1937, %v2025
        %v2044 = vadd.f32 %v1938, %v2028
        %v2045 = vadd.f32 %v1939, %v2033
        %v2046 = vadd.f32 %v1940, %v2036
        %v2047 = vld [vmem:[#allocation3 + $0x4] sm:$0xff]
        %v2048 = vld [vmem:[#allocation3 + $0xc] sm:$0xff]
        %v2049 = vld [vmem:[#allocation3 + $0x14] sm:$0xff]
        %v2050 = vld [vmem:[#allocation3 + $0x1c] sm:$0xff]
        %v2051 = vld [vmem:[#allocation3 + $0x24] sm:$0xff]
        %v2052 = vld [vmem:[#allocation3 + $0x2c] sm:$0xff]
        %v2053 = vld [vmem:[#allocation3 + $0x34] sm:$0xff]
        %v2054 = vld [vmem:[#allocation3 + $0x3c] sm:$0x3]
        %v2055 = vpack.c.bf16 %v2048, %v2047
        %v2056 = vpack.c.bf16 %v2050, %v2049
        %v2057 = vpack.c.bf16 %v2052, %v2051
        %v2058 = vpack.c.bf16 %v2054, %v2053
        %s2059 = scalar_lea.vmem [#allocation16], 32
        %v2060 = vld [vmem:[%s2059] sm:$0xf]
        %v2061 = vld [vmem:[%s2059 + $0x4] sm:$0xf]
        %v2064 = vunpack.c.l.b16 %v2060
        %v2065 = vunpack.c.l.b16 %v2061
        %v2066 = vpack.c.b16 %v2065, %v2064
        %v2069 = vsel %vm1551, %v2055, 0
        %v2072 = vsel %vm1551, %v2056, 0
        %v2075 = vsel %vm1551, %v2057, 0
        %v2078 = vsel %vm1551, %v2058, 0
        %2080 = vmatprep.subr.bf16.mxu0 0
        %2081 = vmatpush1.bf16.msra.mxu0 %v2066
        %2082 = vmatprep.subr.bf16.mxu0 0
        %2083 = vmatpush1.bf16.msra.mxu0 0
        %2084 = vmatprep.subr.bf16.mxu0 0
        %2085 = vmatpush1.bf16.msra.mxu0 0
        %2086 = vmatprep.subr.bf16.mxu0 0
        %2087 = vmatpush1.bf16.msra.mxu0 0
        %2088 = vmatprep.subr.bf16.mxu0 0
        %2089 = vmatpush1.bf16.msra.mxu0 0
        %2090 = vmatprep.subr.bf16.mxu0 0
        %2091 = vmatpush1.bf16.msra.mxu0 0
        %2092 = vmatprep.subr.bf16.mxu0 0
        %2093 = vmatpush1.bf16.msra.mxu0 0
        %2094 = vmatprep.subr.bf16.mxu0 0
        %2095 = vmatpush1.bf16.msra.mxu0 0
        %2096 = vmatprep.subr.bf16.mxu0 0
        %2097 = vmatpush1.bf16.msra.mxu0 0
        %2098 = vmatprep.subr.bf16.mxu0 0
        %2099 = vmatpush1.bf16.msra.mxu0 0
        %2100 = vmatprep.subr.bf16.mxu0 0
        %2101 = vmatpush1.bf16.msra.mxu0 0
        %2102 = vmatprep.subr.bf16.mxu0 0
        %2103 = vmatpush1.bf16.msra.mxu0 0
        %2104 = vmatprep.subr.bf16.mxu0 0
        %2105 = vmatpush1.bf16.msra.mxu0 0
        %2106 = vmatprep.subr.bf16.mxu0 0
        %2107 = vmatpush1.bf16.msra.mxu0 0
        %2108 = vmatprep.subr.bf16.mxu0 0
        %2109 = vmatpush1.bf16.msra.mxu0 0
        %2110 = vmatprep.subr.bf16.mxu0 0
        %2111 = vmatpush1.bf16.msra.mxu0 0
        %2112 = vmatprep.mubr.bf16.mxu0 0
        %2113 = vmatmul.mubr.bf16.gmra.mrb[0].mxu0 %v2069
        %v2114 = vpop.f32.mrb[0].mxu0
        %v2115 = vadd.f32 0.0, %v2114
        %v2116 = vpop.f32.mrb[0].mxu0
        %v2117 = vpop.f32.mrb[0].mxu0
        %v2118 = vadd.f32 0.0, %v2117
        %v2119 = vpop.f32.mrb[0].mxu0
        %2120 = vmatprep.mubr.bf16.mxu0 0
        %2121 = vmatmul.mubr.bf16.gmra.mrb[0].mxu0 %v2072
        %v2122 = vpop.f32.mrb[0].mxu0
        %v2123 = vadd.f32 0.0, %v2122
        %v2124 = vpop.f32.mrb[0].mxu0
        %v2125 = vpop.f32.mrb[0].mxu0
        %v2126 = vadd.f32 0.0, %v2125
        %v2127 = vpop.f32.mrb[0].mxu0
        %2128 = vmatprep.mubr.bf16.mxu0 0
        %2129 = vmatmul.mubr.bf16.gmra.mrb[0].mxu0 %v2075
        %v2130 = vpop.f32.mrb[0].mxu0
        %v2131 = vadd.f32 0.0, %v2130
        %v2132 = vpop.f32.mrb[0].mxu0
        %v2133 = vpop.f32.mrb[0].mxu0
        %v2134 = vadd.f32 0.0, %v2133
        %v2135 = vpop.f32.mrb[0].mxu0
        %2136 = vmatprep.mubr.bf16.mxu0 0
        %2137 = vmatmul.mubr.bf16.gmra.mrb[0].mxu0 %v2078
        %v2138 = vpop.f32.mrb[0].mxu0
        %v2139 = vadd.f32 0.0, %v2138
        %v2140 = vpop.f32.mrb[0].mxu0
        %v2141 = vpop.f32.mrb[0].mxu0
        %v2142 = vadd.f32 0.0, %v2141
        %v2143 = vpop.f32.mrb[0].mxu0
        %2144 = vdwg.mxu0
        %v2145 = vadd.f32 %v2039, %v2115
        %v2146 = vadd.f32 %v2040, %v2118
        %v2147 = vadd.f32 %v2041, %v2123
        %v2148 = vadd.f32 %v2042, %v2126
        %v2149 = vadd.f32 %v2043, %v2131
        %v2150 = vadd.f32 %v2044, %v2134
        %v2151 = vadd.f32 %v2045, %v2139
        %v2152 = vadd.f32 %v2046, %v2142
        %vm2153 = vcmask 261120
        %2154 = vst.msk [vmem:[#allocation4] sm:$0xff] %vm2153, %v2145
        %2155 = vst.msk [vmem:[#allocation4 + $0x8] sm:$0xff] %vm2153, %v2146
        %2156 = vst.msk [vmem:[#allocation4 + $0x10] sm:$0xff] %vm2153, %v2147
        %2157 = vst.msk [vmem:[#allocation4 + $0x18] sm:$0xff] %vm2153, %v2148
        %2158 = vst.msk [vmem:[#allocation4 + $0x20] sm:$0xff] %vm2153, %v2149
        %2159 = vst.msk [vmem:[#allocation4 + $0x28] sm:$0xff] %vm2153, %v2150
        %2160 = vst.msk [vmem:[#allocation4 + $0x30] sm:$0xff] %vm2153, %v2151
        %vm2161 = vcmask 254976
        %2162 = vst.msk [vmem:[#allocation4 + $0x38] sm:$0x3] %vm2161, %v2152
        %v2163 = vld [vmem:[#allocation4] ss:$2 sm:$0xff]
        %s2164 = scalar_lea.vmem [#allocation4], 16
        %v2165 = vld [vmem:[%s2164] ss:$2 sm:$0xff]
        %s2166 = scalar_lea.vmem [#allocation4], 32
        %v2167 = vld [vmem:[%s2166] ss:$2 sm:$0xff]
        %s2168 = scalar_lea.vmem [#allocation4], 48
        %v2169 = vld [vmem:[%s2168] ss:$2 sm:$0x1f]
        %s2170 = scalar_lea.vmem [#allocation4], 1
        %v2171 = vld [vmem:[%s2170] ss:$2 sm:$0xff]
        %s2172 = scalar_lea.vmem [#allocation4], 17
        %v2173 = vld [vmem:[%s2172] ss:$2 sm:$0xff]
        %s2174 = scalar_lea.vmem [#allocation4], 33
        %v2175 = vld [vmem:[%s2174] ss:$2 sm:$0xff]
        %s2176 = scalar_lea.vmem [#allocation4], 49
        %v2177 = vld [vmem:[%s2176] ss:$2 sm:$0x1f]
        %v2178 = vmax.f32 %v2163, %v2171
        %v2179 = vmax.f32 %v2165, %v2173
        %v2180 = vmax.f32 %v2167, %v2175
        %v2181 = vmax.f32 %v2169, %v2177
        %v2182 = vld [vmem:[%s4] sm:$0x1]
        %v2184 = vlaneseq
        %v2185 = vshrl.u32 %v2184, 7
        %v2186 = vsub.s32 0, %v2185
        %v2187 = vrot.slane %v2182, %v2186
        %v2189 = vadd.f32 %v2178, %v2187
        %v2190 = vadd.f32 %v2179, %v2187
        %v2191 = vadd.f32 %v2180, %v2187
        %v2192 = vadd.f32 %v2181, %v2187
        %v2193 = vmax.f32 %v2189, 0.0
        %v2194 = vmax.f32 %v2190, 0.0
        %v2195 = vmax.f32 %v2191, 0.0
        %v2196 = vmax.f32 %v2192, 0.0
        %2197 = vst.msk [vmem:[#allocation5] sm:$0xff] %vm2153, %v2193
        %2198 = vst.msk [vmem:[#allocation5 + $0x8] sm:$0xff] %vm2153, %v2194
        %2199 = vst.msk [vmem:[#allocation5 + $0x10] sm:$0xff] %vm2153, %v2195
        %vm2200 = vcmask 258048
        %2201 = vst.msk [vmem:[#allocation5 + $0x18] sm:$0x1f] %vm2200, %v2196
        %v2202 = vld [vmem:[#allocation5] sm:$0x1f]
        %v2203 = vpack.c.bf16 %v2202, %v2202
        %v2204 = vld [vmem:[%s5] sm:$0xf]
        %v2205 = vld [vmem:[%s5 + $0x4] sm:$0xf]
        %v2206 = vld [vmem:[%s5 + $0x8] sm:$0xf]
        %v2207 = vld [vmem:[%s5 + $0xc] sm:$0xf]
        %v2208 = vld [vmem:[#allocation5 + $0x1] sm:$0x1f]
        %v2209 = vpack.c.bf16 %v2208, %v2208
        %s2210 = scalar_lea.vmem %s5, 16
        %v2211 = vld [vmem:[%s2210] sm:$0xf]
        %v2212 = vld [vmem:[%s2210 + $0x4] sm:$0xf]
        %v2213 = vld [vmem:[%s2210 + $0x8] sm:$0xf]
        %v2214 = vld [vmem:[%s2210 + $0xc] sm:$0xf]
        %v2219 = vunpack.c.l.b16 %v2211
        %v2220 = vunpack.c.l.b16 %v2212
        %v2221 = vunpack.c.l.b16 %v2213
        %v2222 = vunpack.c.l.b16 %v2214
        %v2223 = vpack.c.b16 %v2220, %v2219
        %v2224 = vpack.c.b16 %v2222, %v2221
        %v2228 = vsel %vm2153, %v2209, 0
        %2230 = vmatprep.subr.bf16.mxu0 0
        %2231 = vmatpush1.bf16.msra.mxu0 %v2223
        %2232 = vmatprep.subr.bf16.mxu0 0
        %2233 = vmatpush1.bf16.msra.mxu0 %v2224
        %2234 = vmatprep.subr.bf16.mxu0 0
        %2235 = vmatpush1.bf16.msra.mxu0 0
        %2236 = vmatprep.subr.bf16.mxu0 0
        %2237 = vmatpush1.bf16.msra.mxu0 0
        %2238 = vmatprep.subr.bf16.mxu0 0
        %2239 = vmatpush1.bf16.msra.mxu0 0
        %2240 = vmatprep.subr.bf16.mxu0 0
        %2241 = vmatpush1.bf16.msra.mxu0 0
        %2242 = vmatprep.subr.bf16.mxu0 0
        %2243 = vmatpush1.bf16.msra.mxu0 0
        %2244 = vmatprep.subr.bf16.mxu0 0
        %2245 = vmatpush1.bf16.msra.mxu0 0
        %2246 = vmatprep.subr.bf16.mxu0 0
        %2247 = vmatpush1.bf16.msra.mxu0 0
        %2248 = vmatprep.subr.bf16.mxu0 0
        %2249 = vmatpush1.bf16.msra.mxu0 0
        %2250 = vmatprep.subr.bf16.mxu0 0
        %2251 = vmatpush1.bf16.msra.mxu0 0
        %2252 = vmatprep.subr.bf16.mxu0 0
        %2253 = vmatpush1.bf16.msra.mxu0 0
        %2254 = vmatprep.subr.bf16.mxu0 0
        %2255 = vmatpush1.bf16.msra.mxu0 0
        %2256 = vmatprep.subr.bf16.mxu0 0
        %2257 = vmatpush1.bf16.msra.mxu0 0
        %2258 = vmatprep.subr.bf16.mxu0 0
        %2259 = vmatpush1.bf16.msra.mxu0 0
        %2260 = vmatprep.subr.bf16.mxu0 0
        %2261 = vmatpush1.bf16.msra.mxu0 0
        %2262 = vmatprep.mubr.bf16.mxu0 0
        %2263 = vmatmul.mubr.bf16.gmra.mrb[0].mxu0 %v2228
        %v2264 = vpop.f32.mrb[0].mxu0
        %v2265 = vadd.f32 0.0, %v2264
        %v2266 = vpop.f32.mrb[0].mxu0
        %v2267 = vpop.f32.mrb[0].mxu0
        %v2268 = vpop.f32.mrb[0].mxu0
        %2269 = vdwg.mxu0
        %v2274 = vunpack.c.l.b16 %v2204
        %v2275 = vunpack.c.l.b16 %v2205
        %v2276 = vunpack.c.l.b16 %v2206
        %v2277 = vunpack.c.l.b16 %v2207
        %v2278 = vpack.c.b16 %v2275, %v2274
        %v2279 = vpack.c.b16 %v2277, %v2276
        %v2283 = vsel %vm2153, %v2203, 0
        %2285 = vmatprep.subr.bf16.mxu0 0
        %2286 = vmatpush1.bf16.msra.mxu0 %v2278
        %2287 = vmatprep.subr.bf16.mxu0 0
        %2288 = vmatpush1.bf16.msra.mxu0 %v2279
        %2289 = vmatprep.subr.bf16.mxu0 0
        %2290 = vmatpush1.bf16.msra.mxu0 0
        %2291 = vmatprep.subr.bf16.mxu0 0
        %2292 = vmatpush1.bf16.msra.mxu0 0
        %2293 = vmatprep.subr.bf16.mxu0 0
        %2294 = vmatpush1.bf16.msra.mxu0 0
        %2295 = vmatprep.subr.bf16.mxu0 0
        %2296 = vmatpush1.bf16.msra.mxu0 0
        %2297 = vmatprep.subr.bf16.mxu0 0
        %2298 = vmatpush1.bf16.msra.mxu0 0
        %2299 = vmatprep.subr.bf16.mxu0 0
        %2300 = vmatpush1.bf16.msra.mxu0 0
        %2301 = vmatprep.subr.bf16.mxu0 0
        %2302 = vmatpush1.bf16.msra.mxu0 0
        %2303 = vmatprep.subr.bf16.mxu0 0
        %2304 = vmatpush1.bf16.msra.mxu0 0
        %2305 = vmatprep.subr.bf16.mxu0 0
        %2306 = vmatpush1.bf16.msra.mxu0 0
        %2307 = vmatprep.subr.bf16.mxu0 0
        %2308 = vmatpush1.bf16.msra.mxu0 0
        %2309 = vmatprep.subr.bf16.mxu0 0
        %2310 = vmatpush1.bf16.msra.mxu0 0
        %2311 = vmatprep.subr.bf16.mxu0 0
        %2312 = vmatpush1.bf16.msra.mxu0 0
        %2313 = vmatprep.subr.bf16.mxu0 0
        %2314 = vmatpush1.bf16.msra.mxu0 0
        %2315 = vmatprep.subr.bf16.mxu0 0
        %2316 = vmatpush1.bf16.msra.mxu0 0
        %2317 = vmatprep.mubr.bf16.mxu0 0
        %2318 = vmatmul.mubr.bf16.gmra.mrb[0].mxu0 %v2283
        %v2319 = vpop.f32.mrb[0].mxu0
        %v2320 = vadd.f32 %v2265, %v2319
        %v2321 = vpop.f32.mrb[0].mxu0
        %v2322 = vpop.f32.mrb[0].mxu0
        %v2323 = vpop.f32.mrb[0].mxu0
        %2324 = vdwg.mxu0
        %v2325 = vld [vmem:[#allocation5 + $0x2] sm:$0x1f]
        %v2326 = vpack.c.bf16 %v2325, %v2325
        %s2327 = scalar_lea.vmem %s5, 32
        %v2328 = vld [vmem:[%s2327] sm:$0xf]
        %v2329 = vld [vmem:[%s2327 + $0x4] sm:$0xf]
        %v2330 = vld [vmem:[%s2327 + $0x8] sm:$0xf]
        %v2331 = vld [vmem:[%s2327 + $0xc] sm:$0xf]
        %v2336 = vunpack.c.l.b16 %v2328
        %v2337 = vunpack.c.l.b16 %v2329
        %v2338 = vunpack.c.l.b16 %v2330
        %v2339 = vunpack.c.l.b16 %v2331
        %v2340 = vpack.c.b16 %v2337, %v2336
        %v2341 = vpack.c.b16 %v2339, %v2338
        %v2345 = vsel %vm2153, %v2326, 0
        %2347 = vmatprep.subr.bf16.mxu0 0
        %2348 = vmatpush1.bf16.msra.mxu0 %v2340
        %2349 = vmatprep.subr.bf16.mxu0 0
        %2350 = vmatpush1.bf16.msra.mxu0 %v2341
        %2351 = vmatprep.subr.bf16.mxu0 0
        %2352 = vmatpush1.bf16.msra.mxu0 0
        %2353 = vmatprep.subr.bf16.mxu0 0
        %2354 = vmatpush1.bf16.msra.mxu0 0
        %2355 = vmatprep.subr.bf16.mxu0 0
        %2356 = vmatpush1.bf16.msra.mxu0 0
        %2357 = vmatprep.subr.bf16.mxu0 0
        %2358 = vmatpush1.bf16.msra.mxu0 0
        %2359 = vmatprep.subr.bf16.mxu0 0
        %2360 = vmatpush1.bf16.msra.mxu0 0
        %2361 = vmatprep.subr.bf16.mxu0 0
        %2362 = vmatpush1.bf16.msra.mxu0 0
        %2363 = vmatprep.subr.bf16.mxu0 0
        %2364 = vmatpush1.bf16.msra.mxu0 0
        %2365 = vmatprep.subr.bf16.mxu0 0
        %2366 = vmatpush1.bf16.msra.mxu0 0
        %2367 = vmatprep.subr.bf16.mxu0 0
        %2368 = vmatpush1.bf16.msra.mxu0 0
        %2369 = vmatprep.subr.bf16.mxu0 0
        %2370 = vmatpush1.bf16.msra.mxu0 0
        %2371 = vmatprep.subr.bf16.mxu0 0
        %2372 = vmatpush1.bf16.msra.mxu0 0
        %2373 = vmatprep.subr.bf16.mxu0 0
        %2374 = vmatpush1.bf16.msra.mxu0 0
        %2375 = vmatprep.subr.bf16.mxu0 0
        %2376 = vmatpush1.bf16.msra.mxu0 0
        %2377 = vmatprep.subr.bf16.mxu0 0
        %2378 = vmatpush1.bf16.msra.mxu0 0
        %2379 = vmatprep.mubr.bf16.mxu0 0
        %2380 = vmatmul.mubr.bf16.gmra.mrb[0].mxu0 %v2345
        %v2381 = vpop.f32.mrb[0].mxu0
        %v2382 = vadd.f32 0.0, %v2381
        %v2383 = vpop.f32.mrb[0].mxu0
        %v2384 = vpop.f32.mrb[0].mxu0
        %v2385 = vpop.f32.mrb[0].mxu0
        %2386 = vdwg.mxu0
        %v2387 = vadd.f32 %v2320, %v2382
        %v2388 = vld [vmem:[#allocation5 + $0x3] sm:$0x1f]
        %v2389 = vpack.c.bf16 %v2388, %v2388
        %s2390 = scalar_lea.vmem %s5, 48
        %v2391 = vld [vmem:[%s2390] sm:$0xf]
        %v2392 = vld [vmem:[%s2390 + $0x4] sm:$0xf]
        %v2393 = vld [vmem:[%s2390 + $0x8] sm:$0xf]
        %v2394 = vld [vmem:[%s2390 + $0xc] sm:$0xf]
        %v2399 = vunpack.c.l.b16 %v2391
        %v2400 = vunpack.c.l.b16 %v2392
        %v2401 = vunpack.c.l.b16 %v2393
        %v2402 = vunpack.c.l.b16 %v2394
        %v2403 = vpack.c.b16 %v2400, %v2399
        %v2404 = vpack.c.b16 %v2402, %v2401
        %v2408 = vsel %vm2153, %v2389, 0
        %2410 = vmatprep.subr.bf16.mxu0 0
        %2411 = vmatpush1.bf16.msra.mxu0 %v2403
        %2412 = vmatprep.subr.bf16.mxu0 0
        %2413 = vmatpush1.bf16.msra.mxu0 %v2404
        %2414 = vmatprep.subr.bf16.mxu0 0
        %2415 = vmatpush1.bf16.msra.mxu0 0
        %2416 = vmatprep.subr.bf16.mxu0 0
        %2417 = vmatpush1.bf16.msra.mxu0 0
        %2418 = vmatprep.subr.bf16.mxu0 0
        %2419 = vmatpush1.bf16.msra.mxu0 0
        %2420 = vmatprep.subr.bf16.mxu0 0
        %2421 = vmatpush1.bf16.msra.mxu0 0
        %2422 = vmatprep.subr.bf16.mxu0 0
        %2423 = vmatpush1.bf16.msra.mxu0 0
        %2424 = vmatprep.subr.bf16.mxu0 0
        %2425 = vmatpush1.bf16.msra.mxu0 0
        %2426 = vmatprep.subr.bf16.mxu0 0
        %2427 = vmatpush1.bf16.msra.mxu0 0
        %2428 = vmatprep.subr.bf16.mxu0 0
        %2429 = vmatpush1.bf16.msra.mxu0 0
        %2430 = vmatprep.subr.bf16.mxu0 0
        %2431 = vmatpush1.bf16.msra.mxu0 0
        %2432 = vmatprep.subr.bf16.mxu0 0
        %2433 = vmatpush1.bf16.msra.mxu0 0
        %2434 = vmatprep.subr.bf16.mxu0 0
        %2435 = vmatpush1.bf16.msra.mxu0 0
        %2436 = vmatprep.subr.bf16.mxu0 0
        %2437 = vmatpush1.bf16.msra.mxu0 0
        %2438 = vmatprep.subr.bf16.mxu0 0
        %2439 = vmatpush1.bf16.msra.mxu0 0
        %2440 = vmatprep.subr.bf16.mxu0 0
        %2441 = vmatpush1.bf16.msra.mxu0 0
        %2442 = vmatprep.mubr.bf16.mxu0 0
        %2443 = vmatmul.mubr.bf16.gmra.mrb[0].mxu0 %v2408
        %v2444 = vpop.f32.mrb[0].mxu0
        %v2445 = vadd.f32 0.0, %v2444
        %v2446 = vpop.f32.mrb[0].mxu0
        %v2447 = vpop.f32.mrb[0].mxu0
        %v2448 = vpop.f32.mrb[0].mxu0
        %2449 = vdwg.mxu0
        %v2450 = vadd.f32 %v2387, %v2445
        %v2451 = vld [vmem:[#allocation5 + $0x4] sm:$0x1f]
        %v2452 = vpack.c.bf16 %v2451, %v2451
        %s2453 = scalar_lea.vmem %s5, 64
        %v2454 = vld [vmem:[%s2453] sm:$0xf]
        %v2455 = vld [vmem:[%s2453 + $0x4] sm:$0xf]
        %v2456 = vld [vmem:[%s2453 + $0x8] sm:$0xf]
        %v2457 = vld [vmem:[%s2453 + $0xc] sm:$0xf]
        %v2462 = vunpack.c.l.b16 %v2454
        %v2463 = vunpack.c.l.b16 %v2455
        %v2464 = vunpack.c.l.b16 %v2456
        %v2465 = vunpack.c.l.b16 %v2457
        %v2466 = vpack.c.b16 %v2463, %v2462
        %v2467 = vpack.c.b16 %v2465, %v2464
        %v2471 = vsel %vm2153, %v2452, 0
        %2473 = vmatprep.subr.bf16.mxu0 0
        %2474 = vmatpush1.bf16.msra.mxu0 %v2466
        %2475 = vmatprep.subr.bf16.mxu0 0
        %2476 = vmatpush1.bf16.msra.mxu0 %v2467
        %2477 = vmatprep.subr.bf16.mxu0 0
        %2478 = vmatpush1.bf16.msra.mxu0 0
        %2479 = vmatprep.subr.bf16.mxu0 0
        %2480 = vmatpush1.bf16.msra.mxu0 0
        %2481 = vmatprep.subr.bf16.mxu0 0
        %2482 = vmatpush1.bf16.msra.mxu0 0
        %2483 = vmatprep.subr.bf16.mxu0 0
        %2484 = vmatpush1.bf16.msra.mxu0 0
        %2485 = vmatprep.subr.bf16.mxu0 0
        %2486 = vmatpush1.bf16.msra.mxu0 0
        %2487 = vmatprep.subr.bf16.mxu0 0
        %2488 = vmatpush1.bf16.msra.mxu0 0
        %2489 = vmatprep.subr.bf16.mxu0 0
        %2490 = vmatpush1.bf16.msra.mxu0 0
        %2491 = vmatprep.subr.bf16.mxu0 0
        %2492 = vmatpush1.bf16.msra.mxu0 0
        %2493 = vmatprep.subr.bf16.mxu0 0
        %2494 = vmatpush1.bf16.msra.mxu0 0
        %2495 = vmatprep.subr.bf16.mxu0 0
        %2496 = vmatpush1.bf16.msra.mxu0 0
        %2497 = vmatprep.subr.bf16.mxu0 0
        %2498 = vmatpush1.bf16.msra.mxu0 0
        %2499 = vmatprep.subr.bf16.mxu0 0
        %2500 = vmatpush1.bf16.msra.mxu0 0
        %2501 = vmatprep.subr.bf16.mxu0 0
        %2502 = vmatpush1.bf16.msra.mxu0 0
        %2503 = vmatprep.subr.bf16.mxu0 0
        %2504 = vmatpush1.bf16.msra.mxu0 0
        %2505 = vmatprep.mubr.bf16.mxu0 0
        %2506 = vmatmul.mubr.bf16.gmra.mrb[0].mxu0 %v2471
        %v2507 = vpop.f32.mrb[0].mxu0
        %v2508 = vadd.f32 0.0, %v2507
        %v2509 = vpop.f32.mrb[0].mxu0
        %v2510 = vpop.f32.mrb[0].mxu0
        %v2511 = vpop.f32.mrb[0].mxu0
        %2512 = vdwg.mxu0
        %v2513 = vadd.f32 %v2450, %v2508
        %v2514 = vld [vmem:[%s6] sm:$0x1]
        %v2516 = vlaneseq
        %v2517 = vshrl.u32 %v2516, 7
        %v2518 = vsub.s32 0, %v2517
        %v2519 = vrot.slane %v2514, %v2518
        %v2521 = vadd.f32 %v2513, %v2519
        %v2522 = vmax.f32 %v2521, 0.0
        %vm2523 = vcmask 520192
        %2524 = vst.msk [vmem:[%s750] sm:$0x1f] %vm2523, %v2522
        %v2525 = vld [vmem:[%s745] sm:$0xff]
        %v2526 = vld [vmem:[%s745 + $0x8] sm:$0xff]
        %v2527 = vld [vmem:[%s745 + $0x10] sm:$0xff]
        %v2528 = vld [vmem:[%s745 + $0x18] sm:$0xff]
        %v2529 = vld [vmem:[%s745 + $0x20] sm:$0xff]
        %v2530 = vld [vmem:[%s745 + $0x28] sm:$0xff]
        %v2531 = vld [vmem:[%s745 + $0x30] sm:$0xff]
        %v2532 = vld [vmem:[%s745 + $0x38] sm:$0xff]
        %v2533 = vld [vmem:[%s745 + $0x40] sm:$0xff]
        %v2534 = vld [vmem:[%s745 + $0x48] sm:$0xff]
        %v2535 = vld [vmem:[%s745 + $0x50] sm:$0xff]
        %v2536 = vld [vmem:[%s745 + $0x58] sm:$0xff]
        %v2537 = vld [vmem:[%s745 + $0x60] sm:$0xff]
        %v2538 = vld [vmem:[%s745 + $0x68] sm:$0xff]
        %v2539 = vld [vmem:[%s745 + $0x70] sm:$0xff]
        %v2540 = vld [vmem:[%s745 + $0x78] sm:$0x7]
        %v2541 = vpack.c.bf16 %v2526, %v2525
        %v2542 = vpack.c.bf16 %v2528, %v2527
        %v2543 = vpack.c.bf16 %v2530, %v2529
        %v2544 = vpack.c.bf16 %v2532, %v2531
        %v2545 = vpack.c.bf16 %v2534, %v2533
        %v2546 = vpack.c.bf16 %v2536, %v2535
        %v2547 = vpack.c.bf16 %v2538, %v2537
        %v2548 = vpack.c.bf16 %v2540, %v2539
        %v2549 = vld [vmem:[#allocation18] sm:$0x3]
        %v2550 = vld [vmem:[%s745 + $0x1] sm:$0xff]
        %v2551 = vld [vmem:[%s745 + $0x9] sm:$0xff]
        %v2552 = vld [vmem:[%s745 + $0x11] sm:$0xff]
        %v2553 = vld [vmem:[%s745 + $0x19] sm:$0xff]
        %v2554 = vld [vmem:[%s745 + $0x21] sm:$0xff]
        %v2555 = vld [vmem:[%s745 + $0x29] sm:$0xff]
        %v2556 = vld [vmem:[%s745 + $0x31] sm:$0xff]
        %v2557 = vld [vmem:[%s745 + $0x39] sm:$0xff]
        %v2558 = vld [vmem:[%s745 + $0x41] sm:$0xff]
        %v2559 = vld [vmem:[%s745 + $0x49] sm:$0xff]
        %v2560 = vld [vmem:[%s745 + $0x51] sm:$0xff]
        %v2561 = vld [vmem:[%s745 + $0x59] sm:$0xff]
        %v2562 = vld [vmem:[%s745 + $0x61] sm:$0xff]
        %v2563 = vld [vmem:[%s745 + $0x69] sm:$0xff]
        %v2564 = vld [vmem:[%s745 + $0x71] sm:$0xff]
        %v2565 = vld [vmem:[%s745 + $0x79] sm:$0x7]
        %v2566 = vpack.c.bf16 %v2551, %v2550
        %v2567 = vpack.c.bf16 %v2553, %v2552
        %v2568 = vpack.c.bf16 %v2555, %v2554
        %v2569 = vpack.c.bf16 %v2557, %v2556
        %v2570 = vpack.c.bf16 %v2559, %v2558
        %v2571 = vpack.c.bf16 %v2561, %v2560
        %v2572 = vpack.c.bf16 %v2563, %v2562
        %v2573 = vpack.c.bf16 %v2565, %v2564
        %s2574 = scalar_lea.vmem [#allocation18], 2
        %v2575 = vld [vmem:[%s2574] sm:$0x3]
        %v2577 = vsel %vm803, %v2566, 0
        %v2580 = vsel %vm803, %v2567, 0
        %v2583 = vsel %vm803, %v2568, 0
        %v2586 = vsel %vm803, %v2569, 0
        %v2589 = vsel %vm803, %v2570, 0
        %v2592 = vsel %vm803, %v2571, 0
        %v2595 = vsel %vm803, %v2572, 0
        %v2598 = vsel %vm803, %v2573, 0
        %v2601 = vsel %vm828, %v2575, 0
        %2603 = vmatprep.subr.bf16.mxu0 0
        %2604 = vmatpush1.bf16.msra.mxu0 %v2601
        %2605 = vmatprep.subr.bf16.mxu0 0
        %2606 = vmatpush1.bf16.msra.mxu0 0
        %2607 = vmatprep.subr.bf16.mxu0 0
        %2608 = vmatpush1.bf16.msra.mxu0 0
        %2609 = vmatprep.subr.bf16.mxu0 0
        %2610 = vmatpush1.bf16.msra.mxu0 0
        %2611 = vmatprep.subr.bf16.mxu0 0
        %2612 = vmatpush1.bf16.msra.mxu0 0
        %2613 = vmatprep.subr.bf16.mxu0 0
        %2614 = vmatpush1.bf16.msra.mxu0 0
        %2615 = vmatprep.subr.bf16.mxu0 0
        %2616 = vmatpush1.bf16.msra.mxu0 0
        %2617 = vmatprep.subr.bf16.mxu0 0
        %2618 = vmatpush1.bf16.msra.mxu0 0
        %2619 = vmatprep.subr.bf16.mxu0 0
        %2620 = vmatpush1.bf16.msra.mxu0 0
        %2621 = vmatprep.subr.bf16.mxu0 0
        %2622 = vmatpush1.bf16.msra.mxu0 0
        %2623 = vmatprep.subr.bf16.mxu0 0
        %2624 = vmatpush1.bf16.msra.mxu0 0
        %2625 = vmatprep.subr.bf16.mxu0 0
        %2626 = vmatpush1.bf16.msra.mxu0 0
        %2627 = vmatprep.subr.bf16.mxu0 0
        %2628 = vmatpush1.bf16.msra.mxu0 0
        %2629 = vmatprep.subr.bf16.mxu0 0
        %2630 = vmatpush1.bf16.msra.mxu0 0
        %2631 = vmatprep.subr.bf16.mxu0 0
        %2632 = vmatpush1.bf16.msra.mxu0 0
        %2633 = vmatprep.subr.bf16.mxu0 0
        %2634 = vmatpush1.bf16.msra.mxu0 0
        %2635 = vmatprep.mubr.bf16.mxu0 0
        %2636 = vmatmul.mubr.bf16.gmra.mrb[0].mxu0 %v2577
        %v2637 = vpop.f32.mrb[0].mxu0
        %v2638 = vadd.f32 0.0, %v2637
        %v2639 = vpop.f32.mrb[0].mxu0
        %v2640 = vpop.f32.mrb[0].mxu0
        %v2641 = vadd.f32 0.0, %v2640
        %v2642 = vpop.f32.mrb[0].mxu0
        %2643 = vmatprep.mubr.bf16.mxu0 0
        %2644 = vmatmul.mubr.bf16.gmra.mrb[0].mxu0 %v2580
        %v2645 = vpop.f32.mrb[0].mxu0
        %v2646 = vadd.f32 0.0, %v2645
        %v2647 = vpop.f32.mrb[0].mxu0
        %v2648 = vpop.f32.mrb[0].mxu0
        %v2649 = vadd.f32 0.0, %v2648
        %v2650 = vpop.f32.mrb[0].mxu0
        %2651 = vmatprep.mubr.bf16.mxu0 0
        %2652 = vmatmul.mubr.bf16.gmra.mrb[0].mxu0 %v2583
        %v2653 = vpop.f32.mrb[0].mxu0
        %v2654 = vadd.f32 0.0, %v2653
        %v2655 = vpop.f32.mrb[0].mxu0
        %v2656 = vpop.f32.mrb[0].mxu0
        %v2657 = vadd.f32 0.0, %v2656
        %v2658 = vpop.f32.mrb[0].mxu0
        %2659 = vmatprep.mubr.bf16.mxu0 0
        %2660 = vmatmul.mubr.bf16.gmra.mrb[0].mxu0 %v2586
        %v2661 = vpop.f32.mrb[0].mxu0
        %v2662 = vadd.f32 0.0, %v2661
        %v2663 = vpop.f32.mrb[0].mxu0
        %v2664 = vpop.f32.mrb[0].mxu0
        %v2665 = vadd.f32 0.0, %v2664
        %v2666 = vpop.f32.mrb[0].mxu0
        %2667 = vmatprep.mubr.bf16.mxu0 0
        %2668 = vmatmul.mubr.bf16.gmra.mrb[0].mxu0 %v2589
        %v2669 = vpop.f32.mrb[0].mxu0
        %v2670 = vadd.f32 0.0, %v2669
        %v2671 = vpop.f32.mrb[0].mxu0
        %v2672 = vpop.f32.mrb[0].mxu0
        %v2673 = vadd.f32 0.0, %v2672
        %v2674 = vpop.f32.mrb[0].mxu0
        %2675 = vmatprep.mubr.bf16.mxu0 0
        %2676 = vmatmul.mubr.bf16.gmra.mrb[0].mxu0 %v2592
        %v2677 = vpop.f32.mrb[0].mxu0
        %v2678 = vadd.f32 0.0, %v2677
        %v2679 = vpop.f32.mrb[0].mxu0
        %v2680 = vpop.f32.mrb[0].mxu0
        %v2681 = vadd.f32 0.0, %v2680
        %v2682 = vpop.f32.mrb[0].mxu0
        %2683 = vmatprep.mubr.bf16.mxu0 0
        %2684 = vmatmul.mubr.bf16.gmra.mrb[0].mxu0 %v2595
        %v2685 = vpop.f32.mrb[0].mxu0
        %v2686 = vadd.f32 0.0, %v2685
        %v2687 = vpop.f32.mrb[0].mxu0
        %v2688 = vpop.f32.mrb[0].mxu0
        %v2689 = vadd.f32 0.0, %v2688
        %v2690 = vpop.f32.mrb[0].mxu0
        %2691 = vmatprep.mubr.bf16.mxu0 0
        %2692 = vmatmul.mubr.bf16.gmra.mrb[0].mxu0 %v2598
        %v2693 = vpop.f32.mrb[0].mxu0
        %v2694 = vadd.f32 0.0, %v2693
        %v2695 = vpop.f32.mrb[0].mxu0
        %v2696 = vpop.f32.mrb[0].mxu0
        %v2697 = vadd.f32 0.0, %v2696
        %v2698 = vpop.f32.mrb[0].mxu0
        %2699 = vdwg.mxu0
        %v2701 = vsel %vm803, %v2541, 0
        %v2704 = vsel %vm803, %v2542, 0
        %v2707 = vsel %vm803, %v2543, 0
        %v2710 = vsel %vm803, %v2544, 0
        %v2713 = vsel %vm803, %v2545, 0
        %v2716 = vsel %vm803, %v2546, 0
        %v2719 = vsel %vm803, %v2547, 0
        %v2722 = vsel %vm803, %v2548, 0
        %v2725 = vsel %vm828, %v2549, 0
        %2727 = vmatprep.subr.bf16.mxu0 0
        %2728 = vmatpush1.bf16.msra.mxu0 %v2725
        %2729 = vmatprep.subr.bf16.mxu0 0
        %2730 = vmatpush1.bf16.msra.mxu0 0
        %2731 = vmatprep.subr.bf16.mxu0 0
        %2732 = vmatpush1.bf16.msra.mxu0 0
        %2733 = vmatprep.subr.bf16.mxu0 0
        %2734 = vmatpush1.bf16.msra.mxu0 0
        %2735 = vmatprep.subr.bf16.mxu0 0
        %2736 = vmatpush1.bf16.msra.mxu0 0
        %2737 = vmatprep.subr.bf16.mxu0 0
        %2738 = vmatpush1.bf16.msra.mxu0 0
        %2739 = vmatprep.subr.bf16.mxu0 0
        %2740 = vmatpush1.bf16.msra.mxu0 0
        %2741 = vmatprep.subr.bf16.mxu0 0
        %2742 = vmatpush1.bf16.msra.mxu0 0
        %2743 = vmatprep.subr.bf16.mxu0 0
        %2744 = vmatpush1.bf16.msra.mxu0 0
        %2745 = vmatprep.subr.bf16.mxu0 0
        %2746 = vmatpush1.bf16.msra.mxu0 0
        %2747 = vmatprep.subr.bf16.mxu0 0
        %2748 = vmatpush1.bf16.msra.mxu0 0
        %2749 = vmatprep.subr.bf16.mxu0 0
        %2750 = vmatpush1.bf16.msra.mxu0 0
        %2751 = vmatprep.subr.bf16.mxu0 0
        %2752 = vmatpush1.bf16.msra.mxu0 0
        %2753 = vmatprep.subr.bf16.mxu0 0
        %2754 = vmatpush1.bf16.msra.mxu0 0
        %2755 = vmatprep.subr.bf16.mxu0 0
        %2756 = vmatpush1.bf16.msra.mxu0 0
        %2757 = vmatprep.subr.bf16.mxu0 0
        %2758 = vmatpush1.bf16.msra.mxu0 0
        %2759 = vmatprep.mubr.bf16.mxu0 0
        %2760 = vmatmul.mubr.bf16.gmra.mrb[0].mxu0 %v2701
        %v2761 = vpop.f32.mrb[0].mxu0
        %v2762 = vadd.f32 %v2638, %v2761
        %v2763 = vpop.f32.mrb[0].mxu0
        %v2764 = vpop.f32.mrb[0].mxu0
        %v2765 = vadd.f32 %v2641, %v2764
        %v2766 = vpop.f32.mrb[0].mxu0
        %2767 = vmatprep.mubr.bf16.mxu0 0
        %2768 = vmatmul.mubr.bf16.gmra.mrb[0].mxu0 %v2704
        %v2769 = vpop.f32.mrb[0].mxu0
        %v2770 = vadd.f32 %v2646, %v2769
        %v2771 = vpop.f32.mrb[0].mxu0
        %v2772 = vpop.f32.mrb[0].mxu0
        %v2773 = vadd.f32 %v2649, %v2772
        %v2774 = vpop.f32.mrb[0].mxu0
        %2775 = vmatprep.mubr.bf16.mxu0 0
        %2776 = vmatmul.mubr.bf16.gmra.mrb[0].mxu0 %v2707
        %v2777 = vpop.f32.mrb[0].mxu0
        %v2778 = vadd.f32 %v2654, %v2777
        %v2779 = vpop.f32.mrb[0].mxu0
        %v2780 = vpop.f32.mrb[0].mxu0
        %v2781 = vadd.f32 %v2657, %v2780
        %v2782 = vpop.f32.mrb[0].mxu0
        %2783 = vmatprep.mubr.bf16.mxu0 0
        %2784 = vmatmul.mubr.bf16.gmra.mrb[0].mxu0 %v2710
        %v2785 = vpop.f32.mrb[0].mxu0
        %v2786 = vadd.f32 %v2662, %v2785
        %v2787 = vpop.f32.mrb[0].mxu0
        %v2788 = vpop.f32.mrb[0].mxu0
        %v2789 = vadd.f32 %v2665, %v2788
        %v2790 = vpop.f32.mrb[0].mxu0
        %2791 = vmatprep.mubr.bf16.mxu0 0
        %2792 = vmatmul.mubr.bf16.gmra.mrb[0].mxu0 %v2713
        %v2793 = vpop.f32.mrb[0].mxu0
        %v2794 = vadd.f32 %v2670, %v2793
        %v2795 = vpop.f32.mrb[0].mxu0
        %v2796 = vpop.f32.mrb[0].mxu0
        %v2797 = vadd.f32 %v2673, %v2796
        %v2798 = vpop.f32.mrb[0].mxu0
        %2799 = vmatprep.mubr.bf16.mxu0 0
        %2800 = vmatmul.mubr.bf16.gmra.mrb[0].mxu0 %v2716
        %v2801 = vpop.f32.mrb[0].mxu0
        %v2802 = vadd.f32 %v2678, %v2801
        %v2803 = vpop.f32.mrb[0].mxu0
        %v2804 = vpop.f32.mrb[0].mxu0
        %v2805 = vadd.f32 %v2681, %v2804
        %v2806 = vpop.f32.mrb[0].mxu0
        %2807 = vmatprep.mubr.bf16.mxu0 0
        %2808 = vmatmul.mubr.bf16.gmra.mrb[0].mxu0 %v2719
        %v2809 = vpop.f32.mrb[0].mxu0
        %v2810 = vadd.f32 %v2686, %v2809
        %v2811 = vpop.f32.mrb[0].mxu0
        %v2812 = vpop.f32.mrb[0].mxu0
        %v2813 = vadd.f32 %v2689, %v2812
        %v2814 = vpop.f32.mrb[0].mxu0
        %2815 = vmatprep.mubr.bf16.mxu0 0
        %2816 = vmatmul.mubr.bf16.gmra.mrb[0].mxu0 %v2722
        %v2817 = vpop.f32.mrb[0].mxu0
        %v2818 = vadd.f32 %v2694, %v2817
        %v2819 = vpop.f32.mrb[0].mxu0
        %v2820 = vpop.f32.mrb[0].mxu0
        %v2821 = vadd.f32 %v2697, %v2820
        %v2822 = vpop.f32.mrb[0].mxu0
        %2823 = vdwg.mxu0
        %v2824 = vld [vmem:[%s745 + $0x2] sm:$0xff]
        %v2825 = vld [vmem:[%s745 + $0xa] sm:$0xff]
        %v2826 = vld [vmem:[%s745 + $0x12] sm:$0xff]
        %v2827 = vld [vmem:[%s745 + $0x1a] sm:$0xff]
        %v2828 = vld [vmem:[%s745 + $0x22] sm:$0xff]
        %v2829 = vld [vmem:[%s745 + $0x2a] sm:$0xff]
        %v2830 = vld [vmem:[%s745 + $0x32] sm:$0xff]
        %v2831 = vld [vmem:[%s745 + $0x3a] sm:$0xff]
        %v2832 = vld [vmem:[%s745 + $0x42] sm:$0xff]
        %v2833 = vld [vmem:[%s745 + $0x4a] sm:$0xff]
        %v2834 = vld [vmem:[%s745 + $0x52] sm:$0xff]
        %v2835 = vld [vmem:[%s745 + $0x5a] sm:$0xff]
        %v2836 = vld [vmem:[%s745 + $0x62] sm:$0xff]
        %v2837 = vld [vmem:[%s745 + $0x6a] sm:$0xff]
        %v2838 = vld [vmem:[%s745 + $0x72] sm:$0xff]
        %v2839 = vld [vmem:[%s745 + $0x7a] sm:$0x7]
        %v2840 = vpack.c.bf16 %v2825, %v2824
        %v2841 = vpack.c.bf16 %v2827, %v2826
        %v2842 = vpack.c.bf16 %v2829, %v2828
        %v2843 = vpack.c.bf16 %v2831, %v2830
        %v2844 = vpack.c.bf16 %v2833, %v2832
        %v2845 = vpack.c.bf16 %v2835, %v2834
        %v2846 = vpack.c.bf16 %v2837, %v2836
        %v2847 = vpack.c.bf16 %v2839, %v2838
        %s2848 = scalar_lea.vmem [#allocation18], 4
        %v2849 = vld [vmem:[%s2848] sm:$0x3]
        %v2851 = vsel %vm803, %v2840, 0
        %v2854 = vsel %vm803, %v2841, 0
        %v2857 = vsel %vm803, %v2842, 0
        %v2860 = vsel %vm803, %v2843, 0
        %v2863 = vsel %vm803, %v2844, 0
        %v2866 = vsel %vm803, %v2845, 0
        %v2869 = vsel %vm803, %v2846, 0
        %v2872 = vsel %vm803, %v2847, 0
        %v2875 = vsel %vm828, %v2849, 0
        %2877 = vmatprep.subr.bf16.mxu0 0
        %2878 = vmatpush1.bf16.msra.mxu0 %v2875
        %2879 = vmatprep.subr.bf16.mxu0 0
        %2880 = vmatpush1.bf16.msra.mxu0 0
        %2881 = vmatprep.subr.bf16.mxu0 0
        %2882 = vmatpush1.bf16.msra.mxu0 0
        %2883 = vmatprep.subr.bf16.mxu0 0
        %2884 = vmatpush1.bf16.msra.mxu0 0
        %2885 = vmatprep.subr.bf16.mxu0 0
        %2886 = vmatpush1.bf16.msra.mxu0 0
        %2887 = vmatprep.subr.bf16.mxu0 0
        %2888 = vmatpush1.bf16.msra.mxu0 0
        %2889 = vmatprep.subr.bf16.mxu0 0
        %2890 = vmatpush1.bf16.msra.mxu0 0
        %2891 = vmatprep.subr.bf16.mxu0 0
        %2892 = vmatpush1.bf16.msra.mxu0 0
        %2893 = vmatprep.subr.bf16.mxu0 0
        %2894 = vmatpush1.bf16.msra.mxu0 0
        %2895 = vmatprep.subr.bf16.mxu0 0
        %2896 = vmatpush1.bf16.msra.mxu0 0
        %2897 = vmatprep.subr.bf16.mxu0 0
        %2898 = vmatpush1.bf16.msra.mxu0 0
        %2899 = vmatprep.subr.bf16.mxu0 0
        %2900 = vmatpush1.bf16.msra.mxu0 0
        %2901 = vmatprep.subr.bf16.mxu0 0
        %2902 = vmatpush1.bf16.msra.mxu0 0
        %2903 = vmatprep.subr.bf16.mxu0 0
        %2904 = vmatpush1.bf16.msra.mxu0 0
        %2905 = vmatprep.subr.bf16.mxu0 0
        %2906 = vmatpush1.bf16.msra.mxu0 0
        %2907 = vmatprep.subr.bf16.mxu0 0
        %2908 = vmatpush1.bf16.msra.mxu0 0
        %2909 = vmatprep.mubr.bf16.mxu0 0
        %2910 = vmatmul.mubr.bf16.gmra.mrb[0].mxu0 %v2851
        %v2911 = vpop.f32.mrb[0].mxu0
        %v2912 = vadd.f32 0.0, %v2911
        %v2913 = vpop.f32.mrb[0].mxu0
        %v2914 = vpop.f32.mrb[0].mxu0
        %v2915 = vadd.f32 0.0, %v2914
        %v2916 = vpop.f32.mrb[0].mxu0
        %2917 = vmatprep.mubr.bf16.mxu0 0
        %2918 = vmatmul.mubr.bf16.gmra.mrb[0].mxu0 %v2854
        %v2919 = vpop.f32.mrb[0].mxu0
        %v2920 = vadd.f32 0.0, %v2919
        %v2921 = vpop.f32.mrb[0].mxu0
        %v2922 = vpop.f32.mrb[0].mxu0
        %v2923 = vadd.f32 0.0, %v2922
        %v2924 = vpop.f32.mrb[0].mxu0
        %2925 = vmatprep.mubr.bf16.mxu0 0
        %2926 = vmatmul.mubr.bf16.gmra.mrb[0].mxu0 %v2857
        %v2927 = vpop.f32.mrb[0].mxu0
        %v2928 = vadd.f32 0.0, %v2927
        %v2929 = vpop.f32.mrb[0].mxu0
        %v2930 = vpop.f32.mrb[0].mxu0
        %v2931 = vadd.f32 0.0, %v2930
        %v2932 = vpop.f32.mrb[0].mxu0
        %2933 = vmatprep.mubr.bf16.mxu0 0
        %2934 = vmatmul.mubr.bf16.gmra.mrb[0].mxu0 %v2860
        %v2935 = vpop.f32.mrb[0].mxu0
        %v2936 = vadd.f32 0.0, %v2935
        %v2937 = vpop.f32.mrb[0].mxu0
        %v2938 = vpop.f32.mrb[0].mxu0
        %v2939 = vadd.f32 0.0, %v2938
        %v2940 = vpop.f32.mrb[0].mxu0
        %2941 = vmatprep.mubr.bf16.mxu0 0
        %2942 = vmatmul.mubr.bf16.gmra.mrb[0].mxu0 %v2863
        %v2943 = vpop.f32.mrb[0].mxu0
        %v2944 = vadd.f32 0.0, %v2943
        %v2945 = vpop.f32.mrb[0].mxu0
        %v2946 = vpop.f32.mrb[0].mxu0
        %v2947 = vadd.f32 0.0, %v2946
        %v2948 = vpop.f32.mrb[0].mxu0
        %2949 = vmatprep.mubr.bf16.mxu0 0
        %2950 = vmatmul.mubr.bf16.gmra.mrb[0].mxu0 %v2866
        %v2951 = vpop.f32.mrb[0].mxu0
        %v2952 = vadd.f32 0.0, %v2951
        %v2953 = vpop.f32.mrb[0].mxu0
        %v2954 = vpop.f32.mrb[0].mxu0
        %v2955 = vadd.f32 0.0, %v2954
        %v2956 = vpop.f32.mrb[0].mxu0
        %2957 = vmatprep.mubr.bf16.mxu0 0
        %2958 = vmatmul.mubr.bf16.gmra.mrb[0].mxu0 %v2869
        %v2959 = vpop.f32.mrb[0].mxu0
        %v2960 = vadd.f32 0.0, %v2959
        %v2961 = vpop.f32.mrb[0].mxu0
        %v2962 = vpop.f32.mrb[0].mxu0
        %v2963 = vadd.f32 0.0, %v2962
        %v2964 = vpop.f32.mrb[0].mxu0
        %2965 = vmatprep.mubr.bf16.mxu0 0
        %2966 = vmatmul.mubr.bf16.gmra.mrb[0].mxu0 %v2872
        %v2967 = vpop.f32.mrb[0].mxu0
        %v2968 = vadd.f32 0.0, %v2967
        %v2969 = vpop.f32.mrb[0].mxu0
        %v2970 = vpop.f32.mrb[0].mxu0
        %v2971 = vadd.f32 0.0, %v2970
        %v2972 = vpop.f32.mrb[0].mxu0
        %2973 = vdwg.mxu0
        %v2974 = vadd.f32 %v2762, %v2912
        %v2975 = vadd.f32 %v2765, %v2915
        %v2976 = vadd.f32 %v2770, %v2920
        %v2977 = vadd.f32 %v2773, %v2923
        %v2978 = vadd.f32 %v2778, %v2928
        %v2979 = vadd.f32 %v2781, %v2931
        %v2980 = vadd.f32 %v2786, %v2936
        %v2981 = vadd.f32 %v2789, %v2939
        %v2982 = vadd.f32 %v2794, %v2944
        %v2983 = vadd.f32 %v2797, %v2947
        %v2984 = vadd.f32 %v2802, %v2952
        %v2985 = vadd.f32 %v2805, %v2955
        %v2986 = vadd.f32 %v2810, %v2960
        %v2987 = vadd.f32 %v2813, %v2963
        %v2988 = vadd.f32 %v2818, %v2968
        %v2989 = vadd.f32 %v2821, %v2971
        %v2990 = vld [vmem:[%s745 + $0x3] sm:$0xff]
        %v2991 = vld [vmem:[%s745 + $0xb] sm:$0xff]
        %v2992 = vld [vmem:[%s745 + $0x13] sm:$0xff]
        %v2993 = vld [vmem:[%s745 + $0x1b] sm:$0xff]
        %v2994 = vld [vmem:[%s745 + $0x23] sm:$0xff]
        %v2995 = vld [vmem:[%s745 + $0x2b] sm:$0xff]
        %v2996 = vld [vmem:[%s745 + $0x33] sm:$0xff]
        %v2997 = vld [vmem:[%s745 + $0x3b] sm:$0xff]
        %v2998 = vld [vmem:[%s745 + $0x43] sm:$0xff]
        %v2999 = vld [vmem:[%s745 + $0x4b] sm:$0xff]
        %v3000 = vld [vmem:[%s745 + $0x53] sm:$0xff]
        %v3001 = vld [vmem:[%s745 + $0x5b] sm:$0xff]
        %v3002 = vld [vmem:[%s745 + $0x63] sm:$0xff]
        %v3003 = vld [vmem:[%s745 + $0x6b] sm:$0xff]
        %v3004 = vld [vmem:[%s745 + $0x73] sm:$0xff]
        %v3005 = vld [vmem:[%s745 + $0x7b] sm:$0x7]
        %v3006 = vpack.c.bf16 %v2991, %v2990
        %v3007 = vpack.c.bf16 %v2993, %v2992
        %v3008 = vpack.c.bf16 %v2995, %v2994
        %v3009 = vpack.c.bf16 %v2997, %v2996
        %v3010 = vpack.c.bf16 %v2999, %v2998
        %v3011 = vpack.c.bf16 %v3001, %v3000
        %v3012 = vpack.c.bf16 %v3003, %v3002
        %v3013 = vpack.c.bf16 %v3005, %v3004
        %s3014 = scalar_lea.vmem [#allocation18], 6
        %v3015 = vld [vmem:[%s3014] sm:$0x3]
        %v3017 = vsel %vm803, %v3006, 0
        %v3020 = vsel %vm803, %v3007, 0
        %v3023 = vsel %vm803, %v3008, 0
        %v3026 = vsel %vm803, %v3009, 0
        %v3029 = vsel %vm803, %v3010, 0
        %v3032 = vsel %vm803, %v3011, 0
        %v3035 = vsel %vm803, %v3012, 0
        %v3038 = vsel %vm803, %v3013, 0
        %v3041 = vsel %vm828, %v3015, 0
        %3043 = vmatprep.subr.bf16.mxu0 0
        %3044 = vmatpush1.bf16.msra.mxu0 %v3041
        %3045 = vmatprep.subr.bf16.mxu0 0
        %3046 = vmatpush1.bf16.msra.mxu0 0
        %3047 = vmatprep.subr.bf16.mxu0 0
        %3048 = vmatpush1.bf16.msra.mxu0 0
        %3049 = vmatprep.subr.bf16.mxu0 0
        %3050 = vmatpush1.bf16.msra.mxu0 0
        %3051 = vmatprep.subr.bf16.mxu0 0
        %3052 = vmatpush1.bf16.msra.mxu0 0
        %3053 = vmatprep.subr.bf16.mxu0 0
        %3054 = vmatpush1.bf16.msra.mxu0 0
        %3055 = vmatprep.subr.bf16.mxu0 0
        %3056 = vmatpush1.bf16.msra.mxu0 0
        %3057 = vmatprep.subr.bf16.mxu0 0
        %3058 = vmatpush1.bf16.msra.mxu0 0
        %3059 = vmatprep.subr.bf16.mxu0 0
        %3060 = vmatpush1.bf16.msra.mxu0 0
        %3061 = vmatprep.subr.bf16.mxu0 0
        %3062 = vmatpush1.bf16.msra.mxu0 0
        %3063 = vmatprep.subr.bf16.mxu0 0
        %3064 = vmatpush1.bf16.msra.mxu0 0
        %3065 = vmatprep.subr.bf16.mxu0 0
        %3066 = vmatpush1.bf16.msra.mxu0 0
        %3067 = vmatprep.subr.bf16.mxu0 0
        %3068 = vmatpush1.bf16.msra.mxu0 0
        %3069 = vmatprep.subr.bf16.mxu0 0
        %3070 = vmatpush1.bf16.msra.mxu0 0
        %3071 = vmatprep.subr.bf16.mxu0 0
        %3072 = vmatpush1.bf16.msra.mxu0 0
        %3073 = vmatprep.subr.bf16.mxu0 0
        %3074 = vmatpush1.bf16.msra.mxu0 0
        %3075 = vmatprep.mubr.bf16.mxu0 0
        %3076 = vmatmul.mubr.bf16.gmra.mrb[0].mxu0 %v3017
        %v3077 = vpop.f32.mrb[0].mxu0
        %v3078 = vadd.f32 0.0, %v3077
        %v3079 = vpop.f32.mrb[0].mxu0
        %v3080 = vpop.f32.mrb[0].mxu0
        %v3081 = vadd.f32 0.0, %v3080
        %v3082 = vpop.f32.mrb[0].mxu0
        %3083 = vmatprep.mubr.bf16.mxu0 0
        %3084 = vmatmul.mubr.bf16.gmra.mrb[0].mxu0 %v3020
        %v3085 = vpop.f32.mrb[0].mxu0
        %v3086 = vadd.f32 0.0, %v3085
        %v3087 = vpop.f32.mrb[0].mxu0
        %v3088 = vpop.f32.mrb[0].mxu0
        %v3089 = vadd.f32 0.0, %v3088
        %v3090 = vpop.f32.mrb[0].mxu0
        %3091 = vmatprep.mubr.bf16.mxu0 0
        %3092 = vmatmul.mubr.bf16.gmra.mrb[0].mxu0 %v3023
        %v3093 = vpop.f32.mrb[0].mxu0
        %v3094 = vadd.f32 0.0, %v3093
        %v3095 = vpop.f32.mrb[0].mxu0
        %v3096 = vpop.f32.mrb[0].mxu0
        %v3097 = vadd.f32 0.0, %v3096
        %v3098 = vpop.f32.mrb[0].mxu0
        %3099 = vmatprep.mubr.bf16.mxu0 0
        %3100 = vmatmul.mubr.bf16.gmra.mrb[0].mxu0 %v3026
        %v3101 = vpop.f32.mrb[0].mxu0
        %v3102 = vadd.f32 0.0, %v3101
        %v3103 = vpop.f32.mrb[0].mxu0
        %v3104 = vpop.f32.mrb[0].mxu0
        %v3105 = vadd.f32 0.0, %v3104
        %v3106 = vpop.f32.mrb[0].mxu0
        %3107 = vmatprep.mubr.bf16.mxu0 0
        %3108 = vmatmul.mubr.bf16.gmra.mrb[0].mxu0 %v3029
        %v3109 = vpop.f32.mrb[0].mxu0
        %v3110 = vadd.f32 0.0, %v3109
        %v3111 = vpop.f32.mrb[0].mxu0
        %v3112 = vpop.f32.mrb[0].mxu0
        %v3113 = vadd.f32 0.0, %v3112
        %v3114 = vpop.f32.mrb[0].mxu0
        %3115 = vmatprep.mubr.bf16.mxu0 0
        %3116 = vmatmul.mubr.bf16.gmra.mrb[0].mxu0 %v3032
        %v3117 = vpop.f32.mrb[0].mxu0
        %v3118 = vadd.f32 0.0, %v3117
        %v3119 = vpop.f32.mrb[0].mxu0
        %v3120 = vpop.f32.mrb[0].mxu0
        %v3121 = vadd.f32 0.0, %v3120
        %v3122 = vpop.f32.mrb[0].mxu0
        %3123 = vmatprep.mubr.bf16.mxu0 0
        %3124 = vmatmul.mubr.bf16.gmra.mrb[0].mxu0 %v3035
        %v3125 = vpop.f32.mrb[0].mxu0
        %v3126 = vadd.f32 0.0, %v3125
        %v3127 = vpop.f32.mrb[0].mxu0
        %v3128 = vpop.f32.mrb[0].mxu0
        %v3129 = vadd.f32 0.0, %v3128
        %v3130 = vpop.f32.mrb[0].mxu0
        %3131 = vmatprep.mubr.bf16.mxu0 0
        %3132 = vmatmul.mubr.bf16.gmra.mrb[0].mxu0 %v3038
        %v3133 = vpop.f32.mrb[0].mxu0
        %v3134 = vadd.f32 0.0, %v3133
        %v3135 = vpop.f32.mrb[0].mxu0
        %v3136 = vpop.f32.mrb[0].mxu0
        %v3137 = vadd.f32 0.0, %v3136
        %v3138 = vpop.f32.mrb[0].mxu0
        %3139 = vdwg.mxu0
        %v3140 = vadd.f32 %v2974, %v3078
        %v3141 = vadd.f32 %v2975, %v3081
        %v3142 = vadd.f32 %v2976, %v3086
        %v3143 = vadd.f32 %v2977, %v3089
        %v3144 = vadd.f32 %v2978, %v3094
        %v3145 = vadd.f32 %v2979, %v3097
        %v3146 = vadd.f32 %v2980, %v3102
        %v3147 = vadd.f32 %v2981, %v3105
        %v3148 = vadd.f32 %v2982, %v3110
        %v3149 = vadd.f32 %v2983, %v3113
        %v3150 = vadd.f32 %v2984, %v3118
        %v3151 = vadd.f32 %v2985, %v3121
        %v3152 = vadd.f32 %v2986, %v3126
        %v3153 = vadd.f32 %v2987, %v3129
        %v3154 = vadd.f32 %v2988, %v3134
        %v3155 = vadd.f32 %v2989, %v3137
        %v3156 = vld [vmem:[%s745 + $0x4] sm:$0xff]
        %v3157 = vld [vmem:[%s745 + $0xc] sm:$0xff]
        %v3158 = vld [vmem:[%s745 + $0x14] sm:$0xff]
        %v3159 = vld [vmem:[%s745 + $0x1c] sm:$0xff]
        %v3160 = vld [vmem:[%s745 + $0x24] sm:$0xff]
        %v3161 = vld [vmem:[%s745 + $0x2c] sm:$0xff]
        %v3162 = vld [vmem:[%s745 + $0x34] sm:$0xff]
        %v3163 = vld [vmem:[%s745 + $0x3c] sm:$0xff]
        %v3164 = vld [vmem:[%s745 + $0x44] sm:$0xff]
        %v3165 = vld [vmem:[%s745 + $0x4c] sm:$0xff]
        %v3166 = vld [vmem:[%s745 + $0x54] sm:$0xff]
        %v3167 = vld [vmem:[%s745 + $0x5c] sm:$0xff]
        %v3168 = vld [vmem:[%s745 + $0x64] sm:$0xff]
        %v3169 = vld [vmem:[%s745 + $0x6c] sm:$0xff]
        %v3170 = vld [vmem:[%s745 + $0x74] sm:$0xff]
        %v3171 = vld [vmem:[%s745 + $0x7c] sm:$0x7]
        %v3172 = vpack.c.bf16 %v3157, %v3156
        %v3173 = vpack.c.bf16 %v3159, %v3158
        %v3174 = vpack.c.bf16 %v3161, %v3160
        %v3175 = vpack.c.bf16 %v3163, %v3162
        %v3176 = vpack.c.bf16 %v3165, %v3164
        %v3177 = vpack.c.bf16 %v3167, %v3166
        %v3178 = vpack.c.bf16 %v3169, %v3168
        %v3179 = vpack.c.bf16 %v3171, %v3170
        %s3180 = scalar_lea.vmem [#allocation18], 8
        %v3181 = vld [vmem:[%s3180] sm:$0x3]
        %v3183 = vsel %vm803, %v3172, 0
        %v3186 = vsel %vm803, %v3173, 0
        %v3189 = vsel %vm803, %v3174, 0
        %v3192 = vsel %vm803, %v3175, 0
        %v3195 = vsel %vm803, %v3176, 0
        %v3198 = vsel %vm803, %v3177, 0
        %v3201 = vsel %vm803, %v3178, 0
        %v3204 = vsel %vm803, %v3179, 0
        %v3207 = vsel %vm828, %v3181, 0
        %3209 = vmatprep.subr.bf16.mxu0 0
        %3210 = vmatpush1.bf16.msra.mxu0 %v3207
        %3211 = vmatprep.subr.bf16.mxu0 0
        %3212 = vmatpush1.bf16.msra.mxu0 0
        %3213 = vmatprep.subr.bf16.mxu0 0
        %3214 = vmatpush1.bf16.msra.mxu0 0
        %3215 = vmatprep.subr.bf16.mxu0 0
        %3216 = vmatpush1.bf16.msra.mxu0 0
        %3217 = vmatprep.subr.bf16.mxu0 0
        %3218 = vmatpush1.bf16.msra.mxu0 0
        %3219 = vmatprep.subr.bf16.mxu0 0
        %3220 = vmatpush1.bf16.msra.mxu0 0
        %3221 = vmatprep.subr.bf16.mxu0 0
        %3222 = vmatpush1.bf16.msra.mxu0 0
        %3223 = vmatprep.subr.bf16.mxu0 0
        %3224 = vmatpush1.bf16.msra.mxu0 0
        %3225 = vmatprep.subr.bf16.mxu0 0
        %3226 = vmatpush1.bf16.msra.mxu0 0
        %3227 = vmatprep.subr.bf16.mxu0 0
        %3228 = vmatpush1.bf16.msra.mxu0 0
        %3229 = vmatprep.subr.bf16.mxu0 0
        %3230 = vmatpush1.bf16.msra.mxu0 0
        %3231 = vmatprep.subr.bf16.mxu0 0
        %3232 = vmatpush1.bf16.msra.mxu0 0
        %3233 = vmatprep.subr.bf16.mxu0 0
        %3234 = vmatpush1.bf16.msra.mxu0 0
        %3235 = vmatprep.subr.bf16.mxu0 0
        %3236 = vmatpush1.bf16.msra.mxu0 0
        %3237 = vmatprep.subr.bf16.mxu0 0
        %3238 = vmatpush1.bf16.msra.mxu0 0
        %3239 = vmatprep.subr.bf16.mxu0 0
        %3240 = vmatpush1.bf16.msra.mxu0 0
        %3241 = vmatprep.mubr.bf16.mxu0 0
        %3242 = vmatmul.mubr.bf16.gmra.mrb[0].mxu0 %v3183
        %v3243 = vpop.f32.mrb[0].mxu0
        %v3244 = vadd.f32 0.0, %v3243
        %v3245 = vpop.f32.mrb[0].mxu0
        %v3246 = vpop.f32.mrb[0].mxu0
        %v3247 = vadd.f32 0.0, %v3246
        %v3248 = vpop.f32.mrb[0].mxu0
        %3249 = vmatprep.mubr.bf16.mxu0 0
        %3250 = vmatmul.mubr.bf16.gmra.mrb[0].mxu0 %v3186
        %v3251 = vpop.f32.mrb[0].mxu0
        %v3252 = vadd.f32 0.0, %v3251
        %v3253 = vpop.f32.mrb[0].mxu0
        %v3254 = vpop.f32.mrb[0].mxu0
        %v3255 = vadd.f32 0.0, %v3254
        %v3256 = vpop.f32.mrb[0].mxu0
        %3257 = vmatprep.mubr.bf16.mxu0 0
        %3258 = vmatmul.mubr.bf16.gmra.mrb[0].mxu0 %v3189
        %v3259 = vpop.f32.mrb[0].mxu0
        %v3260 = vadd.f32 0.0, %v3259
        %v3261 = vpop.f32.mrb[0].mxu0
        %v3262 = vpop.f32.mrb[0].mxu0
        %v3263 = vadd.f32 0.0, %v3262
        %v3264 = vpop.f32.mrb[0].mxu0
        %3265 = vmatprep.mubr.bf16.mxu0 0
        %3266 = vmatmul.mubr.bf16.gmra.mrb[0].mxu0 %v3192
        %v3267 = vpop.f32.mrb[0].mxu0
        %v3268 = vadd.f32 0.0, %v3267
        %v3269 = vpop.f32.mrb[0].mxu0
        %v3270 = vpop.f32.mrb[0].mxu0
        %v3271 = vadd.f32 0.0, %v3270
        %v3272 = vpop.f32.mrb[0].mxu0
        %3273 = vmatprep.mubr.bf16.mxu0 0
        %3274 = vmatmul.mubr.bf16.gmra.mrb[0].mxu0 %v3195
        %v3275 = vpop.f32.mrb[0].mxu0
        %v3276 = vadd.f32 0.0, %v3275
        %v3277 = vpop.f32.mrb[0].mxu0
        %v3278 = vpop.f32.mrb[0].mxu0
        %v3279 = vadd.f32 0.0, %v3278
        %v3280 = vpop.f32.mrb[0].mxu0
        %3281 = vmatprep.mubr.bf16.mxu0 0
        %3282 = vmatmul.mubr.bf16.gmra.mrb[0].mxu0 %v3198
        %v3283 = vpop.f32.mrb[0].mxu0
        %v3284 = vadd.f32 0.0, %v3283
        %v3285 = vpop.f32.mrb[0].mxu0
        %v3286 = vpop.f32.mrb[0].mxu0
        %v3287 = vadd.f32 0.0, %v3286
        %v3288 = vpop.f32.mrb[0].mxu0
        %3289 = vmatprep.mubr.bf16.mxu0 0
        %3290 = vmatmul.mubr.bf16.gmra.mrb[0].mxu0 %v3201
        %v3291 = vpop.f32.mrb[0].mxu0
        %v3292 = vadd.f32 0.0, %v3291
        %v3293 = vpop.f32.mrb[0].mxu0
        %v3294 = vpop.f32.mrb[0].mxu0
        %v3295 = vadd.f32 0.0, %v3294
        %v3296 = vpop.f32.mrb[0].mxu0
        %3297 = vmatprep.mubr.bf16.mxu0 0
        %3298 = vmatmul.mubr.bf16.gmra.mrb[0].mxu0 %v3204
        %v3299 = vpop.f32.mrb[0].mxu0
        %v3300 = vadd.f32 0.0, %v3299
        %v3301 = vpop.f32.mrb[0].mxu0
        %v3302 = vpop.f32.mrb[0].mxu0
        %v3303 = vadd.f32 0.0, %v3302
        %v3304 = vpop.f32.mrb[0].mxu0
        %3305 = vdwg.mxu0
        %v3306 = vadd.f32 %v3140, %v3244
        %v3307 = vadd.f32 %v3141, %v3247
        %v3308 = vadd.f32 %v3142, %v3252
        %v3309 = vadd.f32 %v3143, %v3255
        %v3310 = vadd.f32 %v3144, %v3260
        %v3311 = vadd.f32 %v3145, %v3263
        %v3312 = vadd.f32 %v3146, %v3268
        %v3313 = vadd.f32 %v3147, %v3271
        %v3314 = vadd.f32 %v3148, %v3276
        %v3315 = vadd.f32 %v3149, %v3279
        %v3316 = vadd.f32 %v3150, %v3284
        %v3317 = vadd.f32 %v3151, %v3287
        %v3318 = vadd.f32 %v3152, %v3292
        %v3319 = vadd.f32 %v3153, %v3295
        %v3320 = vadd.f32 %v3154, %v3300
        %v3321 = vadd.f32 %v3155, %v3303
        %v3322 = vld [vmem:[%s745 + $0x5] sm:$0xff]
        %v3323 = vld [vmem:[%s745 + $0xd] sm:$0xff]
        %v3324 = vld [vmem:[%s745 + $0x15] sm:$0xff]
        %v3325 = vld [vmem:[%s745 + $0x1d] sm:$0xff]
        %v3326 = vld [vmem:[%s745 + $0x25] sm:$0xff]
        %v3327 = vld [vmem:[%s745 + $0x2d] sm:$0xff]
        %v3328 = vld [vmem:[%s745 + $0x35] sm:$0xff]
        %v3329 = vld [vmem:[%s745 + $0x3d] sm:$0xff]
        %v3330 = vld [vmem:[%s745 + $0x45] sm:$0xff]
        %v3331 = vld [vmem:[%s745 + $0x4d] sm:$0xff]
        %v3332 = vld [vmem:[%s745 + $0x55] sm:$0xff]
        %v3333 = vld [vmem:[%s745 + $0x5d] sm:$0xff]
        %v3334 = vld [vmem:[%s745 + $0x65] sm:$0xff]
        %v3335 = vld [vmem:[%s745 + $0x6d] sm:$0xff]
        %v3336 = vld [vmem:[%s745 + $0x75] sm:$0xff]
        %v3337 = vld [vmem:[%s745 + $0x7d] sm:$0x7]
        %v3338 = vpack.c.bf16 %v3323, %v3322
        %v3339 = vpack.c.bf16 %v3325, %v3324
        %v3340 = vpack.c.bf16 %v3327, %v3326
        %v3341 = vpack.c.bf16 %v3329, %v3328
        %v3342 = vpack.c.bf16 %v3331, %v3330
        %v3343 = vpack.c.bf16 %v3333, %v3332
        %v3344 = vpack.c.bf16 %v3335, %v3334
        %v3345 = vpack.c.bf16 %v3337, %v3336
        %s3346 = scalar_lea.vmem [#allocation18], 10
        %v3347 = vld [vmem:[%s3346] sm:$0x3]
        %v3349 = vsel %vm803, %v3338, 0
        %v3352 = vsel %vm803, %v3339, 0
        %v3355 = vsel %vm803, %v3340, 0
        %v3358 = vsel %vm803, %v3341, 0
        %v3361 = vsel %vm803, %v3342, 0
        %v3364 = vsel %vm803, %v3343, 0
        %v3367 = vsel %vm803, %v3344, 0
        %v3370 = vsel %vm803, %v3345, 0
        %v3373 = vsel %vm828, %v3347, 0
        %3375 = vmatprep.subr.bf16.mxu0 0
        %3376 = vmatpush1.bf16.msra.mxu0 %v3373
        %3377 = vmatprep.subr.bf16.mxu0 0
        %3378 = vmatpush1.bf16.msra.mxu0 0
        %3379 = vmatprep.subr.bf16.mxu0 0
        %3380 = vmatpush1.bf16.msra.mxu0 0
        %3381 = vmatprep.subr.bf16.mxu0 0
        %3382 = vmatpush1.bf16.msra.mxu0 0
        %3383 = vmatprep.subr.bf16.mxu0 0
        %3384 = vmatpush1.bf16.msra.mxu0 0
        %3385 = vmatprep.subr.bf16.mxu0 0
        %3386 = vmatpush1.bf16.msra.mxu0 0
        %3387 = vmatprep.subr.bf16.mxu0 0
        %3388 = vmatpush1.bf16.msra.mxu0 0
        %3389 = vmatprep.subr.bf16.mxu0 0
        %3390 = vmatpush1.bf16.msra.mxu0 0
        %3391 = vmatprep.subr.bf16.mxu0 0
        %3392 = vmatpush1.bf16.msra.mxu0 0
        %3393 = vmatprep.subr.bf16.mxu0 0
        %3394 = vmatpush1.bf16.msra.mxu0 0
        %3395 = vmatprep.subr.bf16.mxu0 0
        %3396 = vmatpush1.bf16.msra.mxu0 0
        %3397 = vmatprep.subr.bf16.mxu0 0
        %3398 = vmatpush1.bf16.msra.mxu0 0
        %3399 = vmatprep.subr.bf16.mxu0 0
        %3400 = vmatpush1.bf16.msra.mxu0 0
        %3401 = vmatprep.subr.bf16.mxu0 0
        %3402 = vmatpush1.bf16.msra.mxu0 0
        %3403 = vmatprep.subr.bf16.mxu0 0
        %3404 = vmatpush1.bf16.msra.mxu0 0
        %3405 = vmatprep.subr.bf16.mxu0 0
        %3406 = vmatpush1.bf16.msra.mxu0 0
        %3407 = vmatprep.mubr.bf16.mxu0 0
        %3408 = vmatmul.mubr.bf16.gmra.mrb[0].mxu0 %v3349
        %v3409 = vpop.f32.mrb[0].mxu0
        %v3410 = vadd.f32 0.0, %v3409
        %v3411 = vpop.f32.mrb[0].mxu0
        %v3412 = vpop.f32.mrb[0].mxu0
        %v3413 = vadd.f32 0.0, %v3412
        %v3414 = vpop.f32.mrb[0].mxu0
        %3415 = vmatprep.mubr.bf16.mxu0 0
        %3416 = vmatmul.mubr.bf16.gmra.mrb[0].mxu0 %v3352
        %v3417 = vpop.f32.mrb[0].mxu0
        %v3418 = vadd.f32 0.0, %v3417
        %v3419 = vpop.f32.mrb[0].mxu0
        %v3420 = vpop.f32.mrb[0].mxu0
        %v3421 = vadd.f32 0.0, %v3420
        %v3422 = vpop.f32.mrb[0].mxu0
        %3423 = vmatprep.mubr.bf16.mxu0 0
        %3424 = vmatmul.mubr.bf16.gmra.mrb[0].mxu0 %v3355
        %v3425 = vpop.f32.mrb[0].mxu0
        %v3426 = vadd.f32 0.0, %v3425
        %v3427 = vpop.f32.mrb[0].mxu0
        %v3428 = vpop.f32.mrb[0].mxu0
        %v3429 = vadd.f32 0.0, %v3428
        %v3430 = vpop.f32.mrb[0].mxu0
        %3431 = vmatprep.mubr.bf16.mxu0 0
        %3432 = vmatmul.mubr.bf16.gmra.mrb[0].mxu0 %v3358
        %v3433 = vpop.f32.mrb[0].mxu0
        %v3434 = vadd.f32 0.0, %v3433
        %v3435 = vpop.f32.mrb[0].mxu0
        %v3436 = vpop.f32.mrb[0].mxu0
        %v3437 = vadd.f32 0.0, %v3436
        %v3438 = vpop.f32.mrb[0].mxu0
        %3439 = vmatprep.mubr.bf16.mxu0 0
        %3440 = vmatmul.mubr.bf16.gmra.mrb[0].mxu0 %v3361
        %v3441 = vpop.f32.mrb[0].mxu0
        %v3442 = vadd.f32 0.0, %v3441
        %v3443 = vpop.f32.mrb[0].mxu0
        %v3444 = vpop.f32.mrb[0].mxu0
        %v3445 = vadd.f32 0.0, %v3444
        %v3446 = vpop.f32.mrb[0].mxu0
        %3447 = vmatprep.mubr.bf16.mxu0 0
        %3448 = vmatmul.mubr.bf16.gmra.mrb[0].mxu0 %v3364
        %v3449 = vpop.f32.mrb[0].mxu0
        %v3450 = vadd.f32 0.0, %v3449
        %v3451 = vpop.f32.mrb[0].mxu0
        %v3452 = vpop.f32.mrb[0].mxu0
        %v3453 = vadd.f32 0.0, %v3452
        %v3454 = vpop.f32.mrb[0].mxu0
        %3455 = vmatprep.mubr.bf16.mxu0 0
        %3456 = vmatmul.mubr.bf16.gmra.mrb[0].mxu0 %v3367
        %v3457 = vpop.f32.mrb[0].mxu0
        %v3458 = vadd.f32 0.0, %v3457
        %v3459 = vpop.f32.mrb[0].mxu0
        %v3460 = vpop.f32.mrb[0].mxu0
        %v3461 = vadd.f32 0.0, %v3460
        %v3462 = vpop.f32.mrb[0].mxu0
        %3463 = vmatprep.mubr.bf16.mxu0 0
        %3464 = vmatmul.mubr.bf16.gmra.mrb[0].mxu0 %v3370
        %v3465 = vpop.f32.mrb[0].mxu0
        %v3466 = vadd.f32 0.0, %v3465
        %v3467 = vpop.f32.mrb[0].mxu0
        %v3468 = vpop.f32.mrb[0].mxu0
        %v3469 = vadd.f32 0.0, %v3468
        %v3470 = vpop.f32.mrb[0].mxu0
        %3471 = vdwg.mxu0
        %v3472 = vadd.f32 %v3306, %v3410
        %v3473 = vadd.f32 %v3307, %v3413
        %v3474 = vadd.f32 %v3308, %v3418
        %v3475 = vadd.f32 %v3309, %v3421
        %v3476 = vadd.f32 %v3310, %v3426
        %v3477 = vadd.f32 %v3311, %v3429
        %v3478 = vadd.f32 %v3312, %v3434
        %v3479 = vadd.f32 %v3313, %v3437
        %v3480 = vadd.f32 %v3314, %v3442
        %v3481 = vadd.f32 %v3315, %v3445
        %v3482 = vadd.f32 %v3316, %v3450
        %v3483 = vadd.f32 %v3317, %v3453
        %v3484 = vadd.f32 %v3318, %v3458
        %v3485 = vadd.f32 %v3319, %v3461
        %v3486 = vadd.f32 %v3320, %v3466
        %v3487 = vadd.f32 %v3321, %v3469
        %3488 = vst.msk [vmem:[#allocation6] sm:$0xff] %vm1551, %v3472
        %3489 = vst.msk [vmem:[#allocation6 + $0x8] sm:$0xff] %vm1551, %v3473
        %3490 = vst.msk [vmem:[#allocation6 + $0x10] sm:$0xff] %vm1551, %v3474
        %3491 = vst.msk [vmem:[#allocation6 + $0x18] sm:$0xff] %vm1551, %v3475
        %3492 = vst.msk [vmem:[#allocation6 + $0x20] sm:$0xff] %vm1551, %v3476
        %3493 = vst.msk [vmem:[#allocation6 + $0x28] sm:$0xff] %vm1551, %v3477
        %3494 = vst.msk [vmem:[#allocation6 + $0x30] sm:$0xff] %vm1551, %v3478
        %3495 = vst.msk [vmem:[#allocation6 + $0x38] sm:$0xff] %vm1551, %v3479
        %3496 = vst.msk [vmem:[#allocation6 + $0x40] sm:$0xff] %vm1551, %v3480
        %3497 = vst.msk [vmem:[#allocation6 + $0x48] sm:$0xff] %vm1551, %v3481
        %3498 = vst.msk [vmem:[#allocation6 + $0x50] sm:$0xff] %vm1551, %v3482
        %3499 = vst.msk [vmem:[#allocation6 + $0x58] sm:$0xff] %vm1551, %v3483
        %3500 = vst.msk [vmem:[#allocation6 + $0x60] sm:$0xff] %vm1551, %v3484
        %3501 = vst.msk [vmem:[#allocation6 + $0x68] sm:$0xff] %vm1551, %v3485
        %3502 = vst.msk [vmem:[#allocation6 + $0x70] sm:$0xff] %vm1551, %v3486
        %vm3503 = vcmask 124928
        %3504 = vst.msk [vmem:[#allocation6 + $0x78] sm:$0x7] %vm3503, %v3487
        %v3505 = vld [vmem:[#allocation6] ss:$3 sm:$0xff]
        %s3506 = scalar_lea.vmem [#allocation6], 24
        %v3507 = vld [vmem:[%s3506] ss:$3 sm:$0xff]
        %s3508 = scalar_lea.vmem [#allocation6], 48
        %v3509 = vld [vmem:[%s3508] ss:$3 sm:$0xff]
        %s3510 = scalar_lea.vmem [#allocation6], 72
        %v3511 = vld [vmem:[%s3510] ss:$3 sm:$0xff]
        %s3512 = scalar_lea.vmem [#allocation6], 96
        %v3513 = vld [vmem:[%s3512] ss:$3 sm:$0xff]
        %s3514 = scalar_lea.vmem [#allocation6], 120
        %v3515 = vld [vmem:[%s3514] ss:$3 sm:$0x1]
        %s3516 = scalar_lea.vmem [#allocation6], 1
        %v3517 = vld [vmem:[%s3516] ss:$3 sm:$0xff]
        %s3518 = scalar_lea.vmem [#allocation6], 25
        %v3519 = vld [vmem:[%s3518] ss:$3 sm:$0xff]
        %s3520 = scalar_lea.vmem [#allocation6], 49
        %v3521 = vld [vmem:[%s3520] ss:$3 sm:$0xff]
        %s3522 = scalar_lea.vmem [#allocation6], 73
        %v3523 = vld [vmem:[%s3522] ss:$3 sm:$0xff]
        %s3524 = scalar_lea.vmem [#allocation6], 97
        %v3525 = vld [vmem:[%s3524] ss:$3 sm:$0xff]
        %s3526 = scalar_lea.vmem [#allocation6], 121
        %v3527 = vld [vmem:[%s3526] ss:$3 sm:$0x1]
        %v3528 = vmax.f32 %v3505, %v3517
        %v3529 = vmax.f32 %v3507, %v3519
        %v3530 = vmax.f32 %v3509, %v3521
        %v3531 = vmax.f32 %v3511, %v3523
        %v3532 = vmax.f32 %v3513, %v3525
        %v3533 = vmax.f32 %v3515, %v3527
        %s3534 = scalar_lea.vmem [#allocation6], 2
        %v3535 = vld [vmem:[%s3534] ss:$3 sm:$0xff]
        %s3536 = scalar_lea.vmem [#allocation6], 26
        %v3537 = vld [vmem:[%s3536] ss:$3 sm:$0xff]
        %s3538 = scalar_lea.vmem [#allocation6], 50
        %v3539 = vld [vmem:[%s3538] ss:$3 sm:$0xff]
        %s3540 = scalar_lea.vmem [#allocation6], 74
        %v3541 = vld [vmem:[%s3540] ss:$3 sm:$0xff]
        %s3542 = scalar_lea.vmem [#allocation6], 98
        %v3543 = vld [vmem:[%s3542] ss:$3 sm:$0xff]
        %s3544 = scalar_lea.vmem [#allocation6], 122
        %v3545 = vld [vmem:[%s3544] ss:$3 sm:$0x1]
        %v3546 = vmax.f32 %v3528, %v3535
        %v3547 = vmax.f32 %v3529, %v3537
        %v3548 = vmax.f32 %v3530, %v3539
        %v3549 = vmax.f32 %v3531, %v3541
        %v3550 = vmax.f32 %v3532, %v3543
        %v3551 = vmax.f32 %v3533, %v3545
        %v3552 = vld [vmem:[#allocation19] sm:$0x1]
        %v3554 = vlaneseq
        %v3555 = vshrl.u32 %v3554, 7
        %v3556 = vsub.s32 0, %v3555
        %v3557 = vrot.slane %v3552, %v3556
        %v3559 = vadd.f32 %v3546, %v3557
        %v3560 = vadd.f32 %v3547, %v3557
        %v3561 = vadd.f32 %v3548, %v3557
        %v3562 = vadd.f32 %v3549, %v3557
        %v3563 = vadd.f32 %v3550, %v3557
        %v3564 = vadd.f32 %v3551, %v3557
        %v3565 = vmax.f32 %v3559, 0.0
        %v3566 = vmax.f32 %v3560, 0.0
        %v3567 = vmax.f32 %v3561, 0.0
        %v3568 = vmax.f32 %v3562, 0.0
        %v3569 = vmax.f32 %v3563, 0.0
        %v3570 = vmax.f32 %v3564, 0.0
        %3571 = vst.msk [vmem:[#allocation7] sm:$0xff] %vm1551, %v3565
        %3572 = vst.msk [vmem:[#allocation7 + $0x8] sm:$0xff] %vm1551, %v3566
        %3573 = vst.msk [vmem:[#allocation7 + $0x10] sm:$0xff] %vm1551, %v3567
        %3574 = vst.msk [vmem:[#allocation7 + $0x18] sm:$0xff] %vm1551, %v3568
        %3575 = vst.msk [vmem:[#allocation7 + $0x20] sm:$0xff] %vm1551, %v3569
        %vm3576 = vcmask 122880
        %3577 = vst.msk [vmem:[#allocation7 + $0x28] sm:$0x1] %vm3576, %v3570
        %v3578 = vld [vmem:[#allocation7] sm:$0xff]
        %v3579 = vld [vmem:[#allocation7 + $0x8] sm:$0xff]
        %v3580 = vld [vmem:[#allocation7 + $0x10] sm:$0xff]
        %v3581 = vld [vmem:[#allocation7 + $0x18] sm:$0xff]
        %v3582 = vld [vmem:[#allocation7 + $0x20] sm:$0xf]
        %v3583 = vpack.c.bf16 %v3579, %v3578
        %v3584 = vpack.c.bf16 %v3581, %v3580
        %v3585 = vpack.c.bf16 %v3582, %v3582
        %v3586 = vld [vmem:[%s9] sm:$0xf]
        %v3587 = vld [vmem:[%s9 + $0x4] sm:$0xf]
        %v3588 = vld [vmem:[#allocation7 + $0x1] sm:$0xff]
        %v3589 = vld [vmem:[#allocation7 + $0x9] sm:$0xff]
        %v3590 = vld [vmem:[#allocation7 + $0x11] sm:$0xff]
        %v3591 = vld [vmem:[#allocation7 + $0x19] sm:$0xff]
        %v3592 = vld [vmem:[#allocation7 + $0x21] sm:$0xf]
        %v3593 = vpack.c.bf16 %v3589, %v3588
        %v3594 = vpack.c.bf16 %v3591, %v3590
        %v3595 = vpack.c.bf16 %v3592, %v3592
        %s3596 = scalar_lea.vmem %s9, 8
        %v3597 = vld [vmem:[%s3596] sm:$0xf]
        %v3598 = vld [vmem:[%s3596 + $0x4] sm:$0xf]
        %v3601 = vunpack.c.l.b16 %v3597
        %v3602 = vunpack.c.l.b16 %v3598
        %v3603 = vpack.c.b16 %v3602, %v3601
        %v3606 = vsel %vm1551, %v3593, 0
        %v3609 = vsel %vm1551, %v3594, 0
        %v3612 = vsel %vm1551, %v3595, 0
        %3614 = vmatprep.subr.bf16.mxu0 0
        %3615 = vmatpush1.bf16.msra.mxu0 %v3603
        %3616 = vmatprep.subr.bf16.mxu0 0
        %3617 = vmatpush1.bf16.msra.mxu0 0
        %3618 = vmatprep.subr.bf16.mxu0 0
        %3619 = vmatpush1.bf16.msra.mxu0 0
        %3620 = vmatprep.subr.bf16.mxu0 0
        %3621 = vmatpush1.bf16.msra.mxu0 0
        %3622 = vmatprep.subr.bf16.mxu0 0
        %3623 = vmatpush1.bf16.msra.mxu0 0
        %3624 = vmatprep.subr.bf16.mxu0 0
        %3625 = vmatpush1.bf16.msra.mxu0 0
        %3626 = vmatprep.subr.bf16.mxu0 0
        %3627 = vmatpush1.bf16.msra.mxu0 0
        %3628 = vmatprep.subr.bf16.mxu0 0
        %3629 = vmatpush1.bf16.msra.mxu0 0
        %3630 = vmatprep.subr.bf16.mxu0 0
        %3631 = vmatpush1.bf16.msra.mxu0 0
        %3632 = vmatprep.subr.bf16.mxu0 0
        %3633 = vmatpush1.bf16.msra.mxu0 0
        %3634 = vmatprep.subr.bf16.mxu0 0
        %3635 = vmatpush1.bf16.msra.mxu0 0
        %3636 = vmatprep.subr.bf16.mxu0 0
        %3637 = vmatpush1.bf16.msra.mxu0 0
        %3638 = vmatprep.subr.bf16.mxu0 0
        %3639 = vmatpush1.bf16.msra.mxu0 0
        %3640 = vmatprep.subr.bf16.mxu0 0
        %3641 = vmatpush1.bf16.msra.mxu0 0
        %3642 = vmatprep.subr.bf16.mxu0 0
        %3643 = vmatpush1.bf16.msra.mxu0 0
        %3644 = vmatprep.subr.bf16.mxu0 0
        %3645 = vmatpush1.bf16.msra.mxu0 0
        %3646 = vmatprep.mubr.bf16.mxu0 0
        %3647 = vmatmul.mubr.bf16.gmra.mrb[0].mxu0 %v3606
        %v3648 = vpop.f32.mrb[0].mxu0
        %v3649 = vadd.f32 0.0, %v3648
        %v3650 = vpop.f32.mrb[0].mxu0
        %v3651 = vpop.f32.mrb[0].mxu0
        %v3652 = vadd.f32 0.0, %v3651
        %v3653 = vpop.f32.mrb[0].mxu0
        %3654 = vmatprep.mubr.bf16.mxu0 0
        %3655 = vmatmul.mubr.bf16.gmra.mrb[0].mxu0 %v3609
        %v3656 = vpop.f32.mrb[0].mxu0
        %v3657 = vadd.f32 0.0, %v3656
        %v3658 = vpop.f32.mrb[0].mxu0
        %v3659 = vpop.f32.mrb[0].mxu0
        %v3660 = vadd.f32 0.0, %v3659
        %v3661 = vpop.f32.mrb[0].mxu0
        %3662 = vmatprep.mubr.bf16.mxu0 0
        %3663 = vmatmul.mubr.bf16.gmra.mrb[0].mxu0 %v3612
        %v3664 = vpop.f32.mrb[0].mxu0
        %v3665 = vadd.f32 0.0, %v3664
        %v3666 = vpop.f32.mrb[0].mxu0
        %v3667 = vpop.f32.mrb[0].mxu0
        %v3668 = vpop.f32.mrb[0].mxu0
        %3669 = vdwg.mxu0
        %v3672 = vunpack.c.l.b16 %v3586
        %v3673 = vunpack.c.l.b16 %v3587
        %v3674 = vpack.c.b16 %v3673, %v3672
        %v3677 = vsel %vm1551, %v3583, 0
        %v3680 = vsel %vm1551, %v3584, 0
        %v3683 = vsel %vm1551, %v3585, 0
        %3685 = vmatprep.subr.bf16.mxu0 0
        %3686 = vmatpush1.bf16.msra.mxu0 %v3674
        %3687 = vmatprep.subr.bf16.mxu0 0
        %3688 = vmatpush1.bf16.msra.mxu0 0
        %3689 = vmatprep.subr.bf16.mxu0 0
        %3690 = vmatpush1.bf16.msra.mxu0 0
        %3691 = vmatprep.subr.bf16.mxu0 0
        %3692 = vmatpush1.bf16.msra.mxu0 0
        %3693 = vmatprep.subr.bf16.mxu0 0
        %3694 = vmatpush1.bf16.msra.mxu0 0
        %3695 = vmatprep.subr.bf16.mxu0 0
        %3696 = vmatpush1.bf16.msra.mxu0 0
        %3697 = vmatprep.subr.bf16.mxu0 0
        %3698 = vmatpush1.bf16.msra.mxu0 0
        %3699 = vmatprep.subr.bf16.mxu0 0
        %3700 = vmatpush1.bf16.msra.mxu0 0
        %3701 = vmatprep.subr.bf16.mxu0 0
        %3702 = vmatpush1.bf16.msra.mxu0 0
        %3703 = vmatprep.subr.bf16.mxu0 0
        %3704 = vmatpush1.bf16.msra.mxu0 0
        %3705 = vmatprep.subr.bf16.mxu0 0
        %3706 = vmatpush1.bf16.msra.mxu0 0
        %3707 = vmatprep.subr.bf16.mxu0 0
        %3708 = vmatpush1.bf16.msra.mxu0 0
        %3709 = vmatprep.subr.bf16.mxu0 0
        %3710 = vmatpush1.bf16.msra.mxu0 0
        %3711 = vmatprep.subr.bf16.mxu0 0
        %3712 = vmatpush1.bf16.msra.mxu0 0
        %3713 = vmatprep.subr.bf16.mxu0 0
        %3714 = vmatpush1.bf16.msra.mxu0 0
        %3715 = vmatprep.subr.bf16.mxu0 0
        %3716 = vmatpush1.bf16.msra.mxu0 0
        %3717 = vmatprep.mubr.bf16.mxu0 0
        %3718 = vmatmul.mubr.bf16.gmra.mrb[0].mxu0 %v3677
        %v3719 = vpop.f32.mrb[0].mxu0
        %v3720 = vadd.f32 %v3649, %v3719
        %v3721 = vpop.f32.mrb[0].mxu0
        %v3722 = vpop.f32.mrb[0].mxu0
        %v3723 = vadd.f32 %v3652, %v3722
        %v3724 = vpop.f32.mrb[0].mxu0
        %3725 = vmatprep.mubr.bf16.mxu0 0
        %3726 = vmatmul.mubr.bf16.gmra.mrb[0].mxu0 %v3680
        %v3727 = vpop.f32.mrb[0].mxu0
        %v3728 = vadd.f32 %v3657, %v3727
        %v3729 = vpop.f32.mrb[0].mxu0
        %v3730 = vpop.f32.mrb[0].mxu0
        %v3731 = vadd.f32 %v3660, %v3730
        %v3732 = vpop.f32.mrb[0].mxu0
        %3733 = vmatprep.mubr.bf16.mxu0 0
        %3734 = vmatmul.mubr.bf16.gmra.mrb[0].mxu0 %v3683
        %v3735 = vpop.f32.mrb[0].mxu0
        %v3736 = vadd.f32 %v3665, %v3735
        %v3737 = vpop.f32.mrb[0].mxu0
        %v3738 = vpop.f32.mrb[0].mxu0
        %v3739 = vpop.f32.mrb[0].mxu0
        %3740 = vdwg.mxu0
        %v3741 = vld [vmem:[#allocation7 + $0x2] sm:$0xff]
        %v3742 = vld [vmem:[#allocation7 + $0xa] sm:$0xff]
        %v3743 = vld [vmem:[#allocation7 + $0x12] sm:$0xff]
        %v3744 = vld [vmem:[#allocation7 + $0x1a] sm:$0xff]
        %v3745 = vld [vmem:[#allocation7 + $0x22] sm:$0xf]
        %v3746 = vpack.c.bf16 %v3742, %v3741
        %v3747 = vpack.c.bf16 %v3744, %v3743
        %v3748 = vpack.c.bf16 %v3745, %v3745
        %s3749 = scalar_lea.vmem %s9, 16
        %v3750 = vld [vmem:[%s3749] sm:$0xf]
        %v3751 = vld [vmem:[%s3749 + $0x4] sm:$0xf]
        %v3754 = vunpack.c.l.b16 %v3750
        %v3755 = vunpack.c.l.b16 %v3751
        %v3756 = vpack.c.b16 %v3755, %v3754
        %v3759 = vsel %vm1551, %v3746, 0
        %v3762 = vsel %vm1551, %v3747, 0
        %v3765 = vsel %vm1551, %v3748, 0
        %3767 = vmatprep.subr.bf16.mxu0 0
        %3768 = vmatpush1.bf16.msra.mxu0 %v3756
        %3769 = vmatprep.subr.bf16.mxu0 0
        %3770 = vmatpush1.bf16.msra.mxu0 0
        %3771 = vmatprep.subr.bf16.mxu0 0
        %3772 = vmatpush1.bf16.msra.mxu0 0
        %3773 = vmatprep.subr.bf16.mxu0 0
        %3774 = vmatpush1.bf16.msra.mxu0 0
        %3775 = vmatprep.subr.bf16.mxu0 0
        %3776 = vmatpush1.bf16.msra.mxu0 0
        %3777 = vmatprep.subr.bf16.mxu0 0
        %3778 = vmatpush1.bf16.msra.mxu0 0
        %3779 = vmatprep.subr.bf16.mxu0 0
        %3780 = vmatpush1.bf16.msra.mxu0 0
        %3781 = vmatprep.subr.bf16.mxu0 0
        %3782 = vmatpush1.bf16.msra.mxu0 0
        %3783 = vmatprep.subr.bf16.mxu0 0
        %3784 = vmatpush1.bf16.msra.mxu0 0
        %3785 = vmatprep.subr.bf16.mxu0 0
        %3786 = vmatpush1.bf16.msra.mxu0 0
        %3787 = vmatprep.subr.bf16.mxu0 0
        %3788 = vmatpush1.bf16.msra.mxu0 0
        %3789 = vmatprep.subr.bf16.mxu0 0
        %3790 = vmatpush1.bf16.msra.mxu0 0
        %3791 = vmatprep.subr.bf16.mxu0 0
        %3792 = vmatpush1.bf16.msra.mxu0 0
        %3793 = vmatprep.subr.bf16.mxu0 0
        %3794 = vmatpush1.bf16.msra.mxu0 0
        %3795 = vmatprep.subr.bf16.mxu0 0
        %3796 = vmatpush1.bf16.msra.mxu0 0
        %3797 = vmatprep.subr.bf16.mxu0 0
        %3798 = vmatpush1.bf16.msra.mxu0 0
        %3799 = vmatprep.mubr.bf16.mxu0 0
        %3800 = vmatmul.mubr.bf16.gmra.mrb[0].mxu0 %v3759
        %v3801 = vpop.f32.mrb[0].mxu0
        %v3802 = vadd.f32 0.0, %v3801
        %v3803 = vpop.f32.mrb[0].mxu0
        %v3804 = vpop.f32.mrb[0].mxu0
        %v3805 = vadd.f32 0.0, %v3804
        %v3806 = vpop.f32.mrb[0].mxu0
        %3807 = vmatprep.mubr.bf16.mxu0 0
        %3808 = vmatmul.mubr.bf16.gmra.mrb[0].mxu0 %v3762
        %v3809 = vpop.f32.mrb[0].mxu0
        %v3810 = vadd.f32 0.0, %v3809
        %v3811 = vpop.f32.mrb[0].mxu0
        %v3812 = vpop.f32.mrb[0].mxu0
        %v3813 = vadd.f32 0.0, %v3812
        %v3814 = vpop.f32.mrb[0].mxu0
        %3815 = vmatprep.mubr.bf16.mxu0 0
        %3816 = vmatmul.mubr.bf16.gmra.mrb[0].mxu0 %v3765
        %v3817 = vpop.f32.mrb[0].mxu0
        %v3818 = vadd.f32 0.0, %v3817
        %v3819 = vpop.f32.mrb[0].mxu0
        %v3820 = vpop.f32.mrb[0].mxu0
        %v3821 = vpop.f32.mrb[0].mxu0
        %3822 = vdwg.mxu0
        %v3823 = vadd.f32 %v3720, %v3802
        %v3824 = vadd.f32 %v3723, %v3805
        %v3825 = vadd.f32 %v3728, %v3810
        %v3826 = vadd.f32 %v3731, %v3813
        %v3827 = vadd.f32 %v3736, %v3818
        %v3828 = vld [vmem:[#allocation7 + $0x3] sm:$0xff]
        %v3829 = vld [vmem:[#allocation7 + $0xb] sm:$0xff]
        %v3830 = vld [vmem:[#allocation7 + $0x13] sm:$0xff]
        %v3831 = vld [vmem:[#allocation7 + $0x1b] sm:$0xff]
        %v3832 = vld [vmem:[#allocation7 + $0x23] sm:$0xf]
        %v3833 = vpack.c.bf16 %v3829, %v3828
        %v3834 = vpack.c.bf16 %v3831, %v3830
        %v3835 = vpack.c.bf16 %v3832, %v3832
        %s3836 = scalar_lea.vmem %s9, 24
        %v3837 = vld [vmem:[%s3836] sm:$0xf]
        %v3838 = vld [vmem:[%s3836 + $0x4] sm:$0xf]
        %v3841 = vunpack.c.l.b16 %v3837
        %v3842 = vunpack.c.l.b16 %v3838
        %v3843 = vpack.c.b16 %v3842, %v3841
        %v3846 = vsel %vm1551, %v3833, 0
        %v3849 = vsel %vm1551, %v3834, 0
        %v3852 = vsel %vm1551, %v3835, 0
        %3854 = vmatprep.subr.bf16.mxu0 0
        %3855 = vmatpush1.bf16.msra.mxu0 %v3843
        %3856 = vmatprep.subr.bf16.mxu0 0
        %3857 = vmatpush1.bf16.msra.mxu0 0
        %3858 = vmatprep.subr.bf16.mxu0 0
        %3859 = vmatpush1.bf16.msra.mxu0 0
        %3860 = vmatprep.subr.bf16.mxu0 0
        %3861 = vmatpush1.bf16.msra.mxu0 0
        %3862 = vmatprep.subr.bf16.mxu0 0
        %3863 = vmatpush1.bf16.msra.mxu0 0
        %3864 = vmatprep.subr.bf16.mxu0 0
        %3865 = vmatpush1.bf16.msra.mxu0 0
        %3866 = vmatprep.subr.bf16.mxu0 0
        %3867 = vmatpush1.bf16.msra.mxu0 0
        %3868 = vmatprep.subr.bf16.mxu0 0
        %3869 = vmatpush1.bf16.msra.mxu0 0
        %3870 = vmatprep.subr.bf16.mxu0 0
        %3871 = vmatpush1.bf16.msra.mxu0 0
        %3872 = vmatprep.subr.bf16.mxu0 0
        %3873 = vmatpush1.bf16.msra.mxu0 0
        %3874 = vmatprep.subr.bf16.mxu0 0
        %3875 = vmatpush1.bf16.msra.mxu0 0
        %3876 = vmatprep.subr.bf16.mxu0 0
        %3877 = vmatpush1.bf16.msra.mxu0 0
        %3878 = vmatprep.subr.bf16.mxu0 0
        %3879 = vmatpush1.bf16.msra.mxu0 0
        %3880 = vmatprep.subr.bf16.mxu0 0
        %3881 = vmatpush1.bf16.msra.mxu0 0
        %3882 = vmatprep.subr.bf16.mxu0 0
        %3883 = vmatpush1.bf16.msra.mxu0 0
        %3884 = vmatprep.subr.bf16.mxu0 0
        %3885 = vmatpush1.bf16.msra.mxu0 0
        %3886 = vmatprep.mubr.bf16.mxu0 0
        %3887 = vmatmul.mubr.bf16.gmra.mrb[0].mxu0 %v3846
        %v3888 = vpop.f32.mrb[0].mxu0
        %v3889 = vadd.f32 0.0, %v3888
        %v3890 = vpop.f32.mrb[0].mxu0
        %v3891 = vpop.f32.mrb[0].mxu0
        %v3892 = vadd.f32 0.0, %v3891
        %v3893 = vpop.f32.mrb[0].mxu0
        %3894 = vmatprep.mubr.bf16.mxu0 0
        %3895 = vmatmul.mubr.bf16.gmra.mrb[0].mxu0 %v3849
        %v3896 = vpop.f32.mrb[0].mxu0
        %v3897 = vadd.f32 0.0, %v3896
        %v3898 = vpop.f32.mrb[0].mxu0
        %v3899 = vpop.f32.mrb[0].mxu0
        %v3900 = vadd.f32 0.0, %v3899
        %v3901 = vpop.f32.mrb[0].mxu0
        %3902 = vmatprep.mubr.bf16.mxu0 0
        %3903 = vmatmul.mubr.bf16.gmra.mrb[0].mxu0 %v3852
        %v3904 = vpop.f32.mrb[0].mxu0
        %v3905 = vadd.f32 0.0, %v3904
        %v3906 = vpop.f32.mrb[0].mxu0
        %v3907 = vpop.f32.mrb[0].mxu0
        %v3908 = vpop.f32.mrb[0].mxu0
        %3909 = vdwg.mxu0
        %v3910 = vadd.f32 %v3823, %v3889
        %v3911 = vadd.f32 %v3824, %v3892
        %v3912 = vadd.f32 %v3825, %v3897
        %v3913 = vadd.f32 %v3826, %v3900
        %v3914 = vadd.f32 %v3827, %v3905
        %v3915 = vld [vmem:[#allocation7 + $0x4] sm:$0xff]
        %v3916 = vld [vmem:[#allocation7 + $0xc] sm:$0xff]
        %v3917 = vld [vmem:[#allocation7 + $0x14] sm:$0xff]
        %v3918 = vld [vmem:[#allocation7 + $0x1c] sm:$0xff]
        %v3919 = vld [vmem:[#allocation7 + $0x24] sm:$0xf]
        %v3920 = vpack.c.bf16 %v3916, %v3915
        %v3921 = vpack.c.bf16 %v3918, %v3917
        %v3922 = vpack.c.bf16 %v3919, %v3919
        %s3923 = scalar_lea.vmem %s9, 32
        %v3924 = vld [vmem:[%s3923] sm:$0xf]
        %v3925 = vld [vmem:[%s3923 + $0x4] sm:$0xf]
        %v3928 = vunpack.c.l.b16 %v3924
        %v3929 = vunpack.c.l.b16 %v3925
        %v3930 = vpack.c.b16 %v3929, %v3928
        %v3933 = vsel %vm1551, %v3920, 0
        %v3936 = vsel %vm1551, %v3921, 0
        %v3939 = vsel %vm1551, %v3922, 0
        %3941 = vmatprep.subr.bf16.mxu0 0
        %3942 = vmatpush1.bf16.msra.mxu0 %v3930
        %3943 = vmatprep.subr.bf16.mxu0 0
        %3944 = vmatpush1.bf16.msra.mxu0 0
        %3945 = vmatprep.subr.bf16.mxu0 0
        %3946 = vmatpush1.bf16.msra.mxu0 0
        %3947 = vmatprep.subr.bf16.mxu0 0
        %3948 = vmatpush1.bf16.msra.mxu0 0
        %3949 = vmatprep.subr.bf16.mxu0 0
        %3950 = vmatpush1.bf16.msra.mxu0 0
        %3951 = vmatprep.subr.bf16.mxu0 0
        %3952 = vmatpush1.bf16.msra.mxu0 0
        %3953 = vmatprep.subr.bf16.mxu0 0
        %3954 = vmatpush1.bf16.msra.mxu0 0
        %3955 = vmatprep.subr.bf16.mxu0 0
        %3956 = vmatpush1.bf16.msra.mxu0 0
        %3957 = vmatprep.subr.bf16.mxu0 0
        %3958 = vmatpush1.bf16.msra.mxu0 0
        %3959 = vmatprep.subr.bf16.mxu0 0
        %3960 = vmatpush1.bf16.msra.mxu0 0
        %3961 = vmatprep.subr.bf16.mxu0 0
        %3962 = vmatpush1.bf16.msra.mxu0 0
        %3963 = vmatprep.subr.bf16.mxu0 0
        %3964 = vmatpush1.bf16.msra.mxu0 0
        %3965 = vmatprep.subr.bf16.mxu0 0
        %3966 = vmatpush1.bf16.msra.mxu0 0
        %3967 = vmatprep.subr.bf16.mxu0 0
        %3968 = vmatpush1.bf16.msra.mxu0 0
        %3969 = vmatprep.subr.bf16.mxu0 0
        %3970 = vmatpush1.bf16.msra.mxu0 0
        %3971 = vmatprep.subr.bf16.mxu0 0
        %3972 = vmatpush1.bf16.msra.mxu0 0
        %3973 = vmatprep.mubr.bf16.mxu0 0
        %3974 = vmatmul.mubr.bf16.gmra.mrb[0].mxu0 %v3933
        %v3975 = vpop.f32.mrb[0].mxu0
        %v3976 = vadd.f32 0.0, %v3975
        %v3977 = vpop.f32.mrb[0].mxu0
        %v3978 = vpop.f32.mrb[0].mxu0
        %v3979 = vadd.f32 0.0, %v3978
        %v3980 = vpop.f32.mrb[0].mxu0
        %3981 = vmatprep.mubr.bf16.mxu0 0
        %3982 = vmatmul.mubr.bf16.gmra.mrb[0].mxu0 %v3936
        %v3983 = vpop.f32.mrb[0].mxu0
        %v3984 = vadd.f32 0.0, %v3983
        %v3985 = vpop.f32.mrb[0].mxu0
        %v3986 = vpop.f32.mrb[0].mxu0
        %v3987 = vadd.f32 0.0, %v3986
        %v3988 = vpop.f32.mrb[0].mxu0
        %3989 = vmatprep.mubr.bf16.mxu0 0
        %3990 = vmatmul.mubr.bf16.gmra.mrb[0].mxu0 %v3939
        %v3991 = vpop.f32.mrb[0].mxu0
        %v3992 = vadd.f32 0.0, %v3991
        %v3993 = vpop.f32.mrb[0].mxu0
        %v3994 = vpop.f32.mrb[0].mxu0
        %v3995 = vpop.f32.mrb[0].mxu0
        %3996 = vdwg.mxu0
        %v3997 = vadd.f32 %v3910, %v3976
        %v3998 = vadd.f32 %v3911, %v3979
        %v3999 = vadd.f32 %v3912, %v3984
        %v4000 = vadd.f32 %v3913, %v3987
        %v4001 = vadd.f32 %v3914, %v3992
        %v4002 = vld [vmem:[#allocation7 + $0x5] sm:$0xff]
        %v4003 = vld [vmem:[#allocation7 + $0xd] sm:$0xff]
        %v4004 = vld [vmem:[#allocation7 + $0x15] sm:$0xff]
        %v4005 = vld [vmem:[#allocation7 + $0x1d] sm:$0xff]
        %v4006 = vld [vmem:[#allocation7 + $0x25] sm:$0xf]
        %v4007 = vpack.c.bf16 %v4003, %v4002
        %v4008 = vpack.c.bf16 %v4005, %v4004
        %v4009 = vpack.c.bf16 %v4006, %v4006
        %s4010 = scalar_lea.vmem %s9, 40
        %v4011 = vld [vmem:[%s4010] sm:$0xf]
        %v4012 = vld [vmem:[%s4010 + $0x4] sm:$0xf]
        %v4015 = vunpack.c.l.b16 %v4011
        %v4016 = vunpack.c.l.b16 %v4012
        %v4017 = vpack.c.b16 %v4016, %v4015
        %v4020 = vsel %vm1551, %v4007, 0
        %v4023 = vsel %vm1551, %v4008, 0
        %v4026 = vsel %vm1551, %v4009, 0
        %4028 = vmatprep.subr.bf16.mxu0 0
        %4029 = vmatpush1.bf16.msra.mxu0 %v4017
        %4030 = vmatprep.subr.bf16.mxu0 0
        %4031 = vmatpush1.bf16.msra.mxu0 0
        %4032 = vmatprep.subr.bf16.mxu0 0
        %4033 = vmatpush1.bf16.msra.mxu0 0
        %4034 = vmatprep.subr.bf16.mxu0 0
        %4035 = vmatpush1.bf16.msra.mxu0 0
        %4036 = vmatprep.subr.bf16.mxu0 0
        %4037 = vmatpush1.bf16.msra.mxu0 0
        %4038 = vmatprep.subr.bf16.mxu0 0
        %4039 = vmatpush1.bf16.msra.mxu0 0
        %4040 = vmatprep.subr.bf16.mxu0 0
        %4041 = vmatpush1.bf16.msra.mxu0 0
        %4042 = vmatprep.subr.bf16.mxu0 0
        %4043 = vmatpush1.bf16.msra.mxu0 0
        %4044 = vmatprep.subr.bf16.mxu0 0
        %4045 = vmatpush1.bf16.msra.mxu0 0
        %4046 = vmatprep.subr.bf16.mxu0 0
        %4047 = vmatpush1.bf16.msra.mxu0 0
        %4048 = vmatprep.subr.bf16.mxu0 0
        %4049 = vmatpush1.bf16.msra.mxu0 0
        %4050 = vmatprep.subr.bf16.mxu0 0
        %4051 = vmatpush1.bf16.msra.mxu0 0
        %4052 = vmatprep.subr.bf16.mxu0 0
        %4053 = vmatpush1.bf16.msra.mxu0 0
        %4054 = vmatprep.subr.bf16.mxu0 0
        %4055 = vmatpush1.bf16.msra.mxu0 0
        %4056 = vmatprep.subr.bf16.mxu0 0
        %4057 = vmatpush1.bf16.msra.mxu0 0
        %4058 = vmatprep.subr.bf16.mxu0 0
        %4059 = vmatpush1.bf16.msra.mxu0 0
        %4060 = vmatprep.mubr.bf16.mxu0 0
        %4061 = vmatmul.mubr.bf16.gmra.mrb[0].mxu0 %v4020
        %v4062 = vpop.f32.mrb[0].mxu0
        %v4063 = vadd.f32 0.0, %v4062
        %v4064 = vpop.f32.mrb[0].mxu0
        %v4065 = vpop.f32.mrb[0].mxu0
        %v4066 = vadd.f32 0.0, %v4065
        %v4067 = vpop.f32.mrb[0].mxu0
        %4068 = vmatprep.mubr.bf16.mxu0 0
        %4069 = vmatmul.mubr.bf16.gmra.mrb[0].mxu0 %v4023
        %v4070 = vpop.f32.mrb[0].mxu0
        %v4071 = vadd.f32 0.0, %v4070
        %v4072 = vpop.f32.mrb[0].mxu0
        %v4073 = vpop.f32.mrb[0].mxu0
        %v4074 = vadd.f32 0.0, %v4073
        %v4075 = vpop.f32.mrb[0].mxu0
        %4076 = vmatprep.mubr.bf16.mxu0 0
        %4077 = vmatmul.mubr.bf16.gmra.mrb[0].mxu0 %v4026
        %v4078 = vpop.f32.mrb[0].mxu0
        %v4079 = vadd.f32 0.0, %v4078
        %v4080 = vpop.f32.mrb[0].mxu0
        %v4081 = vpop.f32.mrb[0].mxu0
        %v4082 = vpop.f32.mrb[0].mxu0
        %4083 = vdwg.mxu0
        %v4084 = vadd.f32 %v3997, %v4063
        %v4085 = vadd.f32 %v3998, %v4066
        %v4086 = vadd.f32 %v3999, %v4071
        %v4087 = vadd.f32 %v4000, %v4074
        %v4088 = vadd.f32 %v4001, %v4079
        %4089 = vst.msk [vmem:[#allocation8] sm:$0xff] %vm2153, %v4084
        %4090 = vst.msk [vmem:[#allocation8 + $0x8] sm:$0xff] %vm2153, %v4085
        %4091 = vst.msk [vmem:[#allocation8 + $0x10] sm:$0xff] %vm2153, %v4086
        %4092 = vst.msk [vmem:[#allocation8 + $0x18] sm:$0xff] %vm2153, %v4087
        %vm4093 = vcmask 257024
        %4094 = vst.msk [vmem:[#allocation8 + $0x20] sm:$0xf] %vm4093, %v4088
        %v4095 = vld [vmem:[#allocation8] ss:$3 sm:$0xff]
        %s4096 = scalar_lea.vmem [#allocation8], 24
        %v4097 = vld [vmem:[%s4096] ss:$3 sm:$0xf]
        %s4098 = scalar_lea.vmem [#allocation8], 1
        %v4099 = vld [vmem:[%s4098] ss:$3 sm:$0xff]
        %s4100 = scalar_lea.vmem [#allocation8], 25
        %v4101 = vld [vmem:[%s4100] ss:$3 sm:$0xf]
        %v4102 = vmax.f32 %v4095, %v4099
        %v4103 = vmax.f32 %v4097, %v4101
        %s4104 = scalar_lea.vmem [#allocation8], 2
        %v4105 = vld [vmem:[%s4104] ss:$3 sm:$0xff]
        %s4106 = scalar_lea.vmem [#allocation8], 26
        %v4107 = vld [vmem:[%s4106] ss:$3 sm:$0xf]
        %v4108 = vmax.f32 %v4102, %v4105
        %v4109 = vmax.f32 %v4103, %v4107
        %v4110 = vld [vmem:[#allocation21] sm:$0x1]
        %v4112 = vlaneseq
        %v4113 = vshrl.u32 %v4112, 7
        %v4114 = vsub.s32 0, %v4113
        %v4115 = vrot.slane %v4110, %v4114
        %v4117 = vadd.f32 %v4108, %v4115
        %v4118 = vadd.f32 %v4109, %v4115
        %v4119 = vmax.f32 %v4117, 0.0
        %v4120 = vmax.f32 %v4118, 0.0
        %4121 = vst.msk [vmem:[#allocation9] sm:$0xff] %vm2153, %v4119
        %4122 = vst.msk [vmem:[#allocation9 + $0x8] sm:$0xf] %vm4093, %v4120
        %v4123 = vld [vmem:[#allocation9] sm:$0x1f]
        %v4124 = vpack.c.bf16 %v4123, %v4123
        %v4125 = vld [vmem:[%s11] sm:$0xf]
        %v4126 = vld [vmem:[%s11 + $0x4] sm:$0xf]
        %v4127 = vld [vmem:[%s11 + $0x8] sm:$0xf]
        %v4128 = vld [vmem:[%s11 + $0xc] sm:$0xf]
        %v4129 = vld [vmem:[#allocation9 + $0x1] sm:$0x1f]
        %v4130 = vpack.c.bf16 %v4129, %v4129
        %s4131 = scalar_lea.vmem %s11, 16
        %v4132 = vld [vmem:[%s4131] sm:$0xf]
        %v4133 = vld [vmem:[%s4131 + $0x4] sm:$0xf]
        %v4134 = vld [vmem:[%s4131 + $0x8] sm:$0xf]
        %v4135 = vld [vmem:[%s4131 + $0xc] sm:$0xf]
        %v4140 = vunpack.c.l.b16 %v4132
        %v4141 = vunpack.c.l.b16 %v4133
        %v4142 = vunpack.c.l.b16 %v4134
        %v4143 = vunpack.c.l.b16 %v4135
        %v4144 = vpack.c.b16 %v4141, %v4140
        %v4145 = vpack.c.b16 %v4143, %v4142
        %v4149 = vsel %vm2153, %v4130, 0
        %4151 = vmatprep.subr.bf16.mxu0 0
        %4152 = vmatpush1.bf16.msra.mxu0 %v4144
        %4153 = vmatprep.subr.bf16.mxu0 0
        %4154 = vmatpush1.bf16.msra.mxu0 %v4145
        %4155 = vmatprep.subr.bf16.mxu0 0
        %4156 = vmatpush1.bf16.msra.mxu0 0
        %4157 = vmatprep.subr.bf16.mxu0 0
        %4158 = vmatpush1.bf16.msra.mxu0 0
        %4159 = vmatprep.subr.bf16.mxu0 0
        %4160 = vmatpush1.bf16.msra.mxu0 0
        %4161 = vmatprep.subr.bf16.mxu0 0
        %4162 = vmatpush1.bf16.msra.mxu0 0
        %4163 = vmatprep.subr.bf16.mxu0 0
        %4164 = vmatpush1.bf16.msra.mxu0 0
        %4165 = vmatprep.subr.bf16.mxu0 0
        %4166 = vmatpush1.bf16.msra.mxu0 0
        %4167 = vmatprep.subr.bf16.mxu0 0
        %4168 = vmatpush1.bf16.msra.mxu0 0
        %4169 = vmatprep.subr.bf16.mxu0 0
        %4170 = vmatpush1.bf16.msra.mxu0 0
        %4171 = vmatprep.subr.bf16.mxu0 0
        %4172 = vmatpush1.bf16.msra.mxu0 0
        %4173 = vmatprep.subr.bf16.mxu0 0
        %4174 = vmatpush1.bf16.msra.mxu0 0
        %4175 = vmatprep.subr.bf16.mxu0 0
        %4176 = vmatpush1.bf16.msra.mxu0 0
        %4177 = vmatprep.subr.bf16.mxu0 0
        %4178 = vmatpush1.bf16.msra.mxu0 0
        %4179 = vmatprep.subr.bf16.mxu0 0
        %4180 = vmatpush1.bf16.msra.mxu0 0
        %4181 = vmatprep.subr.bf16.mxu0 0
        %4182 = vmatpush1.bf16.msra.mxu0 0
        %4183 = vmatprep.mubr.bf16.mxu0 0
        %4184 = vmatmul.mubr.bf16.gmra.mrb[0].mxu0 %v4149
        %v4185 = vpop.f32.mrb[0].mxu0
        %v4186 = vadd.f32 0.0, %v4185
        %v4187 = vpop.f32.mrb[0].mxu0
        %v4188 = vpop.f32.mrb[0].mxu0
        %v4189 = vpop.f32.mrb[0].mxu0
        %4190 = vdwg.mxu0
        %v4195 = vunpack.c.l.b16 %v4125
        %v4196 = vunpack.c.l.b16 %v4126
        %v4197 = vunpack.c.l.b16 %v4127
        %v4198 = vunpack.c.l.b16 %v4128
        %v4199 = vpack.c.b16 %v4196, %v4195
        %v4200 = vpack.c.b16 %v4198, %v4197
        %v4204 = vsel %vm2153, %v4124, 0
        %4206 = vmatprep.subr.bf16.mxu0 0
        %4207 = vmatpush1.bf16.msra.mxu0 %v4199
        %4208 = vmatprep.subr.bf16.mxu0 0
        %4209 = vmatpush1.bf16.msra.mxu0 %v4200
        %4210 = vmatprep.subr.bf16.mxu0 0
        %4211 = vmatpush1.bf16.msra.mxu0 0
        %4212 = vmatprep.subr.bf16.mxu0 0
        %4213 = vmatpush1.bf16.msra.mxu0 0
        %4214 = vmatprep.subr.bf16.mxu0 0
        %4215 = vmatpush1.bf16.msra.mxu0 0
        %4216 = vmatprep.subr.bf16.mxu0 0
        %4217 = vmatpush1.bf16.msra.mxu0 0
        %4218 = vmatprep.subr.bf16.mxu0 0
        %4219 = vmatpush1.bf16.msra.mxu0 0
        %4220 = vmatprep.subr.bf16.mxu0 0
        %4221 = vmatpush1.bf16.msra.mxu0 0
        %4222 = vmatprep.subr.bf16.mxu0 0
        %4223 = vmatpush1.bf16.msra.mxu0 0
        %4224 = vmatprep.subr.bf16.mxu0 0
        %4225 = vmatpush1.bf16.msra.mxu0 0
        %4226 = vmatprep.subr.bf16.mxu0 0
        %4227 = vmatpush1.bf16.msra.mxu0 0
        %4228 = vmatprep.subr.bf16.mxu0 0
        %4229 = vmatpush1.bf16.msra.mxu0 0
        %4230 = vmatprep.subr.bf16.mxu0 0
        %4231 = vmatpush1.bf16.msra.mxu0 0
        %4232 = vmatprep.subr.bf16.mxu0 0
        %4233 = vmatpush1.bf16.msra.mxu0 0
        %4234 = vmatprep.subr.bf16.mxu0 0
        %4235 = vmatpush1.bf16.msra.mxu0 0
        %4236 = vmatprep.subr.bf16.mxu0 0
        %4237 = vmatpush1.bf16.msra.mxu0 0
        %4238 = vmatprep.mubr.bf16.mxu0 0
        %4239 = vmatmul.mubr.bf16.gmra.mrb[0].mxu0 %v4204
        %v4240 = vpop.f32.mrb[0].mxu0
        %v4241 = vadd.f32 %v4186, %v4240
        %v4242 = vpop.f32.mrb[0].mxu0
        %v4243 = vpop.f32.mrb[0].mxu0
        %v4244 = vpop.f32.mrb[0].mxu0
        %4245 = vdwg.mxu0
        %v4246 = vld [vmem:[#allocation9 + $0x2] sm:$0x1f]
        %v4247 = vpack.c.bf16 %v4246, %v4246
        %s4248 = scalar_lea.vmem %s11, 32
        %v4249 = vld [vmem:[%s4248] sm:$0xf]
        %v4250 = vld [vmem:[%s4248 + $0x4] sm:$0xf]
        %v4251 = vld [vmem:[%s4248 + $0x8] sm:$0xf]
        %v4252 = vld [vmem:[%s4248 + $0xc] sm:$0xf]
        %v4257 = vunpack.c.l.b16 %v4249
        %v4258 = vunpack.c.l.b16 %v4250
        %v4259 = vunpack.c.l.b16 %v4251
        %v4260 = vunpack.c.l.b16 %v4252
        %v4261 = vpack.c.b16 %v4258, %v4257
        %v4262 = vpack.c.b16 %v4260, %v4259
        %v4266 = vsel %vm2153, %v4247, 0
        %4268 = vmatprep.subr.bf16.mxu0 0
        %4269 = vmatpush1.bf16.msra.mxu0 %v4261
        %4270 = vmatprep.subr.bf16.mxu0 0
        %4271 = vmatpush1.bf16.msra.mxu0 %v4262
        %4272 = vmatprep.subr.bf16.mxu0 0
        %4273 = vmatpush1.bf16.msra.mxu0 0
        %4274 = vmatprep.subr.bf16.mxu0 0
        %4275 = vmatpush1.bf16.msra.mxu0 0
        %4276 = vmatprep.subr.bf16.mxu0 0
        %4277 = vmatpush1.bf16.msra.mxu0 0
        %4278 = vmatprep.subr.bf16.mxu0 0
        %4279 = vmatpush1.bf16.msra.mxu0 0
        %4280 = vmatprep.subr.bf16.mxu0 0
        %4281 = vmatpush1.bf16.msra.mxu0 0
        %4282 = vmatprep.subr.bf16.mxu0 0
        %4283 = vmatpush1.bf16.msra.mxu0 0
        %4284 = vmatprep.subr.bf16.mxu0 0
        %4285 = vmatpush1.bf16.msra.mxu0 0
        %4286 = vmatprep.subr.bf16.mxu0 0
        %4287 = vmatpush1.bf16.msra.mxu0 0
        %4288 = vmatprep.subr.bf16.mxu0 0
        %4289 = vmatpush1.bf16.msra.mxu0 0
        %4290 = vmatprep.subr.bf16.mxu0 0
        %4291 = vmatpush1.bf16.msra.mxu0 0
        %4292 = vmatprep.subr.bf16.mxu0 0
        %4293 = vmatpush1.bf16.msra.mxu0 0
        %4294 = vmatprep.subr.bf16.mxu0 0
        %4295 = vmatpush1.bf16.msra.mxu0 0
        %4296 = vmatprep.subr.bf16.mxu0 0
        %4297 = vmatpush1.bf16.msra.mxu0 0
        %4298 = vmatprep.subr.bf16.mxu0 0
        %4299 = vmatpush1.bf16.msra.mxu0 0
        %4300 = vmatprep.mubr.bf16.mxu0 0
        %4301 = vmatmul.mubr.bf16.gmra.mrb[0].mxu0 %v4266
        %v4302 = vpop.f32.mrb[0].mxu0
        %v4303 = vadd.f32 0.0, %v4302
        %v4304 = vpop.f32.mrb[0].mxu0
        %v4305 = vpop.f32.mrb[0].mxu0
        %v4306 = vpop.f32.mrb[0].mxu0
        %4307 = vdwg.mxu0
        %v4308 = vadd.f32 %v4241, %v4303
        %v4309 = vld [vmem:[#allocation9 + $0x3] sm:$0x1f]
        %v4310 = vpack.c.bf16 %v4309, %v4309
        %s4311 = scalar_lea.vmem %s11, 48
        %v4312 = vld [vmem:[%s4311] sm:$0xf]
        %v4313 = vld [vmem:[%s4311 + $0x4] sm:$0xf]
        %v4314 = vld [vmem:[%s4311 + $0x8] sm:$0xf]
        %v4315 = vld [vmem:[%s4311 + $0xc] sm:$0xf]
        %v4320 = vunpack.c.l.b16 %v4312
        %v4321 = vunpack.c.l.b16 %v4313
        %v4322 = vunpack.c.l.b16 %v4314
        %v4323 = vunpack.c.l.b16 %v4315
        %v4324 = vpack.c.b16 %v4321, %v4320
        %v4325 = vpack.c.b16 %v4323, %v4322
        %v4329 = vsel %vm2153, %v4310, 0
        %4331 = vmatprep.subr.bf16.mxu0 0
        %4332 = vmatpush1.bf16.msra.mxu0 %v4324
        %4333 = vmatprep.subr.bf16.mxu0 0
        %4334 = vmatpush1.bf16.msra.mxu0 %v4325
        %4335 = vmatprep.subr.bf16.mxu0 0
        %4336 = vmatpush1.bf16.msra.mxu0 0
        %4337 = vmatprep.subr.bf16.mxu0 0
        %4338 = vmatpush1.bf16.msra.mxu0 0
        %4339 = vmatprep.subr.bf16.mxu0 0
        %4340 = vmatpush1.bf16.msra.mxu0 0
        %4341 = vmatprep.subr.bf16.mxu0 0
        %4342 = vmatpush1.bf16.msra.mxu0 0
        %4343 = vmatprep.subr.bf16.mxu0 0
        %4344 = vmatpush1.bf16.msra.mxu0 0
        %4345 = vmatprep.subr.bf16.mxu0 0
        %4346 = vmatpush1.bf16.msra.mxu0 0
        %4347 = vmatprep.subr.bf16.mxu0 0
        %4348 = vmatpush1.bf16.msra.mxu0 0
        %4349 = vmatprep.subr.bf16.mxu0 0
        %4350 = vmatpush1.bf16.msra.mxu0 0
        %4351 = vmatprep.subr.bf16.mxu0 0
        %4352 = vmatpush1.bf16.msra.mxu0 0
        %4353 = vmatprep.subr.bf16.mxu0 0
        %4354 = vmatpush1.bf16.msra.mxu0 0
        %4355 = vmatprep.subr.bf16.mxu0 0
        %4356 = vmatpush1.bf16.msra.mxu0 0
        %4357 = vmatprep.subr.bf16.mxu0 0
        %4358 = vmatpush1.bf16.msra.mxu0 0
        %4359 = vmatprep.subr.bf16.mxu0 0
        %4360 = vmatpush1.bf16.msra.mxu0 0
        %4361 = vmatprep.subr.bf16.mxu0 0
        %4362 = vmatpush1.bf16.msra.mxu0 0
        %4363 = vmatprep.mubr.bf16.mxu0 0
        %4364 = vmatmul.mubr.bf16.gmra.mrb[0].mxu0 %v4329
        %v4365 = vpop.f32.mrb[0].mxu0
        %v4366 = vadd.f32 0.0, %v4365
        %v4367 = vpop.f32.mrb[0].mxu0
        %v4368 = vpop.f32.mrb[0].mxu0
        %v4369 = vpop.f32.mrb[0].mxu0
        %4370 = vdwg.mxu0
        %v4371 = vadd.f32 %v4308, %v4366
        %v4372 = vld [vmem:[#allocation9 + $0x4] sm:$0x1f]
        %v4373 = vpack.c.bf16 %v4372, %v4372
        %s4374 = scalar_lea.vmem %s11, 64
        %v4375 = vld [vmem:[%s4374] sm:$0xf]
        %v4376 = vld [vmem:[%s4374 + $0x4] sm:$0xf]
        %v4377 = vld [vmem:[%s4374 + $0x8] sm:$0xf]
        %v4378 = vld [vmem:[%s4374 + $0xc] sm:$0xf]
        %v4383 = vunpack.c.l.b16 %v4375
        %v4384 = vunpack.c.l.b16 %v4376
        %v4385 = vunpack.c.l.b16 %v4377
        %v4386 = vunpack.c.l.b16 %v4378
        %v4387 = vpack.c.b16 %v4384, %v4383
        %v4388 = vpack.c.b16 %v4386, %v4385
        %v4392 = vsel %vm2153, %v4373, 0
        %4394 = vmatprep.subr.bf16.mxu0 0
        %4395 = vmatpush1.bf16.msra.mxu0 %v4387
        %4396 = vmatprep.subr.bf16.mxu0 0
        %4397 = vmatpush1.bf16.msra.mxu0 %v4388
        %4398 = vmatprep.subr.bf16.mxu0 0
        %4399 = vmatpush1.bf16.msra.mxu0 0
        %4400 = vmatprep.subr.bf16.mxu0 0
        %4401 = vmatpush1.bf16.msra.mxu0 0
        %4402 = vmatprep.subr.bf16.mxu0 0
        %4403 = vmatpush1.bf16.msra.mxu0 0
        %4404 = vmatprep.subr.bf16.mxu0 0
        %4405 = vmatpush1.bf16.msra.mxu0 0
        %4406 = vmatprep.subr.bf16.mxu0 0
        %4407 = vmatpush1.bf16.msra.mxu0 0
        %4408 = vmatprep.subr.bf16.mxu0 0
        %4409 = vmatpush1.bf16.msra.mxu0 0
        %4410 = vmatprep.subr.bf16.mxu0 0
        %4411 = vmatpush1.bf16.msra.mxu0 0
        %4412 = vmatprep.subr.bf16.mxu0 0
        %4413 = vmatpush1.bf16.msra.mxu0 0
        %4414 = vmatprep.subr.bf16.mxu0 0
        %4415 = vmatpush1.bf16.msra.mxu0 0
        %4416 = vmatprep.subr.bf16.mxu0 0
        %4417 = vmatpush1.bf16.msra.mxu0 0
        %4418 = vmatprep.subr.bf16.mxu0 0
        %4419 = vmatpush1.bf16.msra.mxu0 0
        %4420 = vmatprep.subr.bf16.mxu0 0
        %4421 = vmatpush1.bf16.msra.mxu0 0
        %4422 = vmatprep.subr.bf16.mxu0 0
        %4423 = vmatpush1.bf16.msra.mxu0 0
        %4424 = vmatprep.subr.bf16.mxu0 0
        %4425 = vmatpush1.bf16.msra.mxu0 0
        %4426 = vmatprep.mubr.bf16.mxu0 0
        %4427 = vmatmul.mubr.bf16.gmra.mrb[0].mxu0 %v4392
        %v4428 = vpop.f32.mrb[0].mxu0
        %v4429 = vadd.f32 0.0, %v4428
        %v4430 = vpop.f32.mrb[0].mxu0
        %v4431 = vpop.f32.mrb[0].mxu0
        %v4432 = vpop.f32.mrb[0].mxu0
        %4433 = vdwg.mxu0
        %v4434 = vadd.f32 %v4371, %v4429
        %v4435 = vld [vmem:[#allocation9 + $0x5] sm:$0x1f]
        %v4436 = vpack.c.bf16 %v4435, %v4435
        %s4437 = scalar_lea.vmem %s11, 80
        %v4438 = vld [vmem:[%s4437] sm:$0xf]
        %v4439 = vld [vmem:[%s4437 + $0x4] sm:$0xf]
        %v4440 = vld [vmem:[%s4437 + $0x8] sm:$0xf]
        %v4441 = vld [vmem:[%s4437 + $0xc] sm:$0xf]
        %v4446 = vunpack.c.l.b16 %v4438
        %v4447 = vunpack.c.l.b16 %v4439
        %v4448 = vunpack.c.l.b16 %v4440
        %v4449 = vunpack.c.l.b16 %v4441
        %v4450 = vpack.c.b16 %v4447, %v4446
        %v4451 = vpack.c.b16 %v4449, %v4448
        %v4455 = vsel %vm2153, %v4436, 0
        %4457 = vmatprep.subr.bf16.mxu0 0
        %4458 = vmatpush1.bf16.msra.mxu0 %v4450
        %4459 = vmatprep.subr.bf16.mxu0 0
        %4460 = vmatpush1.bf16.msra.mxu0 %v4451
        %4461 = vmatprep.subr.bf16.mxu0 0
        %4462 = vmatpush1.bf16.msra.mxu0 0
        %4463 = vmatprep.subr.bf16.mxu0 0
        %4464 = vmatpush1.bf16.msra.mxu0 0
        %4465 = vmatprep.subr.bf16.mxu0 0
        %4466 = vmatpush1.bf16.msra.mxu0 0
        %4467 = vmatprep.subr.bf16.mxu0 0
        %4468 = vmatpush1.bf16.msra.mxu0 0
        %4469 = vmatprep.subr.bf16.mxu0 0
        %4470 = vmatpush1.bf16.msra.mxu0 0
        %4471 = vmatprep.subr.bf16.mxu0 0
        %4472 = vmatpush1.bf16.msra.mxu0 0
        %4473 = vmatprep.subr.bf16.mxu0 0
        %4474 = vmatpush1.bf16.msra.mxu0 0
        %4475 = vmatprep.subr.bf16.mxu0 0
        %4476 = vmatpush1.bf16.msra.mxu0 0
        %4477 = vmatprep.subr.bf16.mxu0 0
        %4478 = vmatpush1.bf16.msra.mxu0 0
        %4479 = vmatprep.subr.bf16.mxu0 0
        %4480 = vmatpush1.bf16.msra.mxu0 0
        %4481 = vmatprep.subr.bf16.mxu0 0
        %4482 = vmatpush1.bf16.msra.mxu0 0
        %4483 = vmatprep.subr.bf16.mxu0 0
        %4484 = vmatpush1.bf16.msra.mxu0 0
        %4485 = vmatprep.subr.bf16.mxu0 0
        %4486 = vmatpush1.bf16.msra.mxu0 0
        %4487 = vmatprep.subr.bf16.mxu0 0
        %4488 = vmatpush1.bf16.msra.mxu0 0
        %4489 = vmatprep.mubr.bf16.mxu0 0
        %4490 = vmatmul.mubr.bf16.gmra.mrb[0].mxu0 %v4455
        %v4491 = vpop.f32.mrb[0].mxu0
        %v4492 = vadd.f32 0.0, %v4491
        %v4493 = vpop.f32.mrb[0].mxu0
        %v4494 = vpop.f32.mrb[0].mxu0
        %v4495 = vpop.f32.mrb[0].mxu0
        %4496 = vdwg.mxu0
        %v4497 = vadd.f32 %v4434, %v4492
        %v4498 = vld [vmem:[#allocation22] sm:$0x1]
        %v4500 = vlaneseq
        %v4501 = vshrl.u32 %v4500, 7
        %v4502 = vsub.s32 0, %v4501
        %v4503 = vrot.slane %v4498, %v4502
        %v4505 = vadd.f32 %v4497, %v4503
        %v4506 = vmax.f32 %v4505, 0.0
        %s4507 = scalar_lea.vmem %s750, 8
        %4508 = vst.msk [vmem:[%s4507] sm:$0x1f] %vm2523, %v4506
        %v4509 = vld [vmem:[%s745] sm:$0xff]
        %v4510 = vld [vmem:[%s745 + $0x8] sm:$0xff]
        %v4511 = vld [vmem:[%s745 + $0x10] sm:$0xff]
        %v4512 = vld [vmem:[%s745 + $0x18] sm:$0xff]
        %v4513 = vld [vmem:[%s745 + $0x20] sm:$0xff]
        %v4514 = vld [vmem:[%s745 + $0x28] sm:$0xff]
        %v4515 = vld [vmem:[%s745 + $0x30] sm:$0xff]
        %v4516 = vld [vmem:[%s745 + $0x38] sm:$0xff]
        %v4517 = vld [vmem:[%s745 + $0x40] sm:$0xff]
        %v4518 = vld [vmem:[%s745 + $0x48] sm:$0xff]
        %v4519 = vld [vmem:[%s745 + $0x50] sm:$0xff]
        %v4520 = vld [vmem:[%s745 + $0x58] sm:$0xff]
        %v4521 = vld [vmem:[%s745 + $0x60] sm:$0xff]
        %v4522 = vld [vmem:[%s745 + $0x68] sm:$0xff]
        %v4523 = vld [vmem:[%s745 + $0x70] sm:$0xff]
        %v4524 = vld [vmem:[%s745 + $0x78] sm:$0x3]
        %v4525 = vpack.c.bf16 %v4510, %v4509
        %v4526 = vpack.c.bf16 %v4512, %v4511
        %v4527 = vpack.c.bf16 %v4514, %v4513
        %v4528 = vpack.c.bf16 %v4516, %v4515
        %v4529 = vpack.c.bf16 %v4518, %v4517
        %v4530 = vpack.c.bf16 %v4520, %v4519
        %v4531 = vpack.c.bf16 %v4522, %v4521
        %v4532 = vpack.c.bf16 %v4524, %v4523
        %v4533 = vld [vmem:[#allocation24] sm:$0x3]
        %v4534 = vld [vmem:[%s745 + $0x1] sm:$0xff]
        %v4535 = vld [vmem:[%s745 + $0x9] sm:$0xff]
        %v4536 = vld [vmem:[%s745 + $0x11] sm:$0xff]
        %v4537 = vld [vmem:[%s745 + $0x19] sm:$0xff]
        %v4538 = vld [vmem:[%s745 + $0x21] sm:$0xff]
        %v4539 = vld [vmem:[%s745 + $0x29] sm:$0xff]
        %v4540 = vld [vmem:[%s745 + $0x31] sm:$0xff]
        %v4541 = vld [vmem:[%s745 + $0x39] sm:$0xff]
        %v4542 = vld [vmem:[%s745 + $0x41] sm:$0xff]
        %v4543 = vld [vmem:[%s745 + $0x49] sm:$0xff]
        %v4544 = vld [vmem:[%s745 + $0x51] sm:$0xff]
        %v4545 = vld [vmem:[%s745 + $0x59] sm:$0xff]
        %v4546 = vld [vmem:[%s745 + $0x61] sm:$0xff]
        %v4547 = vld [vmem:[%s745 + $0x69] sm:$0xff]
        %v4548 = vld [vmem:[%s745 + $0x71] sm:$0xff]
        %v4549 = vld [vmem:[%s745 + $0x79] sm:$0x3]
        %v4550 = vpack.c.bf16 %v4535, %v4534
        %v4551 = vpack.c.bf16 %v4537, %v4536
        %v4552 = vpack.c.bf16 %v4539, %v4538
        %v4553 = vpack.c.bf16 %v4541, %v4540
        %v4554 = vpack.c.bf16 %v4543, %v4542
        %v4555 = vpack.c.bf16 %v4545, %v4544
        %v4556 = vpack.c.bf16 %v4547, %v4546
        %v4557 = vpack.c.bf16 %v4549, %v4548
        %s4558 = scalar_lea.vmem [#allocation24], 2
        %v4559 = vld [vmem:[%s4558] sm:$0x3]
        %v4561 = vsel %vm803, %v4550, 0
        %v4564 = vsel %vm803, %v4551, 0
        %v4567 = vsel %vm803, %v4552, 0
        %v4570 = vsel %vm803, %v4553, 0
        %v4573 = vsel %vm803, %v4554, 0
        %v4576 = vsel %vm803, %v4555, 0
        %v4579 = vsel %vm803, %v4556, 0
        %v4582 = vsel %vm803, %v4557, 0
        %v4585 = vsel %vm828, %v4559, 0
        %4587 = vmatprep.subr.bf16.mxu0 0
        %4588 = vmatpush1.bf16.msra.mxu0 %v4585
        %4589 = vmatprep.subr.bf16.mxu0 0
        %4590 = vmatpush1.bf16.msra.mxu0 0
        %4591 = vmatprep.subr.bf16.mxu0 0
        %4592 = vmatpush1.bf16.msra.mxu0 0
        %4593 = vmatprep.subr.bf16.mxu0 0
        %4594 = vmatpush1.bf16.msra.mxu0 0
        %4595 = vmatprep.subr.bf16.mxu0 0
        %4596 = vmatpush1.bf16.msra.mxu0 0
        %4597 = vmatprep.subr.bf16.mxu0 0
        %4598 = vmatpush1.bf16.msra.mxu0 0
        %4599 = vmatprep.subr.bf16.mxu0 0
        %4600 = vmatpush1.bf16.msra.mxu0 0
        %4601 = vmatprep.subr.bf16.mxu0 0
        %4602 = vmatpush1.bf16.msra.mxu0 0
        %4603 = vmatprep.subr.bf16.mxu0 0
        %4604 = vmatpush1.bf16.msra.mxu0 0
        %4605 = vmatprep.subr.bf16.mxu0 0
        %4606 = vmatpush1.bf16.msra.mxu0 0
        %4607 = vmatprep.subr.bf16.mxu0 0
        %4608 = vmatpush1.bf16.msra.mxu0 0
        %4609 = vmatprep.subr.bf16.mxu0 0
        %4610 = vmatpush1.bf16.msra.mxu0 0
        %4611 = vmatprep.subr.bf16.mxu0 0
        %4612 = vmatpush1.bf16.msra.mxu0 0
        %4613 = vmatprep.subr.bf16.mxu0 0
        %4614 = vmatpush1.bf16.msra.mxu0 0
        %4615 = vmatprep.subr.bf16.mxu0 0
        %4616 = vmatpush1.bf16.msra.mxu0 0
        %4617 = vmatprep.subr.bf16.mxu0 0
        %4618 = vmatpush1.bf16.msra.mxu0 0
        %4619 = vmatprep.mubr.bf16.mxu0 0
        %4620 = vmatmul.mubr.bf16.gmra.mrb[0].mxu0 %v4561
        %v4621 = vpop.f32.mrb[0].mxu0
        %v4622 = vadd.f32 0.0, %v4621
        %v4623 = vpop.f32.mrb[0].mxu0
        %v4624 = vpop.f32.mrb[0].mxu0
        %v4625 = vadd.f32 0.0, %v4624
        %v4626 = vpop.f32.mrb[0].mxu0
        %4627 = vmatprep.mubr.bf16.mxu0 0
        %4628 = vmatmul.mubr.bf16.gmra.mrb[0].mxu0 %v4564
        %v4629 = vpop.f32.mrb[0].mxu0
        %v4630 = vadd.f32 0.0, %v4629
        %v4631 = vpop.f32.mrb[0].mxu0
        %v4632 = vpop.f32.mrb[0].mxu0
        %v4633 = vadd.f32 0.0, %v4632
        %v4634 = vpop.f32.mrb[0].mxu0
        %4635 = vmatprep.mubr.bf16.mxu0 0
        %4636 = vmatmul.mubr.bf16.gmra.mrb[0].mxu0 %v4567
        %v4637 = vpop.f32.mrb[0].mxu0
        %v4638 = vadd.f32 0.0, %v4637
        %v4639 = vpop.f32.mrb[0].mxu0
        %v4640 = vpop.f32.mrb[0].mxu0
        %v4641 = vadd.f32 0.0, %v4640
        %v4642 = vpop.f32.mrb[0].mxu0
        %4643 = vmatprep.mubr.bf16.mxu0 0
        %4644 = vmatmul.mubr.bf16.gmra.mrb[0].mxu0 %v4570
        %v4645 = vpop.f32.mrb[0].mxu0
        %v4646 = vadd.f32 0.0, %v4645
        %v4647 = vpop.f32.mrb[0].mxu0
        %v4648 = vpop.f32.mrb[0].mxu0
        %v4649 = vadd.f32 0.0, %v4648
        %v4650 = vpop.f32.mrb[0].mxu0
        %4651 = vmatprep.mubr.bf16.mxu0 0
        %4652 = vmatmul.mubr.bf16.gmra.mrb[0].mxu0 %v4573
        %v4653 = vpop.f32.mrb[0].mxu0
        %v4654 = vadd.f32 0.0, %v4653
        %v4655 = vpop.f32.mrb[0].mxu0
        %v4656 = vpop.f32.mrb[0].mxu0
        %v4657 = vadd.f32 0.0, %v4656
        %v4658 = vpop.f32.mrb[0].mxu0
        %4659 = vmatprep.mubr.bf16.mxu0 0
        %4660 = vmatmul.mubr.bf16.gmra.mrb[0].mxu0 %v4576
        %v4661 = vpop.f32.mrb[0].mxu0
        %v4662 = vadd.f32 0.0, %v4661
        %v4663 = vpop.f32.mrb[0].mxu0
        %v4664 = vpop.f32.mrb[0].mxu0
        %v4665 = vadd.f32 0.0, %v4664
        %v4666 = vpop.f32.mrb[0].mxu0
        %4667 = vmatprep.mubr.bf16.mxu0 0
        %4668 = vmatmul.mubr.bf16.gmra.mrb[0].mxu0 %v4579
        %v4669 = vpop.f32.mrb[0].mxu0
        %v4670 = vadd.f32 0.0, %v4669
        %v4671 = vpop.f32.mrb[0].mxu0
        %v4672 = vpop.f32.mrb[0].mxu0
        %v4673 = vadd.f32 0.0, %v4672
        %v4674 = vpop.f32.mrb[0].mxu0
        %4675 = vmatprep.mubr.bf16.mxu0 0
        %4676 = vmatmul.mubr.bf16.gmra.mrb[0].mxu0 %v4582
        %v4677 = vpop.f32.mrb[0].mxu0
        %v4678 = vadd.f32 0.0, %v4677
        %v4679 = vpop.f32.mrb[0].mxu0
        %v4680 = vpop.f32.mrb[0].mxu0
        %v4681 = vadd.f32 0.0, %v4680
        %v4682 = vpop.f32.mrb[0].mxu0
        %4683 = vdwg.mxu0
        %v4685 = vsel %vm803, %v4525, 0
        %v4688 = vsel %vm803, %v4526, 0
        %v4691 = vsel %vm803, %v4527, 0
        %v4694 = vsel %vm803, %v4528, 0
        %v4697 = vsel %vm803, %v4529, 0
        %v4700 = vsel %vm803, %v4530, 0
        %v4703 = vsel %vm803, %v4531, 0
        %v4706 = vsel %vm803, %v4532, 0
        %v4709 = vsel %vm828, %v4533, 0
        %4711 = vmatprep.subr.bf16.mxu0 0
        %4712 = vmatpush1.bf16.msra.mxu0 %v4709
        %4713 = vmatprep.subr.bf16.mxu0 0
        %4714 = vmatpush1.bf16.msra.mxu0 0
        %4715 = vmatprep.subr.bf16.mxu0 0
        %4716 = vmatpush1.bf16.msra.mxu0 0
        %4717 = vmatprep.subr.bf16.mxu0 0
        %4718 = vmatpush1.bf16.msra.mxu0 0
        %4719 = vmatprep.subr.bf16.mxu0 0
        %4720 = vmatpush1.bf16.msra.mxu0 0
        %4721 = vmatprep.subr.bf16.mxu0 0
        %4722 = vmatpush1.bf16.msra.mxu0 0
        %4723 = vmatprep.subr.bf16.mxu0 0
        %4724 = vmatpush1.bf16.msra.mxu0 0
        %4725 = vmatprep.subr.bf16.mxu0 0
        %4726 = vmatpush1.bf16.msra.mxu0 0
        %4727 = vmatprep.subr.bf16.mxu0 0
        %4728 = vmatpush1.bf16.msra.mxu0 0
        %4729 = vmatprep.subr.bf16.mxu0 0
        %4730 = vmatpush1.bf16.msra.mxu0 0
        %4731 = vmatprep.subr.bf16.mxu0 0
        %4732 = vmatpush1.bf16.msra.mxu0 0
        %4733 = vmatprep.subr.bf16.mxu0 0
        %4734 = vmatpush1.bf16.msra.mxu0 0
        %4735 = vmatprep.subr.bf16.mxu0 0
        %4736 = vmatpush1.bf16.msra.mxu0 0
        %4737 = vmatprep.subr.bf16.mxu0 0
        %4738 = vmatpush1.bf16.msra.mxu0 0
        %4739 = vmatprep.subr.bf16.mxu0 0
        %4740 = vmatpush1.bf16.msra.mxu0 0
        %4741 = vmatprep.subr.bf16.mxu0 0
        %4742 = vmatpush1.bf16.msra.mxu0 0
        %4743 = vmatprep.mubr.bf16.mxu0 0
        %4744 = vmatmul.mubr.bf16.gmra.mrb[0].mxu0 %v4685
        %v4745 = vpop.f32.mrb[0].mxu0
        %v4746 = vadd.f32 %v4622, %v4745
        %v4747 = vpop.f32.mrb[0].mxu0
        %v4748 = vpop.f32.mrb[0].mxu0
        %v4749 = vadd.f32 %v4625, %v4748
        %v4750 = vpop.f32.mrb[0].mxu0
        %4751 = vmatprep.mubr.bf16.mxu0 0
        %4752 = vmatmul.mubr.bf16.gmra.mrb[0].mxu0 %v4688
        %v4753 = vpop.f32.mrb[0].mxu0
        %v4754 = vadd.f32 %v4630, %v4753
        %v4755 = vpop.f32.mrb[0].mxu0
        %v4756 = vpop.f32.mrb[0].mxu0
        %v4757 = vadd.f32 %v4633, %v4756
        %v4758 = vpop.f32.mrb[0].mxu0
        %4759 = vmatprep.mubr.bf16.mxu0 0
        %4760 = vmatmul.mubr.bf16.gmra.mrb[0].mxu0 %v4691
        %v4761 = vpop.f32.mrb[0].mxu0
        %v4762 = vadd.f32 %v4638, %v4761
        %v4763 = vpop.f32.mrb[0].mxu0
        %v4764 = vpop.f32.mrb[0].mxu0
        %v4765 = vadd.f32 %v4641, %v4764
        %v4766 = vpop.f32.mrb[0].mxu0
        %4767 = vmatprep.mubr.bf16.mxu0 0
        %4768 = vmatmul.mubr.bf16.gmra.mrb[0].mxu0 %v4694
        %v4769 = vpop.f32.mrb[0].mxu0
        %v4770 = vadd.f32 %v4646, %v4769
        %v4771 = vpop.f32.mrb[0].mxu0
        %v4772 = vpop.f32.mrb[0].mxu0
        %v4773 = vadd.f32 %v4649, %v4772
        %v4774 = vpop.f32.mrb[0].mxu0
        %4775 = vmatprep.mubr.bf16.mxu0 0
        %4776 = vmatmul.mubr.bf16.gmra.mrb[0].mxu0 %v4697
        %v4777 = vpop.f32.mrb[0].mxu0
        %v4778 = vadd.f32 %v4654, %v4777
        %v4779 = vpop.f32.mrb[0].mxu0
        %v4780 = vpop.f32.mrb[0].mxu0
        %v4781 = vadd.f32 %v4657, %v4780
        %v4782 = vpop.f32.mrb[0].mxu0
        %4783 = vmatprep.mubr.bf16.mxu0 0
        %4784 = vmatmul.mubr.bf16.gmra.mrb[0].mxu0 %v4700
        %v4785 = vpop.f32.mrb[0].mxu0
        %v4786 = vadd.f32 %v4662, %v4785
        %v4787 = vpop.f32.mrb[0].mxu0
        %v4788 = vpop.f32.mrb[0].mxu0
        %v4789 = vadd.f32 %v4665, %v4788
        %v4790 = vpop.f32.mrb[0].mxu0
        %4791 = vmatprep.mubr.bf16.mxu0 0
        %4792 = vmatmul.mubr.bf16.gmra.mrb[0].mxu0 %v4703
        %v4793 = vpop.f32.mrb[0].mxu0
        %v4794 = vadd.f32 %v4670, %v4793
        %v4795 = vpop.f32.mrb[0].mxu0
        %v4796 = vpop.f32.mrb[0].mxu0
        %v4797 = vadd.f32 %v4673, %v4796
        %v4798 = vpop.f32.mrb[0].mxu0
        %4799 = vmatprep.mubr.bf16.mxu0 0
        %4800 = vmatmul.mubr.bf16.gmra.mrb[0].mxu0 %v4706
        %v4801 = vpop.f32.mrb[0].mxu0
        %v4802 = vadd.f32 %v4678, %v4801
        %v4803 = vpop.f32.mrb[0].mxu0
        %v4804 = vpop.f32.mrb[0].mxu0
        %v4805 = vadd.f32 %v4681, %v4804
        %v4806 = vpop.f32.mrb[0].mxu0
        %4807 = vdwg.mxu0
        %v4808 = vld [vmem:[%s745 + $0x2] sm:$0xff]
        %v4809 = vld [vmem:[%s745 + $0xa] sm:$0xff]
        %v4810 = vld [vmem:[%s745 + $0x12] sm:$0xff]
        %v4811 = vld [vmem:[%s745 + $0x1a] sm:$0xff]
        %v4812 = vld [vmem:[%s745 + $0x22] sm:$0xff]
        %v4813 = vld [vmem:[%s745 + $0x2a] sm:$0xff]
        %v4814 = vld [vmem:[%s745 + $0x32] sm:$0xff]
        %v4815 = vld [vmem:[%s745 + $0x3a] sm:$0xff]
        %v4816 = vld [vmem:[%s745 + $0x42] sm:$0xff]
        %v4817 = vld [vmem:[%s745 + $0x4a] sm:$0xff]
        %v4818 = vld [vmem:[%s745 + $0x52] sm:$0xff]
        %v4819 = vld [vmem:[%s745 + $0x5a] sm:$0xff]
        %v4820 = vld [vmem:[%s745 + $0x62] sm:$0xff]
        %v4821 = vld [vmem:[%s745 + $0x6a] sm:$0xff]
        %v4822 = vld [vmem:[%s745 + $0x72] sm:$0xff]
        %v4823 = vld [vmem:[%s745 + $0x7a] sm:$0x3]
        %v4824 = vpack.c.bf16 %v4809, %v4808
        %v4825 = vpack.c.bf16 %v4811, %v4810
        %v4826 = vpack.c.bf16 %v4813, %v4812
        %v4827 = vpack.c.bf16 %v4815, %v4814
        %v4828 = vpack.c.bf16 %v4817, %v4816
        %v4829 = vpack.c.bf16 %v4819, %v4818
        %v4830 = vpack.c.bf16 %v4821, %v4820
        %v4831 = vpack.c.bf16 %v4823, %v4822
        %s4832 = scalar_lea.vmem [#allocation24], 4
        %v4833 = vld [vmem:[%s4832] sm:$0x3]
        %v4835 = vsel %vm803, %v4824, 0
        %v4838 = vsel %vm803, %v4825, 0
        %v4841 = vsel %vm803, %v4826, 0
        %v4844 = vsel %vm803, %v4827, 0
        %v4847 = vsel %vm803, %v4828, 0
        %v4850 = vsel %vm803, %v4829, 0
        %v4853 = vsel %vm803, %v4830, 0
        %v4856 = vsel %vm803, %v4831, 0
        %v4859 = vsel %vm828, %v4833, 0
        %4861 = vmatprep.subr.bf16.mxu0 0
        %4862 = vmatpush1.bf16.msra.mxu0 %v4859
        %4863 = vmatprep.subr.bf16.mxu0 0
        %4864 = vmatpush1.bf16.msra.mxu0 0
        %4865 = vmatprep.subr.bf16.mxu0 0
        %4866 = vmatpush1.bf16.msra.mxu0 0
        %4867 = vmatprep.subr.bf16.mxu0 0
        %4868 = vmatpush1.bf16.msra.mxu0 0
        %4869 = vmatprep.subr.bf16.mxu0 0
        %4870 = vmatpush1.bf16.msra.mxu0 0
        %4871 = vmatprep.subr.bf16.mxu0 0
        %4872 = vmatpush1.bf16.msra.mxu0 0
        %4873 = vmatprep.subr.bf16.mxu0 0
        %4874 = vmatpush1.bf16.msra.mxu0 0
        %4875 = vmatprep.subr.bf16.mxu0 0
        %4876 = vmatpush1.bf16.msra.mxu0 0
        %4877 = vmatprep.subr.bf16.mxu0 0
        %4878 = vmatpush1.bf16.msra.mxu0 0
        %4879 = vmatprep.subr.bf16.mxu0 0
        %4880 = vmatpush1.bf16.msra.mxu0 0
        %4881 = vmatprep.subr.bf16.mxu0 0
        %4882 = vmatpush1.bf16.msra.mxu0 0
        %4883 = vmatprep.subr.bf16.mxu0 0
        %4884 = vmatpush1.bf16.msra.mxu0 0
        %4885 = vmatprep.subr.bf16.mxu0 0
        %4886 = vmatpush1.bf16.msra.mxu0 0
        %4887 = vmatprep.subr.bf16.mxu0 0
        %4888 = vmatpush1.bf16.msra.mxu0 0
        %4889 = vmatprep.subr.bf16.mxu0 0
        %4890 = vmatpush1.bf16.msra.mxu0 0
        %4891 = vmatprep.subr.bf16.mxu0 0
        %4892 = vmatpush1.bf16.msra.mxu0 0
        %4893 = vmatprep.mubr.bf16.mxu0 0
        %4894 = vmatmul.mubr.bf16.gmra.mrb[0].mxu0 %v4835
        %v4895 = vpop.f32.mrb[0].mxu0
        %v4896 = vadd.f32 0.0, %v4895
        %v4897 = vpop.f32.mrb[0].mxu0
        %v4898 = vpop.f32.mrb[0].mxu0
        %v4899 = vadd.f32 0.0, %v4898
        %v4900 = vpop.f32.mrb[0].mxu0
        %4901 = vmatprep.mubr.bf16.mxu0 0
        %4902 = vmatmul.mubr.bf16.gmra.mrb[0].mxu0 %v4838
        %v4903 = vpop.f32.mrb[0].mxu0
        %v4904 = vadd.f32 0.0, %v4903
        %v4905 = vpop.f32.mrb[0].mxu0
        %v4906 = vpop.f32.mrb[0].mxu0
        %v4907 = vadd.f32 0.0, %v4906
        %v4908 = vpop.f32.mrb[0].mxu0
        %4909 = vmatprep.mubr.bf16.mxu0 0
        %4910 = vmatmul.mubr.bf16.gmra.mrb[0].mxu0 %v4841
        %v4911 = vpop.f32.mrb[0].mxu0
        %v4912 = vadd.f32 0.0, %v4911
        %v4913 = vpop.f32.mrb[0].mxu0
        %v4914 = vpop.f32.mrb[0].mxu0
        %v4915 = vadd.f32 0.0, %v4914
        %v4916 = vpop.f32.mrb[0].mxu0
        %4917 = vmatprep.mubr.bf16.mxu0 0
        %4918 = vmatmul.mubr.bf16.gmra.mrb[0].mxu0 %v4844
        %v4919 = vpop.f32.mrb[0].mxu0
        %v4920 = vadd.f32 0.0, %v4919
        %v4921 = vpop.f32.mrb[0].mxu0
        %v4922 = vpop.f32.mrb[0].mxu0
        %v4923 = vadd.f32 0.0, %v4922
        %v4924 = vpop.f32.mrb[0].mxu0
        %4925 = vmatprep.mubr.bf16.mxu0 0
        %4926 = vmatmul.mubr.bf16.gmra.mrb[0].mxu0 %v4847
        %v4927 = vpop.f32.mrb[0].mxu0
        %v4928 = vadd.f32 0.0, %v4927
        %v4929 = vpop.f32.mrb[0].mxu0
        %v4930 = vpop.f32.mrb[0].mxu0
        %v4931 = vadd.f32 0.0, %v4930
        %v4932 = vpop.f32.mrb[0].mxu0
        %4933 = vmatprep.mubr.bf16.mxu0 0
        %4934 = vmatmul.mubr.bf16.gmra.mrb[0].mxu0 %v4850
        %v4935 = vpop.f32.mrb[0].mxu0
        %v4936 = vadd.f32 0.0, %v4935
        %v4937 = vpop.f32.mrb[0].mxu0
        %v4938 = vpop.f32.mrb[0].mxu0
        %v4939 = vadd.f32 0.0, %v4938
        %v4940 = vpop.f32.mrb[0].mxu0
        %4941 = vmatprep.mubr.bf16.mxu0 0
        %4942 = vmatmul.mubr.bf16.gmra.mrb[0].mxu0 %v4853
        %v4943 = vpop.f32.mrb[0].mxu0
        %v4944 = vadd.f32 0.0, %v4943
        %v4945 = vpop.f32.mrb[0].mxu0
        %v4946 = vpop.f32.mrb[0].mxu0
        %v4947 = vadd.f32 0.0, %v4946
        %v4948 = vpop.f32.mrb[0].mxu0
        %4949 = vmatprep.mubr.bf16.mxu0 0
        %4950 = vmatmul.mubr.bf16.gmra.mrb[0].mxu0 %v4856
        %v4951 = vpop.f32.mrb[0].mxu0
        %v4952 = vadd.f32 0.0, %v4951
        %v4953 = vpop.f32.mrb[0].mxu0
        %v4954 = vpop.f32.mrb[0].mxu0
        %v4955 = vadd.f32 0.0, %v4954
        %v4956 = vpop.f32.mrb[0].mxu0
        %4957 = vdwg.mxu0
        %v4958 = vadd.f32 %v4746, %v4896
        %v4959 = vadd.f32 %v4749, %v4899
        %v4960 = vadd.f32 %v4754, %v4904
        %v4961 = vadd.f32 %v4757, %v4907
        %v4962 = vadd.f32 %v4762, %v4912
        %v4963 = vadd.f32 %v4765, %v4915
        %v4964 = vadd.f32 %v4770, %v4920
        %v4965 = vadd.f32 %v4773, %v4923
        %v4966 = vadd.f32 %v4778, %v4928
        %v4967 = vadd.f32 %v4781, %v4931
        %v4968 = vadd.f32 %v4786, %v4936
        %v4969 = vadd.f32 %v4789, %v4939
        %v4970 = vadd.f32 %v4794, %v4944
        %v4971 = vadd.f32 %v4797, %v4947
        %v4972 = vadd.f32 %v4802, %v4952
        %v4973 = vadd.f32 %v4805, %v4955
        %v4974 = vld [vmem:[%s745 + $0x3] sm:$0xff]
        %v4975 = vld [vmem:[%s745 + $0xb] sm:$0xff]
        %v4976 = vld [vmem:[%s745 + $0x13] sm:$0xff]
        %v4977 = vld [vmem:[%s745 + $0x1b] sm:$0xff]
        %v4978 = vld [vmem:[%s745 + $0x23] sm:$0xff]
        %v4979 = vld [vmem:[%s745 + $0x2b] sm:$0xff]
        %v4980 = vld [vmem:[%s745 + $0x33] sm:$0xff]
        %v4981 = vld [vmem:[%s745 + $0x3b] sm:$0xff]
        %v4982 = vld [vmem:[%s745 + $0x43] sm:$0xff]
        %v4983 = vld [vmem:[%s745 + $0x4b] sm:$0xff]
        %v4984 = vld [vmem:[%s745 + $0x53] sm:$0xff]
        %v4985 = vld [vmem:[%s745 + $0x5b] sm:$0xff]
        %v4986 = vld [vmem:[%s745 + $0x63] sm:$0xff]
        %v4987 = vld [vmem:[%s745 + $0x6b] sm:$0xff]
        %v4988 = vld [vmem:[%s745 + $0x73] sm:$0xff]
        %v4989 = vld [vmem:[%s745 + $0x7b] sm:$0x3]
        %v4990 = vpack.c.bf16 %v4975, %v4974
        %v4991 = vpack.c.bf16 %v4977, %v4976
        %v4992 = vpack.c.bf16 %v4979, %v4978
        %v4993 = vpack.c.bf16 %v4981, %v4980
        %v4994 = vpack.c.bf16 %v4983, %v4982
        %v4995 = vpack.c.bf16 %v4985, %v4984
        %v4996 = vpack.c.bf16 %v4987, %v4986
        %v4997 = vpack.c.bf16 %v4989, %v4988
        %s4998 = scalar_lea.vmem [#allocation24], 6
        %v4999 = vld [vmem:[%s4998] sm:$0x3]
        %v5001 = vsel %vm803, %v4990, 0
        %v5004 = vsel %vm803, %v4991, 0
        %v5007 = vsel %vm803, %v4992, 0
        %v5010 = vsel %vm803, %v4993, 0
        %v5013 = vsel %vm803, %v4994, 0
        %v5016 = vsel %vm803, %v4995, 0
        %v5019 = vsel %vm803, %v4996, 0
        %v5022 = vsel %vm803, %v4997, 0
        %v5025 = vsel %vm828, %v4999, 0
        %5027 = vmatprep.subr.bf16.mxu0 0
        %5028 = vmatpush1.bf16.msra.mxu0 %v5025
        %5029 = vmatprep.subr.bf16.mxu0 0
        %5030 = vmatpush1.bf16.msra.mxu0 0
        %5031 = vmatprep.subr.bf16.mxu0 0
        %5032 = vmatpush1.bf16.msra.mxu0 0
        %5033 = vmatprep.subr.bf16.mxu0 0
        %5034 = vmatpush1.bf16.msra.mxu0 0
        %5035 = vmatprep.subr.bf16.mxu0 0
        %5036 = vmatpush1.bf16.msra.mxu0 0
        %5037 = vmatprep.subr.bf16.mxu0 0
        %5038 = vmatpush1.bf16.msra.mxu0 0
        %5039 = vmatprep.subr.bf16.mxu0 0
        %5040 = vmatpush1.bf16.msra.mxu0 0
        %5041 = vmatprep.subr.bf16.mxu0 0
        %5042 = vmatpush1.bf16.msra.mxu0 0
        %5043 = vmatprep.subr.bf16.mxu0 0
        %5044 = vmatpush1.bf16.msra.mxu0 0
        %5045 = vmatprep.subr.bf16.mxu0 0
        %5046 = vmatpush1.bf16.msra.mxu0 0
        %5047 = vmatprep.subr.bf16.mxu0 0
        %5048 = vmatpush1.bf16.msra.mxu0 0
        %5049 = vmatprep.subr.bf16.mxu0 0
        %5050 = vmatpush1.bf16.msra.mxu0 0
        %5051 = vmatprep.subr.bf16.mxu0 0
        %5052 = vmatpush1.bf16.msra.mxu0 0
        %5053 = vmatprep.subr.bf16.mxu0 0
        %5054 = vmatpush1.bf16.msra.mxu0 0
        %5055 = vmatprep.subr.bf16.mxu0 0
        %5056 = vmatpush1.bf16.msra.mxu0 0
        %5057 = vmatprep.subr.bf16.mxu0 0
        %5058 = vmatpush1.bf16.msra.mxu0 0
        %5059 = vmatprep.mubr.bf16.mxu0 0
        %5060 = vmatmul.mubr.bf16.gmra.mrb[0].mxu0 %v5001
        %v5061 = vpop.f32.mrb[0].mxu0
        %v5062 = vadd.f32 0.0, %v5061
        %v5063 = vpop.f32.mrb[0].mxu0
        %v5064 = vpop.f32.mrb[0].mxu0
        %v5065 = vadd.f32 0.0, %v5064
        %v5066 = vpop.f32.mrb[0].mxu0
        %5067 = vmatprep.mubr.bf16.mxu0 0
        %5068 = vmatmul.mubr.bf16.gmra.mrb[0].mxu0 %v5004
        %v5069 = vpop.f32.mrb[0].mxu0
        %v5070 = vadd.f32 0.0, %v5069
        %v5071 = vpop.f32.mrb[0].mxu0
        %v5072 = vpop.f32.mrb[0].mxu0
        %v5073 = vadd.f32 0.0, %v5072
        %v5074 = vpop.f32.mrb[0].mxu0
        %5075 = vmatprep.mubr.bf16.mxu0 0
        %5076 = vmatmul.mubr.bf16.gmra.mrb[0].mxu0 %v5007
        %v5077 = vpop.f32.mrb[0].mxu0
        %v5078 = vadd.f32 0.0, %v5077
        %v5079 = vpop.f32.mrb[0].mxu0
        %v5080 = vpop.f32.mrb[0].mxu0
        %v5081 = vadd.f32 0.0, %v5080
        %v5082 = vpop.f32.mrb[0].mxu0
        %5083 = vmatprep.mubr.bf16.mxu0 0
        %5084 = vmatmul.mubr.bf16.gmra.mrb[0].mxu0 %v5010
        %v5085 = vpop.f32.mrb[0].mxu0
        %v5086 = vadd.f32 0.0, %v5085
        %v5087 = vpop.f32.mrb[0].mxu0
        %v5088 = vpop.f32.mrb[0].mxu0
        %v5089 = vadd.f32 0.0, %v5088
        %v5090 = vpop.f32.mrb[0].mxu0
        %5091 = vmatprep.mubr.bf16.mxu0 0
        %5092 = vmatmul.mubr.bf16.gmra.mrb[0].mxu0 %v5013
        %v5093 = vpop.f32.mrb[0].mxu0
        %v5094 = vadd.f32 0.0, %v5093
        %v5095 = vpop.f32.mrb[0].mxu0
        %v5096 = vpop.f32.mrb[0].mxu0
        %v5097 = vadd.f32 0.0, %v5096
        %v5098 = vpop.f32.mrb[0].mxu0
        %5099 = vmatprep.mubr.bf16.mxu0 0
        %5100 = vmatmul.mubr.bf16.gmra.mrb[0].mxu0 %v5016
        %v5101 = vpop.f32.mrb[0].mxu0
        %v5102 = vadd.f32 0.0, %v5101
        %v5103 = vpop.f32.mrb[0].mxu0
        %v5104 = vpop.f32.mrb[0].mxu0
        %v5105 = vadd.f32 0.0, %v5104
        %v5106 = vpop.f32.mrb[0].mxu0
        %5107 = vmatprep.mubr.bf16.mxu0 0
        %5108 = vmatmul.mubr.bf16.gmra.mrb[0].mxu0 %v5019
        %v5109 = vpop.f32.mrb[0].mxu0
        %v5110 = vadd.f32 0.0, %v5109
        %v5111 = vpop.f32.mrb[0].mxu0
        %v5112 = vpop.f32.mrb[0].mxu0
        %v5113 = vadd.f32 0.0, %v5112
        %v5114 = vpop.f32.mrb[0].mxu0
        %5115 = vmatprep.mubr.bf16.mxu0 0
        %5116 = vmatmul.mubr.bf16.gmra.mrb[0].mxu0 %v5022
        %v5117 = vpop.f32.mrb[0].mxu0
        %v5118 = vadd.f32 0.0, %v5117
        %v5119 = vpop.f32.mrb[0].mxu0
        %v5120 = vpop.f32.mrb[0].mxu0
        %v5121 = vadd.f32 0.0, %v5120
        %v5122 = vpop.f32.mrb[0].mxu0
        %5123 = vdwg.mxu0
        %v5124 = vadd.f32 %v4958, %v5062
        %v5125 = vadd.f32 %v4959, %v5065
        %v5126 = vadd.f32 %v4960, %v5070
        %v5127 = vadd.f32 %v4961, %v5073
        %v5128 = vadd.f32 %v4962, %v5078
        %v5129 = vadd.f32 %v4963, %v5081
        %v5130 = vadd.f32 %v4964, %v5086
        %v5131 = vadd.f32 %v4965, %v5089
        %v5132 = vadd.f32 %v4966, %v5094
        %v5133 = vadd.f32 %v4967, %v5097
        %v5134 = vadd.f32 %v4968, %v5102
        %v5135 = vadd.f32 %v4969, %v5105
        %v5136 = vadd.f32 %v4970, %v5110
        %v5137 = vadd.f32 %v4971, %v5113
        %v5138 = vadd.f32 %v4972, %v5118
        %v5139 = vadd.f32 %v4973, %v5121
        %v5140 = vld [vmem:[%s745 + $0x4] sm:$0xff]
        %v5141 = vld [vmem:[%s745 + $0xc] sm:$0xff]
        %v5142 = vld [vmem:[%s745 + $0x14] sm:$0xff]
        %v5143 = vld [vmem:[%s745 + $0x1c] sm:$0xff]
        %v5144 = vld [vmem:[%s745 + $0x24] sm:$0xff]
        %v5145 = vld [vmem:[%s745 + $0x2c] sm:$0xff]
        %v5146 = vld [vmem:[%s745 + $0x34] sm:$0xff]
        %v5147 = vld [vmem:[%s745 + $0x3c] sm:$0xff]
        %v5148 = vld [vmem:[%s745 + $0x44] sm:$0xff]
        %v5149 = vld [vmem:[%s745 + $0x4c] sm:$0xff]
        %v5150 = vld [vmem:[%s745 + $0x54] sm:$0xff]
        %v5151 = vld [vmem:[%s745 + $0x5c] sm:$0xff]
        %v5152 = vld [vmem:[%s745 + $0x64] sm:$0xff]
        %v5153 = vld [vmem:[%s745 + $0x6c] sm:$0xff]
        %v5154 = vld [vmem:[%s745 + $0x74] sm:$0xff]
        %v5155 = vld [vmem:[%s745 + $0x7c] sm:$0x3]
        %v5156 = vpack.c.bf16 %v5141, %v5140
        %v5157 = vpack.c.bf16 %v5143, %v5142
        %v5158 = vpack.c.bf16 %v5145, %v5144
        %v5159 = vpack.c.bf16 %v5147, %v5146
        %v5160 = vpack.c.bf16 %v5149, %v5148
        %v5161 = vpack.c.bf16 %v5151, %v5150
        %v5162 = vpack.c.bf16 %v5153, %v5152
        %v5163 = vpack.c.bf16 %v5155, %v5154
        %s5164 = scalar_lea.vmem [#allocation24], 8
        %v5165 = vld [vmem:[%s5164] sm:$0x3]
        %v5167 = vsel %vm803, %v5156, 0
        %v5170 = vsel %vm803, %v5157, 0
        %v5173 = vsel %vm803, %v5158, 0
        %v5176 = vsel %vm803, %v5159, 0
        %v5179 = vsel %vm803, %v5160, 0
        %v5182 = vsel %vm803, %v5161, 0
        %v5185 = vsel %vm803, %v5162, 0
        %v5188 = vsel %vm803, %v5163, 0
        %v5191 = vsel %vm828, %v5165, 0
        %5193 = vmatprep.subr.bf16.mxu0 0
        %5194 = vmatpush1.bf16.msra.mxu0 %v5191
        %5195 = vmatprep.subr.bf16.mxu0 0
        %5196 = vmatpush1.bf16.msra.mxu0 0
        %5197 = vmatprep.subr.bf16.mxu0 0
        %5198 = vmatpush1.bf16.msra.mxu0 0
        %5199 = vmatprep.subr.bf16.mxu0 0
        %5200 = vmatpush1.bf16.msra.mxu0 0
        %5201 = vmatprep.subr.bf16.mxu0 0
        %5202 = vmatpush1.bf16.msra.mxu0 0
        %5203 = vmatprep.subr.bf16.mxu0 0
        %5204 = vmatpush1.bf16.msra.mxu0 0
        %5205 = vmatprep.subr.bf16.mxu0 0
        %5206 = vmatpush1.bf16.msra.mxu0 0
        %5207 = vmatprep.subr.bf16.mxu0 0
        %5208 = vmatpush1.bf16.msra.mxu0 0
        %5209 = vmatprep.subr.bf16.mxu0 0
        %5210 = vmatpush1.bf16.msra.mxu0 0
        %5211 = vmatprep.subr.bf16.mxu0 0
        %5212 = vmatpush1.bf16.msra.mxu0 0
        %5213 = vmatprep.subr.bf16.mxu0 0
        %5214 = vmatpush1.bf16.msra.mxu0 0
        %5215 = vmatprep.subr.bf16.mxu0 0
        %5216 = vmatpush1.bf16.msra.mxu0 0
        %5217 = vmatprep.subr.bf16.mxu0 0
        %5218 = vmatpush1.bf16.msra.mxu0 0
        %5219 = vmatprep.subr.bf16.mxu0 0
        %5220 = vmatpush1.bf16.msra.mxu0 0
        %5221 = vmatprep.subr.bf16.mxu0 0
        %5222 = vmatpush1.bf16.msra.mxu0 0
        %5223 = vmatprep.subr.bf16.mxu0 0
        %5224 = vmatpush1.bf16.msra.mxu0 0
        %5225 = vmatprep.mubr.bf16.mxu0 0
        %5226 = vmatmul.mubr.bf16.gmra.mrb[0].mxu0 %v5167
        %v5227 = vpop.f32.mrb[0].mxu0
        %v5228 = vadd.f32 0.0, %v5227
        %v5229 = vpop.f32.mrb[0].mxu0
        %v5230 = vpop.f32.mrb[0].mxu0
        %v5231 = vadd.f32 0.0, %v5230
        %v5232 = vpop.f32.mrb[0].mxu0
        %5233 = vmatprep.mubr.bf16.mxu0 0
        %5234 = vmatmul.mubr.bf16.gmra.mrb[0].mxu0 %v5170
        %v5235 = vpop.f32.mrb[0].mxu0
        %v5236 = vadd.f32 0.0, %v5235
        %v5237 = vpop.f32.mrb[0].mxu0
        %v5238 = vpop.f32.mrb[0].mxu0
        %v5239 = vadd.f32 0.0, %v5238
        %v5240 = vpop.f32.mrb[0].mxu0
        %5241 = vmatprep.mubr.bf16.mxu0 0
        %5242 = vmatmul.mubr.bf16.gmra.mrb[0].mxu0 %v5173
        %v5243 = vpop.f32.mrb[0].mxu0
        %v5244 = vadd.f32 0.0, %v5243
        %v5245 = vpop.f32.mrb[0].mxu0
        %v5246 = vpop.f32.mrb[0].mxu0
        %v5247 = vadd.f32 0.0, %v5246
        %v5248 = vpop.f32.mrb[0].mxu0
        %5249 = vmatprep.mubr.bf16.mxu0 0
        %5250 = vmatmul.mubr.bf16.gmra.mrb[0].mxu0 %v5176
        %v5251 = vpop.f32.mrb[0].mxu0
        %v5252 = vadd.f32 0.0, %v5251
        %v5253 = vpop.f32.mrb[0].mxu0
        %v5254 = vpop.f32.mrb[0].mxu0
        %v5255 = vadd.f32 0.0, %v5254
        %v5256 = vpop.f32.mrb[0].mxu0
        %5257 = vmatprep.mubr.bf16.mxu0 0
        %5258 = vmatmul.mubr.bf16.gmra.mrb[0].mxu0 %v5179
        %v5259 = vpop.f32.mrb[0].mxu0
        %v5260 = vadd.f32 0.0, %v5259
        %v5261 = vpop.f32.mrb[0].mxu0
        %v5262 = vpop.f32.mrb[0].mxu0
        %v5263 = vadd.f32 0.0, %v5262
        %v5264 = vpop.f32.mrb[0].mxu0
        %5265 = vmatprep.mubr.bf16.mxu0 0
        %5266 = vmatmul.mubr.bf16.gmra.mrb[0].mxu0 %v5182
        %v5267 = vpop.f32.mrb[0].mxu0
        %v5268 = vadd.f32 0.0, %v5267
        %v5269 = vpop.f32.mrb[0].mxu0
        %v5270 = vpop.f32.mrb[0].mxu0
        %v5271 = vadd.f32 0.0, %v5270
        %v5272 = vpop.f32.mrb[0].mxu0
        %5273 = vmatprep.mubr.bf16.mxu0 0
        %5274 = vmatmul.mubr.bf16.gmra.mrb[0].mxu0 %v5185
        %v5275 = vpop.f32.mrb[0].mxu0
        %v5276 = vadd.f32 0.0, %v5275
        %v5277 = vpop.f32.mrb[0].mxu0
        %v5278 = vpop.f32.mrb[0].mxu0
        %v5279 = vadd.f32 0.0, %v5278
        %v5280 = vpop.f32.mrb[0].mxu0
        %5281 = vmatprep.mubr.bf16.mxu0 0
        %5282 = vmatmul.mubr.bf16.gmra.mrb[0].mxu0 %v5188
        %v5283 = vpop.f32.mrb[0].mxu0
        %v5284 = vadd.f32 0.0, %v5283
        %v5285 = vpop.f32.mrb[0].mxu0
        %v5286 = vpop.f32.mrb[0].mxu0
        %v5287 = vadd.f32 0.0, %v5286
        %v5288 = vpop.f32.mrb[0].mxu0
        %5289 = vdwg.mxu0
        %v5290 = vadd.f32 %v5124, %v5228
        %v5291 = vadd.f32 %v5125, %v5231
        %v5292 = vadd.f32 %v5126, %v5236
        %v5293 = vadd.f32 %v5127, %v5239
        %v5294 = vadd.f32 %v5128, %v5244
        %v5295 = vadd.f32 %v5129, %v5247
        %v5296 = vadd.f32 %v5130, %v5252
        %v5297 = vadd.f32 %v5131, %v5255
        %v5298 = vadd.f32 %v5132, %v5260
        %v5299 = vadd.f32 %v5133, %v5263
        %v5300 = vadd.f32 %v5134, %v5268
        %v5301 = vadd.f32 %v5135, %v5271
        %v5302 = vadd.f32 %v5136, %v5276
        %v5303 = vadd.f32 %v5137, %v5279
        %v5304 = vadd.f32 %v5138, %v5284
        %v5305 = vadd.f32 %v5139, %v5287
        %v5306 = vld [vmem:[%s745 + $0x5] sm:$0xff]
        %v5307 = vld [vmem:[%s745 + $0xd] sm:$0xff]
        %v5308 = vld [vmem:[%s745 + $0x15] sm:$0xff]
        %v5309 = vld [vmem:[%s745 + $0x1d] sm:$0xff]
        %v5310 = vld [vmem:[%s745 + $0x25] sm:$0xff]
        %v5311 = vld [vmem:[%s745 + $0x2d] sm:$0xff]
        %v5312 = vld [vmem:[%s745 + $0x35] sm:$0xff]
        %v5313 = vld [vmem:[%s745 + $0x3d] sm:$0xff]
        %v5314 = vld [vmem:[%s745 + $0x45] sm:$0xff]
        %v5315 = vld [vmem:[%s745 + $0x4d] sm:$0xff]
        %v5316 = vld [vmem:[%s745 + $0x55] sm:$0xff]
        %v5317 = vld [vmem:[%s745 + $0x5d] sm:$0xff]
        %v5318 = vld [vmem:[%s745 + $0x65] sm:$0xff]
        %v5319 = vld [vmem:[%s745 + $0x6d] sm:$0xff]
        %v5320 = vld [vmem:[%s745 + $0x75] sm:$0xff]
        %v5321 = vld [vmem:[%s745 + $0x7d] sm:$0x3]
        %v5322 = vpack.c.bf16 %v5307, %v5306
        %v5323 = vpack.c.bf16 %v5309, %v5308
        %v5324 = vpack.c.bf16 %v5311, %v5310
        %v5325 = vpack.c.bf16 %v5313, %v5312
        %v5326 = vpack.c.bf16 %v5315, %v5314
        %v5327 = vpack.c.bf16 %v5317, %v5316
        %v5328 = vpack.c.bf16 %v5319, %v5318
        %v5329 = vpack.c.bf16 %v5321, %v5320
        %s5330 = scalar_lea.vmem [#allocation24], 10
        %v5331 = vld [vmem:[%s5330] sm:$0x3]
        %v5333 = vsel %vm803, %v5322, 0
        %v5336 = vsel %vm803, %v5323, 0
        %v5339 = vsel %vm803, %v5324, 0
        %v5342 = vsel %vm803, %v5325, 0
        %v5345 = vsel %vm803, %v5326, 0
        %v5348 = vsel %vm803, %v5327, 0
        %v5351 = vsel %vm803, %v5328, 0
        %v5354 = vsel %vm803, %v5329, 0
        %v5357 = vsel %vm828, %v5331, 0
        %5359 = vmatprep.subr.bf16.mxu0 0
        %5360 = vmatpush1.bf16.msra.mxu0 %v5357
        %5361 = vmatprep.subr.bf16.mxu0 0
        %5362 = vmatpush1.bf16.msra.mxu0 0
        %5363 = vmatprep.subr.bf16.mxu0 0
        %5364 = vmatpush1.bf16.msra.mxu0 0
        %5365 = vmatprep.subr.bf16.mxu0 0
        %5366 = vmatpush1.bf16.msra.mxu0 0
        %5367 = vmatprep.subr.bf16.mxu0 0
        %5368 = vmatpush1.bf16.msra.mxu0 0
        %5369 = vmatprep.subr.bf16.mxu0 0
        %5370 = vmatpush1.bf16.msra.mxu0 0
        %5371 = vmatprep.subr.bf16.mxu0 0
        %5372 = vmatpush1.bf16.msra.mxu0 0
        %5373 = vmatprep.subr.bf16.mxu0 0
        %5374 = vmatpush1.bf16.msra.mxu0 0
        %5375 = vmatprep.subr.bf16.mxu0 0
        %5376 = vmatpush1.bf16.msra.mxu0 0
        %5377 = vmatprep.subr.bf16.mxu0 0
        %5378 = vmatpush1.bf16.msra.mxu0 0
        %5379 = vmatprep.subr.bf16.mxu0 0
        %5380 = vmatpush1.bf16.msra.mxu0 0
        %5381 = vmatprep.subr.bf16.mxu0 0
        %5382 = vmatpush1.bf16.msra.mxu0 0
        %5383 = vmatprep.subr.bf16.mxu0 0
        %5384 = vmatpush1.bf16.msra.mxu0 0
        %5385 = vmatprep.subr.bf16.mxu0 0
        %5386 = vmatpush1.bf16.msra.mxu0 0
        %5387 = vmatprep.subr.bf16.mxu0 0
        %5388 = vmatpush1.bf16.msra.mxu0 0
        %5389 = vmatprep.subr.bf16.mxu0 0
        %5390 = vmatpush1.bf16.msra.mxu0 0
        %5391 = vmatprep.mubr.bf16.mxu0 0
        %5392 = vmatmul.mubr.bf16.gmra.mrb[0].mxu0 %v5333
        %v5393 = vpop.f32.mrb[0].mxu0
        %v5394 = vadd.f32 0.0, %v5393
        %v5395 = vpop.f32.mrb[0].mxu0
        %v5396 = vpop.f32.mrb[0].mxu0
        %v5397 = vadd.f32 0.0, %v5396
        %v5398 = vpop.f32.mrb[0].mxu0
        %5399 = vmatprep.mubr.bf16.mxu0 0
        %5400 = vmatmul.mubr.bf16.gmra.mrb[0].mxu0 %v5336
        %v5401 = vpop.f32.mrb[0].mxu0
        %v5402 = vadd.f32 0.0, %v5401
        %v5403 = vpop.f32.mrb[0].mxu0
        %v5404 = vpop.f32.mrb[0].mxu0
        %v5405 = vadd.f32 0.0, %v5404
        %v5406 = vpop.f32.mrb[0].mxu0
        %5407 = vmatprep.mubr.bf16.mxu0 0
        %5408 = vmatmul.mubr.bf16.gmra.mrb[0].mxu0 %v5339
        %v5409 = vpop.f32.mrb[0].mxu0
        %v5410 = vadd.f32 0.0, %v5409
        %v5411 = vpop.f32.mrb[0].mxu0
        %v5412 = vpop.f32.mrb[0].mxu0
        %v5413 = vadd.f32 0.0, %v5412
        %v5414 = vpop.f32.mrb[0].mxu0
        %5415 = vmatprep.mubr.bf16.mxu0 0
        %5416 = vmatmul.mubr.bf16.gmra.mrb[0].mxu0 %v5342
        %v5417 = vpop.f32.mrb[0].mxu0
        %v5418 = vadd.f32 0.0, %v5417
        %v5419 = vpop.f32.mrb[0].mxu0
        %v5420 = vpop.f32.mrb[0].mxu0
        %v5421 = vadd.f32 0.0, %v5420
        %v5422 = vpop.f32.mrb[0].mxu0
        %5423 = vmatprep.mubr.bf16.mxu0 0
        %5424 = vmatmul.mubr.bf16.gmra.mrb[0].mxu0 %v5345
        %v5425 = vpop.f32.mrb[0].mxu0
        %v5426 = vadd.f32 0.0, %v5425
        %v5427 = vpop.f32.mrb[0].mxu0
        %v5428 = vpop.f32.mrb[0].mxu0
        %v5429 = vadd.f32 0.0, %v5428
        %v5430 = vpop.f32.mrb[0].mxu0
        %5431 = vmatprep.mubr.bf16.mxu0 0
        %5432 = vmatmul.mubr.bf16.gmra.mrb[0].mxu0 %v5348
        %v5433 = vpop.f32.mrb[0].mxu0
        %v5434 = vadd.f32 0.0, %v5433
        %v5435 = vpop.f32.mrb[0].mxu0
        %v5436 = vpop.f32.mrb[0].mxu0
        %v5437 = vadd.f32 0.0, %v5436
        %v5438 = vpop.f32.mrb[0].mxu0
        %5439 = vmatprep.mubr.bf16.mxu0 0
        %5440 = vmatmul.mubr.bf16.gmra.mrb[0].mxu0 %v5351
        %v5441 = vpop.f32.mrb[0].mxu0
        %v5442 = vadd.f32 0.0, %v5441
        %v5443 = vpop.f32.mrb[0].mxu0
        %v5444 = vpop.f32.mrb[0].mxu0
        %v5445 = vadd.f32 0.0, %v5444
        %v5446 = vpop.f32.mrb[0].mxu0
        %5447 = vmatprep.mubr.bf16.mxu0 0
        %5448 = vmatmul.mubr.bf16.gmra.mrb[0].mxu0 %v5354
        %v5449 = vpop.f32.mrb[0].mxu0
        %v5450 = vadd.f32 0.0, %v5449
        %v5451 = vpop.f32.mrb[0].mxu0
        %v5452 = vpop.f32.mrb[0].mxu0
        %v5453 = vadd.f32 0.0, %v5452
        %v5454 = vpop.f32.mrb[0].mxu0
        %5455 = vdwg.mxu0
        %v5456 = vadd.f32 %v5290, %v5394
        %v5457 = vadd.f32 %v5291, %v5397
        %v5458 = vadd.f32 %v5292, %v5402
        %v5459 = vadd.f32 %v5293, %v5405
        %v5460 = vadd.f32 %v5294, %v5410
        %v5461 = vadd.f32 %v5295, %v5413
        %v5462 = vadd.f32 %v5296, %v5418
        %v5463 = vadd.f32 %v5297, %v5421
        %v5464 = vadd.f32 %v5298, %v5426
        %v5465 = vadd.f32 %v5299, %v5429
        %v5466 = vadd.f32 %v5300, %v5434
        %v5467 = vadd.f32 %v5301, %v5437
        %v5468 = vadd.f32 %v5302, %v5442
        %v5469 = vadd.f32 %v5303, %v5445
        %v5470 = vadd.f32 %v5304, %v5450
        %v5471 = vadd.f32 %v5305, %v5453
        %v5472 = vld [vmem:[%s745 + $0x6] sm:$0xff]
        %v5473 = vld [vmem:[%s745 + $0xe] sm:$0xff]
        %v5474 = vld [vmem:[%s745 + $0x16] sm:$0xff]
        %v5475 = vld [vmem:[%s745 + $0x1e] sm:$0xff]
        %v5476 = vld [vmem:[%s745 + $0x26] sm:$0xff]
        %v5477 = vld [vmem:[%s745 + $0x2e] sm:$0xff]
        %v5478 = vld [vmem:[%s745 + $0x36] sm:$0xff]
        %v5479 = vld [vmem:[%s745 + $0x3e] sm:$0xff]
        %v5480 = vld [vmem:[%s745 + $0x46] sm:$0xff]
        %v5481 = vld [vmem:[%s745 + $0x4e] sm:$0xff]
        %v5482 = vld [vmem:[%s745 + $0x56] sm:$0xff]
        %v5483 = vld [vmem:[%s745 + $0x5e] sm:$0xff]
        %v5484 = vld [vmem:[%s745 + $0x66] sm:$0xff]
        %v5485 = vld [vmem:[%s745 + $0x6e] sm:$0xff]
        %v5486 = vld [vmem:[%s745 + $0x76] sm:$0xff]
        %v5487 = vld [vmem:[%s745 + $0x7e] sm:$0x3]
        %v5488 = vpack.c.bf16 %v5473, %v5472
        %v5489 = vpack.c.bf16 %v5475, %v5474
        %v5490 = vpack.c.bf16 %v5477, %v5476
        %v5491 = vpack.c.bf16 %v5479, %v5478
        %v5492 = vpack.c.bf16 %v5481, %v5480
        %v5493 = vpack.c.bf16 %v5483, %v5482
        %v5494 = vpack.c.bf16 %v5485, %v5484
        %v5495 = vpack.c.bf16 %v5487, %v5486
        %s5496 = scalar_lea.vmem [#allocation24], 12
        %v5497 = vld [vmem:[%s5496] sm:$0x3]
        %v5499 = vsel %vm803, %v5488, 0
        %v5502 = vsel %vm803, %v5489, 0
        %v5505 = vsel %vm803, %v5490, 0
        %v5508 = vsel %vm803, %v5491, 0
        %v5511 = vsel %vm803, %v5492, 0
        %v5514 = vsel %vm803, %v5493, 0
        %v5517 = vsel %vm803, %v5494, 0
        %v5520 = vsel %vm803, %v5495, 0
        %v5523 = vsel %vm828, %v5497, 0
        %5525 = vmatprep.subr.bf16.mxu0 0
        %5526 = vmatpush1.bf16.msra.mxu0 %v5523
        %5527 = vmatprep.subr.bf16.mxu0 0
        %5528 = vmatpush1.bf16.msra.mxu0 0
        %5529 = vmatprep.subr.bf16.mxu0 0
        %5530 = vmatpush1.bf16.msra.mxu0 0
        %5531 = vmatprep.subr.bf16.mxu0 0
        %5532 = vmatpush1.bf16.msra.mxu0 0
        %5533 = vmatprep.subr.bf16.mxu0 0
        %5534 = vmatpush1.bf16.msra.mxu0 0
        %5535 = vmatprep.subr.bf16.mxu0 0
        %5536 = vmatpush1.bf16.msra.mxu0 0
        %5537 = vmatprep.subr.bf16.mxu0 0
        %5538 = vmatpush1.bf16.msra.mxu0 0
        %5539 = vmatprep.subr.bf16.mxu0 0
        %5540 = vmatpush1.bf16.msra.mxu0 0
        %5541 = vmatprep.subr.bf16.mxu0 0
        %5542 = vmatpush1.bf16.msra.mxu0 0
        %5543 = vmatprep.subr.bf16.mxu0 0
        %5544 = vmatpush1.bf16.msra.mxu0 0
        %5545 = vmatprep.subr.bf16.mxu0 0
        %5546 = vmatpush1.bf16.msra.mxu0 0
        %5547 = vmatprep.subr.bf16.mxu0 0
        %5548 = vmatpush1.bf16.msra.mxu0 0
        %5549 = vmatprep.subr.bf16.mxu0 0
        %5550 = vmatpush1.bf16.msra.mxu0 0
        %5551 = vmatprep.subr.bf16.mxu0 0
        %5552 = vmatpush1.bf16.msra.mxu0 0
        %5553 = vmatprep.subr.bf16.mxu0 0
        %5554 = vmatpush1.bf16.msra.mxu0 0
        %5555 = vmatprep.subr.bf16.mxu0 0
        %5556 = vmatpush1.bf16.msra.mxu0 0
        %5557 = vmatprep.mubr.bf16.mxu0 0
        %5558 = vmatmul.mubr.bf16.gmra.mrb[0].mxu0 %v5499
        %v5559 = vpop.f32.mrb[0].mxu0
        %v5560 = vadd.f32 0.0, %v5559
        %v5561 = vpop.f32.mrb[0].mxu0
        %v5562 = vpop.f32.mrb[0].mxu0
        %v5563 = vadd.f32 0.0, %v5562
        %v5564 = vpop.f32.mrb[0].mxu0
        %5565 = vmatprep.mubr.bf16.mxu0 0
        %5566 = vmatmul.mubr.bf16.gmra.mrb[0].mxu0 %v5502
        %v5567 = vpop.f32.mrb[0].mxu0
        %v5568 = vadd.f32 0.0, %v5567
        %v5569 = vpop.f32.mrb[0].mxu0
        %v5570 = vpop.f32.mrb[0].mxu0
        %v5571 = vadd.f32 0.0, %v5570
        %v5572 = vpop.f32.mrb[0].mxu0
        %5573 = vmatprep.mubr.bf16.mxu0 0
        %5574 = vmatmul.mubr.bf16.gmra.mrb[0].mxu0 %v5505
        %v5575 = vpop.f32.mrb[0].mxu0
        %v5576 = vadd.f32 0.0, %v5575
        %v5577 = vpop.f32.mrb[0].mxu0
        %v5578 = vpop.f32.mrb[0].mxu0
        %v5579 = vadd.f32 0.0, %v5578
        %v5580 = vpop.f32.mrb[0].mxu0
        %5581 = vmatprep.mubr.bf16.mxu0 0
        %5582 = vmatmul.mubr.bf16.gmra.mrb[0].mxu0 %v5508
        %v5583 = vpop.f32.mrb[0].mxu0
        %v5584 = vadd.f32 0.0, %v5583
        %v5585 = vpop.f32.mrb[0].mxu0
        %v5586 = vpop.f32.mrb[0].mxu0
        %v5587 = vadd.f32 0.0, %v5586
        %v5588 = vpop.f32.mrb[0].mxu0
        %5589 = vmatprep.mubr.bf16.mxu0 0
        %5590 = vmatmul.mubr.bf16.gmra.mrb[0].mxu0 %v5511
        %v5591 = vpop.f32.mrb[0].mxu0
        %v5592 = vadd.f32 0.0, %v5591
        %v5593 = vpop.f32.mrb[0].mxu0
        %v5594 = vpop.f32.mrb[0].mxu0
        %v5595 = vadd.f32 0.0, %v5594
        %v5596 = vpop.f32.mrb[0].mxu0
        %5597 = vmatprep.mubr.bf16.mxu0 0
        %5598 = vmatmul.mubr.bf16.gmra.mrb[0].mxu0 %v5514
        %v5599 = vpop.f32.mrb[0].mxu0
        %v5600 = vadd.f32 0.0, %v5599
        %v5601 = vpop.f32.mrb[0].mxu0
        %v5602 = vpop.f32.mrb[0].mxu0
        %v5603 = vadd.f32 0.0, %v5602
        %v5604 = vpop.f32.mrb[0].mxu0
        %5605 = vmatprep.mubr.bf16.mxu0 0
        %5606 = vmatmul.mubr.bf16.gmra.mrb[0].mxu0 %v5517
        %v5607 = vpop.f32.mrb[0].mxu0
        %v5608 = vadd.f32 0.0, %v5607
        %v5609 = vpop.f32.mrb[0].mxu0
        %v5610 = vpop.f32.mrb[0].mxu0
        %v5611 = vadd.f32 0.0, %v5610
        %v5612 = vpop.f32.mrb[0].mxu0
        %5613 = vmatprep.mubr.bf16.mxu0 0
        %5614 = vmatmul.mubr.bf16.gmra.mrb[0].mxu0 %v5520
        %v5615 = vpop.f32.mrb[0].mxu0
        %v5616 = vadd.f32 0.0, %v5615
        %v5617 = vpop.f32.mrb[0].mxu0
        %v5618 = vpop.f32.mrb[0].mxu0
        %v5619 = vadd.f32 0.0, %v5618
        %v5620 = vpop.f32.mrb[0].mxu0
        %5621 = vdwg.mxu0
        %v5622 = vadd.f32 %v5456, %v5560
        %v5623 = vadd.f32 %v5457, %v5563
        %v5624 = vadd.f32 %v5458, %v5568
        %v5625 = vadd.f32 %v5459, %v5571
        %v5626 = vadd.f32 %v5460, %v5576
        %v5627 = vadd.f32 %v5461, %v5579
        %v5628 = vadd.f32 %v5462, %v5584
        %v5629 = vadd.f32 %v5463, %v5587
        %v5630 = vadd.f32 %v5464, %v5592
        %v5631 = vadd.f32 %v5465, %v5595
        %v5632 = vadd.f32 %v5466, %v5600
        %v5633 = vadd.f32 %v5467, %v5603
        %v5634 = vadd.f32 %v5468, %v5608
        %v5635 = vadd.f32 %v5469, %v5611
        %v5636 = vadd.f32 %v5470, %v5616
        %v5637 = vadd.f32 %v5471, %v5619
        %5638 = vst.msk [vmem:[#allocation10] sm:$0xff] %vm1551, %v5622
        %5639 = vst.msk [vmem:[#allocation10 + $0x8] sm:$0xff] %vm1551, %v5623
        %5640 = vst.msk [vmem:[#allocation10 + $0x10] sm:$0xff] %vm1551, %v5624
        %5641 = vst.msk [vmem:[#allocation10 + $0x18] sm:$0xff] %vm1551, %v5625
        %5642 = vst.msk [vmem:[#allocation10 + $0x20] sm:$0xff] %vm1551, %v5626
        %5643 = vst.msk [vmem:[#allocation10 + $0x28] sm:$0xff] %vm1551, %v5627
        %5644 = vst.msk [vmem:[#allocation10 + $0x30] sm:$0xff] %vm1551, %v5628
        %5645 = vst.msk [vmem:[#allocation10 + $0x38] sm:$0xff] %vm1551, %v5629
        %5646 = vst.msk [vmem:[#allocation10 + $0x40] sm:$0xff] %vm1551, %v5630
        %5647 = vst.msk [vmem:[#allocation10 + $0x48] sm:$0xff] %vm1551, %v5631
        %5648 = vst.msk [vmem:[#allocation10 + $0x50] sm:$0xff] %vm1551, %v5632
        %5649 = vst.msk [vmem:[#allocation10 + $0x58] sm:$0xff] %vm1551, %v5633
        %5650 = vst.msk [vmem:[#allocation10 + $0x60] sm:$0xff] %vm1551, %v5634
        %5651 = vst.msk [vmem:[#allocation10 + $0x68] sm:$0xff] %vm1551, %v5635
        %5652 = vst.msk [vmem:[#allocation10 + $0x70] sm:$0xff] %vm1551, %v5636
        %vm5653 = vcmask 123904
        %5654 = vst.msk [vmem:[#allocation10 + $0x78] sm:$0x3] %vm5653, %v5637
        %v5655 = vld [vmem:[#allocation10] ss:$3 sm:$0xff]
        %s5656 = scalar_lea.vmem [#allocation10], 24
        %v5657 = vld [vmem:[%s5656] ss:$3 sm:$0xff]
        %s5658 = scalar_lea.vmem [#allocation10], 48
        %v5659 = vld [vmem:[%s5658] ss:$3 sm:$0xff]
        %s5660 = scalar_lea.vmem [#allocation10], 72
        %v5661 = vld [vmem:[%s5660] ss:$3 sm:$0xff]
        %s5662 = scalar_lea.vmem [#allocation10], 96
        %v5663 = vld [vmem:[%s5662] ss:$3 sm:$0xff]
        %s5664 = scalar_lea.vmem [#allocation10], 1
        %v5665 = vld [vmem:[%s5664] ss:$3 sm:$0xff]
        %s5666 = scalar_lea.vmem [#allocation10], 25
        %v5667 = vld [vmem:[%s5666] ss:$3 sm:$0xff]
        %s5668 = scalar_lea.vmem [#allocation10], 49
        %v5669 = vld [vmem:[%s5668] ss:$3 sm:$0xff]
        %s5670 = scalar_lea.vmem [#allocation10], 73
        %v5671 = vld [vmem:[%s5670] ss:$3 sm:$0xff]
        %s5672 = scalar_lea.vmem [#allocation10], 97
        %v5673 = vld [vmem:[%s5672] ss:$3 sm:$0xff]
        %v5674 = vmax.f32 %v5655, %v5665
        %v5675 = vmax.f32 %v5657, %v5667
        %v5676 = vmax.f32 %v5659, %v5669
        %v5677 = vmax.f32 %v5661, %v5671
        %v5678 = vmax.f32 %v5663, %v5673
        %s5679 = scalar_lea.vmem [#allocation10], 2
        %v5680 = vld [vmem:[%s5679] ss:$3 sm:$0xff]
        %s5681 = scalar_lea.vmem [#allocation10], 26
        %v5682 = vld [vmem:[%s5681] ss:$3 sm:$0xff]
        %s5683 = scalar_lea.vmem [#allocation10], 50
        %v5684 = vld [vmem:[%s5683] ss:$3 sm:$0xff]
        %s5685 = scalar_lea.vmem [#allocation10], 74
        %v5686 = vld [vmem:[%s5685] ss:$3 sm:$0xff]
        %s5687 = scalar_lea.vmem [#allocation10], 98
        %v5688 = vld [vmem:[%s5687] ss:$3 sm:$0xff]
        %v5689 = vmax.f32 %v5674, %v5680
        %v5690 = vmax.f32 %v5675, %v5682
        %v5691 = vmax.f32 %v5676, %v5684
        %v5692 = vmax.f32 %v5677, %v5686
        %v5693 = vmax.f32 %v5678, %v5688
        %v5694 = vld [vmem:[#allocation25] sm:$0x1]
        %v5696 = vlaneseq
        %v5697 = vshrl.u32 %v5696, 7
        %v5698 = vsub.s32 0, %v5697
        %v5699 = vrot.slane %v5694, %v5698
        %v5701 = vadd.f32 %v5689, %v5699
        %v5702 = vadd.f32 %v5690, %v5699
        %v5703 = vadd.f32 %v5691, %v5699
        %v5704 = vadd.f32 %v5692, %v5699
        %v5705 = vadd.f32 %v5693, %v5699
        %v5706 = vmax.f32 %v5701, 0.0
        %v5707 = vmax.f32 %v5702, 0.0
        %v5708 = vmax.f32 %v5703, 0.0
        %v5709 = vmax.f32 %v5704, 0.0
        %v5710 = vmax.f32 %v5705, 0.0
        %5711 = vst.msk [vmem:[#allocation11] sm:$0xff] %vm1551, %v5706
        %5712 = vst.msk [vmem:[#allocation11 + $0x8] sm:$0xff] %vm1551, %v5707
        %5713 = vst.msk [vmem:[#allocation11 + $0x10] sm:$0xff] %vm1551, %v5708
        %5714 = vst.msk [vmem:[#allocation11 + $0x18] sm:$0xff] %vm1551, %v5709
        %5715 = vst.msk [vmem:[#allocation11 + $0x20] sm:$0xff] %vm1551, %v5710
        %v5716 = vld [vmem:[#allocation11] sm:$0xff]
        %v5717 = vld [vmem:[#allocation11 + $0x8] sm:$0xff]
        %v5718 = vld [vmem:[#allocation11 + $0x10] sm:$0xff]
        %v5719 = vld [vmem:[#allocation11 + $0x18] sm:$0xff]
        %v5720 = vld [vmem:[#allocation11 + $0x20] sm:$0x3]
        %v5721 = vpack.c.bf16 %v5717, %v5716
        %v5722 = vpack.c.bf16 %v5719, %v5718
        %v5723 = vpack.c.bf16 %v5720, %v5720
        %v5724 = vld [vmem:[#allocation27] sm:$0xf]
        %v5725 = vld [vmem:[#allocation27 + $0x4] sm:$0xf]
        %v5726 = vld [vmem:[#allocation11 + $0x1] sm:$0xff]
        %v5727 = vld [vmem:[#allocation11 + $0x9] sm:$0xff]
        %v5728 = vld [vmem:[#allocation11 + $0x11] sm:$0xff]
        %v5729 = vld [vmem:[#allocation11 + $0x19] sm:$0xff]
        %v5730 = vld [vmem:[#allocation11 + $0x21] sm:$0x3]
        %v5731 = vpack.c.bf16 %v5727, %v5726
        %v5732 = vpack.c.bf16 %v5729, %v5728
        %v5733 = vpack.c.bf16 %v5730, %v5730
        %s5734 = scalar_lea.vmem [#allocation27], 8
        %v5735 = vld [vmem:[%s5734] sm:$0xf]
        %v5736 = vld [vmem:[%s5734 + $0x4] sm:$0xf]
        %v5739 = vunpack.c.l.b16 %v5735
        %v5740 = vunpack.c.l.b16 %v5736
        %v5741 = vpack.c.b16 %v5740, %v5739
        %v5744 = vsel %vm1551, %v5731, 0
        %v5747 = vsel %vm1551, %v5732, 0
        %v5750 = vsel %vm1551, %v5733, 0
        %5752 = vmatprep.subr.bf16.mxu0 0
        %5753 = vmatpush1.bf16.msra.mxu0 %v5741
        %5754 = vmatprep.subr.bf16.mxu0 0
        %5755 = vmatpush1.bf16.msra.mxu0 0
        %5756 = vmatprep.subr.bf16.mxu0 0
        %5757 = vmatpush1.bf16.msra.mxu0 0
        %5758 = vmatprep.subr.bf16.mxu0 0
        %5759 = vmatpush1.bf16.msra.mxu0 0
        %5760 = vmatprep.subr.bf16.mxu0 0
        %5761 = vmatpush1.bf16.msra.mxu0 0
        %5762 = vmatprep.subr.bf16.mxu0 0
        %5763 = vmatpush1.bf16.msra.mxu0 0
        %5764 = vmatprep.subr.bf16.mxu0 0
        %5765 = vmatpush1.bf16.msra.mxu0 0
        %5766 = vmatprep.subr.bf16.mxu0 0
        %5767 = vmatpush1.bf16.msra.mxu0 0
        %5768 = vmatprep.subr.bf16.mxu0 0
        %5769 = vmatpush1.bf16.msra.mxu0 0
        %5770 = vmatprep.subr.bf16.mxu0 0
        %5771 = vmatpush1.bf16.msra.mxu0 0
        %5772 = vmatprep.subr.bf16.mxu0 0
        %5773 = vmatpush1.bf16.msra.mxu0 0
        %5774 = vmatprep.subr.bf16.mxu0 0
        %5775 = vmatpush1.bf16.msra.mxu0 0
        %5776 = vmatprep.subr.bf16.mxu0 0
        %5777 = vmatpush1.bf16.msra.mxu0 0
        %5778 = vmatprep.subr.bf16.mxu0 0
        %5779 = vmatpush1.bf16.msra.mxu0 0
        %5780 = vmatprep.subr.bf16.mxu0 0
        %5781 = vmatpush1.bf16.msra.mxu0 0
        %5782 = vmatprep.subr.bf16.mxu0 0
        %5783 = vmatpush1.bf16.msra.mxu0 0
        %5784 = vmatprep.mubr.bf16.mxu0 0
        %5785 = vmatmul.mubr.bf16.gmra.mrb[0].mxu0 %v5744
        %v5786 = vpop.f32.mrb[0].mxu0
        %v5787 = vadd.f32 0.0, %v5786
        %v5788 = vpop.f32.mrb[0].mxu0
        %v5789 = vpop.f32.mrb[0].mxu0
        %v5790 = vadd.f32 0.0, %v5789
        %v5791 = vpop.f32.mrb[0].mxu0
        %5792 = vmatprep.mubr.bf16.mxu0 0
        %5793 = vmatmul.mubr.bf16.gmra.mrb[0].mxu0 %v5747
        %v5794 = vpop.f32.mrb[0].mxu0
        %v5795 = vadd.f32 0.0, %v5794
        %v5796 = vpop.f32.mrb[0].mxu0
        %v5797 = vpop.f32.mrb[0].mxu0
        %v5798 = vadd.f32 0.0, %v5797
        %v5799 = vpop.f32.mrb[0].mxu0
        %5800 = vmatprep.mubr.bf16.mxu0 0
        %5801 = vmatmul.mubr.bf16.gmra.mrb[0].mxu0 %v5750
        %v5802 = vpop.f32.mrb[0].mxu0
        %v5803 = vadd.f32 0.0, %v5802
        %v5804 = vpop.f32.mrb[0].mxu0
        %v5805 = vpop.f32.mrb[0].mxu0
        %v5806 = vpop.f32.mrb[0].mxu0
        %5807 = vdwg.mxu0
        %v5810 = vunpack.c.l.b16 %v5724
        %v5811 = vunpack.c.l.b16 %v5725
        %v5812 = vpack.c.b16 %v5811, %v5810
        %v5815 = vsel %vm1551, %v5721, 0
        %v5818 = vsel %vm1551, %v5722, 0
        %v5821 = vsel %vm1551, %v5723, 0
        %5823 = vmatprep.subr.bf16.mxu0 0
        %5824 = vmatpush1.bf16.msra.mxu0 %v5812
        %5825 = vmatprep.subr.bf16.mxu0 0
        %5826 = vmatpush1.bf16.msra.mxu0 0
        %5827 = vmatprep.subr.bf16.mxu0 0
        %5828 = vmatpush1.bf16.msra.mxu0 0
        %5829 = vmatprep.subr.bf16.mxu0 0
        %5830 = vmatpush1.bf16.msra.mxu0 0
        %5831 = vmatprep.subr.bf16.mxu0 0
        %5832 = vmatpush1.bf16.msra.mxu0 0
        %5833 = vmatprep.subr.bf16.mxu0 0
        %5834 = vmatpush1.bf16.msra.mxu0 0
        %5835 = vmatprep.subr.bf16.mxu0 0
        %5836 = vmatpush1.bf16.msra.mxu0 0
        %5837 = vmatprep.subr.bf16.mxu0 0
        %5838 = vmatpush1.bf16.msra.mxu0 0
        %5839 = vmatprep.subr.bf16.mxu0 0
        %5840 = vmatpush1.bf16.msra.mxu0 0
        %5841 = vmatprep.subr.bf16.mxu0 0
        %5842 = vmatpush1.bf16.msra.mxu0 0
        %5843 = vmatprep.subr.bf16.mxu0 0
        %5844 = vmatpush1.bf16.msra.mxu0 0
        %5845 = vmatprep.subr.bf16.mxu0 0
        %5846 = vmatpush1.bf16.msra.mxu0 0
        %5847 = vmatprep.subr.bf16.mxu0 0
        %5848 = vmatpush1.bf16.msra.mxu0 0
        %5849 = vmatprep.subr.bf16.mxu0 0
        %5850 = vmatpush1.bf16.msra.mxu0 0
        %5851 = vmatprep.subr.bf16.mxu0 0
        %5852 = vmatpush1.bf16.msra.mxu0 0
        %5853 = vmatprep.subr.bf16.mxu0 0
        %5854 = vmatpush1.bf16.msra.mxu0 0
        %5855 = vmatprep.mubr.bf16.mxu0 0
        %5856 = vmatmul.mubr.bf16.gmra.mrb[0].mxu0 %v5815
        %v5857 = vpop.f32.mrb[0].mxu0
        %v5858 = vadd.f32 %v5787, %v5857
        %v5859 = vpop.f32.mrb[0].mxu0
        %v5860 = vpop.f32.mrb[0].mxu0
        %v5861 = vadd.f32 %v5790, %v5860
        %v5862 = vpop.f32.mrb[0].mxu0
        %5863 = vmatprep.mubr.bf16.mxu0 0
        %5864 = vmatmul.mubr.bf16.gmra.mrb[0].mxu0 %v5818
        %v5865 = vpop.f32.mrb[0].mxu0
        %v5866 = vadd.f32 %v5795, %v5865
        %v5867 = vpop.f32.mrb[0].mxu0
        %v5868 = vpop.f32.mrb[0].mxu0
        %v5869 = vadd.f32 %v5798, %v5868
        %v5870 = vpop.f32.mrb[0].mxu0
        %5871 = vmatprep.mubr.bf16.mxu0 0
        %5872 = vmatmul.mubr.bf16.gmra.mrb[0].mxu0 %v5821
        %v5873 = vpop.f32.mrb[0].mxu0
        %v5874 = vadd.f32 %v5803, %v5873
        %v5875 = vpop.f32.mrb[0].mxu0
        %v5876 = vpop.f32.mrb[0].mxu0
        %v5877 = vpop.f32.mrb[0].mxu0
        %5878 = vdwg.mxu0
        %v5879 = vld [vmem:[#allocation11 + $0x2] sm:$0xff]
        %v5880 = vld [vmem:[#allocation11 + $0xa] sm:$0xff]
        %v5881 = vld [vmem:[#allocation11 + $0x12] sm:$0xff]
        %v5882 = vld [vmem:[#allocation11 + $0x1a] sm:$0xff]
        %v5883 = vld [vmem:[#allocation11 + $0x22] sm:$0x3]
        %v5884 = vpack.c.bf16 %v5880, %v5879
        %v5885 = vpack.c.bf16 %v5882, %v5881
        %v5886 = vpack.c.bf16 %v5883, %v5883
        %s5887 = scalar_lea.vmem [#allocation27], 16
        %v5888 = vld [vmem:[%s5887] sm:$0xf]
        %v5889 = vld [vmem:[%s5887 + $0x4] sm:$0xf]
        %v5892 = vunpack.c.l.b16 %v5888
        %v5893 = vunpack.c.l.b16 %v5889
        %v5894 = vpack.c.b16 %v5893, %v5892
        %v5897 = vsel %vm1551, %v5884, 0
        %v5900 = vsel %vm1551, %v5885, 0
        %v5903 = vsel %vm1551, %v5886, 0
        %5905 = vmatprep.subr.bf16.mxu0 0
        %5906 = vmatpush1.bf16.msra.mxu0 %v5894
        %5907 = vmatprep.subr.bf16.mxu0 0
        %5908 = vmatpush1.bf16.msra.mxu0 0
        %5909 = vmatprep.subr.bf16.mxu0 0
        %5910 = vmatpush1.bf16.msra.mxu0 0
        %5911 = vmatprep.subr.bf16.mxu0 0
        %5912 = vmatpush1.bf16.msra.mxu0 0
        %5913 = vmatprep.subr.bf16.mxu0 0
        %5914 = vmatpush1.bf16.msra.mxu0 0
        %5915 = vmatprep.subr.bf16.mxu0 0
        %5916 = vmatpush1.bf16.msra.mxu0 0
        %5917 = vmatprep.subr.bf16.mxu0 0
        %5918 = vmatpush1.bf16.msra.mxu0 0
        %5919 = vmatprep.subr.bf16.mxu0 0
        %5920 = vmatpush1.bf16.msra.mxu0 0
        %5921 = vmatprep.subr.bf16.mxu0 0
        %5922 = vmatpush1.bf16.msra.mxu0 0
        %5923 = vmatprep.subr.bf16.mxu0 0
        %5924 = vmatpush1.bf16.msra.mxu0 0
        %5925 = vmatprep.subr.bf16.mxu0 0
        %5926 = vmatpush1.bf16.msra.mxu0 0
        %5927 = vmatprep.subr.bf16.mxu0 0
        %5928 = vmatpush1.bf16.msra.mxu0 0
        %5929 = vmatprep.subr.bf16.mxu0 0
        %5930 = vmatpush1.bf16.msra.mxu0 0
        %5931 = vmatprep.subr.bf16.mxu0 0
        %5932 = vmatpush1.bf16.msra.mxu0 0
        %5933 = vmatprep.subr.bf16.mxu0 0
        %5934 = vmatpush1.bf16.msra.mxu0 0
        %5935 = vmatprep.subr.bf16.mxu0 0
        %5936 = vmatpush1.bf16.msra.mxu0 0
        %5937 = vmatprep.mubr.bf16.mxu0 0
        %5938 = vmatmul.mubr.bf16.gmra.mrb[0].mxu0 %v5897
        %v5939 = vpop.f32.mrb[0].mxu0
        %v5940 = vadd.f32 0.0, %v5939
        %v5941 = vpop.f32.mrb[0].mxu0
        %v5942 = vpop.f32.mrb[0].mxu0
        %v5943 = vadd.f32 0.0, %v5942
        %v5944 = vpop.f32.mrb[0].mxu0
        %5945 = vmatprep.mubr.bf16.mxu0 0
        %5946 = vmatmul.mubr.bf16.gmra.mrb[0].mxu0 %v5900
        %v5947 = vpop.f32.mrb[0].mxu0
        %v5948 = vadd.f32 0.0, %v5947
        %v5949 = vpop.f32.mrb[0].mxu0
        %v5950 = vpop.f32.mrb[0].mxu0
        %v5951 = vadd.f32 0.0, %v5950
        %v5952 = vpop.f32.mrb[0].mxu0
        %5953 = vmatprep.mubr.bf16.mxu0 0
        %5954 = vmatmul.mubr.bf16.gmra.mrb[0].mxu0 %v5903
        %v5955 = vpop.f32.mrb[0].mxu0
        %v5956 = vadd.f32 0.0, %v5955
        %v5957 = vpop.f32.mrb[0].mxu0
        %v5958 = vpop.f32.mrb[0].mxu0
        %v5959 = vpop.f32.mrb[0].mxu0
        %5960 = vdwg.mxu0
        %v5961 = vadd.f32 %v5858, %v5940
        %v5962 = vadd.f32 %v5861, %v5943
        %v5963 = vadd.f32 %v5866, %v5948
        %v5964 = vadd.f32 %v5869, %v5951
        %v5965 = vadd.f32 %v5874, %v5956
        %v5966 = vld [vmem:[#allocation11 + $0x3] sm:$0xff]
        %v5967 = vld [vmem:[#allocation11 + $0xb] sm:$0xff]
        %v5968 = vld [vmem:[#allocation11 + $0x13] sm:$0xff]
        %v5969 = vld [vmem:[#allocation11 + $0x1b] sm:$0xff]
        %v5970 = vld [vmem:[#allocation11 + $0x23] sm:$0x3]
        %v5971 = vpack.c.bf16 %v5967, %v5966
        %v5972 = vpack.c.bf16 %v5969, %v5968
        %v5973 = vpack.c.bf16 %v5970, %v5970
        %s5974 = scalar_lea.vmem [#allocation27], 24
        %v5975 = vld [vmem:[%s5974] sm:$0xf]
        %v5976 = vld [vmem:[%s5974 + $0x4] sm:$0xf]
        %v5979 = vunpack.c.l.b16 %v5975
        %v5980 = vunpack.c.l.b16 %v5976
        %v5981 = vpack.c.b16 %v5980, %v5979
        %v5984 = vsel %vm1551, %v5971, 0
        %v5987 = vsel %vm1551, %v5972, 0
        %v5990 = vsel %vm1551, %v5973, 0
        %5992 = vmatprep.subr.bf16.mxu0 0
        %5993 = vmatpush1.bf16.msra.mxu0 %v5981
        %5994 = vmatprep.subr.bf16.mxu0 0
        %5995 = vmatpush1.bf16.msra.mxu0 0
        %5996 = vmatprep.subr.bf16.mxu0 0
        %5997 = vmatpush1.bf16.msra.mxu0 0
        %5998 = vmatprep.subr.bf16.mxu0 0
        %5999 = vmatpush1.bf16.msra.mxu0 0
        %6000 = vmatprep.subr.bf16.mxu0 0
        %6001 = vmatpush1.bf16.msra.mxu0 0
        %6002 = vmatprep.subr.bf16.mxu0 0
        %6003 = vmatpush1.bf16.msra.mxu0 0
        %6004 = vmatprep.subr.bf16.mxu0 0
        %6005 = vmatpush1.bf16.msra.mxu0 0
        %6006 = vmatprep.subr.bf16.mxu0 0
        %6007 = vmatpush1.bf16.msra.mxu0 0
        %6008 = vmatprep.subr.bf16.mxu0 0
        %6009 = vmatpush1.bf16.msra.mxu0 0
        %6010 = vmatprep.subr.bf16.mxu0 0
        %6011 = vmatpush1.bf16.msra.mxu0 0
        %6012 = vmatprep.subr.bf16.mxu0 0
        %6013 = vmatpush1.bf16.msra.mxu0 0
        %6014 = vmatprep.subr.bf16.mxu0 0
        %6015 = vmatpush1.bf16.msra.mxu0 0
        %6016 = vmatprep.subr.bf16.mxu0 0
        %6017 = vmatpush1.bf16.msra.mxu0 0
        %6018 = vmatprep.subr.bf16.mxu0 0
        %6019 = vmatpush1.bf16.msra.mxu0 0
        %6020 = vmatprep.subr.bf16.mxu0 0
        %6021 = vmatpush1.bf16.msra.mxu0 0
        %6022 = vmatprep.subr.bf16.mxu0 0
        %6023 = vmatpush1.bf16.msra.mxu0 0
        %6024 = vmatprep.mubr.bf16.mxu0 0
        %6025 = vmatmul.mubr.bf16.gmra.mrb[0].mxu0 %v5984
        %v6026 = vpop.f32.mrb[0].mxu0
        %v6027 = vadd.f32 0.0, %v6026
        %v6028 = vpop.f32.mrb[0].mxu0
        %v6029 = vpop.f32.mrb[0].mxu0
        %v6030 = vadd.f32 0.0, %v6029
        %v6031 = vpop.f32.mrb[0].mxu0
        %6032 = vmatprep.mubr.bf16.mxu0 0
        %6033 = vmatmul.mubr.bf16.gmra.mrb[0].mxu0 %v5987
        %v6034 = vpop.f32.mrb[0].mxu0
        %v6035 = vadd.f32 0.0, %v6034
        %v6036 = vpop.f32.mrb[0].mxu0
        %v6037 = vpop.f32.mrb[0].mxu0
        %v6038 = vadd.f32 0.0, %v6037
        %v6039 = vpop.f32.mrb[0].mxu0
        %6040 = vmatprep.mubr.bf16.mxu0 0
        %6041 = vmatmul.mubr.bf16.gmra.mrb[0].mxu0 %v5990
        %v6042 = vpop.f32.mrb[0].mxu0
        %v6043 = vadd.f32 0.0, %v6042
        %v6044 = vpop.f32.mrb[0].mxu0
        %v6045 = vpop.f32.mrb[0].mxu0
        %v6046 = vpop.f32.mrb[0].mxu0
        %6047 = vdwg.mxu0
        %v6048 = vadd.f32 %v5961, %v6027
        %v6049 = vadd.f32 %v5962, %v6030
        %v6050 = vadd.f32 %v5963, %v6035
        %v6051 = vadd.f32 %v5964, %v6038
        %v6052 = vadd.f32 %v5965, %v6043
        %v6053 = vld [vmem:[#allocation11 + $0x4] sm:$0xff]
        %v6054 = vld [vmem:[#allocation11 + $0xc] sm:$0xff]
        %v6055 = vld [vmem:[#allocation11 + $0x14] sm:$0xff]
        %v6056 = vld [vmem:[#allocation11 + $0x1c] sm:$0xff]
        %v6057 = vld [vmem:[#allocation11 + $0x24] sm:$0x3]
        %v6058 = vpack.c.bf16 %v6054, %v6053
        %v6059 = vpack.c.bf16 %v6056, %v6055
        %v6060 = vpack.c.bf16 %v6057, %v6057
        %s6061 = scalar_lea.vmem [#allocation27], 32
        %v6062 = vld [vmem:[%s6061] sm:$0xf]
        %v6063 = vld [vmem:[%s6061 + $0x4] sm:$0xf]
        %v6066 = vunpack.c.l.b16 %v6062
        %v6067 = vunpack.c.l.b16 %v6063
        %v6068 = vpack.c.b16 %v6067, %v6066
        %v6071 = vsel %vm1551, %v6058, 0
        %v6074 = vsel %vm1551, %v6059, 0
        %v6077 = vsel %vm1551, %v6060, 0
        %6079 = vmatprep.subr.bf16.mxu0 0
        %6080 = vmatpush1.bf16.msra.mxu0 %v6068
        %6081 = vmatprep.subr.bf16.mxu0 0
        %6082 = vmatpush1.bf16.msra.mxu0 0
        %6083 = vmatprep.subr.bf16.mxu0 0
        %6084 = vmatpush1.bf16.msra.mxu0 0
        %6085 = vmatprep.subr.bf16.mxu0 0
        %6086 = vmatpush1.bf16.msra.mxu0 0
        %6087 = vmatprep.subr.bf16.mxu0 0
        %6088 = vmatpush1.bf16.msra.mxu0 0
        %6089 = vmatprep.subr.bf16.mxu0 0
        %6090 = vmatpush1.bf16.msra.mxu0 0
        %6091 = vmatprep.subr.bf16.mxu0 0
        %6092 = vmatpush1.bf16.msra.mxu0 0
        %6093 = vmatprep.subr.bf16.mxu0 0
        %6094 = vmatpush1.bf16.msra.mxu0 0
        %6095 = vmatprep.subr.bf16.mxu0 0
        %6096 = vmatpush1.bf16.msra.mxu0 0
        %6097 = vmatprep.subr.bf16.mxu0 0
        %6098 = vmatpush1.bf16.msra.mxu0 0
        %6099 = vmatprep.subr.bf16.mxu0 0
        %6100 = vmatpush1.bf16.msra.mxu0 0
        %6101 = vmatprep.subr.bf16.mxu0 0
        %6102 = vmatpush1.bf16.msra.mxu0 0
        %6103 = vmatprep.subr.bf16.mxu0 0
        %6104 = vmatpush1.bf16.msra.mxu0 0
        %6105 = vmatprep.subr.bf16.mxu0 0
        %6106 = vmatpush1.bf16.msra.mxu0 0
        %6107 = vmatprep.subr.bf16.mxu0 0
        %6108 = vmatpush1.bf16.msra.mxu0 0
        %6109 = vmatprep.subr.bf16.mxu0 0
        %6110 = vmatpush1.bf16.msra.mxu0 0
        %6111 = vmatprep.mubr.bf16.mxu0 0
        %6112 = vmatmul.mubr.bf16.gmra.mrb[0].mxu0 %v6071
        %v6113 = vpop.f32.mrb[0].mxu0
        %v6114 = vadd.f32 0.0, %v6113
        %v6115 = vpop.f32.mrb[0].mxu0
        %v6116 = vpop.f32.mrb[0].mxu0
        %v6117 = vadd.f32 0.0, %v6116
        %v6118 = vpop.f32.mrb[0].mxu0
        %6119 = vmatprep.mubr.bf16.mxu0 0
        %6120 = vmatmul.mubr.bf16.gmra.mrb[0].mxu0 %v6074
        %v6121 = vpop.f32.mrb[0].mxu0
        %v6122 = vadd.f32 0.0, %v6121
        %v6123 = vpop.f32.mrb[0].mxu0
        %v6124 = vpop.f32.mrb[0].mxu0
        %v6125 = vadd.f32 0.0, %v6124
        %v6126 = vpop.f32.mrb[0].mxu0
        %6127 = vmatprep.mubr.bf16.mxu0 0
        %6128 = vmatmul.mubr.bf16.gmra.mrb[0].mxu0 %v6077
        %v6129 = vpop.f32.mrb[0].mxu0
        %v6130 = vadd.f32 0.0, %v6129
        %v6131 = vpop.f32.mrb[0].mxu0
        %v6132 = vpop.f32.mrb[0].mxu0
        %v6133 = vpop.f32.mrb[0].mxu0
        %6134 = vdwg.mxu0
        %v6135 = vadd.f32 %v6048, %v6114
        %v6136 = vadd.f32 %v6049, %v6117
        %v6137 = vadd.f32 %v6050, %v6122
        %v6138 = vadd.f32 %v6051, %v6125
        %v6139 = vadd.f32 %v6052, %v6130
        %v6140 = vld [vmem:[#allocation11 + $0x5] sm:$0xff]
        %v6141 = vld [vmem:[#allocation11 + $0xd] sm:$0xff]
        %v6142 = vld [vmem:[#allocation11 + $0x15] sm:$0xff]
        %v6143 = vld [vmem:[#allocation11 + $0x1d] sm:$0xff]
        %v6144 = vld [vmem:[#allocation11 + $0x25] sm:$0x3]
        %v6145 = vpack.c.bf16 %v6141, %v6140
        %v6146 = vpack.c.bf16 %v6143, %v6142
        %v6147 = vpack.c.bf16 %v6144, %v6144
        %s6148 = scalar_lea.vmem [#allocation27], 40
        %v6149 = vld [vmem:[%s6148] sm:$0xf]
        %v6150 = vld [vmem:[%s6148 + $0x4] sm:$0xf]
        %v6153 = vunpack.c.l.b16 %v6149
        %v6154 = vunpack.c.l.b16 %v6150
        %v6155 = vpack.c.b16 %v6154, %v6153
        %v6158 = vsel %vm1551, %v6145, 0
        %v6161 = vsel %vm1551, %v6146, 0
        %v6164 = vsel %vm1551, %v6147, 0
        %6166 = vmatprep.subr.bf16.mxu0 0
        %6167 = vmatpush1.bf16.msra.mxu0 %v6155
        %6168 = vmatprep.subr.bf16.mxu0 0
        %6169 = vmatpush1.bf16.msra.mxu0 0
        %6170 = vmatprep.subr.bf16.mxu0 0
        %6171 = vmatpush1.bf16.msra.mxu0 0
        %6172 = vmatprep.subr.bf16.mxu0 0
        %6173 = vmatpush1.bf16.msra.mxu0 0
        %6174 = vmatprep.subr.bf16.mxu0 0
        %6175 = vmatpush1.bf16.msra.mxu0 0
        %6176 = vmatprep.subr.bf16.mxu0 0
        %6177 = vmatpush1.bf16.msra.mxu0 0
        %6178 = vmatprep.subr.bf16.mxu0 0
        %6179 = vmatpush1.bf16.msra.mxu0 0
        %6180 = vmatprep.subr.bf16.mxu0 0
        %6181 = vmatpush1.bf16.msra.mxu0 0
        %6182 = vmatprep.subr.bf16.mxu0 0
        %6183 = vmatpush1.bf16.msra.mxu0 0
        %6184 = vmatprep.subr.bf16.mxu0 0
        %6185 = vmatpush1.bf16.msra.mxu0 0
        %6186 = vmatprep.subr.bf16.mxu0 0
        %6187 = vmatpush1.bf16.msra.mxu0 0
        %6188 = vmatprep.subr.bf16.mxu0 0
        %6189 = vmatpush1.bf16.msra.mxu0 0
        %6190 = vmatprep.subr.bf16.mxu0 0
        %6191 = vmatpush1.bf16.msra.mxu0 0
        %6192 = vmatprep.subr.bf16.mxu0 0
        %6193 = vmatpush1.bf16.msra.mxu0 0
        %6194 = vmatprep.subr.bf16.mxu0 0
        %6195 = vmatpush1.bf16.msra.mxu0 0
        %6196 = vmatprep.subr.bf16.mxu0 0
        %6197 = vmatpush1.bf16.msra.mxu0 0
        %6198 = vmatprep.mubr.bf16.mxu0 0
        %6199 = vmatmul.mubr.bf16.gmra.mrb[0].mxu0 %v6158
        %v6200 = vpop.f32.mrb[0].mxu0
        %v6201 = vadd.f32 0.0, %v6200
        %v6202 = vpop.f32.mrb[0].mxu0
        %v6203 = vpop.f32.mrb[0].mxu0
        %v6204 = vadd.f32 0.0, %v6203
        %v6205 = vpop.f32.mrb[0].mxu0
        %6206 = vmatprep.mubr.bf16.mxu0 0
        %6207 = vmatmul.mubr.bf16.gmra.mrb[0].mxu0 %v6161
        %v6208 = vpop.f32.mrb[0].mxu0
        %v6209 = vadd.f32 0.0, %v6208
        %v6210 = vpop.f32.mrb[0].mxu0
        %v6211 = vpop.f32.mrb[0].mxu0
        %v6212 = vadd.f32 0.0, %v6211
        %v6213 = vpop.f32.mrb[0].mxu0
        %6214 = vmatprep.mubr.bf16.mxu0 0
        %6215 = vmatmul.mubr.bf16.gmra.mrb[0].mxu0 %v6164
        %v6216 = vpop.f32.mrb[0].mxu0
        %v6217 = vadd.f32 0.0, %v6216
        %v6218 = vpop.f32.mrb[0].mxu0
        %v6219 = vpop.f32.mrb[0].mxu0
        %v6220 = vpop.f32.mrb[0].mxu0
        %6221 = vdwg.mxu0
        %v6222 = vadd.f32 %v6135, %v6201
        %v6223 = vadd.f32 %v6136, %v6204
        %v6224 = vadd.f32 %v6137, %v6209
        %v6225 = vadd.f32 %v6138, %v6212
        %v6226 = vadd.f32 %v6139, %v6217
        %v6227 = vld [vmem:[#allocation11 + $0x6] sm:$0xff]
        %v6228 = vld [vmem:[#allocation11 + $0xe] sm:$0xff]
        %v6229 = vld [vmem:[#allocation11 + $0x16] sm:$0xff]
        %v6230 = vld [vmem:[#allocation11 + $0x1e] sm:$0xff]
        %v6231 = vld [vmem:[#allocation11 + $0x26] sm:$0x3]
        %v6232 = vpack.c.bf16 %v6228, %v6227
        %v6233 = vpack.c.bf16 %v6230, %v6229
        %v6234 = vpack.c.bf16 %v6231, %v6231
        %s6235 = scalar_lea.vmem [#allocation27], 48
        %v6236 = vld [vmem:[%s6235] sm:$0xf]
        %v6237 = vld [vmem:[%s6235 + $0x4] sm:$0xf]
        %v6240 = vunpack.c.l.b16 %v6236
        %v6241 = vunpack.c.l.b16 %v6237
        %v6242 = vpack.c.b16 %v6241, %v6240
        %v6245 = vsel %vm1551, %v6232, 0
        %v6248 = vsel %vm1551, %v6233, 0
        %v6251 = vsel %vm1551, %v6234, 0
        %6253 = vmatprep.subr.bf16.mxu0 0
        %6254 = vmatpush1.bf16.msra.mxu0 %v6242
        %6255 = vmatprep.subr.bf16.mxu0 0
        %6256 = vmatpush1.bf16.msra.mxu0 0
        %6257 = vmatprep.subr.bf16.mxu0 0
        %6258 = vmatpush1.bf16.msra.mxu0 0
        %6259 = vmatprep.subr.bf16.mxu0 0
        %6260 = vmatpush1.bf16.msra.mxu0 0
        %6261 = vmatprep.subr.bf16.mxu0 0
        %6262 = vmatpush1.bf16.msra.mxu0 0
        %6263 = vmatprep.subr.bf16.mxu0 0
        %6264 = vmatpush1.bf16.msra.mxu0 0
        %6265 = vmatprep.subr.bf16.mxu0 0
        %6266 = vmatpush1.bf16.msra.mxu0 0
        %6267 = vmatprep.subr.bf16.mxu0 0
        %6268 = vmatpush1.bf16.msra.mxu0 0
        %6269 = vmatprep.subr.bf16.mxu0 0
        %6270 = vmatpush1.bf16.msra.mxu0 0
        %6271 = vmatprep.subr.bf16.mxu0 0
        %6272 = vmatpush1.bf16.msra.mxu0 0
        %6273 = vmatprep.subr.bf16.mxu0 0
        %6274 = vmatpush1.bf16.msra.mxu0 0
        %6275 = vmatprep.subr.bf16.mxu0 0
        %6276 = vmatpush1.bf16.msra.mxu0 0
        %6277 = vmatprep.subr.bf16.mxu0 0
        %6278 = vmatpush1.bf16.msra.mxu0 0
        %6279 = vmatprep.subr.bf16.mxu0 0
        %6280 = vmatpush1.bf16.msra.mxu0 0
        %6281 = vmatprep.subr.bf16.mxu0 0
        %6282 = vmatpush1.bf16.msra.mxu0 0
        %6283 = vmatprep.subr.bf16.mxu0 0
        %6284 = vmatpush1.bf16.msra.mxu0 0
        %6285 = vmatprep.mubr.bf16.mxu0 0
        %6286 = vmatmul.mubr.bf16.gmra.mrb[0].mxu0 %v6245
        %v6287 = vpop.f32.mrb[0].mxu0
        %v6288 = vadd.f32 0.0, %v6287
        %v6289 = vpop.f32.mrb[0].mxu0
        %v6290 = vpop.f32.mrb[0].mxu0
        %v6291 = vadd.f32 0.0, %v6290
        %v6292 = vpop.f32.mrb[0].mxu0
        %6293 = vmatprep.mubr.bf16.mxu0 0
        %6294 = vmatmul.mubr.bf16.gmra.mrb[0].mxu0 %v6248
        %v6295 = vpop.f32.mrb[0].mxu0
        %v6296 = vadd.f32 0.0, %v6295
        %v6297 = vpop.f32.mrb[0].mxu0
        %v6298 = vpop.f32.mrb[0].mxu0
        %v6299 = vadd.f32 0.0, %v6298
        %v6300 = vpop.f32.mrb[0].mxu0
        %6301 = vmatprep.mubr.bf16.mxu0 0
        %6302 = vmatmul.mubr.bf16.gmra.mrb[0].mxu0 %v6251
        %v6303 = vpop.f32.mrb[0].mxu0
        %v6304 = vadd.f32 0.0, %v6303
        %v6305 = vpop.f32.mrb[0].mxu0
        %v6306 = vpop.f32.mrb[0].mxu0
        %v6307 = vpop.f32.mrb[0].mxu0
        %6308 = vdwg.mxu0
        %v6309 = vadd.f32 %v6222, %v6288
        %v6310 = vadd.f32 %v6223, %v6291
        %v6311 = vadd.f32 %v6224, %v6296
        %v6312 = vadd.f32 %v6225, %v6299
        %v6313 = vadd.f32 %v6226, %v6304
        %6314 = vst.msk [vmem:[#allocation12] sm:$0xff] %vm2153, %v6309
        %6315 = vst.msk [vmem:[#allocation12 + $0x8] sm:$0xff] %vm2153, %v6310
        %6316 = vst.msk [vmem:[#allocation12 + $0x10] sm:$0xff] %vm2153, %v6311
        %6317 = vst.msk [vmem:[#allocation12 + $0x18] sm:$0xff] %vm2153, %v6312
        %6318 = vst.msk [vmem:[#allocation12 + $0x20] sm:$0x3] %vm2161, %v6313
        %v6319 = vld [vmem:[#allocation12] ss:$3 sm:$0xff]
        %s6320 = scalar_lea.vmem [#allocation12], 24
        %v6321 = vld [vmem:[%s6320] ss:$3 sm:$0x7]
        %s6322 = scalar_lea.vmem [#allocation12], 1
        %v6323 = vld [vmem:[%s6322] ss:$3 sm:$0xff]
        %s6324 = scalar_lea.vmem [#allocation12], 25
        %v6325 = vld [vmem:[%s6324] ss:$3 sm:$0x7]
        %v6326 = vmax.f32 %v6319, %v6323
        %v6327 = vmax.f32 %v6321, %v6325
        %s6328 = scalar_lea.vmem [#allocation12], 2
        %v6329 = vld [vmem:[%s6328] ss:$3 sm:$0xff]
        %s6330 = scalar_lea.vmem [#allocation12], 26
        %v6331 = vld [vmem:[%s6330] ss:$3 sm:$0x7]
        %v6332 = vmax.f32 %v6326, %v6329
        %v6333 = vmax.f32 %v6327, %v6331
        %v6334 = vld [vmem:[#allocation28] sm:$0x1]
        %v6336 = vlaneseq
        %v6337 = vshrl.u32 %v6336, 7
        %v6338 = vsub.s32 0, %v6337
        %v6339 = vrot.slane %v6334, %v6338
        %v6341 = vadd.f32 %v6332, %v6339
        %v6342 = vadd.f32 %v6333, %v6339
        %v6343 = vmax.f32 %v6341, 0.0
        %v6344 = vmax.f32 %v6342, 0.0
        %6345 = vst.msk [vmem:[#allocation13] sm:$0xff] %vm2153, %v6343
        %vm6346 = vcmask 256000
        %6347 = vst.msk [vmem:[#allocation13 + $0x8] sm:$0x7] %vm6346, %v6344
        %v6348 = vld [vmem:[#allocation13] sm:$0x1f]
        %v6349 = vpack.c.bf16 %v6348, %v6348
        %v6350 = vld [vmem:[%s17] sm:$0xf]
        %v6351 = vld [vmem:[%s17 + $0x4] sm:$0xf]
        %v6352 = vld [vmem:[%s17 + $0x8] sm:$0xf]
        %v6353 = vld [vmem:[%s17 + $0xc] sm:$0xf]
        %v6354 = vld [vmem:[#allocation13 + $0x1] sm:$0x1f]
        %v6355 = vpack.c.bf16 %v6354, %v6354
        %s6356 = scalar_lea.vmem %s17, 16
        %v6357 = vld [vmem:[%s6356] sm:$0xf]
        %v6358 = vld [vmem:[%s6356 + $0x4] sm:$0xf]
        %v6359 = vld [vmem:[%s6356 + $0x8] sm:$0xf]
        %v6360 = vld [vmem:[%s6356 + $0xc] sm:$0xf]
        %v6365 = vunpack.c.l.b16 %v6357
        %v6366 = vunpack.c.l.b16 %v6358
        %v6367 = vunpack.c.l.b16 %v6359
        %v6368 = vunpack.c.l.b16 %v6360
        %v6369 = vpack.c.b16 %v6366, %v6365
        %v6370 = vpack.c.b16 %v6368, %v6367
        %v6374 = vsel %vm2153, %v6355, 0
        %6376 = vmatprep.subr.bf16.mxu0 0
        %6377 = vmatpush1.bf16.msra.mxu0 %v6369
        %6378 = vmatprep.subr.bf16.mxu0 0
        %6379 = vmatpush1.bf16.msra.mxu0 %v6370
        %6380 = vmatprep.subr.bf16.mxu0 0
        %6381 = vmatpush1.bf16.msra.mxu0 0
        %6382 = vmatprep.subr.bf16.mxu0 0
        %6383 = vmatpush1.bf16.msra.mxu0 0
        %6384 = vmatprep.subr.bf16.mxu0 0
        %6385 = vmatpush1.bf16.msra.mxu0 0
        %6386 = vmatprep.subr.bf16.mxu0 0
        %6387 = vmatpush1.bf16.msra.mxu0 0
        %6388 = vmatprep.subr.bf16.mxu0 0
        %6389 = vmatpush1.bf16.msra.mxu0 0
        %6390 = vmatprep.subr.bf16.mxu0 0
        %6391 = vmatpush1.bf16.msra.mxu0 0
        %6392 = vmatprep.subr.bf16.mxu0 0
        %6393 = vmatpush1.bf16.msra.mxu0 0
        %6394 = vmatprep.subr.bf16.mxu0 0
        %6395 = vmatpush1.bf16.msra.mxu0 0
        %6396 = vmatprep.subr.bf16.mxu0 0
        %6397 = vmatpush1.bf16.msra.mxu0 0
        %6398 = vmatprep.subr.bf16.mxu0 0
        %6399 = vmatpush1.bf16.msra.mxu0 0
        %6400 = vmatprep.subr.bf16.mxu0 0
        %6401 = vmatpush1.bf16.msra.mxu0 0
        %6402 = vmatprep.subr.bf16.mxu0 0
        %6403 = vmatpush1.bf16.msra.mxu0 0
        %6404 = vmatprep.subr.bf16.mxu0 0
        %6405 = vmatpush1.bf16.msra.mxu0 0
        %6406 = vmatprep.subr.bf16.mxu0 0
        %6407 = vmatpush1.bf16.msra.mxu0 0
        %6408 = vmatprep.mubr.bf16.mxu0 0
        %6409 = vmatmul.mubr.bf16.gmra.mrb[0].mxu0 %v6374
        %v6410 = vpop.f32.mrb[0].mxu0
        %v6411 = vadd.f32 0.0, %v6410
        %v6412 = vpop.f32.mrb[0].mxu0
        %v6413 = vpop.f32.mrb[0].mxu0
        %v6414 = vpop.f32.mrb[0].mxu0
        %6415 = vdwg.mxu0
        %v6420 = vunpack.c.l.b16 %v6350
        %v6421 = vunpack.c.l.b16 %v6351
        %v6422 = vunpack.c.l.b16 %v6352
        %v6423 = vunpack.c.l.b16 %v6353
        %v6424 = vpack.c.b16 %v6421, %v6420
        %v6425 = vpack.c.b16 %v6423, %v6422
        %v6429 = vsel %vm2153, %v6349, 0
        %6431 = vmatprep.subr.bf16.mxu0 0
        %6432 = vmatpush1.bf16.msra.mxu0 %v6424
        %6433 = vmatprep.subr.bf16.mxu0 0
        %6434 = vmatpush1.bf16.msra.mxu0 %v6425
        %6435 = vmatprep.subr.bf16.mxu0 0
        %6436 = vmatpush1.bf16.msra.mxu0 0
        %6437 = vmatprep.subr.bf16.mxu0 0
        %6438 = vmatpush1.bf16.msra.mxu0 0
        %6439 = vmatprep.subr.bf16.mxu0 0
        %6440 = vmatpush1.bf16.msra.mxu0 0
        %6441 = vmatprep.subr.bf16.mxu0 0
        %6442 = vmatpush1.bf16.msra.mxu0 0
        %6443 = vmatprep.subr.bf16.mxu0 0
        %6444 = vmatpush1.bf16.msra.mxu0 0
        %6445 = vmatprep.subr.bf16.mxu0 0
        %6446 = vmatpush1.bf16.msra.mxu0 0
        %6447 = vmatprep.subr.bf16.mxu0 0
        %6448 = vmatpush1.bf16.msra.mxu0 0
        %6449 = vmatprep.subr.bf16.mxu0 0
        %6450 = vmatpush1.bf16.msra.mxu0 0
        %6451 = vmatprep.subr.bf16.mxu0 0
        %6452 = vmatpush1.bf16.msra.mxu0 0
        %6453 = vmatprep.subr.bf16.mxu0 0
        %6454 = vmatpush1.bf16.msra.mxu0 0
        %6455 = vmatprep.subr.bf16.mxu0 0
        %6456 = vmatpush1.bf16.msra.mxu0 0
        %6457 = vmatprep.subr.bf16.mxu0 0
        %6458 = vmatpush1.bf16.msra.mxu0 0
        %6459 = vmatprep.subr.bf16.mxu0 0
        %6460 = vmatpush1.bf16.msra.mxu0 0
        %6461 = vmatprep.subr.bf16.mxu0 0
        %6462 = vmatpush1.bf16.msra.mxu0 0
        %6463 = vmatprep.mubr.bf16.mxu0 0
        %6464 = vmatmul.mubr.bf16.gmra.mrb[0].mxu0 %v6429
        %v6465 = vpop.f32.mrb[0].mxu0
        %v6466 = vadd.f32 %v6411, %v6465
        %v6467 = vpop.f32.mrb[0].mxu0
        %v6468 = vpop.f32.mrb[0].mxu0
        %v6469 = vpop.f32.mrb[0].mxu0
        %6470 = vdwg.mxu0
        %v6471 = vld [vmem:[#allocation13 + $0x2] sm:$0x1f]
        %v6472 = vpack.c.bf16 %v6471, %v6471
        %s6473 = scalar_lea.vmem %s17, 32
        %v6474 = vld [vmem:[%s6473] sm:$0xf]
        %v6475 = vld [vmem:[%s6473 + $0x4] sm:$0xf]
        %v6476 = vld [vmem:[%s6473 + $0x8] sm:$0xf]
        %v6477 = vld [vmem:[%s6473 + $0xc] sm:$0xf]
        %v6482 = vunpack.c.l.b16 %v6474
        %v6483 = vunpack.c.l.b16 %v6475
        %v6484 = vunpack.c.l.b16 %v6476
        %v6485 = vunpack.c.l.b16 %v6477
        %v6486 = vpack.c.b16 %v6483, %v6482
        %v6487 = vpack.c.b16 %v6485, %v6484
        %v6491 = vsel %vm2153, %v6472, 0
        %6493 = vmatprep.subr.bf16.mxu0 0
        %6494 = vmatpush1.bf16.msra.mxu0 %v6486
        %6495 = vmatprep.subr.bf16.mxu0 0
        %6496 = vmatpush1.bf16.msra.mxu0 %v6487
        %6497 = vmatprep.subr.bf16.mxu0 0
        %6498 = vmatpush1.bf16.msra.mxu0 0
        %6499 = vmatprep.subr.bf16.mxu0 0
        %6500 = vmatpush1.bf16.msra.mxu0 0
        %6501 = vmatprep.subr.bf16.mxu0 0
        %6502 = vmatpush1.bf16.msra.mxu0 0
        %6503 = vmatprep.subr.bf16.mxu0 0
        %6504 = vmatpush1.bf16.msra.mxu0 0
        %6505 = vmatprep.subr.bf16.mxu0 0
        %6506 = vmatpush1.bf16.msra.mxu0 0
        %6507 = vmatprep.subr.bf16.mxu0 0
        %6508 = vmatpush1.bf16.msra.mxu0 0
        %6509 = vmatprep.subr.bf16.mxu0 0
        %6510 = vmatpush1.bf16.msra.mxu0 0
        %6511 = vmatprep.subr.bf16.mxu0 0
        %6512 = vmatpush1.bf16.msra.mxu0 0
        %6513 = vmatprep.subr.bf16.mxu0 0
        %6514 = vmatpush1.bf16.msra.mxu0 0
        %6515 = vmatprep.subr.bf16.mxu0 0
        %6516 = vmatpush1.bf16.msra.mxu0 0
        %6517 = vmatprep.subr.bf16.mxu0 0
        %6518 = vmatpush1.bf16.msra.mxu0 0
        %6519 = vmatprep.subr.bf16.mxu0 0
        %6520 = vmatpush1.bf16.msra.mxu0 0
        %6521 = vmatprep.subr.bf16.mxu0 0
        %6522 = vmatpush1.bf16.msra.mxu0 0
        %6523 = vmatprep.subr.bf16.mxu0 0
        %6524 = vmatpush1.bf16.msra.mxu0 0
        %6525 = vmatprep.mubr.bf16.mxu0 0
        %6526 = vmatmul.mubr.bf16.gmra.mrb[0].mxu0 %v6491
        %v6527 = vpop.f32.mrb[0].mxu0
        %v6528 = vadd.f32 0.0, %v6527
        %v6529 = vpop.f32.mrb[0].mxu0
        %v6530 = vpop.f32.mrb[0].mxu0
        %v6531 = vpop.f32.mrb[0].mxu0
        %6532 = vdwg.mxu0
        %v6533 = vadd.f32 %v6466, %v6528
        %v6534 = vld [vmem:[#allocation13 + $0x3] sm:$0x1f]
        %v6535 = vpack.c.bf16 %v6534, %v6534
        %s6536 = scalar_lea.vmem %s17, 48
        %v6537 = vld [vmem:[%s6536] sm:$0xf]
        %v6538 = vld [vmem:[%s6536 + $0x4] sm:$0xf]
        %v6539 = vld [vmem:[%s6536 + $0x8] sm:$0xf]
        %v6540 = vld [vmem:[%s6536 + $0xc] sm:$0xf]
        %v6545 = vunpack.c.l.b16 %v6537
        %v6546 = vunpack.c.l.b16 %v6538
        %v6547 = vunpack.c.l.b16 %v6539
        %v6548 = vunpack.c.l.b16 %v6540
        %v6549 = vpack.c.b16 %v6546, %v6545
        %v6550 = vpack.c.b16 %v6548, %v6547
        %v6554 = vsel %vm2153, %v6535, 0
        %6556 = vmatprep.subr.bf16.mxu0 0
        %6557 = vmatpush1.bf16.msra.mxu0 %v6549
        %6558 = vmatprep.subr.bf16.mxu0 0
        %6559 = vmatpush1.bf16.msra.mxu0 %v6550
        %6560 = vmatprep.subr.bf16.mxu0 0
        %6561 = vmatpush1.bf16.msra.mxu0 0
        %6562 = vmatprep.subr.bf16.mxu0 0
        %6563 = vmatpush1.bf16.msra.mxu0 0
        %6564 = vmatprep.subr.bf16.mxu0 0
        %6565 = vmatpush1.bf16.msra.mxu0 0
        %6566 = vmatprep.subr.bf16.mxu0 0
        %6567 = vmatpush1.bf16.msra.mxu0 0
        %6568 = vmatprep.subr.bf16.mxu0 0
        %6569 = vmatpush1.bf16.msra.mxu0 0
        %6570 = vmatprep.subr.bf16.mxu0 0
        %6571 = vmatpush1.bf16.msra.mxu0 0
        %6572 = vmatprep.subr.bf16.mxu0 0
        %6573 = vmatpush1.bf16.msra.mxu0 0
        %6574 = vmatprep.subr.bf16.mxu0 0
        %6575 = vmatpush1.bf16.msra.mxu0 0
        %6576 = vmatprep.subr.bf16.mxu0 0
        %6577 = vmatpush1.bf16.msra.mxu0 0
        %6578 = vmatprep.subr.bf16.mxu0 0
        %6579 = vmatpush1.bf16.msra.mxu0 0
        %6580 = vmatprep.subr.bf16.mxu0 0
        %6581 = vmatpush1.bf16.msra.mxu0 0
        %6582 = vmatprep.subr.bf16.mxu0 0
        %6583 = vmatpush1.bf16.msra.mxu0 0
        %6584 = vmatprep.subr.bf16.mxu0 0
        %6585 = vmatpush1.bf16.msra.mxu0 0
        %6586 = vmatprep.subr.bf16.mxu0 0
        %6587 = vmatpush1.bf16.msra.mxu0 0
        %6588 = vmatprep.mubr.bf16.mxu0 0
        %6589 = vmatmul.mubr.bf16.gmra.mrb[0].mxu0 %v6554
        %v6590 = vpop.f32.mrb[0].mxu0
        %v6591 = vadd.f32 0.0, %v6590
        %v6592 = vpop.f32.mrb[0].mxu0
        %v6593 = vpop.f32.mrb[0].mxu0
        %v6594 = vpop.f32.mrb[0].mxu0
        %6595 = vdwg.mxu0
        %v6596 = vadd.f32 %v6533, %v6591
        %v6597 = vld [vmem:[#allocation13 + $0x4] sm:$0x1f]
        %v6598 = vpack.c.bf16 %v6597, %v6597
        %s6599 = scalar_lea.vmem %s17, 64
        %v6600 = vld [vmem:[%s6599] sm:$0xf]
        %v6601 = vld [vmem:[%s6599 + $0x4] sm:$0xf]
        %v6602 = vld [vmem:[%s6599 + $0x8] sm:$0xf]
        %v6603 = vld [vmem:[%s6599 + $0xc] sm:$0xf]
        %v6608 = vunpack.c.l.b16 %v6600
        %v6609 = vunpack.c.l.b16 %v6601
        %v6610 = vunpack.c.l.b16 %v6602
        %v6611 = vunpack.c.l.b16 %v6603
        %v6612 = vpack.c.b16 %v6609, %v6608
        %v6613 = vpack.c.b16 %v6611, %v6610
        %v6617 = vsel %vm2153, %v6598, 0
        %6619 = vmatprep.subr.bf16.mxu0 0
        %6620 = vmatpush1.bf16.msra.mxu0 %v6612
        %6621 = vmatprep.subr.bf16.mxu0 0
        %6622 = vmatpush1.bf16.msra.mxu0 %v6613
        %6623 = vmatprep.subr.bf16.mxu0 0
        %6624 = vmatpush1.bf16.msra.mxu0 0
        %6625 = vmatprep.subr.bf16.mxu0 0
        %6626 = vmatpush1.bf16.msra.mxu0 0
        %6627 = vmatprep.subr.bf16.mxu0 0
        %6628 = vmatpush1.bf16.msra.mxu0 0
        %6629 = vmatprep.subr.bf16.mxu0 0
        %6630 = vmatpush1.bf16.msra.mxu0 0
        %6631 = vmatprep.subr.bf16.mxu0 0
        %6632 = vmatpush1.bf16.msra.mxu0 0
        %6633 = vmatprep.subr.bf16.mxu0 0
        %6634 = vmatpush1.bf16.msra.mxu0 0
        %6635 = vmatprep.subr.bf16.mxu0 0
        %6636 = vmatpush1.bf16.msra.mxu0 0
        %6637 = vmatprep.subr.bf16.mxu0 0
        %6638 = vmatpush1.bf16.msra.mxu0 0
        %6639 = vmatprep.subr.bf16.mxu0 0
        %6640 = vmatpush1.bf16.msra.mxu0 0
        %6641 = vmatprep.subr.bf16.mxu0 0
        %6642 = vmatpush1.bf16.msra.mxu0 0
        %6643 = vmatprep.subr.bf16.mxu0 0
        %6644 = vmatpush1.bf16.msra.mxu0 0
        %6645 = vmatprep.subr.bf16.mxu0 0
        %6646 = vmatpush1.bf16.msra.mxu0 0
        %6647 = vmatprep.subr.bf16.mxu0 0
        %6648 = vmatpush1.bf16.msra.mxu0 0
        %6649 = vmatprep.subr.bf16.mxu0 0
        %6650 = vmatpush1.bf16.msra.mxu0 0
        %6651 = vmatprep.mubr.bf16.mxu0 0
        %6652 = vmatmul.mubr.bf16.gmra.mrb[0].mxu0 %v6617
        %v6653 = vpop.f32.mrb[0].mxu0
        %v6654 = vadd.f32 0.0, %v6653
        %v6655 = vpop.f32.mrb[0].mxu0
        %v6656 = vpop.f32.mrb[0].mxu0
        %v6657 = vpop.f32.mrb[0].mxu0
        %6658 = vdwg.mxu0
        %v6659 = vadd.f32 %v6596, %v6654
        %v6660 = vld [vmem:[#allocation13 + $0x5] sm:$0x1f]
        %v6661 = vpack.c.bf16 %v6660, %v6660
        %s6662 = scalar_lea.vmem %s17, 80
        %v6663 = vld [vmem:[%s6662] sm:$0xf]
        %v6664 = vld [vmem:[%s6662 + $0x4] sm:$0xf]
        %v6665 = vld [vmem:[%s6662 + $0x8] sm:$0xf]
        %v6666 = vld [vmem:[%s6662 + $0xc] sm:$0xf]
        %v6671 = vunpack.c.l.b16 %v6663
        %v6672 = vunpack.c.l.b16 %v6664
        %v6673 = vunpack.c.l.b16 %v6665
        %v6674 = vunpack.c.l.b16 %v6666
        %v6675 = vpack.c.b16 %v6672, %v6671
        %v6676 = vpack.c.b16 %v6674, %v6673
        %v6680 = vsel %vm2153, %v6661, 0
        %6682 = vmatprep.subr.bf16.mxu0 0
        %6683 = vmatpush1.bf16.msra.mxu0 %v6675
        %6684 = vmatprep.subr.bf16.mxu0 0
        %6685 = vmatpush1.bf16.msra.mxu0 %v6676
        %6686 = vmatprep.subr.bf16.mxu0 0
        %6687 = vmatpush1.bf16.msra.mxu0 0
        %6688 = vmatprep.subr.bf16.mxu0 0
        %6689 = vmatpush1.bf16.msra.mxu0 0
        %6690 = vmatprep.subr.bf16.mxu0 0
        %6691 = vmatpush1.bf16.msra.mxu0 0
        %6692 = vmatprep.subr.bf16.mxu0 0
        %6693 = vmatpush1.bf16.msra.mxu0 0
        %6694 = vmatprep.subr.bf16.mxu0 0
        %6695 = vmatpush1.bf16.msra.mxu0 0
        %6696 = vmatprep.subr.bf16.mxu0 0
        %6697 = vmatpush1.bf16.msra.mxu0 0
        %6698 = vmatprep.subr.bf16.mxu0 0
        %6699 = vmatpush1.bf16.msra.mxu0 0
        %6700 = vmatprep.subr.bf16.mxu0 0
        %6701 = vmatpush1.bf16.msra.mxu0 0
        %6702 = vmatprep.subr.bf16.mxu0 0
        %6703 = vmatpush1.bf16.msra.mxu0 0
        %6704 = vmatprep.subr.bf16.mxu0 0
        %6705 = vmatpush1.bf16.msra.mxu0 0
        %6706 = vmatprep.subr.bf16.mxu0 0
        %6707 = vmatpush1.bf16.msra.mxu0 0
        %6708 = vmatprep.subr.bf16.mxu0 0
        %6709 = vmatpush1.bf16.msra.mxu0 0
        %6710 = vmatprep.subr.bf16.mxu0 0
        %6711 = vmatpush1.bf16.msra.mxu0 0
        %6712 = vmatprep.subr.bf16.mxu0 0
        %6713 = vmatpush1.bf16.msra.mxu0 0
        %6714 = vmatprep.mubr.bf16.mxu0 0
        %6715 = vmatmul.mubr.bf16.gmra.mrb[0].mxu0 %v6680
        %v6716 = vpop.f32.mrb[0].mxu0
        %v6717 = vadd.f32 0.0, %v6716
        %v6718 = vpop.f32.mrb[0].mxu0
        %v6719 = vpop.f32.mrb[0].mxu0
        %v6720 = vpop.f32.mrb[0].mxu0
        %6721 = vdwg.mxu0
        %v6722 = vadd.f32 %v6659, %v6717
        %v6723 = vld [vmem:[#allocation13 + $0x6] sm:$0x1f]
        %v6724 = vpack.c.bf16 %v6723, %v6723
        %s6725 = scalar_lea.vmem %s17, 96
        %v6726 = vld [vmem:[%s6725] sm:$0xf]
        %v6727 = vld [vmem:[%s6725 + $0x4] sm:$0xf]
        %v6728 = vld [vmem:[%s6725 + $0x8] sm:$0xf]
        %v6729 = vld [vmem:[%s6725 + $0xc] sm:$0xf]
        %v6734 = vunpack.c.l.b16 %v6726
        %v6735 = vunpack.c.l.b16 %v6727
        %v6736 = vunpack.c.l.b16 %v6728
        %v6737 = vunpack.c.l.b16 %v6729
        %v6738 = vpack.c.b16 %v6735, %v6734
        %v6739 = vpack.c.b16 %v6737, %v6736
        %v6743 = vsel %vm2153, %v6724, 0
        %6745 = vmatprep.subr.bf16.mxu0 0
        %6746 = vmatpush1.bf16.msra.mxu0 %v6738
        %6747 = vmatprep.subr.bf16.mxu0 0
        %6748 = vmatpush1.bf16.msra.mxu0 %v6739
        %6749 = vmatprep.subr.bf16.mxu0 0
        %6750 = vmatpush1.bf16.msra.mxu0 0
        %6751 = vmatprep.subr.bf16.mxu0 0
        %6752 = vmatpush1.bf16.msra.mxu0 0
        %6753 = vmatprep.subr.bf16.mxu0 0
        %6754 = vmatpush1.bf16.msra.mxu0 0
        %6755 = vmatprep.subr.bf16.mxu0 0
        %6756 = vmatpush1.bf16.msra.mxu0 0
        %6757 = vmatprep.subr.bf16.mxu0 0
        %6758 = vmatpush1.bf16.msra.mxu0 0
        %6759 = vmatprep.subr.bf16.mxu0 0
        %6760 = vmatpush1.bf16.msra.mxu0 0
        %6761 = vmatprep.subr.bf16.mxu0 0
        %6762 = vmatpush1.bf16.msra.mxu0 0
        %6763 = vmatprep.subr.bf16.mxu0 0
        %6764 = vmatpush1.bf16.msra.mxu0 0
        %6765 = vmatprep.subr.bf16.mxu0 0
        %6766 = vmatpush1.bf16.msra.mxu0 0
        %6767 = vmatprep.subr.bf16.mxu0 0
        %6768 = vmatpush1.bf16.msra.mxu0 0
        %6769 = vmatprep.subr.bf16.mxu0 0
        %6770 = vmatpush1.bf16.msra.mxu0 0
        %6771 = vmatprep.subr.bf16.mxu0 0
        %6772 = vmatpush1.bf16.msra.mxu0 0
        %6773 = vmatprep.subr.bf16.mxu0 0
        %6774 = vmatpush1.bf16.msra.mxu0 0
        %6775 = vmatprep.subr.bf16.mxu0 0
        %6776 = vmatpush1.bf16.msra.mxu0 0
        %6777 = vmatprep.mubr.bf16.mxu0 0
        %6778 = vmatmul.mubr.bf16.gmra.mrb[0].mxu0 %v6743
        %v6779 = vpop.f32.mrb[0].mxu0
        %v6780 = vadd.f32 0.0, %v6779
        %v6781 = vpop.f32.mrb[0].mxu0
        %v6782 = vpop.f32.mrb[0].mxu0
        %v6783 = vpop.f32.mrb[0].mxu0
        %6784 = vdwg.mxu0
        %v6785 = vadd.f32 %v6722, %v6780
        %v6786 = vld [vmem:[#allocation30] sm:$0x1]
        %v6788 = vlaneseq
        %v6789 = vshrl.u32 %v6788, 7
        %v6790 = vsub.s32 0, %v6789
        %v6791 = vrot.slane %v6786, %v6790
        %v6793 = vadd.f32 %v6785, %v6791
        %v6794 = vmax.f32 %v6793, 0.0
        %s6795 = scalar_lea.vmem %s750, 16
        %6796 = vst.msk [vmem:[%s6795] sm:$0x1f] %vm2523, %v6794
        %p6797 = scmp.lt.s32.totalorder %s36, 1
        %s6798 = scalar_select %p6797, %s36, 1
        %s6799 = smul.addr %s6798, 3
        %s6800 = smul.addr %s6799, 8
        %s6801 = scalar_lea.vmem %s19, %s6800
        // Predicated region
        $region141: #{_lambda_.1} parent=95 // pred_check
          %p6802 = pneg %p458
        $region142: #{_lambda_.1} parent=95 // pred_check_branch
          %6804 = sbr.rel (%p6802) target = $region144
        $region143: #{_lambda_.1} parent=95 // pred_region
          _
        $region144: #{_lambda_.1} parent=95 // pred_fallthru
          _
      $region96: #{_lambda_.1} parent=5 // pred_fallthru
        _
      %p6805 = scmp.le.s32.totalorder 2, %s31
      // Predicated region
      $region145: #{_lambda_.1} parent=5 // pred_check
        %p6806 = pneg %p6805
      $region146: #{_lambda_.1} parent=5 // pred_check_branch
        %6808 = sbr.rel (%p6806) target = $region148
      $region147: #{_lambda_.1} parent=5 // pred_region
        %s6809 = ssub.s32 %s31, 2
        // Predicated region
        $region149: #{_lambda_.1} parent=147 // pred_check
          %p6810 = pneg %p464
        $region150: #{_lambda_.1} parent=147 // pred_check_branch
          %6812 = sbr.rel (%p6810) target = $region152
        $region151: #{_lambda_.1} parent=147 // pred_region
          %p6813 = scmp.lt.s32.totalorder %s37, 1
          %s6814 = scalar_select %p6813, %s37, 1
          %s6815 = smul.addr %s6814, 3
          %s6816 = smul.addr %s6815, 8
          %s6817 = scalar_lea.vmem %s19, %s6816
        $region152: #{_lambda_.1} parent=147 // pred_fallthru
          _
      $region148: #{_lambda_.1} parent=5 // pred_fallthru
        _
    $region6: #{_lambda_.1} parent=1 // loop_footer
      %s35 = sadd.s32 1, %s31
    $region7: #{_lambda_.1} parent=1 // loop_footer_branch
      %30 = sbr.rel target = $region3
    $region8: #{_lambda_.1} parent=1 // loop_exit
      _
    %6818 = vsyncpa [#allocation15], 1
    %s6819 = scalar_lea.sflag [#allocation15], 1
    %6820 = vsyncpa %s6819, 1
    %6821 = vsyncpa [#allocation17], 1
    %6822 = vsyncpa [#allocation20], 1
    %6823 = vsyncpa [#allocation23], 1
    %6824 = vsyncpa [#allocation26], 1
    %6825 = vsyncpa [#allocation29], 1

</llo_original>
